<compile_context>
chip_gen: v7x
topology: tpu7x:2x2x1
jax: 0.10.0
libtpu: 0.0.40
codegen_flags: <defaults>
</compile_context>

<pallas_src>
import functools

import jax
import jax.numpy as jnp
from jax import lax
from jax.experimental import pallas as pl
from jax.experimental.pallas import tpu as pltpu


# ---------------------------------------------------------------------------
# Helpers
# ---------------------------------------------------------------------------

def _round_up(n, m):
    return -(-n // m) * m


def _row_tile(rows, target=512):
    """Row tile for a parallel (outer) grid axis.

    Multiple of 16 (legal second-to-last block dim for f32 and bf16), capped
    at `target`, and shrunk so the grid has >= 2 steps whenever `rows` allows
    (keeps both v7x TensorCores busy).  Never a single huge full-extent block.
    """
    r16 = _round_up(rows, 16)
    t = min(target, r16)
    if r16 > 16 and pl.cdiv(rows, t) < 2:
        t = _round_up(pl.cdiv(rows, 2), 16)
    return max(16, min(t, r16))


def _reduce_tile(rows, target=512):
    """Tile for a reduction ('arbitrary') grid axis: full extent when it fits
    (always layout-legal), otherwise a 128-aligned `target` chunk."""
    return rows if rows <= target else target


def _swish(y):
    # y * sigmoid(y); approx=True puts the divide on the otherwise-idle EUP.
    return y * pl.reciprocal(1.0 + jnp.exp(-y), approx=True)


def _onehot_bf16(eq):
    return jnp.where(eq, 1.0, 0.0).astype(jnp.bfloat16)


# ---------------------------------------------------------------------------
# Kernel 1: fused lin_ji || lin_kj  (+ rbf projection and product)
# ---------------------------------------------------------------------------

def _edge_kernel(x_ref, rbf_ref, wcat_ref, bcat_ref, wrbf_ref, xji_ref, xkj_ref):
    h = xji_ref.shape[-1]
    y = jnp.dot(x_ref[...].astype(jnp.bfloat16), wcat_ref[...],
                preferred_element_type=jnp.float32) + bcat_ref[...]
    y = _swish(y)
    r = jnp.dot(rbf_ref[...].astype(jnp.bfloat16), wrbf_ref[...],
                preferred_element_type=jnp.float32)
    xji_ref[...] = y[:, :h]
    xkj_ref[...] = (y[:, h:] * r).astype(xkj_ref.dtype)


def _edge_fused(x, rbf, q, *, row_tile=512):
    e_rows, h = x.shape
    nr = rbf.shape[1]
    te = _row_tile(e_rows, row_tile)
    return pl.pallas_call(
        _edge_kernel,
        out_shape=(jax.ShapeDtypeStruct((e_rows, h), jnp.float32),    # x_ji
                   jax.ShapeDtypeStruct((e_rows, h), jnp.bfloat16)),  # x_kj
        grid=(pl.cdiv(e_rows, te),),
        in_specs=[pl.BlockSpec((te, h), lambda i: (i, 0)),
                  pl.BlockSpec((te, nr), lambda i: (i, 0)),
                  pl.BlockSpec((h, 2 * h), lambda i: (0, 0)),
                  pl.BlockSpec((1, 2 * h), lambda i: (0, 0)),
                  pl.BlockSpec((nr, h), lambda i: (0, 0))],
        out_specs=(pl.BlockSpec((te, h), lambda i: (i, 0)),
                   pl.BlockSpec((te, h), lambda i: (i, 0))),
        compiler_params=pltpu.CompilerParams(dimension_semantics=("parallel",)),
    )(x, rbf, q["w_cat"], q["b_cat"], q["w_rbf"])


# ---------------------------------------------------------------------------
# Kernel 2: one-hot gather (over edge tiles) + sbf projection + bilinear
# ---------------------------------------------------------------------------

def _gather_bilinear_kernel(idx_ref, sbf_ref, xkj_ref, wsbf_ref, w_ref,
                            t_ref, xkg_ref, *, num_edges, num_bilinear, mask_e):
    e_i = pl.program_id(1)
    te = xkj_ref.shape[0]
    tt = t_ref.shape[0]

    @pl.when(e_i == 0)
    def _():
        xkg_ref[...] = jnp.zeros_like(xkg_ref)

    e_start = e_i * te
    xkj = xkj_ref[...]
    if mask_e:
        # Partial last edge block: zero padding rows so garbage VMEM (possibly
        # NaN) cannot poison the one-hot matmul.
        erow = e_start + lax.broadcasted_iota(jnp.int32, (te, 1), 0)
        xkj = jnp.where(erow < num_edges, xkj, 0)
    # One-hot row gather on the MXU: onehot[w, e] = (idx_kj[w] == e_start + e).
    ecol = e_start + lax.broadcasted_iota(jnp.int32, (tt, te), 1)
    onehot = _onehot_bf16(idx_ref[...] == ecol)
    xkg_ref[...] += jnp.dot(onehot, xkj, preferred_element_type=jnp.float32)

    @pl.when(e_i == pl.num_programs(1) - 1)
    def _():
        # sbf projection stays in-register (no lane-sparse [T, 8] HBM output).
        sbf_p = jnp.dot(sbf_ref[...].astype(jnp.bfloat16), wsbf_ref[...],
                        preferred_element_type=jnp.float32)          # [tt, B]
        xkg = xkg_ref[...].astype(jnp.bfloat16)
        acc = jnp.zeros(t_ref.shape, jnp.float32)
        for j in range(num_bilinear):  # small static unroll; tt=128 + bf16
            acc = acc + sbf_p[:, j:j + 1] * jnp.dot(
                xkg, w_ref[j], preferred_element_type=jnp.float32)
        t_ref[...] = acc.astype(t_ref.dtype)


def _gather_bilinear(sbf, idx_kj, x_kj, q, *, row_tile=128, edge_tile=512):
    t_rows, sr = sbf.shape
    e_rows, h = x_kj.shape
    b = q["w_sbf"].shape[1]
    tt = _row_tile(t_rows, row_tile)
    te = _reduce_tile(e_rows, edge_tile)
    idx2 = idx_kj.reshape(t_rows, 1).astype(jnp.int32)
    kernel = functools.partial(_gather_bilinear_kernel, num_edges=e_rows,
                               num_bilinear=b, mask_e=(e_rows % te != 0))
    return pl.pallas_call(
        kernel,
        out_shape=jax.ShapeDtypeStruct((t_rows, h), jnp.bfloat16),
        grid=(pl.cdiv(t_rows, tt), pl.cdiv(e_rows, te)),
        in_specs=[pl.BlockSpec((tt, 1), lambda ti, ei: (ti, 0)),
                  pl.BlockSpec((tt, sr), lambda ti, ei: (ti, 0)),
                  pl.BlockSpec((te, h), lambda ti, ei: (ei, 0)),
                  pl.BlockSpec((sr, b), lambda ti, ei: (0, 0)),
                  pl.BlockSpec((b, h, h), lambda ti, ei: (0, 0, 0))],
        out_specs=pl.BlockSpec((tt, h), lambda ti, ei: (ti, 0)),
        scratch_shapes=[pltpu.VMEM((tt, h), jnp.float32)],
        compiler_params=pltpu.CompilerParams(
            dimension_semantics=("parallel", "arbitrary")),
    )(idx2, sbf, x_kj, q["w_sbf"], q["W_r"])


# ---------------------------------------------------------------------------
# Kernel 3: one-hot scatter-add (over triplet tiles) + full residual/skip tail
# ---------------------------------------------------------------------------

def _scatter_tail_kernel(idx_ref, t_ref, xji_ref, x_ref, wres_ref, bres_ref,
                         wlin_ref, blin_ref, o_ref, agg_ref, *,
                         num_triplets, n_before, n_after, mask_t):
    t_i = pl.program_id(1)
    tt = t_ref.shape[0]
    te = o_ref.shape[0]

    @pl.when(t_i == 0)
    def _():
        agg_ref[...] = jnp.zeros_like(agg_ref)

    tvals = t_ref[...]
    if mask_t:
        # Partial last triplet block: zero padding rows so garbage rows (whose
        # garbage index might alias a valid edge) contribute nothing.
        wrow = t_i * tt + lax.broadcasted_iota(jnp.int32, (tt, 1), 0)
        tvals = jnp.where(wrow < num_triplets, tvals, 0)
    # One-hot scatter-add on the MXU: onehot_t[e, w] = (idx_ji[w] == e_global).
    e_ids = pl.program_id(0) * te + lax.broadcasted_iota(jnp.int32, (te, tt), 0)
    onehot_t = _onehot_bf16(idx_ref[...] == e_ids)
    agg_ref[...] += jnp.dot(onehot_t, tvals.astype(jnp.bfloat16),
                            preferred_element_type=jnp.float32)

    @pl.when(t_i == pl.num_programs(1) - 1)
    def _():
        h = xji_ref[...] + agg_ref[...]

        def residual(v, l0):
            y = _swish(jnp.dot(v.astype(jnp.bfloat16), wres_ref[l0],
                               preferred_element_type=jnp.float32) + bres_ref[l0])
            y = _swish(jnp.dot(y.astype(jnp.bfloat16), wres_ref[l0 + 1],
                               preferred_element_type=jnp.float32) + bres_ref[l0 + 1])
            return v + y

        for l in range(n_before):
            h = residual(h, 2 * l)
        h = _swish(jnp.dot(h.astype(jnp.bfloat16), wlin_ref[...],
                           preferred_element_type=jnp.float32)
                   + blin_ref[...]) + x_ref[...]
        for l in range(n_after):
            h = residual(h, 2 * (n_before + l))
        o_ref[...] = h.astype(o_ref.dtype)


def _scatter_tail(t, idx_ji, x_ji, x, q, *, n_before, n_after,
                  row_tile=512, trip_tile=512):
    e_rows, h = x.shape
    t_rows = t.shape[0]
    nl = q["w_res"].shape[0]
    te = _row_tile(e_rows, row_tile)
    tt = _reduce_tile(t_rows, trip_tile)
    idx2 = idx_ji.reshape(1, t_rows).astype(jnp.int32)
    kernel = functools.partial(_scatter_tail_kernel, num_triplets=t_rows,
                               n_before=n_before, n_after=n_after,
                               mask_t=(t_rows % tt != 0))
    return pl.pallas_call(
        kernel,
        out_shape=jax.ShapeDtypeStruct((e_rows, h), jnp.float32),
        grid=(pl.cdiv(e_rows, te), pl.cdiv(t_rows, tt)),
        in_specs=[pl.BlockSpec((1, tt), lambda ei, ti: (0, ti)),
                  pl.BlockSpec((tt, h), lambda ei, ti: (ti, 0)),
                  pl.BlockSpec((te, h), lambda ei, ti: (ei, 0)),
                  pl.BlockSpec((te, h), lambda ei, ti: (ei, 0)),
                  pl.BlockSpec((nl, h, h), lambda ei, ti: (0, 0, 0)),
                  pl.BlockSpec((nl, 1, h), lambda ei, ti: (0, 0, 0)),
                  pl.BlockSpec((h, h), lambda ei, ti: (0, 0)),
                  pl.BlockSpec((1, h), lambda ei, ti: (0, 0))],
        out_specs=pl.BlockSpec((te, h), lambda ei, ti: (ei, 0)),
        scratch_shapes=[pltpu.VMEM((te, h), jnp.float32)],
        compiler_params=pltpu.CompilerParams(
            dimension_semantics=("parallel", "arbitrary")),
    )(idx2, t, x_ji, x, q["w_res"], q["b_res"], q["w_lin"], q["b_lin"])


# ---------------------------------------------------------------------------
# Parameter prep (once) and full forward
# ---------------------------------------------------------------------------

def prepare_params(p):
    """One-time prep: fuse / transpose / cast weights into kernel layouts."""
    hid = p["w_ji"].shape[0]
    q = {}
    q["w_cat"] = jnp.concatenate([p["w_ji"], p["w_kj"]], axis=1).astype(jnp.bfloat16)
    q["b_cat"] = jnp.concatenate([p["b_ji"], p["b_kj"]]).reshape(1, 2 * hid).astype(jnp.float32)
    q["w_rbf"] = p["w_rbf"].astype(jnp.bfloat16)
    q["w_sbf"] = p["w_sbf"].astype(jnp.bfloat16)
    q["W_r"] = jnp.transpose(p["W"], (1, 2, 0)).astype(jnp.bfloat16)   # [B, H_l, H_i]
    wres, bres = [], []
    for (w1, b1, w2, b2) in list(p["before"]) + list(p["after"]):
        wres += [w1, w2]
        bres += [b1, b2]
    if wres:
        q["w_res"] = jnp.stack(wres).astype(jnp.bfloat16)
        q["b_res"] = jnp.stack(bres).reshape(len(bres), 1, hid).astype(jnp.float32)
    else:
        q["w_res"] = jnp.zeros((1, hid, hid), jnp.bfloat16)
        q["b_res"] = jnp.zeros((1, 1, hid), jnp.float32)
    q["w_lin"] = p["w_lin"].astype(jnp.bfloat16)
    q["b_lin"] = p["b_lin"].reshape(1, hid).astype(jnp.float32)
    return q


def interaction_block_pallas(x, rbf, sbf, idx_kj, idx_ji, q, *, n_before, n_after):
    x_ji, x_kj = _edge_fused(x, rbf, q)
    t = _gather_bilinear(sbf, idx_kj, x_kj, q)
    return _scatter_tail(t, idx_ji, x_ji, x, q, n_before=n_before, n_after=n_after)


# ---------------------------------------------------------------------------
# Pure-JAX f32 reference (matches the PyTorch forward semantics)
# ---------------------------------------------------------------------------

def interaction_block_ref(x, rbf, sbf, idx_kj, idx_ji, p):
    hi = jax.lax.Precision.HIGHEST
    act = lambda v: v * (1.0 / (1.0 + jnp.exp(-v)))
    mm = lambda a, b: jnp.dot(a, b, precision=hi)

    rbf_p = mm(rbf, p["w_rbf"])
    sbf_p = mm(sbf, p["w_sbf"])
    x_ji = act(mm(x, p["w_ji"]) + p["b_ji"])
    x_kj = act(mm(x, p["w_kj"]) + p["b_kj"]) * rbf_p
    xk = x_kj[idx_kj]
    t = jnp.einsum("wj,wl,ijl->wi", sbf_p, xk, p["W"], precision=hi)
    agg = jnp.zeros_like(x).at[idx_ji].add(t)
    h = x_ji + agg
    for (w1, b1, w2, b2) in p["before"]:
        h = h + act(mm(act(mm(h, w1) + b1), w2) + b2)
    h = act(mm(h, p["w_lin"]) + p["b_lin"]) + x
    for (w1, b1, w2, b2) in p["after"]:
        h = h + act(mm(act(mm(h, w1) + b1), w2) + b2)
    return h


# ---------------------------------------------------------------------------
# Test
# ---------------------------------------------------------------------------

def make_params(key, H, B, NS, NR, n_before, n_after):
    ks = iter(jax.random.split(key, 32))

    def lin(fan_in, fan_out):
        return (jax.random.normal(next(ks), (fan_in, fan_out), jnp.float32)
                / jnp.sqrt(float(fan_in)))

    def bias(n):
        return 0.1 * jax.random.normal(next(ks), (n,), jnp.float32)

    p = {}
    p["w_rbf"] = lin(NR, H)
    p["w_sbf"] = lin(NS * NR, B)
    p["w_ji"], p["b_ji"] = lin(H, H), bias(H)
    p["w_kj"], p["b_kj"] = lin(H, H), bias(H)
    p["W"] = jax.random.normal(next(ks), (H, B, H), jnp.float32) * (2.0 / H)
    p["w_lin"], p["b_lin"] = lin(H, H), bias(H)
    p["before"] = [(lin(H, H), bias(H), lin(H, H), bias(H)) for _ in range(n_before)]
    p["after"] = [(lin(H, H), bias(H), lin(H, H), bias(H)) for _ in range(n_after)]
    return p


if __name__ == "__main__":
    # Small-but-representative DimeNet++ sizes.
    H, B, NS, NR = 128, 8, 7, 6          # hidden, num_bilinear, spherical, radial
    E, T = 256, 512                      # edges, triplets
    n_before, n_after = 1, 2

    key = jax.random.PRNGKey(0)
    kx, krbf, ksbf, kkj, kji, kp = jax.random.split(key, 6)
    x = jax.random.normal(kx, (E, H), jnp.float32)
    rbf = jax.random.normal(krbf, (E, NR), jnp.float32)
    sbf = jax.random.normal(ksbf, (T, NS * NR), jnp.float32)
    idx_kj = jax.random.randint(kkj, (T,), 0, E, dtype=jnp.int32)
    idx_ji = jax.random.randint(kji, (T,), 0, E, dtype=jnp.int32)
    params = make_params(kp, H, B, NS, NR, n_before, n_after)

    q = prepare_params(params)
    fwd = jax.jit(functools.partial(interaction_block_pallas,
                                    n_before=n_before, n_after=n_after))
    out = jax.block_until_ready(fwd(x, rbf, sbf, idx_kj, idx_ji, q))

    ref = jax.block_until_ready(interaction_block_ref(x, rbf, sbf, idx_kj, idx_ji, params))

    assert out.shape == ref.shape and out.dtype == ref.dtype
    max_err = float(jnp.max(jnp.abs(out - ref)))
    # bf16 MXU operands (per the perf review) vs an f32-HIGHEST reference ->
    # compare with a correspondingly relaxed tolerance.
    assert jnp.allclose(out, ref, rtol=5e-2, atol=5e-2), f"max_err={max_err}"
    print("KERNEL_OK")
</pallas_src>

<mosaic_0001>
module attributes {stable_mosaic.version = 11 : i64} {
  func.func @_edge_kernel(%arg0: i32, %arg1: memref<128x128xf32, #tpu.memory_space<vmem>>, %arg2: memref<128x6xf32, #tpu.memory_space<vmem>>, %arg3: memref<128x256xbf16, #tpu.memory_space<vmem>>, %arg4: memref<1x256xf32, #tpu.memory_space<vmem>>, %arg5: memref<6x128xbf16, #tpu.memory_space<vmem>>, %arg6: memref<128x128xf32, #tpu.memory_space<vmem>>, %arg7: memref<128x128xbf16, #tpu.memory_space<vmem>>) attributes {dimension_semantics = [#tpu.dimension_semantics<parallel>], iteration_bounds = array<i64: 2>, scalar_prefetch = 0 : i64, scratch_operands = 0 : i64, tpu.core_type = #tpu.core_type<tc>, window_params = [{transform_indices = @transform_0, window_bounds = array<i64: 128, 128>}, {transform_indices = @transform_1, window_bounds = array<i64: 128, 6>}, {pipeline_mode = #tpu.pipeline_mode<synchronous>, transform_indices = @transform_2, window_bounds = array<i64: 128, 256>}, {pipeline_mode = #tpu.pipeline_mode<synchronous>, transform_indices = @transform_3, window_bounds = array<i64: 1, 256>}, {pipeline_mode = #tpu.pipeline_mode<synchronous>, transform_indices = @transform_4, window_bounds = array<i64: 6, 128>}, {transform_indices = @transform_5, window_bounds = array<i64: 128, 128>}, {transform_indices = @transform_6, window_bounds = array<i64: 128, 128>}]} {
    %c0 = arith.constant 0 : index
    %c0_0 = arith.constant 0 : index
    %0 = vector.load %arg1[%c0, %c0_0] : memref<128x128xf32, #tpu.memory_space<vmem>>, vector<128x128xf32>
    %1 = arith.truncf %0 : vector<128x128xf32> to vector<128x128xbf16>
    %c0_1 = arith.constant 0 : index
    %c0_2 = arith.constant 0 : index
    %2 = vector.load %arg3[%c0_1, %c0_2] : memref<128x256xbf16, #tpu.memory_space<vmem>>, vector<128x256xbf16>
    %cst = arith.constant dense<0.000000e+00> : vector<128x256xf32>
    %3 = tpu.matmul %1, %2, %cst {dimension_numbers = #tpu.dot_dimension_numbers<[1], [0], [0], [1], [0, 0, 1, 1], [], []>} : vector<128x128xbf16>, vector<128x256xbf16>, vector<128x256xf32> -> vector<128x256xf32>
    %c0_3 = arith.constant 0 : index
    %c0_4 = arith.constant 0 : index
    %4 = vector.load %arg4[%c0_3, %c0_4] : memref<1x256xf32, #tpu.memory_space<vmem>>, vector<1x256xf32>
    %5 = vector.broadcast %4 : vector<1x256xf32> to vector<128x256xf32>
    %6 = arith.addf %3, %5 : vector<128x256xf32>
    %cst_5 = arith.constant 0.000000e+00 : f32
    %7 = vector.broadcast %cst_5 : f32 to vector<128x256xf32>
    %8 = arith.subf %7, %6 : vector<128x256xf32>
    %9 = math.exp %8 : vector<128x256xf32>
    %cst_6 = arith.constant 1.000000e+00 : f32
    %10 = vector.broadcast %cst_6 : f32 to vector<128x256xf32>
    %11 = arith.addf %10, %9 : vector<128x256xf32>
    %12 = tpu.reciprocal %11 {approx = true} : vector<128x256xf32> -> vector<128x256xf32>
    %13 = arith.mulf %6, %12 : vector<128x256xf32>
    %c0_7 = arith.constant 0 : index
    %c0_8 = arith.constant 0 : index
    %14 = vector.load %arg2[%c0_7, %c0_8] : memref<128x6xf32, #tpu.memory_space<vmem>>, vector<128x6xf32>
    %15 = arith.truncf %14 : vector<128x6xf32> to vector<128x6xbf16>
    %c0_9 = arith.constant 0 : index
    %c0_10 = arith.constant 0 : index
    %16 = vector.load %arg5[%c0_9, %c0_10] : memref<6x128xbf16, #tpu.memory_space<vmem>>, vector<6x128xbf16>
    %cst_11 = arith.constant dense<0.000000e+00> : vector<128x128xf32>
    %17 = tpu.matmul %15, %16, %cst_11 {dimension_numbers = #tpu.dot_dimension_numbers<[1], [0], [0], [1], [0, 0, 1, 1], [], []>} : vector<128x6xbf16>, vector<6x128xbf16>, vector<128x128xf32> -> vector<128x128xf32>
    %18 = vector.extract_strided_slice %13 {offsets = [0, 0], sizes = [128, 128], strides = [1, 1]} : vector<128x256xf32> to vector<128x128xf32>
    %c0_12 = arith.constant 0 : index
    %c0_13 = arith.constant 0 : index
    %19 = vector.load %arg6[%c0_12, %c0_13] : memref<128x128xf32, #tpu.memory_space<vmem>>, vector<128x128xf32>
    tpu.vector_store %arg6[%c0_12, %c0_13], %18 {strides = array<i32>} : memref<128x128xf32, #tpu.memory_space<vmem>>, vector<128x128xf32>,
    %20 = vector.extract_strided_slice %13 {offsets = [0, 128], sizes = [128, 128], strides = [1, 1]} : vector<128x256xf32> to vector<128x128xf32>
    %21 = arith.mulf %20, %17 : vector<128x128xf32>
    %22 = arith.truncf %21 : vector<128x128xf32> to vector<128x128xbf16>
    %c0_14 = arith.constant 0 : index
    %c0_15 = arith.constant 0 : index
    %23 = vector.load %arg7[%c0_14, %c0_15] : memref<128x128xbf16, #tpu.memory_space<vmem>>, vector<128x128xbf16>
    tpu.vector_store %arg7[%c0_14, %c0_15], %22 {strides = array<i32>} : memref<128x128xbf16, #tpu.memory_space<vmem>>, vector<128x128xbf16>,
    return
  }
  func.func @transform_0(%arg0: i32) -> (i32, i32) {
    %c0_i32 = arith.constant 0 : i32
    %c0_i32_0 = arith.constant 0 : i32
    return %arg0, %c0_i32 : i32, i32
  }
  func.func @transform_1(%arg0: i32) -> (i32, i32) {
    %c0_i32 = arith.constant 0 : i32
    %c0_i32_0 = arith.constant 0 : i32
    return %arg0, %c0_i32 : i32, i32
  }
  func.func @transform_2(%arg0: i32) -> (i32, i32) {
    %c0_i32 = arith.constant 0 : i32
    %c0_i32_0 = arith.constant 0 : i32
    %c0_i32_1 = arith.constant 0 : i32
    return %c0_i32, %c0_i32_0 : i32, i32
  }
  func.func @transform_3(%arg0: i32) -> (i32, i32) {
    %c0_i32 = arith.constant 0 : i32
    %c0_i32_0 = arith.constant 0 : i32
    %c0_i32_1 = arith.constant 0 : i32
    return %c0_i32, %c0_i32_0 : i32, i32
  }
  func.func @transform_4(%arg0: i32) -> (i32, i32) {
    %c0_i32 = arith.constant 0 : i32
    %c0_i32_0 = arith.constant 0 : i32
    %c0_i32_1 = arith.constant 0 : i32
    return %c0_i32, %c0_i32_0 : i32, i32
  }
  func.func @transform_5(%arg0: i32) -> (i32, i32) {
    %c0_i32 = arith.constant 0 : i32
    %c0_i32_0 = arith.constant 0 : i32
    return %arg0, %c0_i32 : i32, i32
  }
  func.func @transform_6(%arg0: i32) -> (i32, i32) {
    %c0_i32 = arith.constant 0 : i32
    %c0_i32_0 = arith.constant 0 : i32
    return %arg0, %c0_i32 : i32, i32
  }
}

module attributes {stable_mosaic.version = 11 : i64} {
  func.func @_gather_bilinear_kernel(%arg0: i32, %arg1: i32, %arg2: memref<128x1xi32, #tpu.memory_space<vmem>>, %arg3: memref<128x42xf32, #tpu.memory_space<vmem>>, %arg4: memref<256x128xbf16, #tpu.memory_space<vmem>>, %arg5: memref<42x8xbf16, #tpu.memory_space<vmem>>, %arg6: memref<8x128x128xbf16, #tpu.memory_space<vmem>>, %arg7: memref<128x128xbf16, #tpu.memory_space<vmem>>, %arg8: memref<128x128xf32, #tpu.memory_space<vmem>>) attributes {dimension_semantics = [#tpu.dimension_semantics<parallel>, #tpu.dimension_semantics<arbitrary>], iteration_bounds = array<i64: 4, 1>, scalar_prefetch = 0 : i64, scratch_operands = 1 : i64, tpu.core_type = #tpu.core_type<tc>, window_params = [{transform_indices = @transform_0, window_bounds = array<i64: 128, 1>}, {transform_indices = @transform_1, window_bounds = array<i64: 128, 42>}, {transform_indices = @transform_2, window_bounds = array<i64: 256, 128>}, {pipeline_mode = #tpu.pipeline_mode<synchronous>, transform_indices = @transform_3, window_bounds = array<i64: 42, 8>}, {pipeline_mode = #tpu.pipeline_mode<synchronous>, transform_indices = @transform_4, window_bounds = array<i64: 8, 128, 128>}, {transform_indices = @transform_5, window_bounds = array<i64: 128, 128>}]} {
    %c0_i32 = arith.constant 0 : i32
    %0 = arith.cmpi eq, %arg1, %c0_i32 : i32
    %1 = arith.extui %0 : i1 to i32
    %c0_i32_0 = arith.constant 0 : i32
    %2 = arith.cmpi ne, %1, %c0_i32_0 : i32
    scf.if %2 {
      %cst_12 = arith.constant 0.000000e+00 : f32
      %22 = vector.broadcast %cst_12 : f32 to vector<128x128xf32>
      %c0_13 = arith.constant 0 : index
      %c0_14 = arith.constant 0 : index
      %23 = vector.load %arg8[%c0_13, %c0_14] : memref<128x128xf32, #tpu.memory_space<vmem>>, vector<128x128xf32>
      tpu.vector_store %arg8[%c0_13, %c0_14], %22 {strides = array<i32>} : memref<128x128xf32, #tpu.memory_space<vmem>>, vector<128x128xf32>,
    } else {
    }
    %c256_i32 = arith.constant 256 : i32
    %3 = arith.muli %arg1, %c256_i32 : i32
    %c0 = arith.constant 0 : index
    %c0_1 = arith.constant 0 : index
    %4 = vector.load %arg4[%c0, %c0_1] : memref<256x128xbf16, #tpu.memory_space<vmem>>, vector<256x128xbf16>
    %5 = tpu.iota {dimensions = array<i32: 1>} : vector<128x256xi32>
    %6 = vector.broadcast %3 : i32 to vector<128x256xi32>
    %7 = arith.addi %6, %5 : vector<128x256xi32>
    %c0_2 = arith.constant 0 : index
    %c0_3 = arith.constant 0 : index
    %8 = vector.load %arg2[%c0_2, %c0_3] : memref<128x1xi32, #tpu.memory_space<vmem>>, vector<128x1xi32>
    %9 = vector.broadcast %8 : vector<128x1xi32> to vector<128x256xi32>
    %10 = arith.cmpi eq, %9, %7 : vector<128x256xi32>
    %cst = arith.constant 1.000000e+00 : f32
    %cst_4 = arith.constant 0.000000e+00 : f32
    %11 = vector.broadcast %cst : f32 to vector<128x256xf32>
    %12 = vector.broadcast %cst_4 : f32 to vector<128x256xf32>
    %13 = arith.select %10, %11, %12 : vector<128x256xi1>, vector<128x256xf32>
    %14 = arith.truncf %13 : vector<128x256xf32> to vector<128x256xbf16>
    %c0_5 = arith.constant 0 : index
    %c0_6 = arith.constant 0 : index
    %15 = vector.load %arg8[%c0_5, %c0_6] : memref<128x128xf32, #tpu.memory_space<vmem>>, vector<128x128xf32>
    %cst_7 = arith.constant dense<0.000000e+00> : vector<128x128xf32>
    %16 = tpu.matmul %14, %4, %cst_7 {dimension_numbers = #tpu.dot_dimension_numbers<[1], [0], [0], [1], [0, 0, 1, 1], [], []>} : vector<128x256xbf16>, vector<256x128xbf16>, vector<128x128xf32> -> vector<128x128xf32>
    %17 = arith.addf %15, %16 : vector<128x128xf32>
    %c0_8 = arith.constant 0 : index
    %c0_9 = arith.constant 0 : index
    %18 = vector.load %arg8[%c0_8, %c0_9] : memref<128x128xf32, #tpu.memory_space<vmem>>, vector<128x128xf32>
    tpu.vector_store %arg8[%c0_8, %c0_9], %17 {strides = array<i32>} : memref<128x128xf32, #tpu.memory_space<vmem>>, vector<128x128xf32>,
    %c0_i32_10 = arith.constant 0 : i32
    %19 = arith.cmpi eq, %arg1, %c0_i32_10 : i32
    %20 = arith.extui %19 : i1 to i32
    %c0_i32_11 = arith.constant 0 : i32
    %21 = arith.cmpi ne, %20, %c0_i32_11 : i32
    scf.if %21 {
      %c0_12 = arith.constant 0 : index
      %c0_13 = arith.constant 0 : index
      %22 = vector.load %arg3[%c0_12, %c0_13] : memref<128x42xf32, #tpu.memory_space<vmem>>, vector<128x42xf32>
      %23 = arith.truncf %22 : vector<128x42xf32> to vector<128x42xbf16>
      %c0_14 = arith.constant 0 : index
      %c0_15 = arith.constant 0 : index
      %24 = vector.load %arg5[%c0_14, %c0_15] : memref<42x8xbf16, #tpu.memory_space<vmem>>, vector<42x8xbf16>
      %cst_16 = arith.constant dense<0.000000e+00> : vector<128x8xf32>
      %25 = tpu.matmul %23, %24, %cst_16 {dimension_numbers = #tpu.dot_dimension_numbers<[1], [0], [0], [1], [0, 0, 1, 1], [], []>} : vector<128x42xbf16>, vector<42x8xbf16>, vector<128x8xf32> -> vector<128x8xf32>
      %c0_17 = arith.constant 0 : index
      %c0_18 = arith.constant 0 : index
      %26 = vector.load %arg8[%c0_17, %c0_18] : memref<128x128xf32, #tpu.memory_space<vmem>>, vector<128x128xf32>
      %27 = arith.truncf %26 : vector<128x128xf32> to vector<128x128xbf16>
      %cst_19 = arith.constant 0.000000e+00 : f32
      %28 = vector.broadcast %cst_19 : f32 to vector<128x128xf32>
      %29 = vector.extract_strided_slice %25 {offsets = [0, 0], sizes = [128, 1], strides = [1, 1]} : vector<128x8xf32> to vector<128x1xf32>
      %c0_20 = arith.constant 0 : index
      %c0_21 = arith.constant 0 : index
      %c0_22 = arith.constant 0 : index
      %30 = vector.load %arg6[%c0_20, %c0_21, %c0_22] : memref<8x128x128xbf16, #tpu.memory_space<vmem>>, vector<1x128x128xbf16>
      %31 = vector.shape_cast %30 : vector<1x128x128xbf16> to vector<128x128xbf16>
      %cst_23 = arith.constant dense<0.000000e+00> : vector<128x128xf32>
      %32 = tpu.matmul %27, %31, %cst_23 {dimension_numbers = #tpu.dot_dimension_numbers<[1], [0], [0], [1], [0, 0, 1, 1], [], []>} : vector<128x128xbf16>, vector<128x128xbf16>, vector<128x128xf32> -> vector<128x128xf32>
      %33 = vector.broadcast %29 : vector<128x1xf32> to vector<128x128xf32>
      %34 = arith.mulf %33, %32 : vector<128x128xf32>
      %35 = arith.addf %28, %34 : vector<128x128xf32>
      %36 = vector.extract_strided_slice %25 {offsets = [0, 1], sizes = [128, 1], strides = [1, 1]} : vector<128x8xf32> to vector<128x1xf32>
      %c1 = arith.constant 1 : index
      %c0_24 = arith.constant 0 : index
      %c0_25 = arith.constant 0 : index
      %37 = vector.load %arg6[%c1, %c0_24, %c0_25] : memref<8x128x128xbf16, #tpu.memory_space<vmem>>, vector<1x128x128xbf16>
      %38 = vector.shape_cast %37 : vector<1x128x128xbf16> to vector<128x128xbf16>
      %cst_26 = arith.constant dense<0.000000e+00> : vector<128x128xf32>
      %39 = tpu.matmul %27, %38, %cst_26 {dimension_numbers = #tpu.dot_dimension_numbers<[1], [0], [0], [1], [0, 0, 1, 1], [], []>} : vector<128x128xbf16>, vector<128x128xbf16>, vector<128x128xf32> -> vector<128x128xf32>
      %40 = vector.broadcast %36 : vector<128x1xf32> to vector<128x128xf32>
      %41 = arith.mulf %40, %39 : vector<128x128xf32>
      %42 = arith.addf %35, %41 : vector<128x128xf32>
      %43 = vector.extract_strided_slice %25 {offsets = [0, 2], sizes = [128, 1], strides = [1, 1]} : vector<128x8xf32> to vector<128x1xf32>
      %c2 = arith.constant 2 : index
      %c0_27 = arith.constant 0 : index
      %c0_28 = arith.constant 0 : index
      %44 = vector.load %arg6[%c2, %c0_27, %c0_28] : memref<8x128x128xbf16, #tpu.memory_space<vmem>>, vector<1x128x128xbf16>
      %45 = vector.shape_cast %44 : vector<1x128x128xbf16> to vector<128x128xbf16>
      %cst_29 = arith.constant dense<0.000000e+00> : vector<128x128xf32>
      %46 = tpu.matmul %27, %45, %cst_29 {dimension_numbers = #tpu.dot_dimension_numbers<[1], [0], [0], [1], [0, 0, 1, 1], [], []>} : vector<128x128xbf16>, vector<128x128xbf16>, vector<128x128xf32> -> vector<128x128xf32>
      %47 = vector.broadcast %43 : vector<128x1xf32> to vector<128x128xf32>
      %48 = arith.mulf %47, %46 : vector<128x128xf32>
      %49 = arith.addf %42, %48 : vector<128x128xf32>
      %50 = vector.extract_strided_slice %25 {offsets = [0, 3], sizes = [128, 1], strides = [1, 1]} : vector<128x8xf32> to vector<128x1xf32>
      %c3 = arith.constant 3 : index
      %c0_30 = arith.constant 0 : index
      %c0_31 = arith.constant 0 : index
      %51 = vector.load %arg6[%c3, %c0_30, %c0_31] : memref<8x128x128xbf16, #tpu.memory_space<vmem>>, vector<1x128x128xbf16>
      %52 = vector.shape_cast %51 : vector<1x128x128xbf16> to vector<128x128xbf16>
      %cst_32 = arith.constant dense<0.000000e+00> : vector<128x128xf32>
      %53 = tpu.matmul %27, %52, %cst_32 {dimension_numbers = #tpu.dot_dimension_numbers<[1], [0], [0], [1], [0, 0, 1, 1], [], []>} : vector<128x128xbf16>, vector<128x128xbf16>, vector<128x128xf32> -> vector<128x128xf32>
      %54 = vector.broadcast %50 : vector<128x1xf32> to vector<128x128xf32>
      %55 = arith.mulf %54, %53 : vector<128x128xf32>
      %56 = arith.addf %49, %55 : vector<128x128xf32>
      %57 = vector.extract_strided_slice %25 {offsets = [0, 4], sizes = [128, 1], strides = [1, 1]} : vector<128x8xf32> to vector<128x1xf32>
      %c4 = arith.constant 4 : index
      %c0_33 = arith.constant 0 : index
      %c0_34 = arith.constant 0 : index
      %58 = vector.load %arg6[%c4, %c0_33, %c0_34] : memref<8x128x128xbf16, #tpu.memory_space<vmem>>, vector<1x128x128xbf16>
      %59 = vector.shape_cast %58 : vector<1x128x128xbf16> to vector<128x128xbf16>
      %cst_35 = arith.constant dense<0.000000e+00> : vector<128x128xf32>
      %60 = tpu.matmul %27, %59, %cst_35 {dimension_numbers = #tpu.dot_dimension_numbers<[1], [0], [0], [1], [0, 0, 1, 1], [], []>} : vector<128x128xbf16>, vector<128x128xbf16>, vector<128x128xf32> -> vector<128x128xf32>
      %61 = vector.broadcast %57 : vector<128x1xf32> to vector<128x128xf32>
      %62 = arith.mulf %61, %60 : vector<128x128xf32>
      %63 = arith.addf %56, %62 : vector<128x128xf32>
      %64 = vector.extract_strided_slice %25 {offsets = [0, 5], sizes = [128, 1], strides = [1, 1]} : vector<128x8xf32> to vector<128x1xf32>
      %c5 = arith.constant 5 : index
      %c0_36 = arith.constant 0 : index
      %c0_37 = arith.constant 0 : index
      %65 = vector.load %arg6[%c5, %c0_36, %c0_37] : memref<8x128x128xbf16, #tpu.memory_space<vmem>>, vector<1x128x128xbf16>
      %66 = vector.shape_cast %65 : vector<1x128x128xbf16> to vector<128x128xbf16>
      %cst_38 = arith.constant dense<0.000000e+00> : vector<128x128xf32>
      %67 = tpu.matmul %27, %66, %cst_38 {dimension_numbers = #tpu.dot_dimension_numbers<[1], [0], [0], [1], [0, 0, 1, 1], [], []>} : vector<128x128xbf16>, vector<128x128xbf16>, vector<128x128xf32> -> vector<128x128xf32>
      %68 = vector.broadcast %64 : vector<128x1xf32> to vector<128x128xf32>
      %69 = arith.mulf %68, %67 : vector<128x128xf32>
      %70 = arith.addf %63, %69 : vector<128x128xf32>
      %71 = vector.extract_strided_slice %25 {offsets = [0, 6], sizes = [128, 1], strides = [1, 1]} : vector<128x8xf32> to vector<128x1xf32>
      %c6 = arith.constant 6 : index
      %c0_39 = arith.constant 0 : index
      %c0_40 = arith.constant 0 : index
      %72 = vector.load %arg6[%c6, %c0_39, %c0_40] : memref<8x128x128xbf16, #tpu.memory_space<vmem>>, vector<1x128x128xbf16>
      %73 = vector.shape_cast %72 : vector<1x128x128xbf16> to vector<128x128xbf16>
      %cst_41 = arith.constant dense<0.000000e+00> : vector<128x128xf32>
      %74 = tpu.matmul %27, %73, %cst_41 {dimension_numbers = #tpu.dot_dimension_numbers<[1], [0], [0], [1], [0, 0, 1, 1], [], []>} : vector<128x128xbf16>, vector<128x128xbf16>, vector<128x128xf32> -> vector<128x128xf32>
      %75 = vector.broadcast %71 : vector<128x1xf32> to vector<128x128xf32>
      %76 = arith.mulf %75, %74 : vector<128x128xf32>
      %77 = arith.addf %70, %76 : vector<128x128xf32>
      %78 = vector.extract_strided_slice %25 {offsets = [0, 7], sizes = [128, 1], strides = [1, 1]} : vector<128x8xf32> to vector<128x1xf32>
      %c7 = arith.constant 7 : index
      %c0_42 = arith.constant 0 : index
      %c0_43 = arith.constant 0 : index
      %79 = vector.load %arg6[%c7, %c0_42, %c0_43] : memref<8x128x128xbf16, #tpu.memory_space<vmem>>, vector<1x128x128xbf16>
      %80 = vector.shape_cast %79 : vector<1x128x128xbf16> to vector<128x128xbf16>
      %cst_44 = arith.constant dense<0.000000e+00> : vector<128x128xf32>
      %81 = tpu.matmul %27, %80, %cst_44 {dimension_numbers = #tpu.dot_dimension_numbers<[1], [0], [0], [1], [0, 0, 1, 1], [], []>} : vector<128x128xbf16>, vector<128x128xbf16>, vector<128x128xf32> -> vector<128x128xf32>
      %82 = vector.broadcast %78 : vector<128x1xf32> to vector<128x128xf32>
      %83 = arith.mulf %82, %81 : vector<128x128xf32>
      %84 = arith.addf %77, %83 : vector<128x128xf32>
      %85 = arith.truncf %84 : vector<128x128xf32> to vector<128x128xbf16>
      %c0_45 = arith.constant 0 : index
      %c0_46 = arith.constant 0 : index
      %86 = vector.load %arg7[%c0_45, %c0_46] : memref<128x128xbf16, #tpu.memory_space<vmem>>, vector<128x128xbf16>
      tpu.vector_store %arg7[%c0_45, %c0_46], %85 {strides = array<i32>} : memref<128x128xbf16, #tpu.memory_space<vmem>>, vector<128x128xbf16>,
    } else {
    }
    return
  }
  func.func @transform_0(%arg0: i32, %arg1: i32) -> (i32, i32) {
    %c0_i32 = arith.constant 0 : i32
    %c0_i32_0 = arith.constant 0 : i32
    return %arg0, %c0_i32 : i32, i32
  }
  func.func @transform_1(%arg0: i32, %arg1: i32) -> (i32, i32) {
    %c0_i32 = arith.constant 0 : i32
    %c0_i32_0 = arith.constant 0 : i32
    return %arg0, %c0_i32 : i32, i32
  }
  func.func @transform_2(%arg0: i32, %arg1: i32) -> (i32, i32) {
    %c0_i32 = arith.constant 0 : i32
    %c0_i32_0 = arith.constant 0 : i32
    return %arg1, %c0_i32 : i32, i32
  }
  func.func @transform_3(%arg0: i32, %arg1: i32) -> (i32, i32) {
    %c0_i32 = arith.constant 0 : i32
    %c0_i32_0 = arith.constant 0 : i32
    %c0_i32_1 = arith.constant 0 : i32
    return %c0_i32, %c0_i32_0 : i32, i32
  }
  func.func @transform_4(%arg0: i32, %arg1: i32) -> (i32, i32, i32) {
    %c0_i32 = arith.constant 0 : i32
    %c0_i32_0 = arith.constant 0 : i32
    %c0_i32_1 = arith.constant 0 : i32
    %c0_i32_2 = arith.constant 0 : i32
    return %c0_i32, %c0_i32_0, %c0_i32_1 : i32, i32, i32
  }
  func.func @transform_5(%arg0: i32, %arg1: i32) -> (i32, i32) {
    %c0_i32 = arith.constant 0 : i32
    %c0_i32_0 = arith.constant 0 : i32
    return %arg0, %c0_i32 : i32, i32
  }
}

module attributes {stable_mosaic.version = 11 : i64} {
  func.func @_scatter_tail_kernel(%arg0: i32, %arg1: i32, %arg2: memref<1x512xi32, #tpu.memory_space<vmem>>, %arg3: memref<512x128xbf16, #tpu.memory_space<vmem>>, %arg4: memref<128x128xf32, #tpu.memory_space<vmem>>, %arg5: memref<128x128xf32, #tpu.memory_space<vmem>>, %arg6: memref<6x128x128xbf16, #tpu.memory_space<vmem>>, %arg7: memref<6x1x128xf32, #tpu.memory_space<vmem>>, %arg8: memref<128x128xbf16, #tpu.memory_space<vmem>>, %arg9: memref<1x128xf32, #tpu.memory_space<vmem>>, %arg10: memref<128x128xf32, #tpu.memory_space<vmem>>, %arg11: memref<128x128xf32, #tpu.memory_space<vmem>>) attributes {dimension_semantics = [#tpu.dimension_semantics<parallel>, #tpu.dimension_semantics<arbitrary>], iteration_bounds = array<i64: 2, 1>, scalar_prefetch = 0 : i64, scratch_operands = 1 : i64, tpu.core_type = #tpu.core_type<tc>, window_params = [{transform_indices = @transform_0, window_bounds = array<i64: 1, 512>}, {transform_indices = @transform_1, window_bounds = array<i64: 512, 128>}, {transform_indices = @transform_2, window_bounds = array<i64: 128, 128>}, {transform_indices = @transform_3, window_bounds = array<i64: 128, 128>}, {pipeline_mode = #tpu.pipeline_mode<synchronous>, transform_indices = @transform_4, window_bounds = array<i64: 6, 128, 128>}, {pipeline_mode = #tpu.pipeline_mode<synchronous>, transform_indices = @transform_5, window_bounds = array<i64: 6, 1, 128>}, {pipeline_mode = #tpu.pipeline_mode<synchronous>, transform_indices = @transform_6, window_bounds = array<i64: 128, 128>}, {pipeline_mode = #tpu.pipeline_mode<synchronous>, transform_indices = @transform_7, window_bounds = array<i64: 1, 128>}, {transform_indices = @transform_8, window_bounds = array<i64: 128, 128>}]} {
    %c0_i32 = arith.constant 0 : i32
    %0 = arith.cmpi eq, %arg1, %c0_i32 : i32
    %1 = arith.extui %0 : i1 to i32
    %c0_i32_0 = arith.constant 0 : i32
    %2 = arith.cmpi ne, %1, %c0_i32_0 : i32
    scf.if %2 {
      %cst_12 = arith.constant 0.000000e+00 : f32
      %22 = vector.broadcast %cst_12 : f32 to vector<128x128xf32>
      %c0_13 = arith.constant 0 : index
      %c0_14 = arith.constant 0 : index
      %23 = vector.load %arg11[%c0_13, %c0_14] : memref<128x128xf32, #tpu.memory_space<vmem>>, vector<128x128xf32>
      tpu.vector_store %arg11[%c0_13, %c0_14], %22 {strides = array<i32>} : memref<128x128xf32, #tpu.memory_space<vmem>>, vector<128x128xf32>,
    } else {
    }
    %c0 = arith.constant 0 : index
    %c0_1 = arith.constant 0 : index
    %3 = vector.load %arg3[%c0, %c0_1] : memref<512x128xbf16, #tpu.memory_space<vmem>>, vector<512x128xbf16>
    %c128_i32 = arith.constant 128 : i32
    %4 = arith.muli %arg0, %c128_i32 : i32
    %5 = tpu.iota {dimensions = array<i32: 0>} : vector<128x512xi32>
    %6 = vector.broadcast %4 : i32 to vector<128x512xi32>
    %7 = arith.addi %6, %5 : vector<128x512xi32>
    %c0_2 = arith.constant 0 : index
    %c0_3 = arith.constant 0 : index
    %8 = vector.load %arg2[%c0_2, %c0_3] : memref<1x512xi32, #tpu.memory_space<vmem>>, vector<1x512xi32>
    %9 = vector.broadcast %8 : vector<1x512xi32> to vector<128x512xi32>
    %10 = arith.cmpi eq, %9, %7 : vector<128x512xi32>
    %cst = arith.constant 1.000000e+00 : f32
    %cst_4 = arith.constant 0.000000e+00 : f32
    %11 = vector.broadcast %cst : f32 to vector<128x512xf32>
    %12 = vector.broadcast %cst_4 : f32 to vector<128x512xf32>
    %13 = arith.select %10, %11, %12 : vector<128x512xi1>, vector<128x512xf32>
    %14 = arith.truncf %13 : vector<128x512xf32> to vector<128x512xbf16>
    %c0_5 = arith.constant 0 : index
    %c0_6 = arith.constant 0 : index
    %15 = vector.load %arg11[%c0_5, %c0_6] : memref<128x128xf32, #tpu.memory_space<vmem>>, vector<128x128xf32>
    %cst_7 = arith.constant dense<0.000000e+00> : vector<128x128xf32>
    %16 = tpu.matmul %14, %3, %cst_7 {dimension_numbers = #tpu.dot_dimension_numbers<[1], [0], [0], [1], [0, 0, 1, 1], [], []>} : vector<128x512xbf16>, vector<512x128xbf16>, vector<128x128xf32> -> vector<128x128xf32>
    %17 = arith.addf %15, %16 : vector<128x128xf32>
    %c0_8 = arith.constant 0 : index
    %c0_9 = arith.constant 0 : index
    %18 = vector.load %arg11[%c0_8, %c0_9] : memref<128x128xf32, #tpu.memory_space<vmem>>, vector<128x128xf32>
    tpu.vector_store %arg11[%c0_8, %c0_9], %17 {strides = array<i32>} : memref<128x128xf32, #tpu.memory_space<vmem>>, vector<128x128xf32>,
    %c0_i32_10 = arith.constant 0 : i32
    %19 = arith.cmpi eq, %arg1, %c0_i32_10 : i32
    %20 = arith.extui %19 : i1 to i32
    %c0_i32_11 = arith.constant 0 : i32
    %21 = arith.cmpi ne, %20, %c0_i32_11 : i32
    scf.if %21 {
      %c0_12 = arith.constant 0 : index
      %c0_13 = arith.constant 0 : index
      %22 = vector.load %arg4[%c0_12, %c0_13] : memref<128x128xf32, #tpu.memory_space<vmem>>, vector<128x128xf32>
      %c0_14 = arith.constant 0 : index
      %c0_15 = arith.constant 0 : index
      %23 = vector.load %arg11[%c0_14, %c0_15] : memref<128x128xf32, #tpu.memory_space<vmem>>, vector<128x128xf32>
      %24 = arith.addf %22, %23 : vector<128x128xf32>
      %25 = arith.truncf %24 : vector<128x128xf32> to vector<128x128xbf16>
      %c0_16 = arith.constant 0 : index
      %c0_17 = arith.constant 0 : index
      %c0_18 = arith.constant 0 : index
      %26 = vector.load %arg6[%c0_16, %c0_17, %c0_18] : memref<6x128x128xbf16, #tpu.memory_space<vmem>>, vector<1x128x128xbf16>
      %27 = vector.shape_cast %26 : vector<1x128x128xbf16> to vector<128x128xbf16>
      %cst_19 = arith.constant dense<0.000000e+00> : vector<128x128xf32>
      %28 = tpu.matmul %25, %27, %cst_19 {dimension_numbers = #tpu.dot_dimension_numbers<[1], [0], [0], [1], [0, 0, 1, 1], [], []>} : vector<128x128xbf16>, vector<128x128xbf16>, vector<128x128xf32> -> vector<128x128xf32>
      %c0_20 = arith.constant 0 : index
      %c0_21 = arith.constant 0 : index
      %c0_22 = arith.constant 0 : index
      %29 = vector.load %arg7[%c0_20, %c0_21, %c0_22] : memref<6x1x128xf32, #tpu.memory_space<vmem>>, vector<1x1x128xf32>
      %30 = vector.shape_cast %29 : vector<1x1x128xf32> to vector<1x128xf32>
      %31 = vector.broadcast %30 : vector<1x128xf32> to vector<128x128xf32>
      %32 = arith.addf %28, %31 : vector<128x128xf32>
      %cst_23 = arith.constant 0.000000e+00 : f32
      %33 = vector.broadcast %cst_23 : f32 to vector<128x128xf32>
      %34 = arith.subf %33, %32 : vector<128x128xf32>
      %35 = math.exp %34 : vector<128x128xf32>
      %cst_24 = arith.constant 1.000000e+00 : f32
      %36 = vector.broadcast %cst_24 : f32 to vector<128x128xf32>
      %37 = arith.addf %36, %35 : vector<128x128xf32>
      %38 = tpu.reciprocal %37 {approx = true} : vector<128x128xf32> -> vector<128x128xf32>
      %39 = arith.mulf %32, %38 : vector<128x128xf32>
      %40 = arith.truncf %39 : vector<128x128xf32> to vector<128x128xbf16>
      %c1 = arith.constant 1 : index
      %c0_25 = arith.constant 0 : index
      %c0_26 = arith.constant 0 : index
      %41 = vector.load %arg6[%c1, %c0_25, %c0_26] : memref<6x128x128xbf16, #tpu.memory_space<vmem>>, vector<1x128x128xbf16>
      %42 = vector.shape_cast %41 : vector<1x128x128xbf16> to vector<128x128xbf16>
      %cst_27 = arith.constant dense<0.000000e+00> : vector<128x128xf32>
      %43 = tpu.matmul %40, %42, %cst_27 {dimension_numbers = #tpu.dot_dimension_numbers<[1], [0], [0], [1], [0, 0, 1, 1], [], []>} : vector<128x128xbf16>, vector<128x128xbf16>, vector<128x128xf32> -> vector<128x128xf32>
      %c1_28 = arith.constant 1 : index
      %c0_29 = arith.constant 0 : index
      %c0_30 = arith.constant 0 : index
      %44 = vector.load %arg7[%c1_28, %c0_29, %c0_30] : memref<6x1x128xf32, #tpu.memory_space<vmem>>, vector<1x1x128xf32>
      %45 = vector.shape_cast %44 : vector<1x1x128xf32> to vector<1x128xf32>
      %46 = vector.broadcast %45 : vector<1x128xf32> to vector<128x128xf32>
      %47 = arith.addf %43, %46 : vector<128x128xf32>
      %cst_31 = arith.constant 0.000000e+00 : f32
      %48 = vector.broadcast %cst_31 : f32 to vector<128x128xf32>
      %49 = arith.subf %48, %47 : vector<128x128xf32>
      %50 = math.exp %49 : vector<128x128xf32>
      %cst_32 = arith.constant 1.000000e+00 : f32
      %51 = vector.broadcast %cst_32 : f32 to vector<128x128xf32>
      %52 = arith.addf %51, %50 : vector<128x128xf32>
      %53 = tpu.reciprocal %52 {approx = true} : vector<128x128xf32> -> vector<128x128xf32>
      %54 = arith.mulf %47, %53 : vector<128x128xf32>
      %55 = arith.addf %24, %54 : vector<128x128xf32>
      %56 = arith.truncf %55 : vector<128x128xf32> to vector<128x128xbf16>
      %c0_33 = arith.constant 0 : index
      %c0_34 = arith.constant 0 : index
      %57 = vector.load %arg8[%c0_33, %c0_34] : memref<128x128xbf16, #tpu.memory_space<vmem>>, vector<128x128xbf16>
      %cst_35 = arith.constant dense<0.000000e+00> : vector<128x128xf32>
      %58 = tpu.matmul %56, %57, %cst_35 {dimension_numbers = #tpu.dot_dimension_numbers<[1], [0], [0], [1], [0, 0, 1, 1], [], []>} : vector<128x128xbf16>, vector<128x128xbf16>, vector<128x128xf32> -> vector<128x128xf32>
      %c0_36 = arith.constant 0 : index
      %c0_37 = arith.constant 0 : index
      %59 = vector.load %arg9[%c0_36, %c0_37] : memref<1x128xf32, #tpu.memory_space<vmem>>, vector<1x128xf32>
      %60 = vector.broadcast %59 : vector<1x128xf32> to vector<128x128xf32>
      %61 = arith.addf %58, %60 : vector<128x128xf32>
      %cst_38 = arith.constant 0.000000e+00 : f32
      %62 = vector.broadcast %cst_38 : f32 to vector<128x128xf32>
      %63 = arith.subf %62, %61 : vector<128x128xf32>
      %64 = math.exp %63 : vector<128x128xf32>
      %cst_39 = arith.constant 1.000000e+00 : f32
      %65 = vector.broadcast %cst_39 : f32 to vector<128x128xf32>
      %66 = arith.addf %65, %64 : vector<128x128xf32>
      %67 = tpu.reciprocal %66 {approx = true} : vector<128x128xf32> -> vector<128x128xf32>
      %68 = arith.mulf %61, %67 : vector<128x128xf32>
      %c0_40 = arith.constant 0 : index
      %c0_41 = arith.constant 0 : index
      %69 = vector.load %arg5[%c0_40, %c0_41] : memref<128x128xf32, #tpu.memory_space<vmem>>, vector<128x128xf32>
      %70 = arith.addf %68, %69 : vector<128x128xf32>
      %71 = arith.truncf %70 : vector<128x128xf32> to vector<128x128xbf16>
      %c2 = arith.constant 2 : index
      %c0_42 = arith.constant 0 : index
      %c0_43 = arith.constant 0 : index
      %72 = vector.load %arg6[%c2, %c0_42, %c0_43] : memref<6x128x128xbf16, #tpu.memory_space<vmem>>, vector<1x128x128xbf16>
      %73 = vector.shape_cast %72 : vector<1x128x128xbf16> to vector<128x128xbf16>
      %cst_44 = arith.constant dense<0.000000e+00> : vector<128x128xf32>
      %74 = tpu.matmul %71, %73, %cst_44 {dimension_numbers = #tpu.dot_dimension_numbers<[1], [0], [0], [1], [0, 0, 1, 1], [], []>} : vector<128x128xbf16>, vector<128x128xbf16>, vector<128x128xf32> -> vector<128x128xf32>
      %c2_45 = arith.constant 2 : index
      %c0_46 = arith.constant 0 : index
      %c0_47 = arith.constant 0 : index
      %75 = vector.load %arg7[%c2_45, %c0_46, %c0_47] : memref<6x1x128xf32, #tpu.memory_space<vmem>>, vector<1x1x128xf32>
      %76 = vector.shape_cast %75 : vector<1x1x128xf32> to vector<1x128xf32>
      %77 = vector.broadcast %76 : vector<1x128xf32> to vector<128x128xf32>
      %78 = arith.addf %74, %77 : vector<128x128xf32>
      %cst_48 = arith.constant 0.000000e+00 : f32
      %79 = vector.broadcast %cst_48 : f32 to vector<128x128xf32>
      %80 = arith.subf %79, %78 : vector<128x128xf32>
      %81 = math.exp %80 : vector<128x128xf32>
      %cst_49 = arith.constant 1.000000e+00 : f32
      %82 = vector.broadcast %cst_49 : f32 to vector<128x128xf32>
      %83 = arith.addf %82, %81 : vector<128x128xf32>
      %84 = tpu.reciprocal %83 {approx = true} : vector<128x128xf32> -> vector<128x128xf32>
      %85 = arith.mulf %78, %84 : vector<128x128xf32>
      %86 = arith.truncf %85 : vector<128x128xf32> to vector<128x128xbf16>
      %c3 = arith.constant 3 : index
      %c0_50 = arith.constant 0 : index
      %c0_51 = arith.constant 0 : index
      %87 = vector.load %arg6[%c3, %c0_50, %c0_51] : memref<6x128x128xbf16, #tpu.memory_space<vmem>>, vector<1x128x128xbf16>
      %88 = vector.shape_cast %87 : vector<1x128x128xbf16> to vector<128x128xbf16>
      %cst_52 = arith.constant dense<0.000000e+00> : vector<128x128xf32>
      %89 = tpu.matmul %86, %88, %cst_52 {dimension_numbers = #tpu.dot_dimension_numbers<[1], [0], [0], [1], [0, 0, 1, 1], [], []>} : vector<128x128xbf16>, vector<128x128xbf16>, vector<128x128xf32> -> vector<128x128xf32>
      %c3_53 = arith.constant 3 : index
      %c0_54 = arith.constant 0 : index
      %c0_55 = arith.constant 0 : index
      %90 = vector.load %arg7[%c3_53, %c0_54, %c0_55] : memref<6x1x128xf32, #tpu.memory_space<vmem>>, vector<1x1x128xf32>
      %91 = vector.shape_cast %90 : vector<1x1x128xf32> to vector<1x128xf32>
      %92 = vector.broadcast %91 : vector<1x128xf32> to vector<128x128xf32>
      %93 = arith.addf %89, %92 : vector<128x128xf32>
      %cst_56 = arith.constant 0.000000e+00 : f32
      %94 = vector.broadcast %cst_56 : f32 to vector<128x128xf32>
      %95 = arith.subf %94, %93 : vector<128x128xf32>
      %96 = math.exp %95 : vector<128x128xf32>
      %cst_57 = arith.constant 1.000000e+00 : f32
      %97 = vector.broadcast %cst_57 : f32 to vector<128x128xf32>
      %98 = arith.addf %97, %96 : vector<128x128xf32>
      %99 = tpu.reciprocal %98 {approx = true} : vector<128x128xf32> -> vector<128x128xf32>
      %100 = arith.mulf %93, %99 : vector<128x128xf32>
      %101 = arith.addf %70, %100 : vector<128x128xf32>
      %102 = arith.truncf %101 : vector<128x128xf32> to vector<128x128xbf16>
      %c4 = arith.constant 4 : index
      %c0_58 = arith.constant 0 : index
      %c0_59 = arith.constant 0 : index
      %103 = vector.load %arg6[%c4, %c0_58, %c0_59] : memref<6x128x128xbf16, #tpu.memory_space<vmem>>, vector<1x128x128xbf16>
      %104 = vector.shape_cast %103 : vector<1x128x128xbf16> to vector<128x128xbf16>
      %cst_60 = arith.constant dense<0.000000e+00> : vector<128x128xf32>
      %105 = tpu.matmul %102, %104, %cst_60 {dimension_numbers = #tpu.dot_dimension_numbers<[1], [0], [0], [1], [0, 0, 1, 1], [], []>} : vector<128x128xbf16>, vector<128x128xbf16>, vector<128x128xf32> -> vector<128x128xf32>
      %c4_61 = arith.constant 4 : index
      %c0_62 = arith.constant 0 : index
      %c0_63 = arith.constant 0 : index
      %106 = vector.load %arg7[%c4_61, %c0_62, %c0_63] : memref<6x1x128xf32, #tpu.memory_space<vmem>>, vector<1x1x128xf32>
      %107 = vector.shape_cast %106 : vector<1x1x128xf32> to vector<1x128xf32>
      %108 = vector.broadcast %107 : vector<1x128xf32> to vector<128x128xf32>
      %109 = arith.addf %105, %108 : vector<128x128xf32>
      %cst_64 = arith.constant 0.000000e+00 : f32
      %110 = vector.broadcast %cst_64 : f32 to vector<128x128xf32>
      %111 = arith.subf %110, %109 : vector<128x128xf32>
      %112 = math.exp %111 : vector<128x128xf32>
      %cst_65 = arith.constant 1.000000e+00 : f32
      %113 = vector.broadcast %cst_65 : f32 to vector<128x128xf32>
      %114 = arith.addf %113, %112 : vector<128x128xf32>
      %115 = tpu.reciprocal %114 {approx = true} : vector<128x128xf32> -> vector<128x128xf32>
      %116 = arith.mulf %109, %115 : vector<128x128xf32>
      %117 = arith.truncf %116 : vector<128x128xf32> to vector<128x128xbf16>
      %c5 = arith.constant 5 : index
      %c0_66 = arith.constant 0 : index
      %c0_67 = arith.constant 0 : index
      %118 = vector.load %arg6[%c5, %c0_66, %c0_67] : memref<6x128x128xbf16, #tpu.memory_space<vmem>>, vector<1x128x128xbf16>
      %119 = vector.shape_cast %118 : vector<1x128x128xbf16> to vector<128x128xbf16>
      %cst_68 = arith.constant dense<0.000000e+00> : vector<128x128xf32>
      %120 = tpu.matmul %117, %119, %cst_68 {dimension_numbers = #tpu.dot_dimension_numbers<[1], [0], [0], [1], [0, 0, 1, 1], [], []>} : vector<128x128xbf16>, vector<128x128xbf16>, vector<128x128xf32> -> vector<128x128xf32>
      %c5_69 = arith.constant 5 : index
      %c0_70 = arith.constant 0 : index
      %c0_71 = arith.constant 0 : index
      %121 = vector.load %arg7[%c5_69, %c0_70, %c0_71] : memref<6x1x128xf32, #tpu.memory_space<vmem>>, vector<1x1x128xf32>
      %122 = vector.shape_cast %121 : vector<1x1x128xf32> to vector<1x128xf32>
      %123 = vector.broadcast %122 : vector<1x128xf32> to vector<128x128xf32>
      %124 = arith.addf %120, %123 : vector<128x128xf32>
      %cst_72 = arith.constant 0.000000e+00 : f32
      %125 = vector.broadcast %cst_72 : f32 to vector<128x128xf32>
      %126 = arith.subf %125, %124 : vector<128x128xf32>
      %127 = math.exp %126 : vector<128x128xf32>
      %cst_73 = arith.constant 1.000000e+00 : f32
      %128 = vector.broadcast %cst_73 : f32 to vector<128x128xf32>
      %129 = arith.addf %128, %127 : vector<128x128xf32>
      %130 = tpu.reciprocal %129 {approx = true} : vector<128x128xf32> -> vector<128x128xf32>
      %131 = arith.mulf %124, %130 : vector<128x128xf32>
      %132 = arith.addf %101, %131 : vector<128x128xf32>
      %c0_74 = arith.constant 0 : index
      %c0_75 = arith.constant 0 : index
      %133 = vector.load %arg10[%c0_74, %c0_75] : memref<128x128xf32, #tpu.memory_space<vmem>>, vector<128x128xf32>
      tpu.vector_store %arg10[%c0_74, %c0_75], %132 {strides = array<i32>} : memref<128x128xf32, #tpu.memory_space<vmem>>, vector<128x128xf32>,
    } else {
    }
    return
  }
  func.func @transform_0(%arg0: i32, %arg1: i32) -> (i32, i32) {
    %c0_i32 = arith.constant 0 : i32
    %c0_i32_0 = arith.constant 0 : i32
    return %c0_i32, %arg1 : i32, i32
  }
  func.func @transform_1(%arg0: i32, %arg1: i32) -> (i32, i32) {
    %c0_i32 = arith.constant 0 : i32
    %c0_i32_0 = arith.constant 0 : i32
    return %arg1, %c0_i32 : i32, i32
  }
  func.func @transform_2(%arg0: i32, %arg1: i32) -> (i32, i32) {
    %c0_i32 = arith.constant 0 : i32
    %c0_i32_0 = arith.constant 0 : i32
    return %arg0, %c0_i32 : i32, i32
  }
  func.func @transform_3(%arg0: i32, %arg1: i32) -> (i32, i32) {
    %c0_i32 = arith.constant 0 : i32
    %c0_i32_0 = arith.constant 0 : i32
    return %arg0, %c0_i32 : i32, i32
  }
  func.func @transform_4(%arg0: i32, %arg1: i32) -> (i32, i32, i32) {
    %c0_i32 = arith.constant 0 : i32
    %c0_i32_0 = arith.constant 0 : i32
    %c0_i32_1 = arith.constant 0 : i32
    %c0_i32_2 = arith.constant 0 : i32
    return %c0_i32, %c0_i32_0, %c0_i32_1 : i32, i32, i32
  }
  func.func @transform_5(%arg0: i32, %arg1: i32) -> (i32, i32, i32) {
    %c0_i32 = arith.constant 0 : i32
    %c0_i32_0 = arith.constant 0 : i32
    %c0_i32_1 = arith.constant 0 : i32
    %c0_i32_2 = arith.constant 0 : i32
    return %c0_i32, %c0_i32_0, %c0_i32_1 : i32, i32, i32
  }
  func.func @transform_6(%arg0: i32, %arg1: i32) -> (i32, i32) {
    %c0_i32 = arith.constant 0 : i32
    %c0_i32_0 = arith.constant 0 : i32
    %c0_i32_1 = arith.constant 0 : i32
    return %c0_i32, %c0_i32_0 : i32, i32
  }
  func.func @transform_7(%arg0: i32, %arg1: i32) -> (i32, i32) {
    %c0_i32 = arith.constant 0 : i32
    %c0_i32_0 = arith.constant 0 : i32
    %c0_i32_1 = arith.constant 0 : i32
    return %c0_i32, %c0_i32_0 : i32, i32
  }
  func.func @transform_8(%arg0: i32, %arg1: i32) -> (i32, i32) {
    %c0_i32 = arith.constant 0 : i32
    %c0_i32_0 = arith.constant 0 : i32
    return %arg0, %c0_i32 : i32, i32
  }
}

</mosaic_0001>

<llo_original>
// kernel: interaction_block_pallas.3
$region0: #{interaction_block_pallas.3}
  #allocation0 [shape = 'u32[]', space=smem, size = 0x4, offset = 0x4, fixed_abs, tag = 'smem constant byte address 0x4 - core index']
  #allocation1 [shape = 'u32[144,128]{1,0:T(1,128)}', space=vmem, size = 0x12000, scoped, tag = 'internal scratch']
  %s0 = inlined_call_operand.vmem [shape: f32[256,128], index: 0, kind: input, shape index: {}]
  %s1 = inlined_call_operand.vmem [shape: f32[256,6], index: 1, kind: input, shape index: {}]
  %s2 = inlined_call_operand.hbm [shape: bf16[128,256], index: 2, kind: input, shape index: {}]
  %s3 = inlined_call_operand.vmem [shape: f32[1,256], index: 3, kind: input, shape index: {}]
  %s4 = inlined_call_operand.vmem [shape: bf16[6,128], index: 4, kind: input, shape index: {}]
  %s5 = inlined_call_operand.vmem [shape: f32[256,128], index: 5, kind: output, shape index: {0}]
  %s6 = inlined_call_operand.vmem [shape: bf16[256,128], index: 6, kind: output, shape index: {1}]
  %7 = xla_tuple %s5, %s6
  %s8 = sld [smem:[#allocation0]]
  $region65: #{interaction_block_pallas.3} parent=0
    _
  %s10 = ssub.s32 1, %s8
  %s11 = scalar_select 0, %s10, %s8
  $region1: #{interaction_block_pallas.3} parent=0
    #allocation2 [shape = 'u8[65536]{0}', space=vmem, size = 0x10000, scoped, tag = 'input window, operand 2, single buffered']
    #allocation3 [shape = 's32[2]{0}', space=sflag, size = 0x8, scoped, tag = 'scoped memory for interaction_block_pallas.3']
    %12 = vsyncpa [#allocation3], 0
    loop: start=0, step=1, limit=4
    $region2: #{interaction_block_pallas.3} parent=1 // loop_pre_header
      _
    $region3: #{interaction_block_pallas.3} parent=1 // loop_header
      %s14 = sphi 0, %s18
      %p15 = scmp.ge.s32.totalorder %s14, 4
      %s24 = sphi 0, %s26
      %s27 = sphi 0, %s24
      %s28 = sphi 0, %s27
      %s44 = sphi 0, %s28
      %s50 = sphi 0, %s52
      %s53 = sphi 0, %s50
      %s54 = sphi 0, %s53
      %s70 = sphi 0, %s54
      %s74 = sphi 0, %s74
      %s76 = sphi 0, %s74
      %s77 = sphi 0, %s76
      %s91 = sphi 0, %s77
      %s95 = sphi 0, %s95
      %s97 = sphi 0, %s95
      %s98 = sphi 0, %s97
      %s112 = sphi 0, %s98
      %s116 = sphi 0, %s116
      %s118 = sphi 0, %s116
      %s119 = sphi 0, %s118
      %s133 = sphi 0, %s119
      %s139 = sphi 0, %s141
      %s142 = sphi 0, %s139
      %s143 = sphi 0, %s142
      %s159 = sphi 0, %s143
      %s165 = sphi 0, %s167
      %s168 = sphi 0, %s165
      %s169 = sphi 0, %s168
      %s185 = sphi 0, %s169
    $region4: #{interaction_block_pallas.3} parent=1 // loop_header_branch
      %17 = sbr.rel (%p15) target = $region8
    $region5: #{interaction_block_pallas.3} parent=1 // loop_body
      %s19 = ssub.s32 %s14, 1
      %s20 = ssub.s32 %s14, 2
      %s21 = sadd.s32 %s14, 1
      %s22 = ssub.s32 %s14, %s21
      %p23 = scmp.eq.s32.totalorder %s22, 0
      %s25 = sadd.s32 %s24, 1
      %s26 = scalar_select %p23, %s24, %s25
      %p29 = pneg %p23
      %p30 = scmp.eq.s32.totalorder %s14, 1
      %p31 = por %p29, %p30
      %p32 = scmp.ne.s32.totalorder %s24, %s27
      %p33 = scmp.eq.s32.totalorder %s14, 0
      %p34 = por %p32, %p33
      %p35 = scmp.ne.s32.totalorder %s24, %s27
      %p36 = scmp.eq.s32.totalorder %s19, 1
      %p37 = por %p35, %p36
      %p38 = scmp.ne.s32.totalorder %s27, %s28
      %p39 = scmp.eq.s32.totalorder %s19, 0
      %p40 = por %p38, %p39
      %p41 = scmp.ne.s32.totalorder %s27, %s28
      %p42 = scmp.eq.s32.totalorder %s20, 1
      %p43 = por %p41, %p42
      %p45 = scmp.ne.s32.totalorder %s28, %s44
      %p46 = scmp.eq.s32.totalorder %s20, 0
      %p47 = por %p45, %p46
      %s48 = ssub.s32 %s14, %s21
      %p49 = scmp.eq.s32.totalorder %s48, 0
      %s51 = sadd.s32 %s50, 1
      %s52 = scalar_select %p49, %s50, %s51
      %p55 = pneg %p49
      %p56 = scmp.eq.s32.totalorder %s14, 1
      %p57 = por %p55, %p56
      %p58 = scmp.ne.s32.totalorder %s50, %s53
      %p59 = scmp.eq.s32.totalorder %s14, 0
      %p60 = por %p58, %p59
      %p61 = scmp.ne.s32.totalorder %s50, %s53
      %p62 = scmp.eq.s32.totalorder %s19, 1
      %p63 = por %p61, %p62
      %p64 = scmp.ne.s32.totalorder %s53, %s54
      %p65 = scmp.eq.s32.totalorder %s19, 0
      %p66 = por %p64, %p65
      %p67 = scmp.ne.s32.totalorder %s53, %s54
      %p68 = scmp.eq.s32.totalorder %s20, 1
      %p69 = por %p67, %p68
      %p71 = scmp.ne.s32.totalorder %s54, %s70
      %p72 = scmp.eq.s32.totalorder %s20, 0
      %p73 = por %p71, %p72
      %s75 = sadd.s32 %s74, 1
      %p78 = scmp.eq.s32.totalorder %s14, 1
      %p79 = scmp.ne.s32.totalorder %s74, %s76
      %p80 = scmp.eq.s32.totalorder %s14, 0
      %p81 = por %p79, %p80
      %p82 = scmp.ne.s32.totalorder %s74, %s76
      %p83 = scmp.eq.s32.totalorder %s19, 1
      %p84 = por %p82, %p83
      %p85 = scmp.ne.s32.totalorder %s76, %s77
      %p86 = scmp.eq.s32.totalorder %s19, 0
      %p87 = por %p85, %p86
      %p88 = scmp.ne.s32.totalorder %s76, %s77
      %p89 = scmp.eq.s32.totalorder %s20, 1
      %p90 = por %p88, %p89
      %p92 = scmp.ne.s32.totalorder %s77, %s91
      %p93 = scmp.eq.s32.totalorder %s20, 0
      %p94 = por %p92, %p93
      %s96 = sadd.s32 %s95, 1
      %p99 = scmp.eq.s32.totalorder %s14, 1
      %p100 = scmp.ne.s32.totalorder %s95, %s97
      %p101 = scmp.eq.s32.totalorder %s14, 0
      %p102 = por %p100, %p101
      %p103 = scmp.ne.s32.totalorder %s95, %s97
      %p104 = scmp.eq.s32.totalorder %s19, 1
      %p105 = por %p103, %p104
      %p106 = scmp.ne.s32.totalorder %s97, %s98
      %p107 = scmp.eq.s32.totalorder %s19, 0
      %p108 = por %p106, %p107
      %p109 = scmp.ne.s32.totalorder %s97, %s98
      %p110 = scmp.eq.s32.totalorder %s20, 1
      %p111 = por %p109, %p110
      %p113 = scmp.ne.s32.totalorder %s98, %s112
      %p114 = scmp.eq.s32.totalorder %s20, 0
      %p115 = por %p113, %p114
      %s117 = sadd.s32 %s116, 1
      %p120 = scmp.eq.s32.totalorder %s14, 1
      %p121 = scmp.ne.s32.totalorder %s116, %s118
      %p122 = scmp.eq.s32.totalorder %s14, 0
      %p123 = por %p121, %p122
      %p124 = scmp.ne.s32.totalorder %s116, %s118
      %p125 = scmp.eq.s32.totalorder %s19, 1
      %p126 = por %p124, %p125
      %p127 = scmp.ne.s32.totalorder %s118, %s119
      %p128 = scmp.eq.s32.totalorder %s19, 0
      %p129 = por %p127, %p128
      %p130 = scmp.ne.s32.totalorder %s118, %s119
      %p131 = scmp.eq.s32.totalorder %s20, 1
      %p132 = por %p130, %p131
      %p134 = scmp.ne.s32.totalorder %s119, %s133
      %p135 = scmp.eq.s32.totalorder %s20, 0
      %p136 = por %p134, %p135
      %s137 = ssub.s32 %s14, %s21
      %p138 = scmp.eq.s32.totalorder %s137, 0
      %s140 = sadd.s32 %s139, 1
      %s141 = scalar_select %p138, %s139, %s140
      %p144 = pneg %p138
      %p145 = scmp.eq.s32.totalorder %s14, 1
      %p146 = por %p144, %p145
      %p147 = scmp.ne.s32.totalorder %s139, %s142
      %p148 = scmp.eq.s32.totalorder %s14, 0
      %p149 = por %p147, %p148
      %p150 = scmp.ne.s32.totalorder %s139, %s142
      %p151 = scmp.eq.s32.totalorder %s19, 1
      %p152 = por %p150, %p151
      %p153 = scmp.ne.s32.totalorder %s142, %s143
      %p154 = scmp.eq.s32.totalorder %s19, 0
      %p155 = por %p153, %p154
      %p156 = scmp.ne.s32.totalorder %s142, %s143
      %p157 = scmp.eq.s32.totalorder %s20, 1
      %p158 = por %p156, %p157
      %p160 = scmp.ne.s32.totalorder %s143, %s159
      %p161 = scmp.eq.s32.totalorder %s20, 0
      %p162 = por %p160, %p161
      %s163 = ssub.s32 %s14, %s21
      %p164 = scmp.eq.s32.totalorder %s163, 0
      %s166 = sadd.s32 %s165, 1
      %s167 = scalar_select %p164, %s165, %s166
      %p170 = pneg %p164
      %p171 = scmp.eq.s32.totalorder %s14, 1
      %p172 = por %p170, %p171
      %p173 = scmp.ne.s32.totalorder %s165, %s168
      %p174 = scmp.eq.s32.totalorder %s14, 0
      %p175 = por %p173, %p174
      %p176 = scmp.ne.s32.totalorder %s165, %s168
      %p177 = scmp.eq.s32.totalorder %s19, 1
      %p178 = por %p176, %p177
      %p179 = scmp.ne.s32.totalorder %s168, %s169
      %p180 = scmp.eq.s32.totalorder %s19, 0
      %p181 = por %p179, %p180
      %p182 = scmp.ne.s32.totalorder %s168, %s169
      %p183 = scmp.eq.s32.totalorder %s20, 1
      %p184 = por %p182, %p183
      %p186 = scmp.ne.s32.totalorder %s169, %s185
      %p187 = scmp.eq.s32.totalorder %s20, 0
      %p188 = por %p186, %p187
      %p189 = scmp.le.s32.totalorder 1, %s14
      %p190 = scmp.lt.s32.totalorder %s14, 3
      %p191 = pnand %p189, %p190
      %p192 = pneg %p191
      // Predicated region
      $region9: #{interaction_block_pallas.3} parent=5 // pred_check
        _
      $region10: #{interaction_block_pallas.3} parent=5 // pred_check_branch
        %194 = sbr.rel (%p191) target = $region12
      $region11: #{interaction_block_pallas.3} parent=5 // pred_region
        %s195 = ssub.s32 %s14, 1
        // Predicated region
        $region13: #{interaction_block_pallas.3} parent=11 // pred_check
          %p196 = pneg %p87
        $region14: #{interaction_block_pallas.3} parent=11 // pred_check_branch
          %198 = sbr.rel (%p196) target = $region16
        $region15: #{interaction_block_pallas.3} parent=11 // pred_region
          %s200 = ssub.s32 2048, 2048
          %201 = vsyncadd [#allocation3], %s200
          %s202 = sshll.u32 [#allocation2], 4
          %s203 = int_to_ptr.vmem [resolvable:$true] %s202
          %208 = dma.hbm_to_vmem [thread:$0]  %s2, 2048, %s203, [#allocation3], 128, 128, 8
        $region16: #{interaction_block_pallas.3} parent=11 // pred_fallthru
          _
        // Predicated region
        $region17: #{interaction_block_pallas.3} parent=11 // pred_check
          %p209 = pneg %p108
        $region18: #{interaction_block_pallas.3} parent=11 // pred_check_branch
          %211 = sbr.rel (%p209) target = $region20
        $region19: #{interaction_block_pallas.3} parent=11 // pred_region
          _
        $region20: #{interaction_block_pallas.3} parent=11 // pred_fallthru
          _
        // Predicated region
        $region21: #{interaction_block_pallas.3} parent=11 // pred_check
          %p212 = pneg %p129
        $region22: #{interaction_block_pallas.3} parent=11 // pred_check_branch
          %214 = sbr.rel (%p212) target = $region24
        $region23: #{interaction_block_pallas.3} parent=11 // pred_region
          _
        $region24: #{interaction_block_pallas.3} parent=11 // pred_fallthru
          _
      $region12: #{interaction_block_pallas.3} parent=5 // pred_fallthru
        _
      %p215 = scmp.lt.s32.totalorder %s14, 2
      // Predicated region
      $region25: #{interaction_block_pallas.3} parent=5 // pred_check
        %p216 = pneg %p215
      $region26: #{interaction_block_pallas.3} parent=5 // pred_check_branch
        %218 = sbr.rel (%p216) target = $region28
      $region27: #{interaction_block_pallas.3} parent=5 // pred_region
        // Predicated region
        $region29: #{interaction_block_pallas.3} parent=27 // pred_check
          %p219 = pneg %p34
        $region30: #{interaction_block_pallas.3} parent=27 // pred_check_branch
          %221 = sbr.rel (%p219) target = $region32
        $region31: #{interaction_block_pallas.3} parent=27 // pred_region
          %s222 = smul.u32 16, %s14
          %p223 = scmp.lt.s32.totalorder %s222, 31
          %s224 = scalar_select %p223, %s222, 31
          %s225 = smul.addr %s224, 8
          %s226 = scalar_lea.vmem %s0, %s225
          %s227 = smul.u32 16, %s14
        $region32: #{interaction_block_pallas.3} parent=27 // pred_fallthru
          _
        // Predicated region
        $region33: #{interaction_block_pallas.3} parent=27 // pred_check
          %p228 = pneg %p60
        $region34: #{interaction_block_pallas.3} parent=27 // pred_check_branch
          %230 = sbr.rel (%p228) target = $region36
        $region35: #{interaction_block_pallas.3} parent=27 // pred_region
          %s231 = smul.u32 16, %s14
          %p232 = scmp.lt.s32.totalorder %s231, 31
          %s233 = scalar_select %p232, %s231, 31
          %s234 = smul.addr %s233, 8
          %s235 = scalar_lea.vmem %s1, %s234
          %s236 = smul.u32 16, %s14
        $region36: #{interaction_block_pallas.3} parent=27 // pred_fallthru
          _
      $region28: #{interaction_block_pallas.3} parent=5 // pred_fallthru
        _
      %p237 = scmp.le.s32.totalorder 1, %s14
      %p238 = scmp.lt.s32.totalorder %s14, 3
      %p239 = pnand %p237, %p238
      %p240 = pneg %p239
      // Predicated region
      $region37: #{interaction_block_pallas.3} parent=5 // pred_check
        _
      $region38: #{interaction_block_pallas.3} parent=5 // pred_check_branch
        %242 = sbr.rel (%p239) target = $region40
      $region39: #{interaction_block_pallas.3} parent=5 // pred_region
        %s243 = ssub.s32 %s14, 1
        // Predicated region
        $region41: #{interaction_block_pallas.3} parent=39 // pred_check
          %p244 = pneg %p87
        $region42: #{interaction_block_pallas.3} parent=39 // pred_check_branch
          %246 = sbr.rel (%p244) target = $region44
        $region43: #{interaction_block_pallas.3} parent=39 // pred_region
          %247 = dma.done [#allocation3], 2048
        $region44: #{interaction_block_pallas.3} parent=39 // pred_fallthru
          _
        %s248 = smul.u32 16, %s19
        %p249 = scmp.lt.s32.totalorder %s248, 31
        %s250 = scalar_select %p249, %s248, 31
        %s251 = smul.addr %s250, 8
        %s252 = scalar_lea.vmem %s0, %s251
        %p253 = pneg %p40
        %p254 = pneg %p37
        %s255 = smul.u32 16, %s19
        %p256 = scmp.lt.s32.totalorder %s255, 31
        %s257 = scalar_select %p256, %s255, 31
        %s258 = smul.addr %s257, 8
        %s259 = scalar_lea.vmem %s1, %s258
        %p260 = pneg %p66
        %p261 = pneg %p63
        %p262 = pneg %p87
        %p263 = pneg %p84
        %p264 = pneg %p108
        %p265 = pneg %p105
        %p266 = pneg %p129
        %p267 = pneg %p126
        %p268 = pneg %p155
        %p269 = pneg %p152
        %s270 = smul.u32 16, %s19
        %p271 = scmp.lt.s32.totalorder %s270, 31
        %s272 = scalar_select %p271, %s270, 31
        %s273 = smul.addr %s272, 8
        %s274 = scalar_lea.vmem %s5, %s273
        %p275 = pneg %p181
        %p276 = pneg %p178
        %s277 = smul.u32 16, %s19
        %p278 = scmp.lt.s32.totalorder %s277, 31
        %s279 = scalar_select %p278, %s277, 31
        %s280 = smul.addr %s279, 4
        %s281 = scalar_lea.vmem %s6, %s280
        %s282 = smul.u32 16, %s19
        %p283 = scmp.lt.s32.totalorder %s282, 31
        %s284 = scalar_select %p283, %s282, 31
        %s285 = smul.addr %s284, 8
        %s286 = scalar_lea.vmem %s0, %s285
        %s287 = smul.u32 16, %s19
        %s288 = smul.u32 16, %s19
        %p289 = scmp.lt.s32.totalorder %s288, 31
        %s290 = scalar_select %p289, %s288, 31
        %s291 = smul.addr %s290, 8
        %s292 = scalar_lea.vmem %s1, %s291
        %s293 = smul.u32 16, %s19
        %s294 = smul.u32 16, %s19
        %p295 = scmp.lt.s32.totalorder %s294, 31
        %s296 = scalar_select %p295, %s294, 31
        %s297 = smul.addr %s296, 8
        %s298 = scalar_lea.vmem %s5, %s297
        %s299 = smul.u32 16, %s19
        %s300 = smul.u32 16, %s19
        %p301 = scmp.lt.s32.totalorder %s300, 31
        %s302 = scalar_select %p301, %s300, 31
        %s303 = smul.addr %s302, 4
        %s304 = scalar_lea.vmem %s6, %s303
        %s305 = smul.u32 16, %s19
        %v307 = vld [vmem:[%s286] sm:$0xff]
        %v308 = vld [vmem:[%s286 + $0x8] sm:$0xff]
        %v309 = vld [vmem:[%s286 + $0x10] sm:$0xff]
        %v310 = vld [vmem:[%s286 + $0x18] sm:$0xff]
        %v311 = vld [vmem:[%s286 + $0x20] sm:$0xff]
        %v312 = vld [vmem:[%s286 + $0x28] sm:$0xff]
        %v313 = vld [vmem:[%s286 + $0x30] sm:$0xff]
        %v314 = vld [vmem:[%s286 + $0x38] sm:$0xff]
        %v315 = vld [vmem:[%s286 + $0x40] sm:$0xff]
        %v316 = vld [vmem:[%s286 + $0x48] sm:$0xff]
        %v317 = vld [vmem:[%s286 + $0x50] sm:$0xff]
        %v318 = vld [vmem:[%s286 + $0x58] sm:$0xff]
        %v319 = vld [vmem:[%s286 + $0x60] sm:$0xff]
        %v320 = vld [vmem:[%s286 + $0x68] sm:$0xff]
        %v321 = vld [vmem:[%s286 + $0x70] sm:$0xff]
        %v322 = vld [vmem:[%s286 + $0x78] sm:$0xff]
        %v323 = vpack.c.bf16 %v308, %v307
        %v324 = vpack.c.bf16 %v310, %v309
        %v325 = vpack.c.bf16 %v312, %v311
        %v326 = vpack.c.bf16 %v314, %v313
        %v327 = vpack.c.bf16 %v316, %v315
        %v328 = vpack.c.bf16 %v318, %v317
        %v329 = vpack.c.bf16 %v320, %v319
        %v330 = vpack.c.bf16 %v322, %v321
        %v331 = vld [vmem:[#allocation2] sm:$0xff]
        %v332 = vld [vmem:[#allocation2 + $0x8] sm:$0xff]
        %v333 = vld [vmem:[#allocation2 + $0x10] sm:$0xff]
        %v334 = vld [vmem:[#allocation2 + $0x18] sm:$0xff]
        %v335 = vld [vmem:[#allocation2 + $0x20] sm:$0xff]
        %v336 = vld [vmem:[#allocation2 + $0x28] sm:$0xff]
        %v337 = vld [vmem:[#allocation2 + $0x30] sm:$0xff]
        %v338 = vld [vmem:[#allocation2 + $0x38] sm:$0xff]
        %v339 = vld [vmem:[#allocation2 + $0x40] sm:$0xff]
        %v340 = vld [vmem:[#allocation2 + $0x48] sm:$0xff]
        %v341 = vld [vmem:[#allocation2 + $0x50] sm:$0xff]
        %v342 = vld [vmem:[#allocation2 + $0x58] sm:$0xff]
        %v343 = vld [vmem:[#allocation2 + $0x60] sm:$0xff]
        %v344 = vld [vmem:[#allocation2 + $0x68] sm:$0xff]
        %v345 = vld [vmem:[#allocation2 + $0x70] sm:$0xff]
        %v346 = vld [vmem:[#allocation2 + $0x78] sm:$0xff]
        %v347 = vld [vmem:[%s3] sm:$0x3]
        %v349 = vlaneseq
        %v350 = vshrl.u32 %v349, 7
        %v351 = vsub.s32 0, %v350
        %v352 = vrot.slane %v347, %v351
        %v353 = vlaneseq
        %v354 = vshrl.u32 %v353, 7
        %v355 = vsub.s32 1, %v354
        %v356 = vrot.slane %v347, %v355
        %v375 = vunpack.c.l.b16 %v331
        %v376 = vunpack.c.h.b16 %v331
        %v377 = vunpack.c.l.b16 %v332
        %v378 = vunpack.c.h.b16 %v332
        %v379 = vunpack.c.l.b16 %v333
        %v380 = vunpack.c.h.b16 %v333
        %v381 = vunpack.c.l.b16 %v334
        %v382 = vunpack.c.h.b16 %v334
        %v383 = vunpack.c.l.b16 %v335
        %v384 = vunpack.c.h.b16 %v335
        %v385 = vunpack.c.l.b16 %v336
        %v386 = vunpack.c.h.b16 %v336
        %v387 = vunpack.c.l.b16 %v337
        %v388 = vunpack.c.h.b16 %v337
        %v389 = vunpack.c.l.b16 %v338
        %v390 = vunpack.c.h.b16 %v338
        %v391 = vunpack.c.l.b16 %v339
        %v392 = vunpack.c.h.b16 %v339
        %v393 = vunpack.c.l.b16 %v340
        %v394 = vunpack.c.h.b16 %v340
        %v395 = vunpack.c.l.b16 %v341
        %v396 = vunpack.c.h.b16 %v341
        %v397 = vunpack.c.l.b16 %v342
        %v398 = vunpack.c.h.b16 %v342
        %v399 = vunpack.c.l.b16 %v343
        %v400 = vunpack.c.h.b16 %v343
        %v401 = vunpack.c.l.b16 %v344
        %v402 = vunpack.c.h.b16 %v344
        %v403 = vunpack.c.l.b16 %v345
        %v404 = vunpack.c.h.b16 %v345
        %v405 = vunpack.c.l.b16 %v346
        %v406 = vunpack.c.h.b16 %v346
        %v407 = vpack.c.b16 %v377, %v375
        %v408 = vpack.c.b16 %v378, %v376
        %v409 = vpack.c.b16 %v381, %v379
        %v410 = vpack.c.b16 %v382, %v380
        %v411 = vpack.c.b16 %v385, %v383
        %v412 = vpack.c.b16 %v386, %v384
        %v413 = vpack.c.b16 %v389, %v387
        %v414 = vpack.c.b16 %v390, %v388
        %v415 = vpack.c.b16 %v393, %v391
        %v416 = vpack.c.b16 %v394, %v392
        %v417 = vpack.c.b16 %v397, %v395
        %v418 = vpack.c.b16 %v398, %v396
        %v419 = vpack.c.b16 %v401, %v399
        %v420 = vpack.c.b16 %v402, %v400
        %v421 = vpack.c.b16 %v405, %v403
        %v422 = vpack.c.b16 %v406, %v404
        %439 = vmatprep.subr.bf16.mxu0 %v408
        %440 = vmatpush1.bf16.msra.mxu0 %v407
        %441 = vmatprep.subr.bf16.mxu0 %v410
        %442 = vmatpush1.bf16.msra.mxu0 %v409
        %443 = vmatprep.subr.bf16.mxu0 %v412
        %444 = vmatpush1.bf16.msra.mxu0 %v411
        %445 = vmatprep.subr.bf16.mxu0 %v414
        %446 = vmatpush1.bf16.msra.mxu0 %v413
        %447 = vmatprep.subr.bf16.mxu0 %v416
        %448 = vmatpush1.bf16.msra.mxu0 %v415
        %449 = vmatprep.subr.bf16.mxu0 %v418
        %450 = vmatpush1.bf16.msra.mxu0 %v417
        %451 = vmatprep.subr.bf16.mxu0 %v420
        %452 = vmatpush1.bf16.msra.mxu0 %v419
        %453 = vmatprep.subr.bf16.mxu0 %v422
        %454 = vmatpush1.bf16.msra.mxu0 %v421
        %455 = vmatprep.subr.bf16.mxu0 0
        %456 = vmatpush1.bf16.msra.mxu0 0
        %457 = vmatprep.subr.bf16.mxu0 0
        %458 = vmatpush1.bf16.msra.mxu0 0
        %459 = vmatprep.subr.bf16.mxu0 0
        %460 = vmatpush1.bf16.msra.mxu0 0
        %461 = vmatprep.subr.bf16.mxu0 0
        %462 = vmatpush1.bf16.msra.mxu0 0
        %463 = vmatprep.subr.bf16.mxu0 0
        %464 = vmatpush1.bf16.msra.mxu0 0
        %465 = vmatprep.subr.bf16.mxu0 0
        %466 = vmatpush1.bf16.msra.mxu0 0
        %467 = vmatprep.subr.bf16.mxu0 0
        %468 = vmatpush1.bf16.msra.mxu0 0
        %469 = vmatprep.subr.bf16.mxu0 0
        %470 = vmatpush1.bf16.msra.mxu0 0
        %471 = vmatprep.mubr.bf16.mxu0 0
        %472 = vmatmul.mubr.bf16.gmra.mrb[0].mxu0 %v323
        %v473 = vpop.f32.mrb[0].mxu0
        %v474 = vadd.f32 %v352, %v473
        %v475 = vpop.f32.mrb[0].mxu0
        %v476 = vadd.f32 %v356, %v475
        %v477 = vpop.f32.mrb[0].mxu0
        %v478 = vadd.f32 %v352, %v477
        %v479 = vpop.f32.mrb[0].mxu0
        %v480 = vadd.f32 %v356, %v479
        %481 = vmatprep.mubr.bf16.mxu0 0
        %482 = vmatmul.mubr.bf16.gmra.mrb[0].mxu0 %v324
        %v483 = vpop.f32.mrb[0].mxu0
        %v484 = vadd.f32 %v352, %v483
        %v485 = vpop.f32.mrb[0].mxu0
        %v486 = vadd.f32 %v356, %v485
        %v487 = vpop.f32.mrb[0].mxu0
        %v488 = vadd.f32 %v352, %v487
        %v489 = vpop.f32.mrb[0].mxu0
        %v490 = vadd.f32 %v356, %v489
        %491 = vmatprep.mubr.bf16.mxu0 0
        %492 = vmatmul.mubr.bf16.gmra.mrb[0].mxu0 %v325
        %v493 = vpop.f32.mrb[0].mxu0
        %v494 = vadd.f32 %v352, %v493
        %v495 = vpop.f32.mrb[0].mxu0
        %v496 = vadd.f32 %v356, %v495
        %v497 = vpop.f32.mrb[0].mxu0
        %v498 = vadd.f32 %v352, %v497
        %v499 = vpop.f32.mrb[0].mxu0
        %v500 = vadd.f32 %v356, %v499
        %501 = vmatprep.mubr.bf16.mxu0 0
        %502 = vmatmul.mubr.bf16.gmra.mrb[0].mxu0 %v326
        %v503 = vpop.f32.mrb[0].mxu0
        %v504 = vadd.f32 %v352, %v503
        %v505 = vpop.f32.mrb[0].mxu0
        %v506 = vadd.f32 %v356, %v505
        %v507 = vpop.f32.mrb[0].mxu0
        %v508 = vadd.f32 %v352, %v507
        %v509 = vpop.f32.mrb[0].mxu0
        %v510 = vadd.f32 %v356, %v509
        %511 = vmatprep.mubr.bf16.mxu0 0
        %512 = vmatmul.mubr.bf16.gmra.mrb[0].mxu0 %v327
        %v513 = vpop.f32.mrb[0].mxu0
        %v514 = vadd.f32 %v352, %v513
        %v515 = vpop.f32.mrb[0].mxu0
        %v516 = vadd.f32 %v356, %v515
        %v517 = vpop.f32.mrb[0].mxu0
        %v518 = vadd.f32 %v352, %v517
        %v519 = vpop.f32.mrb[0].mxu0
        %v520 = vadd.f32 %v356, %v519
        %521 = vmatprep.mubr.bf16.mxu0 0
        %522 = vmatmul.mubr.bf16.gmra.mrb[0].mxu0 %v328
        %v523 = vpop.f32.mrb[0].mxu0
        %v524 = vadd.f32 %v352, %v523
        %v525 = vpop.f32.mrb[0].mxu0
        %v526 = vadd.f32 %v356, %v525
        %v527 = vpop.f32.mrb[0].mxu0
        %v528 = vadd.f32 %v352, %v527
        %v529 = vpop.f32.mrb[0].mxu0
        %v530 = vadd.f32 %v356, %v529
        %531 = vmatprep.mubr.bf16.mxu0 0
        %532 = vmatmul.mubr.bf16.gmra.mrb[0].mxu0 %v329
        %v533 = vpop.f32.mrb[0].mxu0
        %v534 = vadd.f32 %v352, %v533
        %v535 = vpop.f32.mrb[0].mxu0
        %v536 = vadd.f32 %v356, %v535
        %v537 = vpop.f32.mrb[0].mxu0
        %v538 = vadd.f32 %v352, %v537
        %v539 = vpop.f32.mrb[0].mxu0
        %v540 = vadd.f32 %v356, %v539
        %541 = vmatprep.mubr.bf16.mxu0 0
        %542 = vmatmul.mubr.bf16.gmra.mrb[0].mxu0 %v330
        %v543 = vpop.f32.mrb[0].mxu0
        %v544 = vadd.f32 %v352, %v543
        %v545 = vpop.f32.mrb[0].mxu0
        %v546 = vadd.f32 %v356, %v545
        %v547 = vpop.f32.mrb[0].mxu0
        %v548 = vadd.f32 %v352, %v547
        %v549 = vpop.f32.mrb[0].mxu0
        %v550 = vadd.f32 %v356, %v549
        %551 = vdwg.mxu0
        %v552 = vsub.f32 0.0, %v474
        %v553 = vsub.f32 0.0, %v476
        %v554 = vsub.f32 0.0, %v478
        %v555 = vsub.f32 0.0, %v480
        %v556 = vsub.f32 0.0, %v484
        %v557 = vsub.f32 0.0, %v486
        %v558 = vsub.f32 0.0, %v488
        %v559 = vsub.f32 0.0, %v490
        %v560 = vsub.f32 0.0, %v494
        %v561 = vsub.f32 0.0, %v496
        %v562 = vsub.f32 0.0, %v498
        %v563 = vsub.f32 0.0, %v500
        %v564 = vsub.f32 0.0, %v504
        %v565 = vsub.f32 0.0, %v506
        %v566 = vsub.f32 0.0, %v508
        %v567 = vsub.f32 0.0, %v510
        %v568 = vsub.f32 0.0, %v514
        %v569 = vsub.f32 0.0, %v516
        %v570 = vsub.f32 0.0, %v518
        %v571 = vsub.f32 0.0, %v520
        %v572 = vsub.f32 0.0, %v524
        %v573 = vsub.f32 0.0, %v526
        %v574 = vsub.f32 0.0, %v528
        %v575 = vsub.f32 0.0, %v530
        %v576 = vsub.f32 0.0, %v534
        %v577 = vsub.f32 0.0, %v536
        %v578 = vsub.f32 0.0, %v538
        %v579 = vsub.f32 0.0, %v540
        %v580 = vsub.f32 0.0, %v544
        %v581 = vsub.f32 0.0, %v546
        %v582 = vsub.f32 0.0, %v548
        %v583 = vsub.f32 0.0, %v550
        %v584 = vmul.f32 %v552, 1.442695
        %v585 = vpow.pop %v584
        %v586 = vmul.f32 %v553, 1.442695
        %v587 = vpow.pop %v586
        %v588 = vmul.f32 %v554, 1.442695
        %v589 = vpow.pop %v588
        %v590 = vmul.f32 %v555, 1.442695
        %v591 = vpow.pop %v590
        %v592 = vmul.f32 %v556, 1.442695
        %v593 = vpow.pop %v592
        %v594 = vmul.f32 %v557, 1.442695
        %v595 = vpow.pop %v594
        %v596 = vmul.f32 %v558, 1.442695
        %v597 = vpow.pop %v596
        %v598 = vmul.f32 %v559, 1.442695
        %v599 = vpow.pop %v598
        %v600 = vmul.f32 %v560, 1.442695
        %v601 = vpow.pop %v600
        %v602 = vmul.f32 %v561, 1.442695
        %v603 = vpow.pop %v602
        %v604 = vmul.f32 %v562, 1.442695
        %v605 = vpow.pop %v604
        %v606 = vmul.f32 %v563, 1.442695
        %v607 = vpow.pop %v606
        %v608 = vmul.f32 %v564, 1.442695
        %v609 = vpow.pop %v608
        %v610 = vmul.f32 %v565, 1.442695
        %v611 = vpow.pop %v610
        %v612 = vmul.f32 %v566, 1.442695
        %v613 = vpow.pop %v612
        %v614 = vmul.f32 %v567, 1.442695
        %v615 = vpow.pop %v614
        %v616 = vmul.f32 %v568, 1.442695
        %v617 = vpow.pop %v616
        %v618 = vmul.f32 %v569, 1.442695
        %v619 = vpow.pop %v618
        %v620 = vmul.f32 %v570, 1.442695
        %v621 = vpow.pop %v620
        %v622 = vmul.f32 %v571, 1.442695
        %v623 = vpow.pop %v622
        %v624 = vmul.f32 %v572, 1.442695
        %v625 = vpow.pop %v624
        %v626 = vmul.f32 %v573, 1.442695
        %v627 = vpow.pop %v626
        %v628 = vmul.f32 %v574, 1.442695
        %v629 = vpow.pop %v628
        %v630 = vmul.f32 %v575, 1.442695
        %v631 = vpow.pop %v630
        %v632 = vmul.f32 %v576, 1.442695
        %v633 = vpow.pop %v632
        %v634 = vmul.f32 %v577, 1.442695
        %v635 = vpow.pop %v634
        %v636 = vmul.f32 %v578, 1.442695
        %v637 = vpow.pop %v636
        %v638 = vmul.f32 %v579, 1.442695
        %v639 = vpow.pop %v638
        %v640 = vmul.f32 %v580, 1.442695
        %v641 = vpow.pop %v640
        %v642 = vmul.f32 %v581, 1.442695
        %v643 = vpow.pop %v642
        %v644 = vmul.f32 %v582, 1.442695
        %v645 = vpow.pop %v644
        %v646 = vmul.f32 %v583, 1.442695
        %v647 = vpow.pop %v646
        %v648 = vadd.f32 %v585, 1.0
        %v649 = vadd.f32 %v587, 1.0
        %v650 = vadd.f32 %v589, 1.0
        %v651 = vadd.f32 %v591, 1.0
        %v652 = vadd.f32 %v593, 1.0
        %v653 = vadd.f32 %v595, 1.0
        %v654 = vadd.f32 %v597, 1.0
        %v655 = vadd.f32 %v599, 1.0
        %v656 = vadd.f32 %v601, 1.0
        %v657 = vadd.f32 %v603, 1.0
        %v658 = vadd.f32 %v605, 1.0
        %v659 = vadd.f32 %v607, 1.0
        %v660 = vadd.f32 %v609, 1.0
        %v661 = vadd.f32 %v611, 1.0
        %v662 = vadd.f32 %v613, 1.0
        %v663 = vadd.f32 %v615, 1.0
        %v664 = vadd.f32 %v617, 1.0
        %v665 = vadd.f32 %v619, 1.0
        %v666 = vadd.f32 %v621, 1.0
        %v667 = vadd.f32 %v623, 1.0
        %v668 = vadd.f32 %v625, 1.0
        %v669 = vadd.f32 %v627, 1.0
        %v670 = vadd.f32 %v629, 1.0
        %v671 = vadd.f32 %v631, 1.0
        %v672 = vadd.f32 %v633, 1.0
        %v673 = vadd.f32 %v635, 1.0
        %v674 = vadd.f32 %v637, 1.0
        %v675 = vadd.f32 %v639, 1.0
        %v676 = vadd.f32 %v641, 1.0
        %v677 = vadd.f32 %v643, 1.0
        %v678 = vadd.f32 %v645, 1.0
        %v679 = vadd.f32 %v647, 1.0
        %v680 = vrcp.pop %v648
        %v681 = vrcp.pop %v649
        %v682 = vrcp.pop %v650
        %v683 = vrcp.pop %v651
        %v684 = vrcp.pop %v652
        %v685 = vrcp.pop %v653
        %v686 = vrcp.pop %v654
        %v687 = vrcp.pop %v655
        %v688 = vrcp.pop %v656
        %v689 = vrcp.pop %v657
        %v690 = vrcp.pop %v658
        %v691 = vrcp.pop %v659
        %v692 = vrcp.pop %v660
        %v693 = vrcp.pop %v661
        %v694 = vrcp.pop %v662
        %v695 = vrcp.pop %v663
        %v696 = vrcp.pop %v664
        %v697 = vrcp.pop %v665
        %v698 = vrcp.pop %v666
        %v699 = vrcp.pop %v667
        %v700 = vrcp.pop %v668
        %v701 = vrcp.pop %v669
        %v702 = vrcp.pop %v670
        %v703 = vrcp.pop %v671
        %v704 = vrcp.pop %v672
        %v705 = vrcp.pop %v673
        %v706 = vrcp.pop %v674
        %v707 = vrcp.pop %v675
        %v708 = vrcp.pop %v676
        %v709 = vrcp.pop %v677
        %v710 = vrcp.pop %v678
        %v711 = vrcp.pop %v679
        %v712 = vmul.f32 %v474, %v680
        %v713 = vmul.f32 %v476, %v681
        %v714 = vmul.f32 %v478, %v682
        %v715 = vmul.f32 %v480, %v683
        %v716 = vmul.f32 %v484, %v684
        %v717 = vmul.f32 %v486, %v685
        %v718 = vmul.f32 %v488, %v686
        %v719 = vmul.f32 %v490, %v687
        %v720 = vmul.f32 %v494, %v688
        %v721 = vmul.f32 %v496, %v689
        %v722 = vmul.f32 %v498, %v690
        %v723 = vmul.f32 %v500, %v691
        %v724 = vmul.f32 %v504, %v692
        %v725 = vmul.f32 %v506, %v693
        %v726 = vmul.f32 %v508, %v694
        %v727 = vmul.f32 %v510, %v695
        %v728 = vmul.f32 %v514, %v696
        %v729 = vmul.f32 %v516, %v697
        %v730 = vmul.f32 %v518, %v698
        %v731 = vmul.f32 %v520, %v699
        %v732 = vmul.f32 %v524, %v700
        %v733 = vmul.f32 %v526, %v701
        %v734 = vmul.f32 %v528, %v702
        %v735 = vmul.f32 %v530, %v703
        %v736 = vmul.f32 %v534, %v704
        %v737 = vmul.f32 %v536, %v705
        %v738 = vmul.f32 %v538, %v706
        %v739 = vmul.f32 %v540, %v707
        %v740 = vmul.f32 %v544, %v708
        %v741 = vmul.f32 %v546, %v709
        %v742 = vmul.f32 %v548, %v710
        %v743 = vmul.f32 %v550, %v711
        %v744 = vld [vmem:[%s292] sm:$0xff]
        %v745 = vld [vmem:[%s292 + $0x8] sm:$0xff]
        %v746 = vld [vmem:[%s292 + $0x10] sm:$0xff]
        %v747 = vld [vmem:[%s292 + $0x18] sm:$0xff]
        %v748 = vld [vmem:[%s292 + $0x20] sm:$0xff]
        %v749 = vld [vmem:[%s292 + $0x28] sm:$0xff]
        %v750 = vld [vmem:[%s292 + $0x30] sm:$0xff]
        %v751 = vld [vmem:[%s292 + $0x38] sm:$0xff]
        %v752 = vld [vmem:[%s292 + $0x40] sm:$0xff]
        %v753 = vld [vmem:[%s292 + $0x48] sm:$0xff]
        %v754 = vld [vmem:[%s292 + $0x50] sm:$0xff]
        %v755 = vld [vmem:[%s292 + $0x58] sm:$0xff]
        %v756 = vld [vmem:[%s292 + $0x60] sm:$0xff]
        %v757 = vld [vmem:[%s292 + $0x68] sm:$0xff]
        %v758 = vld [vmem:[%s292 + $0x70] sm:$0xff]
        %v759 = vld [vmem:[%s292 + $0x78] sm:$0xff]
        %v760 = vpack.c.bf16 %v745, %v744
        %v761 = vpack.c.bf16 %v747, %v746
        %v762 = vpack.c.bf16 %v749, %v748
        %v763 = vpack.c.bf16 %v751, %v750
        %v764 = vpack.c.bf16 %v753, %v752
        %v765 = vpack.c.bf16 %v755, %v754
        %v766 = vpack.c.bf16 %v757, %v756
        %v767 = vpack.c.bf16 %v759, %v758
        %v768 = vld [vmem:[%s4] sm:$0x7]
        %vm769 = vcmask 48128
        %v771 = vsel %vm769, %v760, 0
        %v774 = vsel %vm769, %v761, 0
        %v777 = vsel %vm769, %v762, 0
        %v780 = vsel %vm769, %v763, 0
        %v783 = vsel %vm769, %v764, 0
        %v786 = vsel %vm769, %v765, 0
        %v789 = vsel %vm769, %v766, 0
        %v792 = vsel %vm769, %v767, 0
        %vm794 = vcmask 1042432
        %v796 = vsel %vm794, %v768, 0
        %798 = vmatprep.subr.bf16.mxu0 0
        %799 = vmatpush1.bf16.msra.mxu0 %v796
        %800 = vmatprep.subr.bf16.mxu0 0
        %801 = vmatpush1.bf16.msra.mxu0 0
        %802 = vmatprep.subr.bf16.mxu0 0
        %803 = vmatpush1.bf16.msra.mxu0 0
        %804 = vmatprep.subr.bf16.mxu0 0
        %805 = vmatpush1.bf16.msra.mxu0 0
        %806 = vmatprep.subr.bf16.mxu0 0
        %807 = vmatpush1.bf16.msra.mxu0 0
        %808 = vmatprep.subr.bf16.mxu0 0
        %809 = vmatpush1.bf16.msra.mxu0 0
        %810 = vmatprep.subr.bf16.mxu0 0
        %811 = vmatpush1.bf16.msra.mxu0 0
        %812 = vmatprep.subr.bf16.mxu0 0
        %813 = vmatpush1.bf16.msra.mxu0 0
        %814 = vmatprep.subr.bf16.mxu0 0
        %815 = vmatpush1.bf16.msra.mxu0 0
        %816 = vmatprep.subr.bf16.mxu0 0
        %817 = vmatpush1.bf16.msra.mxu0 0
        %818 = vmatprep.subr.bf16.mxu0 0
        %819 = vmatpush1.bf16.msra.mxu0 0
        %820 = vmatprep.subr.bf16.mxu0 0
        %821 = vmatpush1.bf16.msra.mxu0 0
        %822 = vmatprep.subr.bf16.mxu0 0
        %823 = vmatpush1.bf16.msra.mxu0 0
        %824 = vmatprep.subr.bf16.mxu0 0
        %825 = vmatpush1.bf16.msra.mxu0 0
        %826 = vmatprep.subr.bf16.mxu0 0
        %827 = vmatpush1.bf16.msra.mxu0 0
        %828 = vmatprep.subr.bf16.mxu0 0
        %829 = vmatpush1.bf16.msra.mxu0 0
        %830 = vmatprep.mubr.bf16.mxu0 0
        %831 = vmatmul.mubr.bf16.gmra.mrb[0].mxu0 %v771
        %v832 = vpop.f32.mrb[0].mxu0
        %v833 = vadd.f32 0.0, %v832
        %v834 = vpop.f32.mrb[0].mxu0
        %v835 = vpop.f32.mrb[0].mxu0
        %v836 = vadd.f32 0.0, %v835
        %v837 = vpop.f32.mrb[0].mxu0
        %838 = vmatprep.mubr.bf16.mxu0 0
        %839 = vmatmul.mubr.bf16.gmra.mrb[0].mxu0 %v774
        %v840 = vpop.f32.mrb[0].mxu0
        %v841 = vadd.f32 0.0, %v840
        %v842 = vpop.f32.mrb[0].mxu0
        %v843 = vpop.f32.mrb[0].mxu0
        %v844 = vadd.f32 0.0, %v843
        %v845 = vpop.f32.mrb[0].mxu0
        %846 = vmatprep.mubr.bf16.mxu0 0
        %847 = vmatmul.mubr.bf16.gmra.mrb[0].mxu0 %v777
        %v848 = vpop.f32.mrb[0].mxu0
        %v849 = vadd.f32 0.0, %v848
        %v850 = vpop.f32.mrb[0].mxu0
        %v851 = vpop.f32.mrb[0].mxu0
        %v852 = vadd.f32 0.0, %v851
        %v853 = vpop.f32.mrb[0].mxu0
        %854 = vmatprep.mubr.bf16.mxu0 0
        %855 = vmatmul.mubr.bf16.gmra.mrb[0].mxu0 %v780
        %v856 = vpop.f32.mrb[0].mxu0
        %v857 = vadd.f32 0.0, %v856
        %v858 = vpop.f32.mrb[0].mxu0
        %v859 = vpop.f32.mrb[0].mxu0
        %v860 = vadd.f32 0.0, %v859
        %v861 = vpop.f32.mrb[0].mxu0
        %862 = vmatprep.mubr.bf16.mxu0 0
        %863 = vmatmul.mubr.bf16.gmra.mrb[0].mxu0 %v783
        %v864 = vpop.f32.mrb[0].mxu0
        %v865 = vadd.f32 0.0, %v864
        %v866 = vpop.f32.mrb[0].mxu0
        %v867 = vpop.f32.mrb[0].mxu0
        %v868 = vadd.f32 0.0, %v867
        %v869 = vpop.f32.mrb[0].mxu0
        %870 = vmatprep.mubr.bf16.mxu0 0
        %871 = vmatmul.mubr.bf16.gmra.mrb[0].mxu0 %v786
        %v872 = vpop.f32.mrb[0].mxu0
        %v873 = vadd.f32 0.0, %v872
        %v874 = vpop.f32.mrb[0].mxu0
        %v875 = vpop.f32.mrb[0].mxu0
        %v876 = vadd.f32 0.0, %v875
        %v877 = vpop.f32.mrb[0].mxu0
        %878 = vmatprep.mubr.bf16.mxu0 0
        %879 = vmatmul.mubr.bf16.gmra.mrb[0].mxu0 %v789
        %v880 = vpop.f32.mrb[0].mxu0
        %v881 = vadd.f32 0.0, %v880
        %v882 = vpop.f32.mrb[0].mxu0
        %v883 = vpop.f32.mrb[0].mxu0
        %v884 = vadd.f32 0.0, %v883
        %v885 = vpop.f32.mrb[0].mxu0
        %886 = vmatprep.mubr.bf16.mxu0 0
        %887 = vmatmul.mubr.bf16.gmra.mrb[0].mxu0 %v792
        %v888 = vpop.f32.mrb[0].mxu0
        %v889 = vadd.f32 0.0, %v888
        %v890 = vpop.f32.mrb[0].mxu0
        %v891 = vpop.f32.mrb[0].mxu0
        %v892 = vadd.f32 0.0, %v891
        %v893 = vpop.f32.mrb[0].mxu0
        %894 = vdwg.mxu0
        %895 = vst [vmem:[%s298] sm:$0xff] %v712
        %896 = vst [vmem:[%s298 + $0x8] sm:$0xff] %v714
        %897 = vst [vmem:[%s298 + $0x10] sm:$0xff] %v716
        %898 = vst [vmem:[%s298 + $0x18] sm:$0xff] %v718
        %899 = vst [vmem:[%s298 + $0x20] sm:$0xff] %v720
        %900 = vst [vmem:[%s298 + $0x28] sm:$0xff] %v722
        %901 = vst [vmem:[%s298 + $0x30] sm:$0xff] %v724
        %902 = vst [vmem:[%s298 + $0x38] sm:$0xff] %v726
        %903 = vst [vmem:[%s298 + $0x40] sm:$0xff] %v728
        %904 = vst [vmem:[%s298 + $0x48] sm:$0xff] %v730
        %905 = vst [vmem:[%s298 + $0x50] sm:$0xff] %v732
        %906 = vst [vmem:[%s298 + $0x58] sm:$0xff] %v734
        %907 = vst [vmem:[%s298 + $0x60] sm:$0xff] %v736
        %908 = vst [vmem:[%s298 + $0x68] sm:$0xff] %v738
        %909 = vst [vmem:[%s298 + $0x70] sm:$0xff] %v740
        %910 = vst [vmem:[%s298 + $0x78] sm:$0xff] %v742
        %v911 = vmul.f32 %v713, %v833
        %v912 = vmul.f32 %v715, %v836
        %v913 = vmul.f32 %v717, %v841
        %v914 = vmul.f32 %v719, %v844
        %v915 = vmul.f32 %v721, %v849
        %v916 = vmul.f32 %v723, %v852
        %v917 = vmul.f32 %v725, %v857
        %v918 = vmul.f32 %v727, %v860
        %v919 = vmul.f32 %v729, %v865
        %v920 = vmul.f32 %v731, %v868
        %v921 = vmul.f32 %v733, %v873
        %v922 = vmul.f32 %v735, %v876
        %v923 = vmul.f32 %v737, %v881
        %v924 = vmul.f32 %v739, %v884
        %v925 = vmul.f32 %v741, %v889
        %v926 = vmul.f32 %v743, %v892
        %v927 = vpack.c.bf16 %v912, %v911
        %v928 = vpack.c.bf16 %v914, %v913
        %v929 = vpack.c.bf16 %v916, %v915
        %v930 = vpack.c.bf16 %v918, %v917
        %v931 = vpack.c.bf16 %v920, %v919
        %v932 = vpack.c.bf16 %v922, %v921
        %v933 = vpack.c.bf16 %v924, %v923
        %v934 = vpack.c.bf16 %v926, %v925
        %v943 = vunpack.c.l.b16 %v927
        %v944 = vunpack.c.h.b16 %v927
        %v945 = vunpack.c.l.b16 %v928
        %v946 = vunpack.c.h.b16 %v928
        %v947 = vunpack.c.l.b16 %v929
        %v948 = vunpack.c.h.b16 %v929
        %v949 = vunpack.c.l.b16 %v930
        %v950 = vunpack.c.h.b16 %v930
        %v951 = vunpack.c.l.b16 %v931
        %v952 = vunpack.c.h.b16 %v931
        %v953 = vunpack.c.l.b16 %v932
        %v954 = vunpack.c.h.b16 %v932
        %v955 = vunpack.c.l.b16 %v933
        %v956 = vunpack.c.h.b16 %v933
        %v957 = vunpack.c.l.b16 %v934
        %v958 = vunpack.c.h.b16 %v934
        %v959 = vpack.c.b16 %v943, %v943
        %v960 = vpack.c.b16 %v944, %v944
        %v961 = vpack.c.b16 %v945, %v945
        %v962 = vpack.c.b16 %v946, %v946
        %v963 = vpack.c.b16 %v947, %v947
        %v964 = vpack.c.b16 %v948, %v948
        %v965 = vpack.c.b16 %v949, %v949
        %v966 = vpack.c.b16 %v950, %v950
        %v967 = vpack.c.b16 %v951, %v951
        %v968 = vpack.c.b16 %v952, %v952
        %v969 = vpack.c.b16 %v953, %v953
        %v970 = vpack.c.b16 %v954, %v954
        %v971 = vpack.c.b16 %v955, %v955
        %v972 = vpack.c.b16 %v956, %v956
        %v973 = vpack.c.b16 %v957, %v957
        %v974 = vpack.c.b16 %v958, %v958
        %991 = vst [vmem:[%s304] sm:$0xf] %v959
        %992 = vst [vmem:[%s304 + $0x4] sm:$0xf] %v960
        %993 = vst [vmem:[%s304 + $0x8] sm:$0xf] %v961
        %994 = vst [vmem:[%s304 + $0xc] sm:$0xf] %v962
        %995 = vst [vmem:[%s304 + $0x10] sm:$0xf] %v963
        %996 = vst [vmem:[%s304 + $0x14] sm:$0xf] %v964
        %997 = vst [vmem:[%s304 + $0x18] sm:$0xf] %v965
        %998 = vst [vmem:[%s304 + $0x1c] sm:$0xf] %v966
        %999 = vst [vmem:[%s304 + $0x20] sm:$0xf] %v967
        %1000 = vst [vmem:[%s304 + $0x24] sm:$0xf] %v968
        %1001 = vst [vmem:[%s304 + $0x28] sm:$0xf] %v969
        %1002 = vst [vmem:[%s304 + $0x2c] sm:$0xf] %v970
        %1003 = vst [vmem:[%s304 + $0x30] sm:$0xf] %v971
        %1004 = vst [vmem:[%s304 + $0x34] sm:$0xf] %v972
        %1005 = vst [vmem:[%s304 + $0x38] sm:$0xf] %v973
        %1006 = vst [vmem:[%s304 + $0x3c] sm:$0xf] %v974
        %s1007 = smul.u32 16, %s19
        %p1008 = scmp.lt.s32.totalorder %s1007, 31
        %s1009 = scalar_select %p1008, %s1007, 31
        %s1010 = smul.addr %s1009, 8
        %s1011 = scalar_lea.vmem %s5, %s1010
        %s1012 = smul.u32 16, %s19
        %p1013 = scmp.lt.s32.totalorder %s1012, 31
        %s1014 = scalar_select %p1013, %s1012, 31
        %s1015 = smul.addr %s1014, 4
        %s1016 = scalar_lea.vmem %s6, %s1015
        // Predicated region
        $region45: #{interaction_block_pallas.3} parent=39 // pred_check
          %p1017 = pneg %p152
        $region46: #{interaction_block_pallas.3} parent=39 // pred_check_branch
          %1019 = sbr.rel (%p1017) target = $region48
        $region47: #{interaction_block_pallas.3} parent=39 // pred_region
          %s1020 = smul.u32 16, %s19
        $region48: #{interaction_block_pallas.3} parent=39 // pred_fallthru
          _
        // Predicated region
        $region49: #{interaction_block_pallas.3} parent=39 // pred_check
          %p1021 = pneg %p178
        $region50: #{interaction_block_pallas.3} parent=39 // pred_check_branch
          %1023 = sbr.rel (%p1021) target = $region52
        $region51: #{interaction_block_pallas.3} parent=39 // pred_region
          %s1024 = smul.u32 16, %s19
        $region52: #{interaction_block_pallas.3} parent=39 // pred_fallthru
          _
      $region40: #{interaction_block_pallas.3} parent=5 // pred_fallthru
        _
      %p1025 = scmp.le.s32.totalorder 2, %s14
      // Predicated region
      $region53: #{interaction_block_pallas.3} parent=5 // pred_check
        %p1026 = pneg %p1025
      $region54: #{interaction_block_pallas.3} parent=5 // pred_check_branch
        %1028 = sbr.rel (%p1026) target = $region56
      $region55: #{interaction_block_pallas.3} parent=5 // pred_region
        %s1029 = ssub.s32 %s14, 2
        // Predicated region
        $region57: #{interaction_block_pallas.3} parent=55 // pred_check
          %p1030 = pneg %p158
        $region58: #{interaction_block_pallas.3} parent=55 // pred_check_branch
          %1032 = sbr.rel (%p1030) target = $region60
        $region59: #{interaction_block_pallas.3} parent=55 // pred_region
          %s1033 = smul.u32 16, %s20
          %p1034 = scmp.lt.s32.totalorder %s1033, 31
          %s1035 = scalar_select %p1034, %s1033, 31
          %s1036 = smul.addr %s1035, 8
          %s1037 = scalar_lea.vmem %s5, %s1036
        $region60: #{interaction_block_pallas.3} parent=55 // pred_fallthru
          _
        // Predicated region
        $region61: #{interaction_block_pallas.3} parent=55 // pred_check
          %p1038 = pneg %p184
        $region62: #{interaction_block_pallas.3} parent=55 // pred_check_branch
          %1040 = sbr.rel (%p1038) target = $region64
        $region63: #{interaction_block_pallas.3} parent=55 // pred_region
          %s1041 = smul.u32 16, %s20
          %p1042 = scmp.lt.s32.totalorder %s1041, 31
          %s1043 = scalar_select %p1042, %s1041, 31
          %s1044 = smul.addr %s1043, 4
          %s1045 = scalar_lea.vmem %s6, %s1044
        $region64: #{interaction_block_pallas.3} parent=55 // pred_fallthru
          _
      $region56: #{interaction_block_pallas.3} parent=5 // pred_fallthru
        _
    $region6: #{interaction_block_pallas.3} parent=1 // loop_footer
      %s18 = sadd.s32 1, %s14
    $region7: #{interaction_block_pallas.3} parent=1 // loop_footer_branch
      %13 = sbr.rel target = $region3
    $region8: #{interaction_block_pallas.3} parent=1 // loop_exit
      _
    %1046 = vsyncpa [#allocation3], 1
    %s1047 = scalar_lea.sflag [#allocation3], 1
    %1048 = vsyncpa %s1047, 1

// kernel: interaction_block_pallas.4
$region0: #{interaction_block_pallas.4}
  #allocation0 [shape = 'u32[]', space=smem, size = 0x4, offset = 0x4, fixed_abs, tag = 'smem constant byte address 0x4 - core index']
  #allocation1 [shape = 'u32[144,128]{1,0:T(1,128)}', space=vmem, size = 0x12000, scoped, tag = 'internal scratch']
  #allocation2 [shape = 'f32[128,128]{1,0:T(8,128)}', space=vmem, size = 0x10000, scoped, tag = 'scratch operand']
  %s0 = inlined_call_operand.vmem [shape: s32[512,1], index: 0, kind: input, shape index: {}]
  %s1 = inlined_call_operand.vmem [shape: f32[512,42], index: 1, kind: input, shape index: {}]
  %s2 = inlined_call_operand.vmem [shape: bf16[256,128], index: 2, kind: input, shape index: {}]
  %s3 = inlined_call_operand.vmem [shape: bf16[42,8], index: 3, kind: input, shape index: {}]
  %s4 = inlined_call_operand.vmem [shape: bf16[8,128,128], index: 4, kind: input, shape index: {}]
  %s5 = inlined_call_operand.vmem [shape: bf16[512,128], index: 5, kind: output, shape index: {}]
  %s6 = sld [smem:[#allocation0]]
  $region61: #{interaction_block_pallas.4} parent=0
    _
  %s8 = ssub.s32 1, %s6
  %s9 = scalar_select 0, %s8, %s6
  loop: start=0, step=1, limit=6
  $region2: #{interaction_block_pallas.4} parent=0 // loop_pre_header
    _
  $region3: #{interaction_block_pallas.4} parent=0 // loop_header
    %s11 = sphi 0, %s15
    %p12 = scmp.ge.s32.totalorder %s11, 6
    %s18 = sphi 0, %s30
    %s19 = sphi 0, %s26
    %s20 = sphi 0, %s18
    %s21 = sphi 0, %s19
    %s22 = sphi 0, %s20
    %s23 = sphi 0, %s21
    %s33 = sphi 0, %s35
    %s36 = sphi 0, %s33
    %s37 = sphi 0, %s36
    %s53 = sphi 0, %s37
    %s59 = sphi 0, %s61
    %s62 = sphi 0, %s59
    %s63 = sphi 0, %s62
    %s79 = sphi 0, %s63
    %s85 = sphi 0, %s87
    %s88 = sphi 0, %s85
    %s89 = sphi 0, %s88
    %s105 = sphi 0, %s89
    %s109 = sphi 0, %s109
    %s111 = sphi 0, %s109
    %s112 = sphi 0, %s111
    %s126 = sphi 0, %s112
    %s130 = sphi 0, %s130
    %s132 = sphi 0, %s130
    %s133 = sphi 0, %s132
    %s147 = sphi 0, %s133
    %s153 = sphi 0, %s155
    %s156 = sphi 0, %s153
    %s157 = sphi 0, %s156
    %s173 = sphi 0, %s157
  $region4: #{interaction_block_pallas.4} parent=0 // loop_header_branch
    %14 = sbr.rel (%p12) target = $region8
  $region5: #{interaction_block_pallas.4} parent=0 // loop_body
    %s16 = ssub.s32 %s11, 1
    %s17 = ssub.s32 %s11, 2
    %s24 = sadd.s32 1, %s19
    %p25 = scmp.ge.s32.totalorder %s24, 1
    %s26 = scalar_select %p25, 0, %s24
    %s27 = sadd.s32 1, %s18
    %s28 = scalar_select %p25, %s27, %s18
    %p29 = scmp.ge.s32.totalorder %s28, 4
    %s30 = scalar_select %p29, 0, %s28
    %s31 = ssub.s32 %s18, %s30
    %p32 = scmp.eq.s32.totalorder %s31, 0
    %s34 = sadd.s32 %s33, 1
    %s35 = scalar_select %p32, %s33, %s34
    %p38 = pneg %p32
    %p39 = scmp.eq.s32.totalorder %s11, 3
    %p40 = por %p38, %p39
    %p41 = scmp.ne.s32.totalorder %s33, %s36
    %p42 = scmp.eq.s32.totalorder %s11, 0
    %p43 = por %p41, %p42
    %p44 = scmp.ne.s32.totalorder %s33, %s36
    %p45 = scmp.eq.s32.totalorder %s16, 3
    %p46 = por %p44, %p45
    %p47 = scmp.ne.s32.totalorder %s36, %s37
    %p48 = scmp.eq.s32.totalorder %s16, 0
    %p49 = por %p47, %p48
    %p50 = scmp.ne.s32.totalorder %s36, %s37
    %p51 = scmp.eq.s32.totalorder %s17, 3
    %p52 = por %p50, %p51
    %p54 = scmp.ne.s32.totalorder %s37, %s53
    %p55 = scmp.eq.s32.totalorder %s17, 0
    %p56 = por %p54, %p55
    %s57 = ssub.s32 %s18, %s30
    %p58 = scmp.eq.s32.totalorder %s57, 0
    %s60 = sadd.s32 %s59, 1
    %s61 = scalar_select %p58, %s59, %s60
    %p64 = pneg %p58
    %p65 = scmp.eq.s32.totalorder %s11, 3
    %p66 = por %p64, %p65
    %p67 = scmp.ne.s32.totalorder %s59, %s62
    %p68 = scmp.eq.s32.totalorder %s11, 0
    %p69 = por %p67, %p68
    %p70 = scmp.ne.s32.totalorder %s59, %s62
    %p71 = scmp.eq.s32.totalorder %s16, 3
    %p72 = por %p70, %p71
    %p73 = scmp.ne.s32.totalorder %s62, %s63
    %p74 = scmp.eq.s32.totalorder %s16, 0
    %p75 = por %p73, %p74
    %p76 = scmp.ne.s32.totalorder %s62, %s63
    %p77 = scmp.eq.s32.totalorder %s17, 3
    %p78 = por %p76, %p77
    %p80 = scmp.ne.s32.totalorder %s63, %s79
    %p81 = scmp.eq.s32.totalorder %s17, 0
    %p82 = por %p80, %p81
    %s83 = ssub.s32 %s19, %s26
    %p84 = scmp.eq.s32.totalorder %s83, 0
    %s86 = sadd.s32 %s85, 1
    %s87 = scalar_select %p84, %s85, %s86
    %p90 = pneg %p84
    %p91 = scmp.eq.s32.totalorder %s11, 3
    %p92 = por %p90, %p91
    %p93 = scmp.ne.s32.totalorder %s85, %s88
    %p94 = scmp.eq.s32.totalorder %s11, 0
    %p95 = por %p93, %p94
    %p96 = scmp.ne.s32.totalorder %s85, %s88
    %p97 = scmp.eq.s32.totalorder %s16, 3
    %p98 = por %p96, %p97
    %p99 = scmp.ne.s32.totalorder %s88, %s89
    %p100 = scmp.eq.s32.totalorder %s16, 0
    %p101 = por %p99, %p100
    %p102 = scmp.ne.s32.totalorder %s88, %s89
    %p103 = scmp.eq.s32.totalorder %s17, 3
    %p104 = por %p102, %p103
    %p106 = scmp.ne.s32.totalorder %s89, %s105
    %p107 = scmp.eq.s32.totalorder %s17, 0
    %p108 = por %p106, %p107
    %s110 = sadd.s32 %s109, 1
    %p113 = scmp.eq.s32.totalorder %s11, 3
    %p114 = scmp.ne.s32.totalorder %s109, %s111
    %p115 = scmp.eq.s32.totalorder %s11, 0
    %p116 = por %p114, %p115
    %p117 = scmp.ne.s32.totalorder %s109, %s111
    %p118 = scmp.eq.s32.totalorder %s16, 3
    %p119 = por %p117, %p118
    %p120 = scmp.ne.s32.totalorder %s111, %s112
    %p121 = scmp.eq.s32.totalorder %s16, 0
    %p122 = por %p120, %p121
    %p123 = scmp.ne.s32.totalorder %s111, %s112
    %p124 = scmp.eq.s32.totalorder %s17, 3
    %p125 = por %p123, %p124
    %p127 = scmp.ne.s32.totalorder %s112, %s126
    %p128 = scmp.eq.s32.totalorder %s17, 0
    %p129 = por %p127, %p128
    %s131 = sadd.s32 %s130, 1
    %p134 = scmp.eq.s32.totalorder %s11, 3
    %p135 = scmp.ne.s32.totalorder %s130, %s132
    %p136 = scmp.eq.s32.totalorder %s11, 0
    %p137 = por %p135, %p136
    %p138 = scmp.ne.s32.totalorder %s130, %s132
    %p139 = scmp.eq.s32.totalorder %s16, 3
    %p140 = por %p138, %p139
    %p141 = scmp.ne.s32.totalorder %s132, %s133
    %p142 = scmp.eq.s32.totalorder %s16, 0
    %p143 = por %p141, %p142
    %p144 = scmp.ne.s32.totalorder %s132, %s133
    %p145 = scmp.eq.s32.totalorder %s17, 3
    %p146 = por %p144, %p145
    %p148 = scmp.ne.s32.totalorder %s133, %s147
    %p149 = scmp.eq.s32.totalorder %s17, 0
    %p150 = por %p148, %p149
    %s151 = ssub.s32 %s18, %s30
    %p152 = scmp.eq.s32.totalorder %s151, 0
    %s154 = sadd.s32 %s153, 1
    %s155 = scalar_select %p152, %s153, %s154
    %p158 = pneg %p152
    %p159 = scmp.eq.s32.totalorder %s11, 3
    %p160 = por %p158, %p159
    %p161 = scmp.ne.s32.totalorder %s153, %s156
    %p162 = scmp.eq.s32.totalorder %s11, 0
    %p163 = por %p161, %p162
    %p164 = scmp.ne.s32.totalorder %s153, %s156
    %p165 = scmp.eq.s32.totalorder %s16, 3
    %p166 = por %p164, %p165
    %p167 = scmp.ne.s32.totalorder %s156, %s157
    %p168 = scmp.eq.s32.totalorder %s16, 0
    %p169 = por %p167, %p168
    %p170 = scmp.ne.s32.totalorder %s156, %s157
    %p171 = scmp.eq.s32.totalorder %s17, 3
    %p172 = por %p170, %p171
    %p174 = scmp.ne.s32.totalorder %s157, %s173
    %p175 = scmp.eq.s32.totalorder %s17, 0
    %p176 = por %p174, %p175
    %p177 = scmp.le.s32.totalorder 1, %s11
    %p178 = scmp.lt.s32.totalorder %s11, 5
    %p179 = pnand %p177, %p178
    %p180 = pneg %p179
    // Predicated region
    $region9: #{interaction_block_pallas.4} parent=5 // pred_check
      _
    $region10: #{interaction_block_pallas.4} parent=5 // pred_check_branch
      %182 = sbr.rel (%p179) target = $region12
    $region11: #{interaction_block_pallas.4} parent=5 // pred_region
      %s183 = ssub.s32 %s11, 1
      // Predicated region
      $region13: #{interaction_block_pallas.4} parent=11 // pred_check
        %p184 = pneg %p101
      $region14: #{interaction_block_pallas.4} parent=11 // pred_check_branch
        %186 = sbr.rel (%p184) target = $region16
      $region15: #{interaction_block_pallas.4} parent=11 // pred_region
        %s187 = smul.u32 32, %s21
        %p188 = scmp.lt.s32.totalorder %s187, 31
        %s189 = scalar_select %p188, %s187, 31
        %s190 = smul.addr %s189, 4
        %s191 = scalar_lea.vmem %s2, %s190
        %s192 = smul.u32 32, %s21
      $region16: #{interaction_block_pallas.4} parent=11 // pred_fallthru
        _
      // Predicated region
      $region17: #{interaction_block_pallas.4} parent=11 // pred_check
        %p193 = pneg %p122
      $region18: #{interaction_block_pallas.4} parent=11 // pred_check_branch
        %195 = sbr.rel (%p193) target = $region20
      $region19: #{interaction_block_pallas.4} parent=11 // pred_region
        _
      $region20: #{interaction_block_pallas.4} parent=11 // pred_fallthru
        _
      // Predicated region
      $region21: #{interaction_block_pallas.4} parent=11 // pred_check
        %p196 = pneg %p143
      $region22: #{interaction_block_pallas.4} parent=11 // pred_check_branch
        %198 = sbr.rel (%p196) target = $region24
      $region23: #{interaction_block_pallas.4} parent=11 // pred_region
        _
      $region24: #{interaction_block_pallas.4} parent=11 // pred_fallthru
        _
    $region12: #{interaction_block_pallas.4} parent=5 // pred_fallthru
      _
    %p199 = scmp.lt.s32.totalorder %s11, 4
    // Predicated region
    $region25: #{interaction_block_pallas.4} parent=5 // pred_check
      %p200 = pneg %p199
    $region26: #{interaction_block_pallas.4} parent=5 // pred_check_branch
      %202 = sbr.rel (%p200) target = $region28
    $region27: #{interaction_block_pallas.4} parent=5 // pred_region
      // Predicated region
      $region29: #{interaction_block_pallas.4} parent=27 // pred_check
        %p203 = pneg %p43
      $region30: #{interaction_block_pallas.4} parent=27 // pred_check_branch
        %205 = sbr.rel (%p203) target = $region32
      $region31: #{interaction_block_pallas.4} parent=27 // pred_region
        %s206 = smul.u32 16, %s18
        %p207 = scmp.lt.s32.totalorder %s206, 63
        %s208 = scalar_select %p207, %s206, 63
        %s209 = smul.addr %s208, 8
        %s210 = scalar_lea.vmem %s0, %s209
        %s211 = smul.u32 16, %s18
      $region32: #{interaction_block_pallas.4} parent=27 // pred_fallthru
        _
      // Predicated region
      $region33: #{interaction_block_pallas.4} parent=27 // pred_check
        %p212 = pneg %p69
      $region34: #{interaction_block_pallas.4} parent=27 // pred_check_branch
        %214 = sbr.rel (%p212) target = $region36
      $region35: #{interaction_block_pallas.4} parent=27 // pred_region
        %s215 = smul.u32 16, %s18
        %p216 = scmp.lt.s32.totalorder %s215, 63
        %s217 = scalar_select %p216, %s215, 63
        %s218 = smul.addr %s217, 8
        %s219 = scalar_lea.vmem %s1, %s218
        %s220 = smul.u32 16, %s18
      $region36: #{interaction_block_pallas.4} parent=27 // pred_fallthru
        _
    $region28: #{interaction_block_pallas.4} parent=5 // pred_fallthru
      _
    %p221 = scmp.le.s32.totalorder 1, %s11
    %p222 = scmp.lt.s32.totalorder %s11, 5
    %p223 = pnand %p221, %p222
    %p224 = pneg %p223
    // Predicated region
    $region37: #{interaction_block_pallas.4} parent=5 // pred_check
      _
    $region38: #{interaction_block_pallas.4} parent=5 // pred_check_branch
      %226 = sbr.rel (%p223) target = $region40
    $region39: #{interaction_block_pallas.4} parent=5 // pred_region
      %s227 = ssub.s32 %s11, 1
      %s228 = smul.u32 16, %s20
      %p229 = scmp.lt.s32.totalorder %s228, 63
      %s230 = scalar_select %p229, %s228, 63
      %s231 = smul.addr %s230, 8
      %s232 = scalar_lea.vmem %s0, %s231
      %p233 = pneg %p49
      %p234 = pneg %p46
      %s235 = smul.u32 16, %s20
      %p236 = scmp.lt.s32.totalorder %s235, 63
      %s237 = scalar_select %p236, %s235, 63
      %s238 = smul.addr %s237, 8
      %s239 = scalar_lea.vmem %s1, %s238
      %p240 = pneg %p75
      %p241 = pneg %p72
      %s242 = smul.u32 32, %s21
      %p243 = scmp.lt.s32.totalorder %s242, 31
      %s244 = scalar_select %p243, %s242, 31
      %s245 = smul.addr %s244, 4
      %s246 = scalar_lea.vmem %s2, %s245
      %p247 = pneg %p101
      %p248 = pneg %p98
      %p249 = pneg %p122
      %p250 = pneg %p119
      %p251 = pneg %p143
      %p252 = pneg %p140
      %p253 = pneg %p169
      %p254 = pneg %p166
      %s255 = smul.u32 16, %s20
      %p256 = scmp.lt.s32.totalorder %s255, 63
      %s257 = scalar_select %p256, %s255, 63
      %s258 = smul.addr %s257, 4
      %s259 = scalar_lea.vmem %s5, %s258
      %s260 = smul.u32 16, %s20
      %p261 = scmp.lt.s32.totalorder %s260, 63
      %s262 = scalar_select %p261, %s260, 63
      %s263 = smul.addr %s262, 8
      %s264 = scalar_lea.vmem %s0, %s263
      %s265 = smul.u32 16, %s20
      %s266 = smul.u32 16, %s20
      %p267 = scmp.lt.s32.totalorder %s266, 63
      %s268 = scalar_select %p267, %s266, 63
      %s269 = smul.addr %s268, 8
      %s270 = scalar_lea.vmem %s1, %s269
      %s271 = smul.u32 16, %s20
      %s272 = smul.u32 32, %s21
      %p273 = scmp.lt.s32.totalorder %s272, 31
      %s274 = scalar_select %p273, %s272, 31
      %s275 = smul.addr %s274, 4
      %s276 = scalar_lea.vmem %s2, %s275
      %s277 = smul.u32 32, %s21
      %s278 = smul.u32 16, %s20
      %p279 = scmp.lt.s32.totalorder %s278, 63
      %s280 = scalar_select %p279, %s278, 63
      %s281 = smul.addr %s280, 4
      %s282 = scalar_lea.vmem %s5, %s281
      %s283 = smul.u32 16, %s20
      %p285 = scmp.eq.s32.totalorder %s21, 0
      // Predicated region
      $region41: #{interaction_block_pallas.4} parent=39 // pred_check
        %p286 = pneg %p285
      $region42: #{interaction_block_pallas.4} parent=39 // pred_check_branch
        %288 = sbr.rel (%p286) target = $region44
      $region43: #{interaction_block_pallas.4} parent=39 // pred_region
        %289 = vst [vmem:[#allocation2] sm:$0xff] 0.0
        %290 = vst [vmem:[#allocation2 + $0x8] sm:$0xff] 0.0
        %291 = vst [vmem:[#allocation2 + $0x10] sm:$0xff] 0.0
        %292 = vst [vmem:[#allocation2 + $0x18] sm:$0xff] 0.0
        %293 = vst [vmem:[#allocation2 + $0x20] sm:$0xff] 0.0
        %294 = vst [vmem:[#allocation2 + $0x28] sm:$0xff] 0.0
        %295 = vst [vmem:[#allocation2 + $0x30] sm:$0xff] 0.0
        %296 = vst [vmem:[#allocation2 + $0x38] sm:$0xff] 0.0
        %297 = vst [vmem:[#allocation2 + $0x40] sm:$0xff] 0.0
        %298 = vst [vmem:[#allocation2 + $0x48] sm:$0xff] 0.0
        %299 = vst [vmem:[#allocation2 + $0x50] sm:$0xff] 0.0
        %300 = vst [vmem:[#allocation2 + $0x58] sm:$0xff] 0.0
        %301 = vst [vmem:[#allocation2 + $0x60] sm:$0xff] 0.0
        %302 = vst [vmem:[#allocation2 + $0x68] sm:$0xff] 0.0
        %303 = vst [vmem:[#allocation2 + $0x70] sm:$0xff] 0.0
        %304 = vst [vmem:[#allocation2 + $0x78] sm:$0xff] 0.0
      $region44: #{interaction_block_pallas.4} parent=39 // pred_fallthru
        _
      %s305 = smul.u32 %s21, 256
      %v306 = vld [vmem:[%s276] sm:$0xf]
      %v307 = vld [vmem:[%s276 + $0x4] sm:$0xf]
      %v308 = vld [vmem:[%s276 + $0x8] sm:$0xf]
      %v309 = vld [vmem:[%s276 + $0xc] sm:$0xf]
      %v310 = vld [vmem:[%s276 + $0x10] sm:$0xf]
      %v311 = vld [vmem:[%s276 + $0x14] sm:$0xf]
      %v312 = vld [vmem:[%s276 + $0x18] sm:$0xf]
      %v313 = vld [vmem:[%s276 + $0x1c] sm:$0xf]
      %v314 = vld [vmem:[%s276 + $0x20] sm:$0xf]
      %v315 = vld [vmem:[%s276 + $0x24] sm:$0xf]
      %v316 = vld [vmem:[%s276 + $0x28] sm:$0xf]
      %v317 = vld [vmem:[%s276 + $0x2c] sm:$0xf]
      %v318 = vld [vmem:[%s276 + $0x30] sm:$0xf]
      %v319 = vld [vmem:[%s276 + $0x34] sm:$0xf]
      %v320 = vld [vmem:[%s276 + $0x38] sm:$0xf]
      %v321 = vld [vmem:[%s276 + $0x3c] sm:$0xf]
      %v322 = vld [vmem:[%s276 + $0x40] sm:$0xf]
      %v323 = vld [vmem:[%s276 + $0x44] sm:$0xf]
      %v324 = vld [vmem:[%s276 + $0x48] sm:$0xf]
      %v325 = vld [vmem:[%s276 + $0x4c] sm:$0xf]
      %v326 = vld [vmem:[%s276 + $0x50] sm:$0xf]
      %v327 = vld [vmem:[%s276 + $0x54] sm:$0xf]
      %v328 = vld [vmem:[%s276 + $0x58] sm:$0xf]
      %v329 = vld [vmem:[%s276 + $0x5c] sm:$0xf]
      %v330 = vld [vmem:[%s276 + $0x60] sm:$0xf]
      %v331 = vld [vmem:[%s276 + $0x64] sm:$0xf]
      %v332 = vld [vmem:[%s276 + $0x68] sm:$0xf]
      %v333 = vld [vmem:[%s276 + $0x6c] sm:$0xf]
      %v334 = vld [vmem:[%s276 + $0x70] sm:$0xf]
      %v335 = vld [vmem:[%s276 + $0x74] sm:$0xf]
      %v336 = vld [vmem:[%s276 + $0x78] sm:$0xf]
      %v337 = vld [vmem:[%s276 + $0x7c] sm:$0xf]
      %v338 = vlaneseq
      %v339 = vand.u32 %v338, 127
      %v340 = vadd.s32 %v339, 128
      %v341 = vstv %s305
      %v342 = vadd.s32 %v341, %v339
      %v343 = vadd.s32 %v341, %v340
      %v344 = vld [vmem:[%s264] sm:$0xff]
      %v345 = vld [vmem:[%s264 + $0x8] sm:$0xff]
      %v346 = vld [vmem:[%s264 + $0x10] sm:$0xff]
      %v347 = vld [vmem:[%s264 + $0x18] sm:$0xff]
      %v348 = vld [vmem:[%s264 + $0x20] sm:$0xff]
      %v349 = vld [vmem:[%s264 + $0x28] sm:$0xff]
      %v350 = vld [vmem:[%s264 + $0x30] sm:$0xff]
      %v351 = vld [vmem:[%s264 + $0x38] sm:$0xff]
      %v352 = vld [vmem:[%s264 + $0x40] sm:$0xff]
      %v353 = vld [vmem:[%s264 + $0x48] sm:$0xff]
      %v354 = vld [vmem:[%s264 + $0x50] sm:$0xff]
      %v355 = vld [vmem:[%s264 + $0x58] sm:$0xff]
      %v356 = vld [vmem:[%s264 + $0x60] sm:$0xff]
      %v357 = vld [vmem:[%s264 + $0x68] sm:$0xff]
      %v358 = vld [vmem:[%s264 + $0x70] sm:$0xff]
      %v359 = vld [vmem:[%s264 + $0x78] sm:$0xff]
      %360 = vset.pattern.permute.xlu0 0
      %361 = vperm.xlu0 %360, %v344
      %v362 = vpop.permute.xlu0 %361
      %363 = vset.pattern.permute.xlu0 0
      %364 = vperm.xlu0 %363, %v345
      %v365 = vpop.permute.xlu0 %364
      %366 = vset.pattern.permute.xlu0 0
      %367 = vperm.xlu0 %366, %v346
      %v368 = vpop.permute.xlu0 %367
      %369 = vset.pattern.permute.xlu0 0
      %370 = vperm.xlu0 %369, %v347
      %v371 = vpop.permute.xlu0 %370
      %372 = vset.pattern.permute.xlu0 0
      %373 = vperm.xlu0 %372, %v348
      %v374 = vpop.permute.xlu0 %373
      %375 = vset.pattern.permute.xlu0 0
      %376 = vperm.xlu0 %375, %v349
      %v377 = vpop.permute.xlu0 %376
      %378 = vset.pattern.permute.xlu0 0
      %379 = vperm.xlu0 %378, %v350
      %v380 = vpop.permute.xlu0 %379
      %381 = vset.pattern.permute.xlu0 0
      %382 = vperm.xlu0 %381, %v351
      %v383 = vpop.permute.xlu0 %382
      %384 = vset.pattern.permute.xlu0 0
      %385 = vperm.xlu0 %384, %v352
      %v386 = vpop.permute.xlu0 %385
      %387 = vset.pattern.permute.xlu0 0
      %388 = vperm.xlu0 %387, %v353
      %v389 = vpop.permute.xlu0 %388
      %390 = vset.pattern.permute.xlu0 0
      %391 = vperm.xlu0 %390, %v354
      %v392 = vpop.permute.xlu0 %391
      %393 = vset.pattern.permute.xlu0 0
      %394 = vperm.xlu0 %393, %v355
      %v395 = vpop.permute.xlu0 %394
      %396 = vset.pattern.permute.xlu0 0
      %397 = vperm.xlu0 %396, %v356
      %v398 = vpop.permute.xlu0 %397
      %399 = vset.pattern.permute.xlu0 0
      %400 = vperm.xlu0 %399, %v357
      %v401 = vpop.permute.xlu0 %400
      %402 = vset.pattern.permute.xlu0 0
      %403 = vperm.xlu0 %402, %v358
      %v404 = vpop.permute.xlu0 %403
      %405 = vset.pattern.permute.xlu0 0
      %406 = vperm.xlu0 %405, %v359
      %v407 = vpop.permute.xlu0 %406
      %vm408 = vcmp.eq.s32.totalorder %v362, %v342
      %vm409 = vcmp.eq.s32.totalorder %v362, %v343
      %vm410 = vcmp.eq.s32.totalorder %v365, %v342
      %vm411 = vcmp.eq.s32.totalorder %v365, %v343
      %vm412 = vcmp.eq.s32.totalorder %v368, %v342
      %vm413 = vcmp.eq.s32.totalorder %v368, %v343
      %vm414 = vcmp.eq.s32.totalorder %v371, %v342
      %vm415 = vcmp.eq.s32.totalorder %v371, %v343
      %vm416 = vcmp.eq.s32.totalorder %v374, %v342
      %vm417 = vcmp.eq.s32.totalorder %v374, %v343
      %vm418 = vcmp.eq.s32.totalorder %v377, %v342
      %vm419 = vcmp.eq.s32.totalorder %v377, %v343
      %vm420 = vcmp.eq.s32.totalorder %v380, %v342
      %vm421 = vcmp.eq.s32.totalorder %v380, %v343
      %vm422 = vcmp.eq.s32.totalorder %v383, %v342
      %vm423 = vcmp.eq.s32.totalorder %v383, %v343
      %vm424 = vcmp.eq.s32.totalorder %v386, %v342
      %vm425 = vcmp.eq.s32.totalorder %v386, %v343
      %vm426 = vcmp.eq.s32.totalorder %v389, %v342
      %vm427 = vcmp.eq.s32.totalorder %v389, %v343
      %vm428 = vcmp.eq.s32.totalorder %v392, %v342
      %vm429 = vcmp.eq.s32.totalorder %v392, %v343
      %vm430 = vcmp.eq.s32.totalorder %v395, %v342
      %vm431 = vcmp.eq.s32.totalorder %v395, %v343
      %vm432 = vcmp.eq.s32.totalorder %v398, %v342
      %vm433 = vcmp.eq.s32.totalorder %v398, %v343
      %vm434 = vcmp.eq.s32.totalorder %v401, %v342
      %vm435 = vcmp.eq.s32.totalorder %v401, %v343
      %vm436 = vcmp.eq.s32.totalorder %v404, %v342
      %vm437 = vcmp.eq.s32.totalorder %v404, %v343
      %vm438 = vcmp.eq.s32.totalorder %v407, %v342
      %vm439 = vcmp.eq.s32.totalorder %v407, %v343
      %v440 = vsel %vm408, 1.0, 0.0
      %v441 = vsel %vm409, 1.0, 0.0
      %v442 = vsel %vm410, 1.0, 0.0
      %v443 = vsel %vm411, 1.0, 0.0
      %v444 = vsel %vm412, 1.0, 0.0
      %v445 = vsel %vm413, 1.0, 0.0
      %v446 = vsel %vm414, 1.0, 0.0
      %v447 = vsel %vm415, 1.0, 0.0
      %v448 = vsel %vm416, 1.0, 0.0
      %v449 = vsel %vm417, 1.0, 0.0
      %v450 = vsel %vm418, 1.0, 0.0
      %v451 = vsel %vm419, 1.0, 0.0
      %v452 = vsel %vm420, 1.0, 0.0
      %v453 = vsel %vm421, 1.0, 0.0
      %v454 = vsel %vm422, 1.0, 0.0
      %v455 = vsel %vm423, 1.0, 0.0
      %v456 = vsel %vm424, 1.0, 0.0
      %v457 = vsel %vm425, 1.0, 0.0
      %v458 = vsel %vm426, 1.0, 0.0
      %v459 = vsel %vm427, 1.0, 0.0
      %v460 = vsel %vm428, 1.0, 0.0
      %v461 = vsel %vm429, 1.0, 0.0
      %v462 = vsel %vm430, 1.0, 0.0
      %v463 = vsel %vm431, 1.0, 0.0
      %v464 = vsel %vm432, 1.0, 0.0
      %v465 = vsel %vm433, 1.0, 0.0
      %v466 = vsel %vm434, 1.0, 0.0
      %v467 = vsel %vm435, 1.0, 0.0
      %v468 = vsel %vm436, 1.0, 0.0
      %v469 = vsel %vm437, 1.0, 0.0
      %v470 = vsel %vm438, 1.0, 0.0
      %v471 = vsel %vm439, 1.0, 0.0
      %v472 = vpack.c.bf16 %v442, %v440
      %v473 = vpack.c.bf16 %v443, %v441
      %v474 = vpack.c.bf16 %v446, %v444
      %v475 = vpack.c.bf16 %v447, %v445
      %v476 = vpack.c.bf16 %v450, %v448
      %v477 = vpack.c.bf16 %v451, %v449
      %v478 = vpack.c.bf16 %v454, %v452
      %v479 = vpack.c.bf16 %v455, %v453
      %v480 = vpack.c.bf16 %v458, %v456
      %v481 = vpack.c.bf16 %v459, %v457
      %v482 = vpack.c.bf16 %v462, %v460
      %v483 = vpack.c.bf16 %v463, %v461
      %v484 = vpack.c.bf16 %v466, %v464
      %v485 = vpack.c.bf16 %v467, %v465
      %v486 = vpack.c.bf16 %v470, %v468
      %v487 = vpack.c.bf16 %v471, %v469
      %v488 = vld [vmem:[#allocation2] sm:$0xff]
      %v489 = vld [vmem:[#allocation2 + $0x8] sm:$0xff]
      %v490 = vld [vmem:[#allocation2 + $0x10] sm:$0xff]
      %v491 = vld [vmem:[#allocation2 + $0x18] sm:$0xff]
      %v492 = vld [vmem:[#allocation2 + $0x20] sm:$0xff]
      %v493 = vld [vmem:[#allocation2 + $0x28] sm:$0xff]
      %v494 = vld [vmem:[#allocation2 + $0x30] sm:$0xff]
      %v495 = vld [vmem:[#allocation2 + $0x38] sm:$0xff]
      %v496 = vld [vmem:[#allocation2 + $0x40] sm:$0xff]
      %v497 = vld [vmem:[#allocation2 + $0x48] sm:$0xff]
      %v498 = vld [vmem:[#allocation2 + $0x50] sm:$0xff]
      %v499 = vld [vmem:[#allocation2 + $0x58] sm:$0xff]
      %v500 = vld [vmem:[#allocation2 + $0x60] sm:$0xff]
      %v501 = vld [vmem:[#allocation2 + $0x68] sm:$0xff]
      %v502 = vld [vmem:[#allocation2 + $0x70] sm:$0xff]
      %v503 = vld [vmem:[#allocation2 + $0x78] sm:$0xff]
      %v536 = vunpack.c.l.b16 %v306
      %v537 = vunpack.c.l.b16 %v307
      %v538 = vunpack.c.l.b16 %v308
      %v539 = vunpack.c.l.b16 %v309
      %v540 = vunpack.c.l.b16 %v310
      %v541 = vunpack.c.l.b16 %v311
      %v542 = vunpack.c.l.b16 %v312
      %v543 = vunpack.c.l.b16 %v313
      %v544 = vunpack.c.l.b16 %v314
      %v545 = vunpack.c.l.b16 %v315
      %v546 = vunpack.c.l.b16 %v316
      %v547 = vunpack.c.l.b16 %v317
      %v548 = vunpack.c.l.b16 %v318
      %v549 = vunpack.c.l.b16 %v319
      %v550 = vunpack.c.l.b16 %v320
      %v551 = vunpack.c.l.b16 %v321
      %v552 = vunpack.c.l.b16 %v322
      %v553 = vunpack.c.l.b16 %v323
      %v554 = vunpack.c.l.b16 %v324
      %v555 = vunpack.c.l.b16 %v325
      %v556 = vunpack.c.l.b16 %v326
      %v557 = vunpack.c.l.b16 %v327
      %v558 = vunpack.c.l.b16 %v328
      %v559 = vunpack.c.l.b16 %v329
      %v560 = vunpack.c.l.b16 %v330
      %v561 = vunpack.c.l.b16 %v331
      %v562 = vunpack.c.l.b16 %v332
      %v563 = vunpack.c.l.b16 %v333
      %v564 = vunpack.c.l.b16 %v334
      %v565 = vunpack.c.l.b16 %v335
      %v566 = vunpack.c.l.b16 %v336
      %v567 = vunpack.c.l.b16 %v337
      %v568 = vpack.c.b16 %v537, %v536
      %v569 = vpack.c.b16 %v539, %v538
      %v570 = vpack.c.b16 %v541, %v540
      %v571 = vpack.c.b16 %v543, %v542
      %v572 = vpack.c.b16 %v545, %v544
      %v573 = vpack.c.b16 %v547, %v546
      %v574 = vpack.c.b16 %v549, %v548
      %v575 = vpack.c.b16 %v551, %v550
      %v576 = vpack.c.b16 %v553, %v552
      %v577 = vpack.c.b16 %v555, %v554
      %v578 = vpack.c.b16 %v557, %v556
      %v579 = vpack.c.b16 %v559, %v558
      %v580 = vpack.c.b16 %v561, %v560
      %v581 = vpack.c.b16 %v563, %v562
      %v582 = vpack.c.b16 %v565, %v564
      %v583 = vpack.c.b16 %v567, %v566
      %600 = vmatprep.subr.bf16.mxu0 0
      %601 = vmatpush1.bf16.msra.mxu0 %v568
      %602 = vmatprep.subr.bf16.mxu0 0
      %603 = vmatpush1.bf16.msra.mxu0 %v569
      %604 = vmatprep.subr.bf16.mxu0 0
      %605 = vmatpush1.bf16.msra.mxu0 %v570
      %606 = vmatprep.subr.bf16.mxu0 0
      %607 = vmatpush1.bf16.msra.mxu0 %v571
      %608 = vmatprep.subr.bf16.mxu0 0
      %609 = vmatpush1.bf16.msra.mxu0 %v572
      %610 = vmatprep.subr.bf16.mxu0 0
      %611 = vmatpush1.bf16.msra.mxu0 %v573
      %612 = vmatprep.subr.bf16.mxu0 0
      %613 = vmatpush1.bf16.msra.mxu0 %v574
      %614 = vmatprep.subr.bf16.mxu0 0
      %615 = vmatpush1.bf16.msra.mxu0 %v575
      %616 = vmatprep.subr.bf16.mxu0 0
      %617 = vmatpush1.bf16.msra.mxu0 %v576
      %618 = vmatprep.subr.bf16.mxu0 0
      %619 = vmatpush1.bf16.msra.mxu0 %v577
      %620 = vmatprep.subr.bf16.mxu0 0
      %621 = vmatpush1.bf16.msra.mxu0 %v578
      %622 = vmatprep.subr.bf16.mxu0 0
      %623 = vmatpush1.bf16.msra.mxu0 %v579
      %624 = vmatprep.subr.bf16.mxu0 0
      %625 = vmatpush1.bf16.msra.mxu0 %v580
      %626 = vmatprep.subr.bf16.mxu0 0
      %627 = vmatpush1.bf16.msra.mxu0 %v581
      %628 = vmatprep.subr.bf16.mxu0 0
      %629 = vmatpush1.bf16.msra.mxu0 %v582
      %630 = vmatprep.subr.bf16.mxu0 0
      %631 = vmatpush1.bf16.msra.mxu0 %v583
      %632 = vmatprep.mubr.bf16.mxu0 %v473
      %633 = vmatmul.mubr.bf16.gmra.mrb[0].mxu0 %v472
      %v634 = vpop.f32.mrb[0].mxu0
      %v635 = vadd.f32 0.0, %v634
      %v636 = vpop.f32.mrb[0].mxu0
      %v637 = vpop.f32.mrb[0].mxu0
      %v638 = vadd.f32 0.0, %v637
      %v639 = vpop.f32.mrb[0].mxu0
      %640 = vmatprep.mubr.bf16.mxu0 %v475
      %641 = vmatmul.mubr.bf16.gmra.mrb[0].mxu0 %v474
      %v642 = vpop.f32.mrb[0].mxu0
      %v643 = vadd.f32 0.0, %v642
      %v644 = vpop.f32.mrb[0].mxu0
      %v645 = vpop.f32.mrb[0].mxu0
      %v646 = vadd.f32 0.0, %v645
      %v647 = vpop.f32.mrb[0].mxu0
      %648 = vmatprep.mubr.bf16.mxu0 %v477
      %649 = vmatmul.mubr.bf16.gmra.mrb[0].mxu0 %v476
      %v650 = vpop.f32.mrb[0].mxu0
      %v651 = vadd.f32 0.0, %v650
      %v652 = vpop.f32.mrb[0].mxu0
      %v653 = vpop.f32.mrb[0].mxu0
      %v654 = vadd.f32 0.0, %v653
      %v655 = vpop.f32.mrb[0].mxu0
      %656 = vmatprep.mubr.bf16.mxu0 %v479
      %657 = vmatmul.mubr.bf16.gmra.mrb[0].mxu0 %v478
      %v658 = vpop.f32.mrb[0].mxu0
      %v659 = vadd.f32 0.0, %v658
      %v660 = vpop.f32.mrb[0].mxu0
      %v661 = vpop.f32.mrb[0].mxu0
      %v662 = vadd.f32 0.0, %v661
      %v663 = vpop.f32.mrb[0].mxu0
      %664 = vmatprep.mubr.bf16.mxu0 %v481
      %665 = vmatmul.mubr.bf16.gmra.mrb[0].mxu0 %v480
      %v666 = vpop.f32.mrb[0].mxu0
      %v667 = vadd.f32 0.0, %v666
      %v668 = vpop.f32.mrb[0].mxu0
      %v669 = vpop.f32.mrb[0].mxu0
      %v670 = vadd.f32 0.0, %v669
      %v671 = vpop.f32.mrb[0].mxu0
      %672 = vmatprep.mubr.bf16.mxu0 %v483
      %673 = vmatmul.mubr.bf16.gmra.mrb[0].mxu0 %v482
      %v674 = vpop.f32.mrb[0].mxu0
      %v675 = vadd.f32 0.0, %v674
      %v676 = vpop.f32.mrb[0].mxu0
      %v677 = vpop.f32.mrb[0].mxu0
      %v678 = vadd.f32 0.0, %v677
      %v679 = vpop.f32.mrb[0].mxu0
      %680 = vmatprep.mubr.bf16.mxu0 %v485
      %681 = vmatmul.mubr.bf16.gmra.mrb[0].mxu0 %v484
      %v682 = vpop.f32.mrb[0].mxu0
      %v683 = vadd.f32 0.0, %v682
      %v684 = vpop.f32.mrb[0].mxu0
      %v685 = vpop.f32.mrb[0].mxu0
      %v686 = vadd.f32 0.0, %v685
      %v687 = vpop.f32.mrb[0].mxu0
      %688 = vmatprep.mubr.bf16.mxu0 %v487
      %689 = vmatmul.mubr.bf16.gmra.mrb[0].mxu0 %v486
      %v690 = vpop.f32.mrb[0].mxu0
      %v691 = vadd.f32 0.0, %v690
      %v692 = vpop.f32.mrb[0].mxu0
      %v693 = vpop.f32.mrb[0].mxu0
      %v694 = vadd.f32 0.0, %v693
      %v695 = vpop.f32.mrb[0].mxu0
      %696 = vdwg.mxu0
      %v697 = vadd.f32 %v488, %v635
      %v698 = vadd.f32 %v489, %v638
      %v699 = vadd.f32 %v490, %v643
      %v700 = vadd.f32 %v491, %v646
      %v701 = vadd.f32 %v492, %v651
      %v702 = vadd.f32 %v493, %v654
      %v703 = vadd.f32 %v494, %v659
      %v704 = vadd.f32 %v495, %v662
      %v705 = vadd.f32 %v496, %v667
      %v706 = vadd.f32 %v497, %v670
      %v707 = vadd.f32 %v498, %v675
      %v708 = vadd.f32 %v499, %v678
      %v709 = vadd.f32 %v500, %v683
      %v710 = vadd.f32 %v501, %v686
      %v711 = vadd.f32 %v502, %v691
      %v712 = vadd.f32 %v503, %v694
      %713 = vst [vmem:[#allocation2] sm:$0xff] %v697
      %714 = vst [vmem:[#allocation2 + $0x8] sm:$0xff] %v698
      %715 = vst [vmem:[#allocation2 + $0x10] sm:$0xff] %v699
      %716 = vst [vmem:[#allocation2 + $0x18] sm:$0xff] %v700
      %717 = vst [vmem:[#allocation2 + $0x20] sm:$0xff] %v701
      %718 = vst [vmem:[#allocation2 + $0x28] sm:$0xff] %v702
      %719 = vst [vmem:[#allocation2 + $0x30] sm:$0xff] %v703
      %720 = vst [vmem:[#allocation2 + $0x38] sm:$0xff] %v704
      %721 = vst [vmem:[#allocation2 + $0x40] sm:$0xff] %v705
      %722 = vst [vmem:[#allocation2 + $0x48] sm:$0xff] %v706
      %723 = vst [vmem:[#allocation2 + $0x50] sm:$0xff] %v707
      %724 = vst [vmem:[#allocation2 + $0x58] sm:$0xff] %v708
      %725 = vst [vmem:[#allocation2 + $0x60] sm:$0xff] %v709
      %726 = vst [vmem:[#allocation2 + $0x68] sm:$0xff] %v710
      %727 = vst [vmem:[#allocation2 + $0x70] sm:$0xff] %v711
      %728 = vst [vmem:[#allocation2 + $0x78] sm:$0xff] %v712
      // Predicated region
      $region45: #{interaction_block_pallas.4} parent=39 // pred_check
        %p729 = pneg %p285
      $region46: #{interaction_block_pallas.4} parent=39 // pred_check_branch
        %731 = sbr.rel (%p729) target = $region48
      $region47: #{interaction_block_pallas.4} parent=39 // pred_region
        %v732 = vld [vmem:[%s270] sm:$0xff]
        %v733 = vld [vmem:[%s270 + $0x8] sm:$0xff]
        %v734 = vld [vmem:[%s270 + $0x10] sm:$0xff]
        %v735 = vld [vmem:[%s270 + $0x18] sm:$0xff]
        %v736 = vld [vmem:[%s270 + $0x20] sm:$0xff]
        %v737 = vld [vmem:[%s270 + $0x28] sm:$0xff]
        %v738 = vld [vmem:[%s270 + $0x30] sm:$0xff]
        %v739 = vld [vmem:[%s270 + $0x38] sm:$0xff]
        %v740 = vld [vmem:[%s270 + $0x40] sm:$0xff]
        %v741 = vld [vmem:[%s270 + $0x48] sm:$0xff]
        %v742 = vld [vmem:[%s270 + $0x50] sm:$0xff]
        %v743 = vld [vmem:[%s270 + $0x58] sm:$0xff]
        %v744 = vld [vmem:[%s270 + $0x60] sm:$0xff]
        %v745 = vld [vmem:[%s270 + $0x68] sm:$0xff]
        %v746 = vld [vmem:[%s270 + $0x70] sm:$0xff]
        %v747 = vld [vmem:[%s270 + $0x78] sm:$0xff]
        %v748 = vpack.c.bf16 %v733, %v732
        %v749 = vpack.c.bf16 %v735, %v734
        %v750 = vpack.c.bf16 %v737, %v736
        %v751 = vpack.c.bf16 %v739, %v738
        %v752 = vpack.c.bf16 %v741, %v740
        %v753 = vpack.c.bf16 %v743, %v742
        %v754 = vpack.c.bf16 %v745, %v744
        %v755 = vpack.c.bf16 %v747, %v746
        %v756 = vld [vmem:[%s3] sm:$0xf]
        %v757 = vld [vmem:[%s3 + $0x4] sm:$0xf]
        %v758 = vld [vmem:[%s3 + $0x8] sm:$0xf]
        %v759 = vld [vmem:[%s3 + $0xc] sm:$0xf]
        %v760 = vld [vmem:[%s3 + $0x10] sm:$0xf]
        %v761 = vld [vmem:[%s3 + $0x14] sm:$0x1]
        %v768 = vunpack.c.l.b16 %v756
        %v769 = vunpack.c.l.b16 %v757
        %v770 = vunpack.c.l.b16 %v758
        %v771 = vunpack.c.l.b16 %v759
        %v772 = vunpack.c.l.b16 %v760
        %v773 = vunpack.c.l.b16 %v761
        %v774 = vpack.c.b16 %v769, %v768
        %v775 = vpack.c.b16 %v771, %v770
        %v776 = vpack.c.b16 %v773, %v772
        %vm779 = vcmask 343040
        %v781 = vsel %vm779, %v748, 0
        %v784 = vsel %vm779, %v749, 0
        %v787 = vsel %vm779, %v750, 0
        %v790 = vsel %vm779, %v751, 0
        %v793 = vsel %vm779, %v752, 0
        %v796 = vsel %vm779, %v753, 0
        %v799 = vsel %vm779, %v754, 0
        %v802 = vsel %vm779, %v755, 0
        %vm804 = vcmask 1044480
        %v806 = vsel %vm804, %v776, 0
        %808 = vmatprep.subr.bf16.mxu0 0
        %809 = vmatpush1.bf16.msra.mxu0 %v774
        %810 = vmatprep.subr.bf16.mxu0 0
        %811 = vmatpush1.bf16.msra.mxu0 %v775
        %812 = vmatprep.subr.bf16.mxu0 0
        %813 = vmatpush1.bf16.msra.mxu0 %v806
        %814 = vmatprep.subr.bf16.mxu0 0
        %815 = vmatpush1.bf16.msra.mxu0 0
        %816 = vmatprep.subr.bf16.mxu0 0
        %817 = vmatpush1.bf16.msra.mxu0 0
        %818 = vmatprep.subr.bf16.mxu0 0
        %819 = vmatpush1.bf16.msra.mxu0 0
        %820 = vmatprep.subr.bf16.mxu0 0
        %821 = vmatpush1.bf16.msra.mxu0 0
        %822 = vmatprep.subr.bf16.mxu0 0
        %823 = vmatpush1.bf16.msra.mxu0 0
        %824 = vmatprep.subr.bf16.mxu0 0
        %825 = vmatpush1.bf16.msra.mxu0 0
        %826 = vmatprep.subr.bf16.mxu0 0
        %827 = vmatpush1.bf16.msra.mxu0 0
        %828 = vmatprep.subr.bf16.mxu0 0
        %829 = vmatpush1.bf16.msra.mxu0 0
        %830 = vmatprep.subr.bf16.mxu0 0
        %831 = vmatpush1.bf16.msra.mxu0 0
        %832 = vmatprep.subr.bf16.mxu0 0
        %833 = vmatpush1.bf16.msra.mxu0 0
        %834 = vmatprep.subr.bf16.mxu0 0
        %835 = vmatpush1.bf16.msra.mxu0 0
        %836 = vmatprep.subr.bf16.mxu0 0
        %837 = vmatpush1.bf16.msra.mxu0 0
        %838 = vmatprep.subr.bf16.mxu0 0
        %839 = vmatpush1.bf16.msra.mxu0 0
        %840 = vmatprep.mubr.bf16.mxu0 0
        %841 = vmatmul.mubr.bf16.gmra.mrb[0].mxu0 %v781
        %v842 = vpop.f32.mrb[0].mxu0
        %v843 = vadd.f32 0.0, %v842
        %v844 = vpop.f32.mrb[0].mxu0
        %v845 = vpop.f32.mrb[0].mxu0
        %v846 = vadd.f32 0.0, %v845
        %v847 = vpop.f32.mrb[0].mxu0
        %848 = vmatprep.mubr.bf16.mxu0 0
        %849 = vmatmul.mubr.bf16.gmra.mrb[0].mxu0 %v784
        %v850 = vpop.f32.mrb[0].mxu0
        %v851 = vadd.f32 0.0, %v850
        %v852 = vpop.f32.mrb[0].mxu0
        %v853 = vpop.f32.mrb[0].mxu0
        %v854 = vadd.f32 0.0, %v853
        %v855 = vpop.f32.mrb[0].mxu0
        %856 = vmatprep.mubr.bf16.mxu0 0
        %857 = vmatmul.mubr.bf16.gmra.mrb[0].mxu0 %v787
        %v858 = vpop.f32.mrb[0].mxu0
        %v859 = vadd.f32 0.0, %v858
        %v860 = vpop.f32.mrb[0].mxu0
        %v861 = vpop.f32.mrb[0].mxu0
        %v862 = vadd.f32 0.0, %v861
        %v863 = vpop.f32.mrb[0].mxu0
        %864 = vmatprep.mubr.bf16.mxu0 0
        %865 = vmatmul.mubr.bf16.gmra.mrb[0].mxu0 %v790
        %v866 = vpop.f32.mrb[0].mxu0
        %v867 = vadd.f32 0.0, %v866
        %v868 = vpop.f32.mrb[0].mxu0
        %v869 = vpop.f32.mrb[0].mxu0
        %v870 = vadd.f32 0.0, %v869
        %v871 = vpop.f32.mrb[0].mxu0
        %872 = vmatprep.mubr.bf16.mxu0 0
        %873 = vmatmul.mubr.bf16.gmra.mrb[0].mxu0 %v793
        %v874 = vpop.f32.mrb[0].mxu0
        %v875 = vadd.f32 0.0, %v874
        %v876 = vpop.f32.mrb[0].mxu0
        %v877 = vpop.f32.mrb[0].mxu0
        %v878 = vadd.f32 0.0, %v877
        %v879 = vpop.f32.mrb[0].mxu0
        %880 = vmatprep.mubr.bf16.mxu0 0
        %881 = vmatmul.mubr.bf16.gmra.mrb[0].mxu0 %v796
        %v882 = vpop.f32.mrb[0].mxu0
        %v883 = vadd.f32 0.0, %v882
        %v884 = vpop.f32.mrb[0].mxu0
        %v885 = vpop.f32.mrb[0].mxu0
        %v886 = vadd.f32 0.0, %v885
        %v887 = vpop.f32.mrb[0].mxu0
        %888 = vmatprep.mubr.bf16.mxu0 0
        %889 = vmatmul.mubr.bf16.gmra.mrb[0].mxu0 %v799
        %v890 = vpop.f32.mrb[0].mxu0
        %v891 = vadd.f32 0.0, %v890
        %v892 = vpop.f32.mrb[0].mxu0
        %v893 = vpop.f32.mrb[0].mxu0
        %v894 = vadd.f32 0.0, %v893
        %v895 = vpop.f32.mrb[0].mxu0
        %896 = vmatprep.mubr.bf16.mxu0 0
        %897 = vmatmul.mubr.bf16.gmra.mrb[0].mxu0 %v802
        %v898 = vpop.f32.mrb[0].mxu0
        %v899 = vadd.f32 0.0, %v898
        %v900 = vpop.f32.mrb[0].mxu0
        %v901 = vpop.f32.mrb[0].mxu0
        %v902 = vadd.f32 0.0, %v901
        %v903 = vpop.f32.mrb[0].mxu0
        %904 = vdwg.mxu0
        %v905 = vld [vmem:[#allocation2] sm:$0xff]
        %v906 = vld [vmem:[#allocation2 + $0x8] sm:$0xff]
        %v907 = vld [vmem:[#allocation2 + $0x10] sm:$0xff]
        %v908 = vld [vmem:[#allocation2 + $0x18] sm:$0xff]
        %v909 = vld [vmem:[#allocation2 + $0x20] sm:$0xff]
        %v910 = vld [vmem:[#allocation2 + $0x28] sm:$0xff]
        %v911 = vld [vmem:[#allocation2 + $0x30] sm:$0xff]
        %v912 = vld [vmem:[#allocation2 + $0x38] sm:$0xff]
        %v913 = vld [vmem:[#allocation2 + $0x40] sm:$0xff]
        %v914 = vld [vmem:[#allocation2 + $0x48] sm:$0xff]
        %v915 = vld [vmem:[#allocation2 + $0x50] sm:$0xff]
        %v916 = vld [vmem:[#allocation2 + $0x58] sm:$0xff]
        %v917 = vld [vmem:[#allocation2 + $0x60] sm:$0xff]
        %v918 = vld [vmem:[#allocation2 + $0x68] sm:$0xff]
        %v919 = vld [vmem:[#allocation2 + $0x70] sm:$0xff]
        %v920 = vld [vmem:[#allocation2 + $0x78] sm:$0xff]
        %v921 = vpack.c.bf16 %v906, %v905
        %v922 = vpack.c.bf16 %v908, %v907
        %v923 = vpack.c.bf16 %v910, %v909
        %v924 = vpack.c.bf16 %v912, %v911
        %v925 = vpack.c.bf16 %v914, %v913
        %v926 = vpack.c.bf16 %v916, %v915
        %v927 = vpack.c.bf16 %v918, %v917
        %v928 = vpack.c.bf16 %v920, %v919
        %v929 = vld [vmem:[%s4] sm:$0xf]
        %v930 = vld [vmem:[%s4 + $0x4] sm:$0xf]
        %v931 = vld [vmem:[%s4 + $0x8] sm:$0xf]
        %v932 = vld [vmem:[%s4 + $0xc] sm:$0xf]
        %v933 = vld [vmem:[%s4 + $0x10] sm:$0xf]
        %v934 = vld [vmem:[%s4 + $0x14] sm:$0xf]
        %v935 = vld [vmem:[%s4 + $0x18] sm:$0xf]
        %v936 = vld [vmem:[%s4 + $0x1c] sm:$0xf]
        %v937 = vld [vmem:[%s4 + $0x20] sm:$0xf]
        %v938 = vld [vmem:[%s4 + $0x24] sm:$0xf]
        %v939 = vld [vmem:[%s4 + $0x28] sm:$0xf]
        %v940 = vld [vmem:[%s4 + $0x2c] sm:$0xf]
        %v941 = vld [vmem:[%s4 + $0x30] sm:$0xf]
        %v942 = vld [vmem:[%s4 + $0x34] sm:$0xf]
        %v943 = vld [vmem:[%s4 + $0x38] sm:$0xf]
        %v944 = vld [vmem:[%s4 + $0x3c] sm:$0xf]
        %v961 = vunpack.c.l.b16 %v929
        %v962 = vunpack.c.l.b16 %v930
        %v963 = vunpack.c.l.b16 %v931
        %v964 = vunpack.c.l.b16 %v932
        %v965 = vunpack.c.l.b16 %v933
        %v966 = vunpack.c.l.b16 %v934
        %v967 = vunpack.c.l.b16 %v935
        %v968 = vunpack.c.l.b16 %v936
        %v969 = vunpack.c.l.b16 %v937
        %v970 = vunpack.c.l.b16 %v938
        %v971 = vunpack.c.l.b16 %v939
        %v972 = vunpack.c.l.b16 %v940
        %v973 = vunpack.c.l.b16 %v941
        %v974 = vunpack.c.l.b16 %v942
        %v975 = vunpack.c.l.b16 %v943
        %v976 = vunpack.c.l.b16 %v944
        %v977 = vpack.c.b16 %v962, %v961
        %v978 = vpack.c.b16 %v964, %v963
        %v979 = vpack.c.b16 %v966, %v965
        %v980 = vpack.c.b16 %v968, %v967
        %v981 = vpack.c.b16 %v970, %v969
        %v982 = vpack.c.b16 %v972, %v971
        %v983 = vpack.c.b16 %v974, %v973
        %v984 = vpack.c.b16 %v976, %v975
        %993 = vmatprep.subr.bf16.mxu0 0
        %994 = vmatpush1.bf16.msra.mxu0 %v977
        %995 = vmatprep.subr.bf16.mxu0 0
        %996 = vmatpush1.bf16.msra.mxu0 %v978
        %997 = vmatprep.subr.bf16.mxu0 0
        %998 = vmatpush1.bf16.msra.mxu0 %v979
        %999 = vmatprep.subr.bf16.mxu0 0
        %1000 = vmatpush1.bf16.msra.mxu0 %v980
        %1001 = vmatprep.subr.bf16.mxu0 0
        %1002 = vmatpush1.bf16.msra.mxu0 %v981
        %1003 = vmatprep.subr.bf16.mxu0 0
        %1004 = vmatpush1.bf16.msra.mxu0 %v982
        %1005 = vmatprep.subr.bf16.mxu0 0
        %1006 = vmatpush1.bf16.msra.mxu0 %v983
        %1007 = vmatprep.subr.bf16.mxu0 0
        %1008 = vmatpush1.bf16.msra.mxu0 %v984
        %1009 = vmatprep.subr.bf16.mxu0 0
        %1010 = vmatpush1.bf16.msra.mxu0 0
        %1011 = vmatprep.subr.bf16.mxu0 0
        %1012 = vmatpush1.bf16.msra.mxu0 0
        %1013 = vmatprep.subr.bf16.mxu0 0
        %1014 = vmatpush1.bf16.msra.mxu0 0
        %1015 = vmatprep.subr.bf16.mxu0 0
        %1016 = vmatpush1.bf16.msra.mxu0 0
        %1017 = vmatprep.subr.bf16.mxu0 0
        %1018 = vmatpush1.bf16.msra.mxu0 0
        %1019 = vmatprep.subr.bf16.mxu0 0
        %1020 = vmatpush1.bf16.msra.mxu0 0
        %1021 = vmatprep.subr.bf16.mxu0 0
        %1022 = vmatpush1.bf16.msra.mxu0 0
        %1023 = vmatprep.subr.bf16.mxu0 0
        %1024 = vmatpush1.bf16.msra.mxu0 0
        %1025 = vmatprep.mubr.bf16.mxu0 0
        %1026 = vmatmul.mubr.bf16.gmra.mrb[0].mxu0 %v921
        %v1027 = vpop.f32.mrb[0].mxu0
        %v1028 = vadd.f32 0.0, %v1027
        %v1029 = vpop.f32.mrb[0].mxu0
        %v1030 = vpop.f32.mrb[0].mxu0
        %v1031 = vadd.f32 0.0, %v1030
        %v1032 = vpop.f32.mrb[0].mxu0
        %1033 = vmatprep.mubr.bf16.mxu0 0
        %1034 = vmatmul.mubr.bf16.gmra.mrb[0].mxu0 %v922
        %v1035 = vpop.f32.mrb[0].mxu0
        %v1036 = vadd.f32 0.0, %v1035
        %v1037 = vpop.f32.mrb[0].mxu0
        %v1038 = vpop.f32.mrb[0].mxu0
        %v1039 = vadd.f32 0.0, %v1038
        %v1040 = vpop.f32.mrb[0].mxu0
        %1041 = vmatprep.mubr.bf16.mxu0 0
        %1042 = vmatmul.mubr.bf16.gmra.mrb[0].mxu0 %v923
        %v1043 = vpop.f32.mrb[0].mxu0
        %v1044 = vadd.f32 0.0, %v1043
        %v1045 = vpop.f32.mrb[0].mxu0
        %v1046 = vpop.f32.mrb[0].mxu0
        %v1047 = vadd.f32 0.0, %v1046
        %v1048 = vpop.f32.mrb[0].mxu0
        %1049 = vmatprep.mubr.bf16.mxu0 0
        %1050 = vmatmul.mubr.bf16.gmra.mrb[0].mxu0 %v924
        %v1051 = vpop.f32.mrb[0].mxu0
        %v1052 = vadd.f32 0.0, %v1051
        %v1053 = vpop.f32.mrb[0].mxu0
        %v1054 = vpop.f32.mrb[0].mxu0
        %v1055 = vadd.f32 0.0, %v1054
        %v1056 = vpop.f32.mrb[0].mxu0
        %1057 = vmatprep.mubr.bf16.mxu0 0
        %1058 = vmatmul.mubr.bf16.gmra.mrb[0].mxu0 %v925
        %v1059 = vpop.f32.mrb[0].mxu0
        %v1060 = vadd.f32 0.0, %v1059
        %v1061 = vpop.f32.mrb[0].mxu0
        %v1062 = vpop.f32.mrb[0].mxu0
        %v1063 = vadd.f32 0.0, %v1062
        %v1064 = vpop.f32.mrb[0].mxu0
        %1065 = vmatprep.mubr.bf16.mxu0 0
        %1066 = vmatmul.mubr.bf16.gmra.mrb[0].mxu0 %v926
        %v1067 = vpop.f32.mrb[0].mxu0
        %v1068 = vadd.f32 0.0, %v1067
        %v1069 = vpop.f32.mrb[0].mxu0
        %v1070 = vpop.f32.mrb[0].mxu0
        %v1071 = vadd.f32 0.0, %v1070
        %v1072 = vpop.f32.mrb[0].mxu0
        %1073 = vmatprep.mubr.bf16.mxu0 0
        %1074 = vmatmul.mubr.bf16.gmra.mrb[0].mxu0 %v927
        %v1075 = vpop.f32.mrb[0].mxu0
        %v1076 = vadd.f32 0.0, %v1075
        %v1077 = vpop.f32.mrb[0].mxu0
        %v1078 = vpop.f32.mrb[0].mxu0
        %v1079 = vadd.f32 0.0, %v1078
        %v1080 = vpop.f32.mrb[0].mxu0
        %1081 = vmatprep.mubr.bf16.mxu0 0
        %1082 = vmatmul.mubr.bf16.gmra.mrb[0].mxu0 %v928
        %v1083 = vpop.f32.mrb[0].mxu0
        %v1084 = vadd.f32 0.0, %v1083
        %v1085 = vpop.f32.mrb[0].mxu0
        %v1086 = vpop.f32.mrb[0].mxu0
        %v1087 = vadd.f32 0.0, %v1086
        %v1088 = vpop.f32.mrb[0].mxu0
        %1089 = vdwg.mxu0
        %1091 = vset.pattern.permute.xlu0 0
        %1092 = vperm.xlu0 %1091, %v843
        %v1093 = vpop.permute.xlu0 %1092
        %1096 = vset.pattern.permute.xlu0 0
        %1097 = vperm.xlu0 %1096, %v846
        %v1098 = vpop.permute.xlu0 %1097
        %1101 = vset.pattern.permute.xlu0 0
        %1102 = vperm.xlu0 %1101, %v851
        %v1103 = vpop.permute.xlu0 %1102
        %1106 = vset.pattern.permute.xlu0 0
        %1107 = vperm.xlu0 %1106, %v854
        %v1108 = vpop.permute.xlu0 %1107
        %1111 = vset.pattern.permute.xlu0 0
        %1112 = vperm.xlu0 %1111, %v859
        %v1113 = vpop.permute.xlu0 %1112
        %1116 = vset.pattern.permute.xlu0 0
        %1117 = vperm.xlu0 %1116, %v862
        %v1118 = vpop.permute.xlu0 %1117
        %1121 = vset.pattern.permute.xlu0 0
        %1122 = vperm.xlu0 %1121, %v867
        %v1123 = vpop.permute.xlu0 %1122
        %1126 = vset.pattern.permute.xlu0 0
        %1127 = vperm.xlu0 %1126, %v870
        %v1128 = vpop.permute.xlu0 %1127
        %1131 = vset.pattern.permute.xlu0 0
        %1132 = vperm.xlu0 %1131, %v875
        %v1133 = vpop.permute.xlu0 %1132
        %1136 = vset.pattern.permute.xlu0 0
        %1137 = vperm.xlu0 %1136, %v878
        %v1138 = vpop.permute.xlu0 %1137
        %1141 = vset.pattern.permute.xlu0 0
        %1142 = vperm.xlu0 %1141, %v883
        %v1143 = vpop.permute.xlu0 %1142
        %1146 = vset.pattern.permute.xlu0 0
        %1147 = vperm.xlu0 %1146, %v886
        %v1148 = vpop.permute.xlu0 %1147
        %1151 = vset.pattern.permute.xlu0 0
        %1152 = vperm.xlu0 %1151, %v891
        %v1153 = vpop.permute.xlu0 %1152
        %1156 = vset.pattern.permute.xlu0 0
        %1157 = vperm.xlu0 %1156, %v894
        %v1158 = vpop.permute.xlu0 %1157
        %1161 = vset.pattern.permute.xlu0 0
        %1162 = vperm.xlu0 %1161, %v899
        %v1163 = vpop.permute.xlu0 %1162
        %1166 = vset.pattern.permute.xlu0 0
        %1167 = vperm.xlu0 %1166, %v902
        %v1168 = vpop.permute.xlu0 %1167
        %v1170 = vmul.f32 %v1093, %v1028
        %v1171 = vmul.f32 %v1098, %v1031
        %v1172 = vmul.f32 %v1103, %v1036
        %v1173 = vmul.f32 %v1108, %v1039
        %v1174 = vmul.f32 %v1113, %v1044
        %v1175 = vmul.f32 %v1118, %v1047
        %v1176 = vmul.f32 %v1123, %v1052
        %v1177 = vmul.f32 %v1128, %v1055
        %v1178 = vmul.f32 %v1133, %v1060
        %v1179 = vmul.f32 %v1138, %v1063
        %v1180 = vmul.f32 %v1143, %v1068
        %v1181 = vmul.f32 %v1148, %v1071
        %v1182 = vmul.f32 %v1153, %v1076
        %v1183 = vmul.f32 %v1158, %v1079
        %v1184 = vmul.f32 %v1163, %v1084
        %v1185 = vmul.f32 %v1168, %v1087
        %v1186 = vadd.f32 %v1170, 0.0
        %v1187 = vadd.f32 %v1171, 0.0
        %v1188 = vadd.f32 %v1172, 0.0
        %v1189 = vadd.f32 %v1173, 0.0
        %v1190 = vadd.f32 %v1174, 0.0
        %v1191 = vadd.f32 %v1175, 0.0
        %v1192 = vadd.f32 %v1176, 0.0
        %v1193 = vadd.f32 %v1177, 0.0
        %v1194 = vadd.f32 %v1178, 0.0
        %v1195 = vadd.f32 %v1179, 0.0
        %v1196 = vadd.f32 %v1180, 0.0
        %v1197 = vadd.f32 %v1181, 0.0
        %v1198 = vadd.f32 %v1182, 0.0
        %v1199 = vadd.f32 %v1183, 0.0
        %v1200 = vadd.f32 %v1184, 0.0
        %v1201 = vadd.f32 %v1185, 0.0
        %s1202 = scalar_lea.vmem %s4, 64
        %v1203 = vld [vmem:[%s1202] sm:$0xf]
        %v1204 = vld [vmem:[%s1202 + $0x4] sm:$0xf]
        %v1205 = vld [vmem:[%s1202 + $0x8] sm:$0xf]
        %v1206 = vld [vmem:[%s1202 + $0xc] sm:$0xf]
        %v1207 = vld [vmem:[%s1202 + $0x10] sm:$0xf]
        %v1208 = vld [vmem:[%s1202 + $0x14] sm:$0xf]
        %v1209 = vld [vmem:[%s1202 + $0x18] sm:$0xf]
        %v1210 = vld [vmem:[%s1202 + $0x1c] sm:$0xf]
        %v1211 = vld [vmem:[%s1202 + $0x20] sm:$0xf]
        %v1212 = vld [vmem:[%s1202 + $0x24] sm:$0xf]
        %v1213 = vld [vmem:[%s1202 + $0x28] sm:$0xf]
        %v1214 = vld [vmem:[%s1202 + $0x2c] sm:$0xf]
        %v1215 = vld [vmem:[%s1202 + $0x30] sm:$0xf]
        %v1216 = vld [vmem:[%s1202 + $0x34] sm:$0xf]
        %v1217 = vld [vmem:[%s1202 + $0x38] sm:$0xf]
        %v1218 = vld [vmem:[%s1202 + $0x3c] sm:$0xf]
        %v1235 = vunpack.c.l.b16 %v1203
        %v1236 = vunpack.c.l.b16 %v1204
        %v1237 = vunpack.c.l.b16 %v1205
        %v1238 = vunpack.c.l.b16 %v1206
        %v1239 = vunpack.c.l.b16 %v1207
        %v1240 = vunpack.c.l.b16 %v1208
        %v1241 = vunpack.c.l.b16 %v1209
        %v1242 = vunpack.c.l.b16 %v1210
        %v1243 = vunpack.c.l.b16 %v1211
        %v1244 = vunpack.c.l.b16 %v1212
        %v1245 = vunpack.c.l.b16 %v1213
        %v1246 = vunpack.c.l.b16 %v1214
        %v1247 = vunpack.c.l.b16 %v1215
        %v1248 = vunpack.c.l.b16 %v1216
        %v1249 = vunpack.c.l.b16 %v1217
        %v1250 = vunpack.c.l.b16 %v1218
        %v1251 = vpack.c.b16 %v1236, %v1235
        %v1252 = vpack.c.b16 %v1238, %v1237
        %v1253 = vpack.c.b16 %v1240, %v1239
        %v1254 = vpack.c.b16 %v1242, %v1241
        %v1255 = vpack.c.b16 %v1244, %v1243
        %v1256 = vpack.c.b16 %v1246, %v1245
        %v1257 = vpack.c.b16 %v1248, %v1247
        %v1258 = vpack.c.b16 %v1250, %v1249
        %1267 = vmatprep.subr.bf16.mxu0 0
        %1268 = vmatpush1.bf16.msra.mxu0 %v1251
        %1269 = vmatprep.subr.bf16.mxu0 0
        %1270 = vmatpush1.bf16.msra.mxu0 %v1252
        %1271 = vmatprep.subr.bf16.mxu0 0
        %1272 = vmatpush1.bf16.msra.mxu0 %v1253
        %1273 = vmatprep.subr.bf16.mxu0 0
        %1274 = vmatpush1.bf16.msra.mxu0 %v1254
        %1275 = vmatprep.subr.bf16.mxu0 0
        %1276 = vmatpush1.bf16.msra.mxu0 %v1255
        %1277 = vmatprep.subr.bf16.mxu0 0
        %1278 = vmatpush1.bf16.msra.mxu0 %v1256
        %1279 = vmatprep.subr.bf16.mxu0 0
        %1280 = vmatpush1.bf16.msra.mxu0 %v1257
        %1281 = vmatprep.subr.bf16.mxu0 0
        %1282 = vmatpush1.bf16.msra.mxu0 %v1258
        %1283 = vmatprep.subr.bf16.mxu0 0
        %1284 = vmatpush1.bf16.msra.mxu0 0
        %1285 = vmatprep.subr.bf16.mxu0 0
        %1286 = vmatpush1.bf16.msra.mxu0 0
        %1287 = vmatprep.subr.bf16.mxu0 0
        %1288 = vmatpush1.bf16.msra.mxu0 0
        %1289 = vmatprep.subr.bf16.mxu0 0
        %1290 = vmatpush1.bf16.msra.mxu0 0
        %1291 = vmatprep.subr.bf16.mxu0 0
        %1292 = vmatpush1.bf16.msra.mxu0 0
        %1293 = vmatprep.subr.bf16.mxu0 0
        %1294 = vmatpush1.bf16.msra.mxu0 0
        %1295 = vmatprep.subr.bf16.mxu0 0
        %1296 = vmatpush1.bf16.msra.mxu0 0
        %1297 = vmatprep.subr.bf16.mxu0 0
        %1298 = vmatpush1.bf16.msra.mxu0 0
        %1299 = vmatprep.mubr.bf16.mxu0 0
        %1300 = vmatmul.mubr.bf16.gmra.mrb[0].mxu0 %v921
        %v1301 = vpop.f32.mrb[0].mxu0
        %v1302 = vadd.f32 0.0, %v1301
        %v1303 = vpop.f32.mrb[0].mxu0
        %v1304 = vpop.f32.mrb[0].mxu0
        %v1305 = vadd.f32 0.0, %v1304
        %v1306 = vpop.f32.mrb[0].mxu0
        %1307 = vmatprep.mubr.bf16.mxu0 0
        %1308 = vmatmul.mubr.bf16.gmra.mrb[0].mxu0 %v922
        %v1309 = vpop.f32.mrb[0].mxu0
        %v1310 = vadd.f32 0.0, %v1309
        %v1311 = vpop.f32.mrb[0].mxu0
        %v1312 = vpop.f32.mrb[0].mxu0
        %v1313 = vadd.f32 0.0, %v1312
        %v1314 = vpop.f32.mrb[0].mxu0
        %1315 = vmatprep.mubr.bf16.mxu0 0
        %1316 = vmatmul.mubr.bf16.gmra.mrb[0].mxu0 %v923
        %v1317 = vpop.f32.mrb[0].mxu0
        %v1318 = vadd.f32 0.0, %v1317
        %v1319 = vpop.f32.mrb[0].mxu0
        %v1320 = vpop.f32.mrb[0].mxu0
        %v1321 = vadd.f32 0.0, %v1320
        %v1322 = vpop.f32.mrb[0].mxu0
        %1323 = vmatprep.mubr.bf16.mxu0 0
        %1324 = vmatmul.mubr.bf16.gmra.mrb[0].mxu0 %v924
        %v1325 = vpop.f32.mrb[0].mxu0
        %v1326 = vadd.f32 0.0, %v1325
        %v1327 = vpop.f32.mrb[0].mxu0
        %v1328 = vpop.f32.mrb[0].mxu0
        %v1329 = vadd.f32 0.0, %v1328
        %v1330 = vpop.f32.mrb[0].mxu0
        %1331 = vmatprep.mubr.bf16.mxu0 0
        %1332 = vmatmul.mubr.bf16.gmra.mrb[0].mxu0 %v925
        %v1333 = vpop.f32.mrb[0].mxu0
        %v1334 = vadd.f32 0.0, %v1333
        %v1335 = vpop.f32.mrb[0].mxu0
        %v1336 = vpop.f32.mrb[0].mxu0
        %v1337 = vadd.f32 0.0, %v1336
        %v1338 = vpop.f32.mrb[0].mxu0
        %1339 = vmatprep.mubr.bf16.mxu0 0
        %1340 = vmatmul.mubr.bf16.gmra.mrb[0].mxu0 %v926
        %v1341 = vpop.f32.mrb[0].mxu0
        %v1342 = vadd.f32 0.0, %v1341
        %v1343 = vpop.f32.mrb[0].mxu0
        %v1344 = vpop.f32.mrb[0].mxu0
        %v1345 = vadd.f32 0.0, %v1344
        %v1346 = vpop.f32.mrb[0].mxu0
        %1347 = vmatprep.mubr.bf16.mxu0 0
        %1348 = vmatmul.mubr.bf16.gmra.mrb[0].mxu0 %v927
        %v1349 = vpop.f32.mrb[0].mxu0
        %v1350 = vadd.f32 0.0, %v1349
        %v1351 = vpop.f32.mrb[0].mxu0
        %v1352 = vpop.f32.mrb[0].mxu0
        %v1353 = vadd.f32 0.0, %v1352
        %v1354 = vpop.f32.mrb[0].mxu0
        %1355 = vmatprep.mubr.bf16.mxu0 0
        %1356 = vmatmul.mubr.bf16.gmra.mrb[0].mxu0 %v928
        %v1357 = vpop.f32.mrb[0].mxu0
        %v1358 = vadd.f32 0.0, %v1357
        %v1359 = vpop.f32.mrb[0].mxu0
        %v1360 = vpop.f32.mrb[0].mxu0
        %v1361 = vadd.f32 0.0, %v1360
        %v1362 = vpop.f32.mrb[0].mxu0
        %1363 = vdwg.mxu0
        %1364 = vset.pattern.permute.xlu0 1
        %1365 = vperm.xlu0 %1364, %v843
        %v1366 = vpop.permute.xlu0 %1365
        %1368 = vset.pattern.permute.xlu0 1
        %1369 = vperm.xlu0 %1368, %v846
        %v1370 = vpop.permute.xlu0 %1369
        %1372 = vset.pattern.permute.xlu0 1
        %1373 = vperm.xlu0 %1372, %v851
        %v1374 = vpop.permute.xlu0 %1373
        %1376 = vset.pattern.permute.xlu0 1
        %1377 = vperm.xlu0 %1376, %v854
        %v1378 = vpop.permute.xlu0 %1377
        %1380 = vset.pattern.permute.xlu0 1
        %1381 = vperm.xlu0 %1380, %v859
        %v1382 = vpop.permute.xlu0 %1381
        %1384 = vset.pattern.permute.xlu0 1
        %1385 = vperm.xlu0 %1384, %v862
        %v1386 = vpop.permute.xlu0 %1385
        %1388 = vset.pattern.permute.xlu0 1
        %1389 = vperm.xlu0 %1388, %v867
        %v1390 = vpop.permute.xlu0 %1389
        %1392 = vset.pattern.permute.xlu0 1
        %1393 = vperm.xlu0 %1392, %v870
        %v1394 = vpop.permute.xlu0 %1393
        %1396 = vset.pattern.permute.xlu0 1
        %1397 = vperm.xlu0 %1396, %v875
        %v1398 = vpop.permute.xlu0 %1397
        %1400 = vset.pattern.permute.xlu0 1
        %1401 = vperm.xlu0 %1400, %v878
        %v1402 = vpop.permute.xlu0 %1401
        %1404 = vset.pattern.permute.xlu0 1
        %1405 = vperm.xlu0 %1404, %v883
        %v1406 = vpop.permute.xlu0 %1405
        %1408 = vset.pattern.permute.xlu0 1
        %1409 = vperm.xlu0 %1408, %v886
        %v1410 = vpop.permute.xlu0 %1409
        %1412 = vset.pattern.permute.xlu0 1
        %1413 = vperm.xlu0 %1412, %v891
        %v1414 = vpop.permute.xlu0 %1413
        %1416 = vset.pattern.permute.xlu0 1
        %1417 = vperm.xlu0 %1416, %v894
        %v1418 = vpop.permute.xlu0 %1417
        %1420 = vset.pattern.permute.xlu0 1
        %1421 = vperm.xlu0 %1420, %v899
        %v1422 = vpop.permute.xlu0 %1421
        %1424 = vset.pattern.permute.xlu0 1
        %1425 = vperm.xlu0 %1424, %v902
        %v1426 = vpop.permute.xlu0 %1425
        %v1428 = vmul.f32 %v1366, %v1302
        %v1429 = vmul.f32 %v1370, %v1305
        %v1430 = vmul.f32 %v1374, %v1310
        %v1431 = vmul.f32 %v1378, %v1313
        %v1432 = vmul.f32 %v1382, %v1318
        %v1433 = vmul.f32 %v1386, %v1321
        %v1434 = vmul.f32 %v1390, %v1326
        %v1435 = vmul.f32 %v1394, %v1329
        %v1436 = vmul.f32 %v1398, %v1334
        %v1437 = vmul.f32 %v1402, %v1337
        %v1438 = vmul.f32 %v1406, %v1342
        %v1439 = vmul.f32 %v1410, %v1345
        %v1440 = vmul.f32 %v1414, %v1350
        %v1441 = vmul.f32 %v1418, %v1353
        %v1442 = vmul.f32 %v1422, %v1358
        %v1443 = vmul.f32 %v1426, %v1361
        %v1444 = vadd.f32 %v1186, %v1428
        %v1445 = vadd.f32 %v1187, %v1429
        %v1446 = vadd.f32 %v1188, %v1430
        %v1447 = vadd.f32 %v1189, %v1431
        %v1448 = vadd.f32 %v1190, %v1432
        %v1449 = vadd.f32 %v1191, %v1433
        %v1450 = vadd.f32 %v1192, %v1434
        %v1451 = vadd.f32 %v1193, %v1435
        %v1452 = vadd.f32 %v1194, %v1436
        %v1453 = vadd.f32 %v1195, %v1437
        %v1454 = vadd.f32 %v1196, %v1438
        %v1455 = vadd.f32 %v1197, %v1439
        %v1456 = vadd.f32 %v1198, %v1440
        %v1457 = vadd.f32 %v1199, %v1441
        %v1458 = vadd.f32 %v1200, %v1442
        %v1459 = vadd.f32 %v1201, %v1443
        %s1460 = scalar_lea.vmem %s4, 128
        %v1461 = vld [vmem:[%s1460] sm:$0xf]
        %v1462 = vld [vmem:[%s1460 + $0x4] sm:$0xf]
        %v1463 = vld [vmem:[%s1460 + $0x8] sm:$0xf]
        %v1464 = vld [vmem:[%s1460 + $0xc] sm:$0xf]
        %v1465 = vld [vmem:[%s1460 + $0x10] sm:$0xf]
        %v1466 = vld [vmem:[%s1460 + $0x14] sm:$0xf]
        %v1467 = vld [vmem:[%s1460 + $0x18] sm:$0xf]
        %v1468 = vld [vmem:[%s1460 + $0x1c] sm:$0xf]
        %v1469 = vld [vmem:[%s1460 + $0x20] sm:$0xf]
        %v1470 = vld [vmem:[%s1460 + $0x24] sm:$0xf]
        %v1471 = vld [vmem:[%s1460 + $0x28] sm:$0xf]
        %v1472 = vld [vmem:[%s1460 + $0x2c] sm:$0xf]
        %v1473 = vld [vmem:[%s1460 + $0x30] sm:$0xf]
        %v1474 = vld [vmem:[%s1460 + $0x34] sm:$0xf]
        %v1475 = vld [vmem:[%s1460 + $0x38] sm:$0xf]
        %v1476 = vld [vmem:[%s1460 + $0x3c] sm:$0xf]
        %v1493 = vunpack.c.l.b16 %v1461
        %v1494 = vunpack.c.l.b16 %v1462
        %v1495 = vunpack.c.l.b16 %v1463
        %v1496 = vunpack.c.l.b16 %v1464
        %v1497 = vunpack.c.l.b16 %v1465
        %v1498 = vunpack.c.l.b16 %v1466
        %v1499 = vunpack.c.l.b16 %v1467
        %v1500 = vunpack.c.l.b16 %v1468
        %v1501 = vunpack.c.l.b16 %v1469
        %v1502 = vunpack.c.l.b16 %v1470
        %v1503 = vunpack.c.l.b16 %v1471
        %v1504 = vunpack.c.l.b16 %v1472
        %v1505 = vunpack.c.l.b16 %v1473
        %v1506 = vunpack.c.l.b16 %v1474
        %v1507 = vunpack.c.l.b16 %v1475
        %v1508 = vunpack.c.l.b16 %v1476
        %v1509 = vpack.c.b16 %v1494, %v1493
        %v1510 = vpack.c.b16 %v1496, %v1495
        %v1511 = vpack.c.b16 %v1498, %v1497
        %v1512 = vpack.c.b16 %v1500, %v1499
        %v1513 = vpack.c.b16 %v1502, %v1501
        %v1514 = vpack.c.b16 %v1504, %v1503
        %v1515 = vpack.c.b16 %v1506, %v1505
        %v1516 = vpack.c.b16 %v1508, %v1507
        %1525 = vmatprep.subr.bf16.mxu0 0
        %1526 = vmatpush1.bf16.msra.mxu0 %v1509
        %1527 = vmatprep.subr.bf16.mxu0 0
        %1528 = vmatpush1.bf16.msra.mxu0 %v1510
        %1529 = vmatprep.subr.bf16.mxu0 0
        %1530 = vmatpush1.bf16.msra.mxu0 %v1511
        %1531 = vmatprep.subr.bf16.mxu0 0
        %1532 = vmatpush1.bf16.msra.mxu0 %v1512
        %1533 = vmatprep.subr.bf16.mxu0 0
        %1534 = vmatpush1.bf16.msra.mxu0 %v1513
        %1535 = vmatprep.subr.bf16.mxu0 0
        %1536 = vmatpush1.bf16.msra.mxu0 %v1514
        %1537 = vmatprep.subr.bf16.mxu0 0
        %1538 = vmatpush1.bf16.msra.mxu0 %v1515
        %1539 = vmatprep.subr.bf16.mxu0 0
        %1540 = vmatpush1.bf16.msra.mxu0 %v1516
        %1541 = vmatprep.subr.bf16.mxu0 0
        %1542 = vmatpush1.bf16.msra.mxu0 0
        %1543 = vmatprep.subr.bf16.mxu0 0
        %1544 = vmatpush1.bf16.msra.mxu0 0
        %1545 = vmatprep.subr.bf16.mxu0 0
        %1546 = vmatpush1.bf16.msra.mxu0 0
        %1547 = vmatprep.subr.bf16.mxu0 0
        %1548 = vmatpush1.bf16.msra.mxu0 0
        %1549 = vmatprep.subr.bf16.mxu0 0
        %1550 = vmatpush1.bf16.msra.mxu0 0
        %1551 = vmatprep.subr.bf16.mxu0 0
        %1552 = vmatpush1.bf16.msra.mxu0 0
        %1553 = vmatprep.subr.bf16.mxu0 0
        %1554 = vmatpush1.bf16.msra.mxu0 0
        %1555 = vmatprep.subr.bf16.mxu0 0
        %1556 = vmatpush1.bf16.msra.mxu0 0
        %1557 = vmatprep.mubr.bf16.mxu0 0
        %1558 = vmatmul.mubr.bf16.gmra.mrb[0].mxu0 %v921
        %v1559 = vpop.f32.mrb[0].mxu0
        %v1560 = vadd.f32 0.0, %v1559
        %v1561 = vpop.f32.mrb[0].mxu0
        %v1562 = vpop.f32.mrb[0].mxu0
        %v1563 = vadd.f32 0.0, %v1562
        %v1564 = vpop.f32.mrb[0].mxu0
        %1565 = vmatprep.mubr.bf16.mxu0 0
        %1566 = vmatmul.mubr.bf16.gmra.mrb[0].mxu0 %v922
        %v1567 = vpop.f32.mrb[0].mxu0
        %v1568 = vadd.f32 0.0, %v1567
        %v1569 = vpop.f32.mrb[0].mxu0
        %v1570 = vpop.f32.mrb[0].mxu0
        %v1571 = vadd.f32 0.0, %v1570
        %v1572 = vpop.f32.mrb[0].mxu0
        %1573 = vmatprep.mubr.bf16.mxu0 0
        %1574 = vmatmul.mubr.bf16.gmra.mrb[0].mxu0 %v923
        %v1575 = vpop.f32.mrb[0].mxu0
        %v1576 = vadd.f32 0.0, %v1575
        %v1577 = vpop.f32.mrb[0].mxu0
        %v1578 = vpop.f32.mrb[0].mxu0
        %v1579 = vadd.f32 0.0, %v1578
        %v1580 = vpop.f32.mrb[0].mxu0
        %1581 = vmatprep.mubr.bf16.mxu0 0
        %1582 = vmatmul.mubr.bf16.gmra.mrb[0].mxu0 %v924
        %v1583 = vpop.f32.mrb[0].mxu0
        %v1584 = vadd.f32 0.0, %v1583
        %v1585 = vpop.f32.mrb[0].mxu0
        %v1586 = vpop.f32.mrb[0].mxu0
        %v1587 = vadd.f32 0.0, %v1586
        %v1588 = vpop.f32.mrb[0].mxu0
        %1589 = vmatprep.mubr.bf16.mxu0 0
        %1590 = vmatmul.mubr.bf16.gmra.mrb[0].mxu0 %v925
        %v1591 = vpop.f32.mrb[0].mxu0
        %v1592 = vadd.f32 0.0, %v1591
        %v1593 = vpop.f32.mrb[0].mxu0
        %v1594 = vpop.f32.mrb[0].mxu0
        %v1595 = vadd.f32 0.0, %v1594
        %v1596 = vpop.f32.mrb[0].mxu0
        %1597 = vmatprep.mubr.bf16.mxu0 0
        %1598 = vmatmul.mubr.bf16.gmra.mrb[0].mxu0 %v926
        %v1599 = vpop.f32.mrb[0].mxu0
        %v1600 = vadd.f32 0.0, %v1599
        %v1601 = vpop.f32.mrb[0].mxu0
        %v1602 = vpop.f32.mrb[0].mxu0
        %v1603 = vadd.f32 0.0, %v1602
        %v1604 = vpop.f32.mrb[0].mxu0
        %1605 = vmatprep.mubr.bf16.mxu0 0
        %1606 = vmatmul.mubr.bf16.gmra.mrb[0].mxu0 %v927
        %v1607 = vpop.f32.mrb[0].mxu0
        %v1608 = vadd.f32 0.0, %v1607
        %v1609 = vpop.f32.mrb[0].mxu0
        %v1610 = vpop.f32.mrb[0].mxu0
        %v1611 = vadd.f32 0.0, %v1610
        %v1612 = vpop.f32.mrb[0].mxu0
        %1613 = vmatprep.mubr.bf16.mxu0 0
        %1614 = vmatmul.mubr.bf16.gmra.mrb[0].mxu0 %v928
        %v1615 = vpop.f32.mrb[0].mxu0
        %v1616 = vadd.f32 0.0, %v1615
        %v1617 = vpop.f32.mrb[0].mxu0
        %v1618 = vpop.f32.mrb[0].mxu0
        %v1619 = vadd.f32 0.0, %v1618
        %v1620 = vpop.f32.mrb[0].mxu0
        %1621 = vdwg.mxu0
        %1622 = vset.pattern.permute.xlu0 2
        %1623 = vperm.xlu0 %1622, %v843
        %v1624 = vpop.permute.xlu0 %1623
        %1626 = vset.pattern.permute.xlu0 2
        %1627 = vperm.xlu0 %1626, %v846
        %v1628 = vpop.permute.xlu0 %1627
        %1630 = vset.pattern.permute.xlu0 2
        %1631 = vperm.xlu0 %1630, %v851
        %v1632 = vpop.permute.xlu0 %1631
        %1634 = vset.pattern.permute.xlu0 2
        %1635 = vperm.xlu0 %1634, %v854
        %v1636 = vpop.permute.xlu0 %1635
        %1638 = vset.pattern.permute.xlu0 2
        %1639 = vperm.xlu0 %1638, %v859
        %v1640 = vpop.permute.xlu0 %1639
        %1642 = vset.pattern.permute.xlu0 2
        %1643 = vperm.xlu0 %1642, %v862
        %v1644 = vpop.permute.xlu0 %1643
        %1646 = vset.pattern.permute.xlu0 2
        %1647 = vperm.xlu0 %1646, %v867
        %v1648 = vpop.permute.xlu0 %1647
        %1650 = vset.pattern.permute.xlu0 2
        %1651 = vperm.xlu0 %1650, %v870
        %v1652 = vpop.permute.xlu0 %1651
        %1654 = vset.pattern.permute.xlu0 2
        %1655 = vperm.xlu0 %1654, %v875
        %v1656 = vpop.permute.xlu0 %1655
        %1658 = vset.pattern.permute.xlu0 2
        %1659 = vperm.xlu0 %1658, %v878
        %v1660 = vpop.permute.xlu0 %1659
        %1662 = vset.pattern.permute.xlu0 2
        %1663 = vperm.xlu0 %1662, %v883
        %v1664 = vpop.permute.xlu0 %1663
        %1666 = vset.pattern.permute.xlu0 2
        %1667 = vperm.xlu0 %1666, %v886
        %v1668 = vpop.permute.xlu0 %1667
        %1670 = vset.pattern.permute.xlu0 2
        %1671 = vperm.xlu0 %1670, %v891
        %v1672 = vpop.permute.xlu0 %1671
        %1674 = vset.pattern.permute.xlu0 2
        %1675 = vperm.xlu0 %1674, %v894
        %v1676 = vpop.permute.xlu0 %1675
        %1678 = vset.pattern.permute.xlu0 2
        %1679 = vperm.xlu0 %1678, %v899
        %v1680 = vpop.permute.xlu0 %1679
        %1682 = vset.pattern.permute.xlu0 2
        %1683 = vperm.xlu0 %1682, %v902
        %v1684 = vpop.permute.xlu0 %1683
        %v1686 = vmul.f32 %v1624, %v1560
        %v1687 = vmul.f32 %v1628, %v1563
        %v1688 = vmul.f32 %v1632, %v1568
        %v1689 = vmul.f32 %v1636, %v1571
        %v1690 = vmul.f32 %v1640, %v1576
        %v1691 = vmul.f32 %v1644, %v1579
        %v1692 = vmul.f32 %v1648, %v1584
        %v1693 = vmul.f32 %v1652, %v1587
        %v1694 = vmul.f32 %v1656, %v1592
        %v1695 = vmul.f32 %v1660, %v1595
        %v1696 = vmul.f32 %v1664, %v1600
        %v1697 = vmul.f32 %v1668, %v1603
        %v1698 = vmul.f32 %v1672, %v1608
        %v1699 = vmul.f32 %v1676, %v1611
        %v1700 = vmul.f32 %v1680, %v1616
        %v1701 = vmul.f32 %v1684, %v1619
        %v1702 = vadd.f32 %v1444, %v1686
        %v1703 = vadd.f32 %v1445, %v1687
        %v1704 = vadd.f32 %v1446, %v1688
        %v1705 = vadd.f32 %v1447, %v1689
        %v1706 = vadd.f32 %v1448, %v1690
        %v1707 = vadd.f32 %v1449, %v1691
        %v1708 = vadd.f32 %v1450, %v1692
        %v1709 = vadd.f32 %v1451, %v1693
        %v1710 = vadd.f32 %v1452, %v1694
        %v1711 = vadd.f32 %v1453, %v1695
        %v1712 = vadd.f32 %v1454, %v1696
        %v1713 = vadd.f32 %v1455, %v1697
        %v1714 = vadd.f32 %v1456, %v1698
        %v1715 = vadd.f32 %v1457, %v1699
        %v1716 = vadd.f32 %v1458, %v1700
        %v1717 = vadd.f32 %v1459, %v1701
        %s1718 = scalar_lea.vmem %s4, 192
        %v1719 = vld [vmem:[%s1718] sm:$0xf]
        %v1720 = vld [vmem:[%s1718 + $0x4] sm:$0xf]
        %v1721 = vld [vmem:[%s1718 + $0x8] sm:$0xf]
        %v1722 = vld [vmem:[%s1718 + $0xc] sm:$0xf]
        %v1723 = vld [vmem:[%s1718 + $0x10] sm:$0xf]
        %v1724 = vld [vmem:[%s1718 + $0x14] sm:$0xf]
        %v1725 = vld [vmem:[%s1718 + $0x18] sm:$0xf]
        %v1726 = vld [vmem:[%s1718 + $0x1c] sm:$0xf]
        %v1727 = vld [vmem:[%s1718 + $0x20] sm:$0xf]
        %v1728 = vld [vmem:[%s1718 + $0x24] sm:$0xf]
        %v1729 = vld [vmem:[%s1718 + $0x28] sm:$0xf]
        %v1730 = vld [vmem:[%s1718 + $0x2c] sm:$0xf]
        %v1731 = vld [vmem:[%s1718 + $0x30] sm:$0xf]
        %v1732 = vld [vmem:[%s1718 + $0x34] sm:$0xf]
        %v1733 = vld [vmem:[%s1718 + $0x38] sm:$0xf]
        %v1734 = vld [vmem:[%s1718 + $0x3c] sm:$0xf]
        %v1751 = vunpack.c.l.b16 %v1719
        %v1752 = vunpack.c.l.b16 %v1720
        %v1753 = vunpack.c.l.b16 %v1721
        %v1754 = vunpack.c.l.b16 %v1722
        %v1755 = vunpack.c.l.b16 %v1723
        %v1756 = vunpack.c.l.b16 %v1724
        %v1757 = vunpack.c.l.b16 %v1725
        %v1758 = vunpack.c.l.b16 %v1726
        %v1759 = vunpack.c.l.b16 %v1727
        %v1760 = vunpack.c.l.b16 %v1728
        %v1761 = vunpack.c.l.b16 %v1729
        %v1762 = vunpack.c.l.b16 %v1730
        %v1763 = vunpack.c.l.b16 %v1731
        %v1764 = vunpack.c.l.b16 %v1732
        %v1765 = vunpack.c.l.b16 %v1733
        %v1766 = vunpack.c.l.b16 %v1734
        %v1767 = vpack.c.b16 %v1752, %v1751
        %v1768 = vpack.c.b16 %v1754, %v1753
        %v1769 = vpack.c.b16 %v1756, %v1755
        %v1770 = vpack.c.b16 %v1758, %v1757
        %v1771 = vpack.c.b16 %v1760, %v1759
        %v1772 = vpack.c.b16 %v1762, %v1761
        %v1773 = vpack.c.b16 %v1764, %v1763
        %v1774 = vpack.c.b16 %v1766, %v1765
        %1783 = vmatprep.subr.bf16.mxu0 0
        %1784 = vmatpush1.bf16.msra.mxu0 %v1767
        %1785 = vmatprep.subr.bf16.mxu0 0
        %1786 = vmatpush1.bf16.msra.mxu0 %v1768
        %1787 = vmatprep.subr.bf16.mxu0 0
        %1788 = vmatpush1.bf16.msra.mxu0 %v1769
        %1789 = vmatprep.subr.bf16.mxu0 0
        %1790 = vmatpush1.bf16.msra.mxu0 %v1770
        %1791 = vmatprep.subr.bf16.mxu0 0
        %1792 = vmatpush1.bf16.msra.mxu0 %v1771
        %1793 = vmatprep.subr.bf16.mxu0 0
        %1794 = vmatpush1.bf16.msra.mxu0 %v1772
        %1795 = vmatprep.subr.bf16.mxu0 0
        %1796 = vmatpush1.bf16.msra.mxu0 %v1773
        %1797 = vmatprep.subr.bf16.mxu0 0
        %1798 = vmatpush1.bf16.msra.mxu0 %v1774
        %1799 = vmatprep.subr.bf16.mxu0 0
        %1800 = vmatpush1.bf16.msra.mxu0 0
        %1801 = vmatprep.subr.bf16.mxu0 0
        %1802 = vmatpush1.bf16.msra.mxu0 0
        %1803 = vmatprep.subr.bf16.mxu0 0
        %1804 = vmatpush1.bf16.msra.mxu0 0
        %1805 = vmatprep.subr.bf16.mxu0 0
        %1806 = vmatpush1.bf16.msra.mxu0 0
        %1807 = vmatprep.subr.bf16.mxu0 0
        %1808 = vmatpush1.bf16.msra.mxu0 0
        %1809 = vmatprep.subr.bf16.mxu0 0
        %1810 = vmatpush1.bf16.msra.mxu0 0
        %1811 = vmatprep.subr.bf16.mxu0 0
        %1812 = vmatpush1.bf16.msra.mxu0 0
        %1813 = vmatprep.subr.bf16.mxu0 0
        %1814 = vmatpush1.bf16.msra.mxu0 0
        %1815 = vmatprep.mubr.bf16.mxu0 0
        %1816 = vmatmul.mubr.bf16.gmra.mrb[0].mxu0 %v921
        %v1817 = vpop.f32.mrb[0].mxu0
        %v1818 = vadd.f32 0.0, %v1817
        %v1819 = vpop.f32.mrb[0].mxu0
        %v1820 = vpop.f32.mrb[0].mxu0
        %v1821 = vadd.f32 0.0, %v1820
        %v1822 = vpop.f32.mrb[0].mxu0
        %1823 = vmatprep.mubr.bf16.mxu0 0
        %1824 = vmatmul.mubr.bf16.gmra.mrb[0].mxu0 %v922
        %v1825 = vpop.f32.mrb[0].mxu0
        %v1826 = vadd.f32 0.0, %v1825
        %v1827 = vpop.f32.mrb[0].mxu0
        %v1828 = vpop.f32.mrb[0].mxu0
        %v1829 = vadd.f32 0.0, %v1828
        %v1830 = vpop.f32.mrb[0].mxu0
        %1831 = vmatprep.mubr.bf16.mxu0 0
        %1832 = vmatmul.mubr.bf16.gmra.mrb[0].mxu0 %v923
        %v1833 = vpop.f32.mrb[0].mxu0
        %v1834 = vadd.f32 0.0, %v1833
        %v1835 = vpop.f32.mrb[0].mxu0
        %v1836 = vpop.f32.mrb[0].mxu0
        %v1837 = vadd.f32 0.0, %v1836
        %v1838 = vpop.f32.mrb[0].mxu0
        %1839 = vmatprep.mubr.bf16.mxu0 0
        %1840 = vmatmul.mubr.bf16.gmra.mrb[0].mxu0 %v924
        %v1841 = vpop.f32.mrb[0].mxu0
        %v1842 = vadd.f32 0.0, %v1841
        %v1843 = vpop.f32.mrb[0].mxu0
        %v1844 = vpop.f32.mrb[0].mxu0
        %v1845 = vadd.f32 0.0, %v1844
        %v1846 = vpop.f32.mrb[0].mxu0
        %1847 = vmatprep.mubr.bf16.mxu0 0
        %1848 = vmatmul.mubr.bf16.gmra.mrb[0].mxu0 %v925
        %v1849 = vpop.f32.mrb[0].mxu0
        %v1850 = vadd.f32 0.0, %v1849
        %v1851 = vpop.f32.mrb[0].mxu0
        %v1852 = vpop.f32.mrb[0].mxu0
        %v1853 = vadd.f32 0.0, %v1852
        %v1854 = vpop.f32.mrb[0].mxu0
        %1855 = vmatprep.mubr.bf16.mxu0 0
        %1856 = vmatmul.mubr.bf16.gmra.mrb[0].mxu0 %v926
        %v1857 = vpop.f32.mrb[0].mxu0
        %v1858 = vadd.f32 0.0, %v1857
        %v1859 = vpop.f32.mrb[0].mxu0
        %v1860 = vpop.f32.mrb[0].mxu0
        %v1861 = vadd.f32 0.0, %v1860
        %v1862 = vpop.f32.mrb[0].mxu0
        %1863 = vmatprep.mubr.bf16.mxu0 0
        %1864 = vmatmul.mubr.bf16.gmra.mrb[0].mxu0 %v927
        %v1865 = vpop.f32.mrb[0].mxu0
        %v1866 = vadd.f32 0.0, %v1865
        %v1867 = vpop.f32.mrb[0].mxu0
        %v1868 = vpop.f32.mrb[0].mxu0
        %v1869 = vadd.f32 0.0, %v1868
        %v1870 = vpop.f32.mrb[0].mxu0
        %1871 = vmatprep.mubr.bf16.mxu0 0
        %1872 = vmatmul.mubr.bf16.gmra.mrb[0].mxu0 %v928
        %v1873 = vpop.f32.mrb[0].mxu0
        %v1874 = vadd.f32 0.0, %v1873
        %v1875 = vpop.f32.mrb[0].mxu0
        %v1876 = vpop.f32.mrb[0].mxu0
        %v1877 = vadd.f32 0.0, %v1876
        %v1878 = vpop.f32.mrb[0].mxu0
        %1879 = vdwg.mxu0
        %1880 = vset.pattern.permute.xlu0 3
        %1881 = vperm.xlu0 %1880, %v843
        %v1882 = vpop.permute.xlu0 %1881
        %1884 = vset.pattern.permute.xlu0 3
        %1885 = vperm.xlu0 %1884, %v846
        %v1886 = vpop.permute.xlu0 %1885
        %1888 = vset.pattern.permute.xlu0 3
        %1889 = vperm.xlu0 %1888, %v851
        %v1890 = vpop.permute.xlu0 %1889
        %1892 = vset.pattern.permute.xlu0 3
        %1893 = vperm.xlu0 %1892, %v854
        %v1894 = vpop.permute.xlu0 %1893
        %1896 = vset.pattern.permute.xlu0 3
        %1897 = vperm.xlu0 %1896, %v859
        %v1898 = vpop.permute.xlu0 %1897
        %1900 = vset.pattern.permute.xlu0 3
        %1901 = vperm.xlu0 %1900, %v862
        %v1902 = vpop.permute.xlu0 %1901
        %1904 = vset.pattern.permute.xlu0 3
        %1905 = vperm.xlu0 %1904, %v867
        %v1906 = vpop.permute.xlu0 %1905
        %1908 = vset.pattern.permute.xlu0 3
        %1909 = vperm.xlu0 %1908, %v870
        %v1910 = vpop.permute.xlu0 %1909
        %1912 = vset.pattern.permute.xlu0 3
        %1913 = vperm.xlu0 %1912, %v875
        %v1914 = vpop.permute.xlu0 %1913
        %1916 = vset.pattern.permute.xlu0 3
        %1917 = vperm.xlu0 %1916, %v878
        %v1918 = vpop.permute.xlu0 %1917
        %1920 = vset.pattern.permute.xlu0 3
        %1921 = vperm.xlu0 %1920, %v883
        %v1922 = vpop.permute.xlu0 %1921
        %1924 = vset.pattern.permute.xlu0 3
        %1925 = vperm.xlu0 %1924, %v886
        %v1926 = vpop.permute.xlu0 %1925
        %1928 = vset.pattern.permute.xlu0 3
        %1929 = vperm.xlu0 %1928, %v891
        %v1930 = vpop.permute.xlu0 %1929
        %1932 = vset.pattern.permute.xlu0 3
        %1933 = vperm.xlu0 %1932, %v894
        %v1934 = vpop.permute.xlu0 %1933
        %1936 = vset.pattern.permute.xlu0 3
        %1937 = vperm.xlu0 %1936, %v899
        %v1938 = vpop.permute.xlu0 %1937
        %1940 = vset.pattern.permute.xlu0 3
        %1941 = vperm.xlu0 %1940, %v902
        %v1942 = vpop.permute.xlu0 %1941
        %v1944 = vmul.f32 %v1882, %v1818
        %v1945 = vmul.f32 %v1886, %v1821
        %v1946 = vmul.f32 %v1890, %v1826
        %v1947 = vmul.f32 %v1894, %v1829
        %v1948 = vmul.f32 %v1898, %v1834
        %v1949 = vmul.f32 %v1902, %v1837
        %v1950 = vmul.f32 %v1906, %v1842
        %v1951 = vmul.f32 %v1910, %v1845
        %v1952 = vmul.f32 %v1914, %v1850
        %v1953 = vmul.f32 %v1918, %v1853
        %v1954 = vmul.f32 %v1922, %v1858
        %v1955 = vmul.f32 %v1926, %v1861
        %v1956 = vmul.f32 %v1930, %v1866
        %v1957 = vmul.f32 %v1934, %v1869
        %v1958 = vmul.f32 %v1938, %v1874
        %v1959 = vmul.f32 %v1942, %v1877
        %v1960 = vadd.f32 %v1702, %v1944
        %v1961 = vadd.f32 %v1703, %v1945
        %v1962 = vadd.f32 %v1704, %v1946
        %v1963 = vadd.f32 %v1705, %v1947
        %v1964 = vadd.f32 %v1706, %v1948
        %v1965 = vadd.f32 %v1707, %v1949
        %v1966 = vadd.f32 %v1708, %v1950
        %v1967 = vadd.f32 %v1709, %v1951
        %v1968 = vadd.f32 %v1710, %v1952
        %v1969 = vadd.f32 %v1711, %v1953
        %v1970 = vadd.f32 %v1712, %v1954
        %v1971 = vadd.f32 %v1713, %v1955
        %v1972 = vadd.f32 %v1714, %v1956
        %v1973 = vadd.f32 %v1715, %v1957
        %v1974 = vadd.f32 %v1716, %v1958
        %v1975 = vadd.f32 %v1717, %v1959
        %s1976 = scalar_lea.vmem %s4, 256
        %v1977 = vld [vmem:[%s1976] sm:$0xf]
        %v1978 = vld [vmem:[%s1976 + $0x4] sm:$0xf]
        %v1979 = vld [vmem:[%s1976 + $0x8] sm:$0xf]
        %v1980 = vld [vmem:[%s1976 + $0xc] sm:$0xf]
        %v1981 = vld [vmem:[%s1976 + $0x10] sm:$0xf]
        %v1982 = vld [vmem:[%s1976 + $0x14] sm:$0xf]
        %v1983 = vld [vmem:[%s1976 + $0x18] sm:$0xf]
        %v1984 = vld [vmem:[%s1976 + $0x1c] sm:$0xf]
        %v1985 = vld [vmem:[%s1976 + $0x20] sm:$0xf]
        %v1986 = vld [vmem:[%s1976 + $0x24] sm:$0xf]
        %v1987 = vld [vmem:[%s1976 + $0x28] sm:$0xf]
        %v1988 = vld [vmem:[%s1976 + $0x2c] sm:$0xf]
        %v1989 = vld [vmem:[%s1976 + $0x30] sm:$0xf]
        %v1990 = vld [vmem:[%s1976 + $0x34] sm:$0xf]
        %v1991 = vld [vmem:[%s1976 + $0x38] sm:$0xf]
        %v1992 = vld [vmem:[%s1976 + $0x3c] sm:$0xf]
        %v2009 = vunpack.c.l.b16 %v1977
        %v2010 = vunpack.c.l.b16 %v1978
        %v2011 = vunpack.c.l.b16 %v1979
        %v2012 = vunpack.c.l.b16 %v1980
        %v2013 = vunpack.c.l.b16 %v1981
        %v2014 = vunpack.c.l.b16 %v1982
        %v2015 = vunpack.c.l.b16 %v1983
        %v2016 = vunpack.c.l.b16 %v1984
        %v2017 = vunpack.c.l.b16 %v1985
        %v2018 = vunpack.c.l.b16 %v1986
        %v2019 = vunpack.c.l.b16 %v1987
        %v2020 = vunpack.c.l.b16 %v1988
        %v2021 = vunpack.c.l.b16 %v1989
        %v2022 = vunpack.c.l.b16 %v1990
        %v2023 = vunpack.c.l.b16 %v1991
        %v2024 = vunpack.c.l.b16 %v1992
        %v2025 = vpack.c.b16 %v2010, %v2009
        %v2026 = vpack.c.b16 %v2012, %v2011
        %v2027 = vpack.c.b16 %v2014, %v2013
        %v2028 = vpack.c.b16 %v2016, %v2015
        %v2029 = vpack.c.b16 %v2018, %v2017
        %v2030 = vpack.c.b16 %v2020, %v2019
        %v2031 = vpack.c.b16 %v2022, %v2021
        %v2032 = vpack.c.b16 %v2024, %v2023
        %2041 = vmatprep.subr.bf16.mxu0 0
        %2042 = vmatpush1.bf16.msra.mxu0 %v2025
        %2043 = vmatprep.subr.bf16.mxu0 0
        %2044 = vmatpush1.bf16.msra.mxu0 %v2026
        %2045 = vmatprep.subr.bf16.mxu0 0
        %2046 = vmatpush1.bf16.msra.mxu0 %v2027
        %2047 = vmatprep.subr.bf16.mxu0 0
        %2048 = vmatpush1.bf16.msra.mxu0 %v2028
        %2049 = vmatprep.subr.bf16.mxu0 0
        %2050 = vmatpush1.bf16.msra.mxu0 %v2029
        %2051 = vmatprep.subr.bf16.mxu0 0
        %2052 = vmatpush1.bf16.msra.mxu0 %v2030
        %2053 = vmatprep.subr.bf16.mxu0 0
        %2054 = vmatpush1.bf16.msra.mxu0 %v2031
        %2055 = vmatprep.subr.bf16.mxu0 0
        %2056 = vmatpush1.bf16.msra.mxu0 %v2032
        %2057 = vmatprep.subr.bf16.mxu0 0
        %2058 = vmatpush1.bf16.msra.mxu0 0
        %2059 = vmatprep.subr.bf16.mxu0 0
        %2060 = vmatpush1.bf16.msra.mxu0 0
        %2061 = vmatprep.subr.bf16.mxu0 0
        %2062 = vmatpush1.bf16.msra.mxu0 0
        %2063 = vmatprep.subr.bf16.mxu0 0
        %2064 = vmatpush1.bf16.msra.mxu0 0
        %2065 = vmatprep.subr.bf16.mxu0 0
        %2066 = vmatpush1.bf16.msra.mxu0 0
        %2067 = vmatprep.subr.bf16.mxu0 0
        %2068 = vmatpush1.bf16.msra.mxu0 0
        %2069 = vmatprep.subr.bf16.mxu0 0
        %2070 = vmatpush1.bf16.msra.mxu0 0
        %2071 = vmatprep.subr.bf16.mxu0 0
        %2072 = vmatpush1.bf16.msra.mxu0 0
        %2073 = vmatprep.mubr.bf16.mxu0 0
        %2074 = vmatmul.mubr.bf16.gmra.mrb[0].mxu0 %v921
        %v2075 = vpop.f32.mrb[0].mxu0
        %v2076 = vadd.f32 0.0, %v2075
        %v2077 = vpop.f32.mrb[0].mxu0
        %v2078 = vpop.f32.mrb[0].mxu0
        %v2079 = vadd.f32 0.0, %v2078
        %v2080 = vpop.f32.mrb[0].mxu0
        %2081 = vmatprep.mubr.bf16.mxu0 0
        %2082 = vmatmul.mubr.bf16.gmra.mrb[0].mxu0 %v922
        %v2083 = vpop.f32.mrb[0].mxu0
        %v2084 = vadd.f32 0.0, %v2083
        %v2085 = vpop.f32.mrb[0].mxu0
        %v2086 = vpop.f32.mrb[0].mxu0
        %v2087 = vadd.f32 0.0, %v2086
        %v2088 = vpop.f32.mrb[0].mxu0
        %2089 = vmatprep.mubr.bf16.mxu0 0
        %2090 = vmatmul.mubr.bf16.gmra.mrb[0].mxu0 %v923
        %v2091 = vpop.f32.mrb[0].mxu0
        %v2092 = vadd.f32 0.0, %v2091
        %v2093 = vpop.f32.mrb[0].mxu0
        %v2094 = vpop.f32.mrb[0].mxu0
        %v2095 = vadd.f32 0.0, %v2094
        %v2096 = vpop.f32.mrb[0].mxu0
        %2097 = vmatprep.mubr.bf16.mxu0 0
        %2098 = vmatmul.mubr.bf16.gmra.mrb[0].mxu0 %v924
        %v2099 = vpop.f32.mrb[0].mxu0
        %v2100 = vadd.f32 0.0, %v2099
        %v2101 = vpop.f32.mrb[0].mxu0
        %v2102 = vpop.f32.mrb[0].mxu0
        %v2103 = vadd.f32 0.0, %v2102
        %v2104 = vpop.f32.mrb[0].mxu0
        %2105 = vmatprep.mubr.bf16.mxu0 0
        %2106 = vmatmul.mubr.bf16.gmra.mrb[0].mxu0 %v925
        %v2107 = vpop.f32.mrb[0].mxu0
        %v2108 = vadd.f32 0.0, %v2107
        %v2109 = vpop.f32.mrb[0].mxu0
        %v2110 = vpop.f32.mrb[0].mxu0
        %v2111 = vadd.f32 0.0, %v2110
        %v2112 = vpop.f32.mrb[0].mxu0
        %2113 = vmatprep.mubr.bf16.mxu0 0
        %2114 = vmatmul.mubr.bf16.gmra.mrb[0].mxu0 %v926
        %v2115 = vpop.f32.mrb[0].mxu0
        %v2116 = vadd.f32 0.0, %v2115
        %v2117 = vpop.f32.mrb[0].mxu0
        %v2118 = vpop.f32.mrb[0].mxu0
        %v2119 = vadd.f32 0.0, %v2118
        %v2120 = vpop.f32.mrb[0].mxu0
        %2121 = vmatprep.mubr.bf16.mxu0 0
        %2122 = vmatmul.mubr.bf16.gmra.mrb[0].mxu0 %v927
        %v2123 = vpop.f32.mrb[0].mxu0
        %v2124 = vadd.f32 0.0, %v2123
        %v2125 = vpop.f32.mrb[0].mxu0
        %v2126 = vpop.f32.mrb[0].mxu0
        %v2127 = vadd.f32 0.0, %v2126
        %v2128 = vpop.f32.mrb[0].mxu0
        %2129 = vmatprep.mubr.bf16.mxu0 0
        %2130 = vmatmul.mubr.bf16.gmra.mrb[0].mxu0 %v928
        %v2131 = vpop.f32.mrb[0].mxu0
        %v2132 = vadd.f32 0.0, %v2131
        %v2133 = vpop.f32.mrb[0].mxu0
        %v2134 = vpop.f32.mrb[0].mxu0
        %v2135 = vadd.f32 0.0, %v2134
        %v2136 = vpop.f32.mrb[0].mxu0
        %2137 = vdwg.mxu0
        %2138 = vset.pattern.permute.xlu0 4
        %2139 = vperm.xlu0 %2138, %v843
        %v2140 = vpop.permute.xlu0 %2139
        %2142 = vset.pattern.permute.xlu0 4
        %2143 = vperm.xlu0 %2142, %v846
        %v2144 = vpop.permute.xlu0 %2143
        %2146 = vset.pattern.permute.xlu0 4
        %2147 = vperm.xlu0 %2146, %v851
        %v2148 = vpop.permute.xlu0 %2147
        %2150 = vset.pattern.permute.xlu0 4
        %2151 = vperm.xlu0 %2150, %v854
        %v2152 = vpop.permute.xlu0 %2151
        %2154 = vset.pattern.permute.xlu0 4
        %2155 = vperm.xlu0 %2154, %v859
        %v2156 = vpop.permute.xlu0 %2155
        %2158 = vset.pattern.permute.xlu0 4
        %2159 = vperm.xlu0 %2158, %v862
        %v2160 = vpop.permute.xlu0 %2159
        %2162 = vset.pattern.permute.xlu0 4
        %2163 = vperm.xlu0 %2162, %v867
        %v2164 = vpop.permute.xlu0 %2163
        %2166 = vset.pattern.permute.xlu0 4
        %2167 = vperm.xlu0 %2166, %v870
        %v2168 = vpop.permute.xlu0 %2167
        %2170 = vset.pattern.permute.xlu0 4
        %2171 = vperm.xlu0 %2170, %v875
        %v2172 = vpop.permute.xlu0 %2171
        %2174 = vset.pattern.permute.xlu0 4
        %2175 = vperm.xlu0 %2174, %v878
        %v2176 = vpop.permute.xlu0 %2175
        %2178 = vset.pattern.permute.xlu0 4
        %2179 = vperm.xlu0 %2178, %v883
        %v2180 = vpop.permute.xlu0 %2179
        %2182 = vset.pattern.permute.xlu0 4
        %2183 = vperm.xlu0 %2182, %v886
        %v2184 = vpop.permute.xlu0 %2183
        %2186 = vset.pattern.permute.xlu0 4
        %2187 = vperm.xlu0 %2186, %v891
        %v2188 = vpop.permute.xlu0 %2187
        %2190 = vset.pattern.permute.xlu0 4
        %2191 = vperm.xlu0 %2190, %v894
        %v2192 = vpop.permute.xlu0 %2191
        %2194 = vset.pattern.permute.xlu0 4
        %2195 = vperm.xlu0 %2194, %v899
        %v2196 = vpop.permute.xlu0 %2195
        %2198 = vset.pattern.permute.xlu0 4
        %2199 = vperm.xlu0 %2198, %v902
        %v2200 = vpop.permute.xlu0 %2199
        %v2202 = vmul.f32 %v2140, %v2076
        %v2203 = vmul.f32 %v2144, %v2079
        %v2204 = vmul.f32 %v2148, %v2084
        %v2205 = vmul.f32 %v2152, %v2087
        %v2206 = vmul.f32 %v2156, %v2092
        %v2207 = vmul.f32 %v2160, %v2095
        %v2208 = vmul.f32 %v2164, %v2100
        %v2209 = vmul.f32 %v2168, %v2103
        %v2210 = vmul.f32 %v2172, %v2108
        %v2211 = vmul.f32 %v2176, %v2111
        %v2212 = vmul.f32 %v2180, %v2116
        %v2213 = vmul.f32 %v2184, %v2119
        %v2214 = vmul.f32 %v2188, %v2124
        %v2215 = vmul.f32 %v2192, %v2127
        %v2216 = vmul.f32 %v2196, %v2132
        %v2217 = vmul.f32 %v2200, %v2135
        %v2218 = vadd.f32 %v1960, %v2202
        %v2219 = vadd.f32 %v1961, %v2203
        %v2220 = vadd.f32 %v1962, %v2204
        %v2221 = vadd.f32 %v1963, %v2205
        %v2222 = vadd.f32 %v1964, %v2206
        %v2223 = vadd.f32 %v1965, %v2207
        %v2224 = vadd.f32 %v1966, %v2208
        %v2225 = vadd.f32 %v1967, %v2209
        %v2226 = vadd.f32 %v1968, %v2210
        %v2227 = vadd.f32 %v1969, %v2211
        %v2228 = vadd.f32 %v1970, %v2212
        %v2229 = vadd.f32 %v1971, %v2213
        %v2230 = vadd.f32 %v1972, %v2214
        %v2231 = vadd.f32 %v1973, %v2215
        %v2232 = vadd.f32 %v1974, %v2216
        %v2233 = vadd.f32 %v1975, %v2217
        %s2234 = scalar_lea.vmem %s4, 320
        %v2235 = vld [vmem:[%s2234] sm:$0xf]
        %v2236 = vld [vmem:[%s2234 + $0x4] sm:$0xf]
        %v2237 = vld [vmem:[%s2234 + $0x8] sm:$0xf]
        %v2238 = vld [vmem:[%s2234 + $0xc] sm:$0xf]
        %v2239 = vld [vmem:[%s2234 + $0x10] sm:$0xf]
        %v2240 = vld [vmem:[%s2234 + $0x14] sm:$0xf]
        %v2241 = vld [vmem:[%s2234 + $0x18] sm:$0xf]
        %v2242 = vld [vmem:[%s2234 + $0x1c] sm:$0xf]
        %v2243 = vld [vmem:[%s2234 + $0x20] sm:$0xf]
        %v2244 = vld [vmem:[%s2234 + $0x24] sm:$0xf]
        %v2245 = vld [vmem:[%s2234 + $0x28] sm:$0xf]
        %v2246 = vld [vmem:[%s2234 + $0x2c] sm:$0xf]
        %v2247 = vld [vmem:[%s2234 + $0x30] sm:$0xf]
        %v2248 = vld [vmem:[%s2234 + $0x34] sm:$0xf]
        %v2249 = vld [vmem:[%s2234 + $0x38] sm:$0xf]
        %v2250 = vld [vmem:[%s2234 + $0x3c] sm:$0xf]
        %v2267 = vunpack.c.l.b16 %v2235
        %v2268 = vunpack.c.l.b16 %v2236
        %v2269 = vunpack.c.l.b16 %v2237
        %v2270 = vunpack.c.l.b16 %v2238
        %v2271 = vunpack.c.l.b16 %v2239
        %v2272 = vunpack.c.l.b16 %v2240
        %v2273 = vunpack.c.l.b16 %v2241
        %v2274 = vunpack.c.l.b16 %v2242
        %v2275 = vunpack.c.l.b16 %v2243
        %v2276 = vunpack.c.l.b16 %v2244
        %v2277 = vunpack.c.l.b16 %v2245
        %v2278 = vunpack.c.l.b16 %v2246
        %v2279 = vunpack.c.l.b16 %v2247
        %v2280 = vunpack.c.l.b16 %v2248
        %v2281 = vunpack.c.l.b16 %v2249
        %v2282 = vunpack.c.l.b16 %v2250
        %v2283 = vpack.c.b16 %v2268, %v2267
        %v2284 = vpack.c.b16 %v2270, %v2269
        %v2285 = vpack.c.b16 %v2272, %v2271
        %v2286 = vpack.c.b16 %v2274, %v2273
        %v2287 = vpack.c.b16 %v2276, %v2275
        %v2288 = vpack.c.b16 %v2278, %v2277
        %v2289 = vpack.c.b16 %v2280, %v2279
        %v2290 = vpack.c.b16 %v2282, %v2281
        %2299 = vmatprep.subr.bf16.mxu0 0
        %2300 = vmatpush1.bf16.msra.mxu0 %v2283
        %2301 = vmatprep.subr.bf16.mxu0 0
        %2302 = vmatpush1.bf16.msra.mxu0 %v2284
        %2303 = vmatprep.subr.bf16.mxu0 0
        %2304 = vmatpush1.bf16.msra.mxu0 %v2285
        %2305 = vmatprep.subr.bf16.mxu0 0
        %2306 = vmatpush1.bf16.msra.mxu0 %v2286
        %2307 = vmatprep.subr.bf16.mxu0 0
        %2308 = vmatpush1.bf16.msra.mxu0 %v2287
        %2309 = vmatprep.subr.bf16.mxu0 0
        %2310 = vmatpush1.bf16.msra.mxu0 %v2288
        %2311 = vmatprep.subr.bf16.mxu0 0
        %2312 = vmatpush1.bf16.msra.mxu0 %v2289
        %2313 = vmatprep.subr.bf16.mxu0 0
        %2314 = vmatpush1.bf16.msra.mxu0 %v2290
        %2315 = vmatprep.subr.bf16.mxu0 0
        %2316 = vmatpush1.bf16.msra.mxu0 0
        %2317 = vmatprep.subr.bf16.mxu0 0
        %2318 = vmatpush1.bf16.msra.mxu0 0
        %2319 = vmatprep.subr.bf16.mxu0 0
        %2320 = vmatpush1.bf16.msra.mxu0 0
        %2321 = vmatprep.subr.bf16.mxu0 0
        %2322 = vmatpush1.bf16.msra.mxu0 0
        %2323 = vmatprep.subr.bf16.mxu0 0
        %2324 = vmatpush1.bf16.msra.mxu0 0
        %2325 = vmatprep.subr.bf16.mxu0 0
        %2326 = vmatpush1.bf16.msra.mxu0 0
        %2327 = vmatprep.subr.bf16.mxu0 0
        %2328 = vmatpush1.bf16.msra.mxu0 0
        %2329 = vmatprep.subr.bf16.mxu0 0
        %2330 = vmatpush1.bf16.msra.mxu0 0
        %2331 = vmatprep.mubr.bf16.mxu0 0
        %2332 = vmatmul.mubr.bf16.gmra.mrb[0].mxu0 %v921
        %v2333 = vpop.f32.mrb[0].mxu0
        %v2334 = vadd.f32 0.0, %v2333
        %v2335 = vpop.f32.mrb[0].mxu0
        %v2336 = vpop.f32.mrb[0].mxu0
        %v2337 = vadd.f32 0.0, %v2336
        %v2338 = vpop.f32.mrb[0].mxu0
        %2339 = vmatprep.mubr.bf16.mxu0 0
        %2340 = vmatmul.mubr.bf16.gmra.mrb[0].mxu0 %v922
        %v2341 = vpop.f32.mrb[0].mxu0
        %v2342 = vadd.f32 0.0, %v2341
        %v2343 = vpop.f32.mrb[0].mxu0
        %v2344 = vpop.f32.mrb[0].mxu0
        %v2345 = vadd.f32 0.0, %v2344
        %v2346 = vpop.f32.mrb[0].mxu0
        %2347 = vmatprep.mubr.bf16.mxu0 0
        %2348 = vmatmul.mubr.bf16.gmra.mrb[0].mxu0 %v923
        %v2349 = vpop.f32.mrb[0].mxu0
        %v2350 = vadd.f32 0.0, %v2349
        %v2351 = vpop.f32.mrb[0].mxu0
        %v2352 = vpop.f32.mrb[0].mxu0
        %v2353 = vadd.f32 0.0, %v2352
        %v2354 = vpop.f32.mrb[0].mxu0
        %2355 = vmatprep.mubr.bf16.mxu0 0
        %2356 = vmatmul.mubr.bf16.gmra.mrb[0].mxu0 %v924
        %v2357 = vpop.f32.mrb[0].mxu0
        %v2358 = vadd.f32 0.0, %v2357
        %v2359 = vpop.f32.mrb[0].mxu0
        %v2360 = vpop.f32.mrb[0].mxu0
        %v2361 = vadd.f32 0.0, %v2360
        %v2362 = vpop.f32.mrb[0].mxu0
        %2363 = vmatprep.mubr.bf16.mxu0 0
        %2364 = vmatmul.mubr.bf16.gmra.mrb[0].mxu0 %v925
        %v2365 = vpop.f32.mrb[0].mxu0
        %v2366 = vadd.f32 0.0, %v2365
        %v2367 = vpop.f32.mrb[0].mxu0
        %v2368 = vpop.f32.mrb[0].mxu0
        %v2369 = vadd.f32 0.0, %v2368
        %v2370 = vpop.f32.mrb[0].mxu0
        %2371 = vmatprep.mubr.bf16.mxu0 0
        %2372 = vmatmul.mubr.bf16.gmra.mrb[0].mxu0 %v926
        %v2373 = vpop.f32.mrb[0].mxu0
        %v2374 = vadd.f32 0.0, %v2373
        %v2375 = vpop.f32.mrb[0].mxu0
        %v2376 = vpop.f32.mrb[0].mxu0
        %v2377 = vadd.f32 0.0, %v2376
        %v2378 = vpop.f32.mrb[0].mxu0
        %2379 = vmatprep.mubr.bf16.mxu0 0
        %2380 = vmatmul.mubr.bf16.gmra.mrb[0].mxu0 %v927
        %v2381 = vpop.f32.mrb[0].mxu0
        %v2382 = vadd.f32 0.0, %v2381
        %v2383 = vpop.f32.mrb[0].mxu0
        %v2384 = vpop.f32.mrb[0].mxu0
        %v2385 = vadd.f32 0.0, %v2384
        %v2386 = vpop.f32.mrb[0].mxu0
        %2387 = vmatprep.mubr.bf16.mxu0 0
        %2388 = vmatmul.mubr.bf16.gmra.mrb[0].mxu0 %v928
        %v2389 = vpop.f32.mrb[0].mxu0
        %v2390 = vadd.f32 0.0, %v2389
        %v2391 = vpop.f32.mrb[0].mxu0
        %v2392 = vpop.f32.mrb[0].mxu0
        %v2393 = vadd.f32 0.0, %v2392
        %v2394 = vpop.f32.mrb[0].mxu0
        %2395 = vdwg.mxu0
        %2396 = vset.pattern.permute.xlu0 5
        %2397 = vperm.xlu0 %2396, %v843
        %v2398 = vpop.permute.xlu0 %2397
        %2400 = vset.pattern.permute.xlu0 5
        %2401 = vperm.xlu0 %2400, %v846
        %v2402 = vpop.permute.xlu0 %2401
        %2404 = vset.pattern.permute.xlu0 5
        %2405 = vperm.xlu0 %2404, %v851
        %v2406 = vpop.permute.xlu0 %2405
        %2408 = vset.pattern.permute.xlu0 5
        %2409 = vperm.xlu0 %2408, %v854
        %v2410 = vpop.permute.xlu0 %2409
        %2412 = vset.pattern.permute.xlu0 5
        %2413 = vperm.xlu0 %2412, %v859
        %v2414 = vpop.permute.xlu0 %2413
        %2416 = vset.pattern.permute.xlu0 5
        %2417 = vperm.xlu0 %2416, %v862
        %v2418 = vpop.permute.xlu0 %2417
        %2420 = vset.pattern.permute.xlu0 5
        %2421 = vperm.xlu0 %2420, %v867
        %v2422 = vpop.permute.xlu0 %2421
        %2424 = vset.pattern.permute.xlu0 5
        %2425 = vperm.xlu0 %2424, %v870
        %v2426 = vpop.permute.xlu0 %2425
        %2428 = vset.pattern.permute.xlu0 5
        %2429 = vperm.xlu0 %2428, %v875
        %v2430 = vpop.permute.xlu0 %2429
        %2432 = vset.pattern.permute.xlu0 5
        %2433 = vperm.xlu0 %2432, %v878
        %v2434 = vpop.permute.xlu0 %2433
        %2436 = vset.pattern.permute.xlu0 5
        %2437 = vperm.xlu0 %2436, %v883
        %v2438 = vpop.permute.xlu0 %2437
        %2440 = vset.pattern.permute.xlu0 5
        %2441 = vperm.xlu0 %2440, %v886
        %v2442 = vpop.permute.xlu0 %2441
        %2444 = vset.pattern.permute.xlu0 5
        %2445 = vperm.xlu0 %2444, %v891
        %v2446 = vpop.permute.xlu0 %2445
        %2448 = vset.pattern.permute.xlu0 5
        %2449 = vperm.xlu0 %2448, %v894
        %v2450 = vpop.permute.xlu0 %2449
        %2452 = vset.pattern.permute.xlu0 5
        %2453 = vperm.xlu0 %2452, %v899
        %v2454 = vpop.permute.xlu0 %2453
        %2456 = vset.pattern.permute.xlu0 5
        %2457 = vperm.xlu0 %2456, %v902
        %v2458 = vpop.permute.xlu0 %2457
        %v2460 = vmul.f32 %v2398, %v2334
        %v2461 = vmul.f32 %v2402, %v2337
        %v2462 = vmul.f32 %v2406, %v2342
        %v2463 = vmul.f32 %v2410, %v2345
        %v2464 = vmul.f32 %v2414, %v2350
        %v2465 = vmul.f32 %v2418, %v2353
        %v2466 = vmul.f32 %v2422, %v2358
        %v2467 = vmul.f32 %v2426, %v2361
        %v2468 = vmul.f32 %v2430, %v2366
        %v2469 = vmul.f32 %v2434, %v2369
        %v2470 = vmul.f32 %v2438, %v2374
        %v2471 = vmul.f32 %v2442, %v2377
        %v2472 = vmul.f32 %v2446, %v2382
        %v2473 = vmul.f32 %v2450, %v2385
        %v2474 = vmul.f32 %v2454, %v2390
        %v2475 = vmul.f32 %v2458, %v2393
        %v2476 = vadd.f32 %v2218, %v2460
        %v2477 = vadd.f32 %v2219, %v2461
        %v2478 = vadd.f32 %v2220, %v2462
        %v2479 = vadd.f32 %v2221, %v2463
        %v2480 = vadd.f32 %v2222, %v2464
        %v2481 = vadd.f32 %v2223, %v2465
        %v2482 = vadd.f32 %v2224, %v2466
        %v2483 = vadd.f32 %v2225, %v2467
        %v2484 = vadd.f32 %v2226, %v2468
        %v2485 = vadd.f32 %v2227, %v2469
        %v2486 = vadd.f32 %v2228, %v2470
        %v2487 = vadd.f32 %v2229, %v2471
        %v2488 = vadd.f32 %v2230, %v2472
        %v2489 = vadd.f32 %v2231, %v2473
        %v2490 = vadd.f32 %v2232, %v2474
        %v2491 = vadd.f32 %v2233, %v2475
        %s2492 = scalar_lea.vmem %s4, 384
        %v2493 = vld [vmem:[%s2492] sm:$0xf]
        %v2494 = vld [vmem:[%s2492 + $0x4] sm:$0xf]
        %v2495 = vld [vmem:[%s2492 + $0x8] sm:$0xf]
        %v2496 = vld [vmem:[%s2492 + $0xc] sm:$0xf]
        %v2497 = vld [vmem:[%s2492 + $0x10] sm:$0xf]
        %v2498 = vld [vmem:[%s2492 + $0x14] sm:$0xf]
        %v2499 = vld [vmem:[%s2492 + $0x18] sm:$0xf]
        %v2500 = vld [vmem:[%s2492 + $0x1c] sm:$0xf]
        %v2501 = vld [vmem:[%s2492 + $0x20] sm:$0xf]
        %v2502 = vld [vmem:[%s2492 + $0x24] sm:$0xf]
        %v2503 = vld [vmem:[%s2492 + $0x28] sm:$0xf]
        %v2504 = vld [vmem:[%s2492 + $0x2c] sm:$0xf]
        %v2505 = vld [vmem:[%s2492 + $0x30] sm:$0xf]
        %v2506 = vld [vmem:[%s2492 + $0x34] sm:$0xf]
        %v2507 = vld [vmem:[%s2492 + $0x38] sm:$0xf]
        %v2508 = vld [vmem:[%s2492 + $0x3c] sm:$0xf]
        %v2525 = vunpack.c.l.b16 %v2493
        %v2526 = vunpack.c.l.b16 %v2494
        %v2527 = vunpack.c.l.b16 %v2495
        %v2528 = vunpack.c.l.b16 %v2496
        %v2529 = vunpack.c.l.b16 %v2497
        %v2530 = vunpack.c.l.b16 %v2498
        %v2531 = vunpack.c.l.b16 %v2499
        %v2532 = vunpack.c.l.b16 %v2500
        %v2533 = vunpack.c.l.b16 %v2501
        %v2534 = vunpack.c.l.b16 %v2502
        %v2535 = vunpack.c.l.b16 %v2503
        %v2536 = vunpack.c.l.b16 %v2504
        %v2537 = vunpack.c.l.b16 %v2505
        %v2538 = vunpack.c.l.b16 %v2506
        %v2539 = vunpack.c.l.b16 %v2507
        %v2540 = vunpack.c.l.b16 %v2508
        %v2541 = vpack.c.b16 %v2526, %v2525
        %v2542 = vpack.c.b16 %v2528, %v2527
        %v2543 = vpack.c.b16 %v2530, %v2529
        %v2544 = vpack.c.b16 %v2532, %v2531
        %v2545 = vpack.c.b16 %v2534, %v2533
        %v2546 = vpack.c.b16 %v2536, %v2535
        %v2547 = vpack.c.b16 %v2538, %v2537
        %v2548 = vpack.c.b16 %v2540, %v2539
        %2557 = vmatprep.subr.bf16.mxu0 0
        %2558 = vmatpush1.bf16.msra.mxu0 %v2541
        %2559 = vmatprep.subr.bf16.mxu0 0
        %2560 = vmatpush1.bf16.msra.mxu0 %v2542
        %2561 = vmatprep.subr.bf16.mxu0 0
        %2562 = vmatpush1.bf16.msra.mxu0 %v2543
        %2563 = vmatprep.subr.bf16.mxu0 0
        %2564 = vmatpush1.bf16.msra.mxu0 %v2544
        %2565 = vmatprep.subr.bf16.mxu0 0
        %2566 = vmatpush1.bf16.msra.mxu0 %v2545
        %2567 = vmatprep.subr.bf16.mxu0 0
        %2568 = vmatpush1.bf16.msra.mxu0 %v2546
        %2569 = vmatprep.subr.bf16.mxu0 0
        %2570 = vmatpush1.bf16.msra.mxu0 %v2547
        %2571 = vmatprep.subr.bf16.mxu0 0
        %2572 = vmatpush1.bf16.msra.mxu0 %v2548
        %2573 = vmatprep.subr.bf16.mxu0 0
        %2574 = vmatpush1.bf16.msra.mxu0 0
        %2575 = vmatprep.subr.bf16.mxu0 0
        %2576 = vmatpush1.bf16.msra.mxu0 0
        %2577 = vmatprep.subr.bf16.mxu0 0
        %2578 = vmatpush1.bf16.msra.mxu0 0
        %2579 = vmatprep.subr.bf16.mxu0 0
        %2580 = vmatpush1.bf16.msra.mxu0 0
        %2581 = vmatprep.subr.bf16.mxu0 0
        %2582 = vmatpush1.bf16.msra.mxu0 0
        %2583 = vmatprep.subr.bf16.mxu0 0
        %2584 = vmatpush1.bf16.msra.mxu0 0
        %2585 = vmatprep.subr.bf16.mxu0 0
        %2586 = vmatpush1.bf16.msra.mxu0 0
        %2587 = vmatprep.subr.bf16.mxu0 0
        %2588 = vmatpush1.bf16.msra.mxu0 0
        %2589 = vmatprep.mubr.bf16.mxu0 0
        %2590 = vmatmul.mubr.bf16.gmra.mrb[0].mxu0 %v921
        %v2591 = vpop.f32.mrb[0].mxu0
        %v2592 = vadd.f32 0.0, %v2591
        %v2593 = vpop.f32.mrb[0].mxu0
        %v2594 = vpop.f32.mrb[0].mxu0
        %v2595 = vadd.f32 0.0, %v2594
        %v2596 = vpop.f32.mrb[0].mxu0
        %2597 = vmatprep.mubr.bf16.mxu0 0
        %2598 = vmatmul.mubr.bf16.gmra.mrb[0].mxu0 %v922
        %v2599 = vpop.f32.mrb[0].mxu0
        %v2600 = vadd.f32 0.0, %v2599
        %v2601 = vpop.f32.mrb[0].mxu0
        %v2602 = vpop.f32.mrb[0].mxu0
        %v2603 = vadd.f32 0.0, %v2602
        %v2604 = vpop.f32.mrb[0].mxu0
        %2605 = vmatprep.mubr.bf16.mxu0 0
        %2606 = vmatmul.mubr.bf16.gmra.mrb[0].mxu0 %v923
        %v2607 = vpop.f32.mrb[0].mxu0
        %v2608 = vadd.f32 0.0, %v2607
        %v2609 = vpop.f32.mrb[0].mxu0
        %v2610 = vpop.f32.mrb[0].mxu0
        %v2611 = vadd.f32 0.0, %v2610
        %v2612 = vpop.f32.mrb[0].mxu0
        %2613 = vmatprep.mubr.bf16.mxu0 0
        %2614 = vmatmul.mubr.bf16.gmra.mrb[0].mxu0 %v924
        %v2615 = vpop.f32.mrb[0].mxu0
        %v2616 = vadd.f32 0.0, %v2615
        %v2617 = vpop.f32.mrb[0].mxu0
        %v2618 = vpop.f32.mrb[0].mxu0
        %v2619 = vadd.f32 0.0, %v2618
        %v2620 = vpop.f32.mrb[0].mxu0
        %2621 = vmatprep.mubr.bf16.mxu0 0
        %2622 = vmatmul.mubr.bf16.gmra.mrb[0].mxu0 %v925
        %v2623 = vpop.f32.mrb[0].mxu0
        %v2624 = vadd.f32 0.0, %v2623
        %v2625 = vpop.f32.mrb[0].mxu0
        %v2626 = vpop.f32.mrb[0].mxu0
        %v2627 = vadd.f32 0.0, %v2626
        %v2628 = vpop.f32.mrb[0].mxu0
        %2629 = vmatprep.mubr.bf16.mxu0 0
        %2630 = vmatmul.mubr.bf16.gmra.mrb[0].mxu0 %v926
        %v2631 = vpop.f32.mrb[0].mxu0
        %v2632 = vadd.f32 0.0, %v2631
        %v2633 = vpop.f32.mrb[0].mxu0
        %v2634 = vpop.f32.mrb[0].mxu0
        %v2635 = vadd.f32 0.0, %v2634
        %v2636 = vpop.f32.mrb[0].mxu0
        %2637 = vmatprep.mubr.bf16.mxu0 0
        %2638 = vmatmul.mubr.bf16.gmra.mrb[0].mxu0 %v927
        %v2639 = vpop.f32.mrb[0].mxu0
        %v2640 = vadd.f32 0.0, %v2639
        %v2641 = vpop.f32.mrb[0].mxu0
        %v2642 = vpop.f32.mrb[0].mxu0
        %v2643 = vadd.f32 0.0, %v2642
        %v2644 = vpop.f32.mrb[0].mxu0
        %2645 = vmatprep.mubr.bf16.mxu0 0
        %2646 = vmatmul.mubr.bf16.gmra.mrb[0].mxu0 %v928
        %v2647 = vpop.f32.mrb[0].mxu0
        %v2648 = vadd.f32 0.0, %v2647
        %v2649 = vpop.f32.mrb[0].mxu0
        %v2650 = vpop.f32.mrb[0].mxu0
        %v2651 = vadd.f32 0.0, %v2650
        %v2652 = vpop.f32.mrb[0].mxu0
        %2653 = vdwg.mxu0
        %2654 = vset.pattern.permute.xlu0 6
        %2655 = vperm.xlu0 %2654, %v843
        %v2656 = vpop.permute.xlu0 %2655
        %2658 = vset.pattern.permute.xlu0 6
        %2659 = vperm.xlu0 %2658, %v846
        %v2660 = vpop.permute.xlu0 %2659
        %2662 = vset.pattern.permute.xlu0 6
        %2663 = vperm.xlu0 %2662, %v851
        %v2664 = vpop.permute.xlu0 %2663
        %2666 = vset.pattern.permute.xlu0 6
        %2667 = vperm.xlu0 %2666, %v854
        %v2668 = vpop.permute.xlu0 %2667
        %2670 = vset.pattern.permute.xlu0 6
        %2671 = vperm.xlu0 %2670, %v859
        %v2672 = vpop.permute.xlu0 %2671
        %2674 = vset.pattern.permute.xlu0 6
        %2675 = vperm.xlu0 %2674, %v862
        %v2676 = vpop.permute.xlu0 %2675
        %2678 = vset.pattern.permute.xlu0 6
        %2679 = vperm.xlu0 %2678, %v867
        %v2680 = vpop.permute.xlu0 %2679
        %2682 = vset.pattern.permute.xlu0 6
        %2683 = vperm.xlu0 %2682, %v870
        %v2684 = vpop.permute.xlu0 %2683
        %2686 = vset.pattern.permute.xlu0 6
        %2687 = vperm.xlu0 %2686, %v875
        %v2688 = vpop.permute.xlu0 %2687
        %2690 = vset.pattern.permute.xlu0 6
        %2691 = vperm.xlu0 %2690, %v878
        %v2692 = vpop.permute.xlu0 %2691
        %2694 = vset.pattern.permute.xlu0 6
        %2695 = vperm.xlu0 %2694, %v883
        %v2696 = vpop.permute.xlu0 %2695
        %2698 = vset.pattern.permute.xlu0 6
        %2699 = vperm.xlu0 %2698, %v886
        %v2700 = vpop.permute.xlu0 %2699
        %2702 = vset.pattern.permute.xlu0 6
        %2703 = vperm.xlu0 %2702, %v891
        %v2704 = vpop.permute.xlu0 %2703
        %2706 = vset.pattern.permute.xlu0 6
        %2707 = vperm.xlu0 %2706, %v894
        %v2708 = vpop.permute.xlu0 %2707
        %2710 = vset.pattern.permute.xlu0 6
        %2711 = vperm.xlu0 %2710, %v899
        %v2712 = vpop.permute.xlu0 %2711
        %2714 = vset.pattern.permute.xlu0 6
        %2715 = vperm.xlu0 %2714, %v902
        %v2716 = vpop.permute.xlu0 %2715
        %v2718 = vmul.f32 %v2656, %v2592
        %v2719 = vmul.f32 %v2660, %v2595
        %v2720 = vmul.f32 %v2664, %v2600
        %v2721 = vmul.f32 %v2668, %v2603
        %v2722 = vmul.f32 %v2672, %v2608
        %v2723 = vmul.f32 %v2676, %v2611
        %v2724 = vmul.f32 %v2680, %v2616
        %v2725 = vmul.f32 %v2684, %v2619
        %v2726 = vmul.f32 %v2688, %v2624
        %v2727 = vmul.f32 %v2692, %v2627
        %v2728 = vmul.f32 %v2696, %v2632
        %v2729 = vmul.f32 %v2700, %v2635
        %v2730 = vmul.f32 %v2704, %v2640
        %v2731 = vmul.f32 %v2708, %v2643
        %v2732 = vmul.f32 %v2712, %v2648
        %v2733 = vmul.f32 %v2716, %v2651
        %v2734 = vadd.f32 %v2476, %v2718
        %v2735 = vadd.f32 %v2477, %v2719
        %v2736 = vadd.f32 %v2478, %v2720
        %v2737 = vadd.f32 %v2479, %v2721
        %v2738 = vadd.f32 %v2480, %v2722
        %v2739 = vadd.f32 %v2481, %v2723
        %v2740 = vadd.f32 %v2482, %v2724
        %v2741 = vadd.f32 %v2483, %v2725
        %v2742 = vadd.f32 %v2484, %v2726
        %v2743 = vadd.f32 %v2485, %v2727
        %v2744 = vadd.f32 %v2486, %v2728
        %v2745 = vadd.f32 %v2487, %v2729
        %v2746 = vadd.f32 %v2488, %v2730
        %v2747 = vadd.f32 %v2489, %v2731
        %v2748 = vadd.f32 %v2490, %v2732
        %v2749 = vadd.f32 %v2491, %v2733
        %s2750 = scalar_lea.vmem %s4, 448
        %v2751 = vld [vmem:[%s2750] sm:$0xf]
        %v2752 = vld [vmem:[%s2750 + $0x4] sm:$0xf]
        %v2753 = vld [vmem:[%s2750 + $0x8] sm:$0xf]
        %v2754 = vld [vmem:[%s2750 + $0xc] sm:$0xf]
        %v2755 = vld [vmem:[%s2750 + $0x10] sm:$0xf]
        %v2756 = vld [vmem:[%s2750 + $0x14] sm:$0xf]
        %v2757 = vld [vmem:[%s2750 + $0x18] sm:$0xf]
        %v2758 = vld [vmem:[%s2750 + $0x1c] sm:$0xf]
        %v2759 = vld [vmem:[%s2750 + $0x20] sm:$0xf]
        %v2760 = vld [vmem:[%s2750 + $0x24] sm:$0xf]
        %v2761 = vld [vmem:[%s2750 + $0x28] sm:$0xf]
        %v2762 = vld [vmem:[%s2750 + $0x2c] sm:$0xf]
        %v2763 = vld [vmem:[%s2750 + $0x30] sm:$0xf]
        %v2764 = vld [vmem:[%s2750 + $0x34] sm:$0xf]
        %v2765 = vld [vmem:[%s2750 + $0x38] sm:$0xf]
        %v2766 = vld [vmem:[%s2750 + $0x3c] sm:$0xf]
        %v2783 = vunpack.c.l.b16 %v2751
        %v2784 = vunpack.c.l.b16 %v2752
        %v2785 = vunpack.c.l.b16 %v2753
        %v2786 = vunpack.c.l.b16 %v2754
        %v2787 = vunpack.c.l.b16 %v2755
        %v2788 = vunpack.c.l.b16 %v2756
        %v2789 = vunpack.c.l.b16 %v2757
        %v2790 = vunpack.c.l.b16 %v2758
        %v2791 = vunpack.c.l.b16 %v2759
        %v2792 = vunpack.c.l.b16 %v2760
        %v2793 = vunpack.c.l.b16 %v2761
        %v2794 = vunpack.c.l.b16 %v2762
        %v2795 = vunpack.c.l.b16 %v2763
        %v2796 = vunpack.c.l.b16 %v2764
        %v2797 = vunpack.c.l.b16 %v2765
        %v2798 = vunpack.c.l.b16 %v2766
        %v2799 = vpack.c.b16 %v2784, %v2783
        %v2800 = vpack.c.b16 %v2786, %v2785
        %v2801 = vpack.c.b16 %v2788, %v2787
        %v2802 = vpack.c.b16 %v2790, %v2789
        %v2803 = vpack.c.b16 %v2792, %v2791
        %v2804 = vpack.c.b16 %v2794, %v2793
        %v2805 = vpack.c.b16 %v2796, %v2795
        %v2806 = vpack.c.b16 %v2798, %v2797
        %2815 = vmatprep.subr.bf16.mxu0 0
        %2816 = vmatpush1.bf16.msra.mxu0 %v2799
        %2817 = vmatprep.subr.bf16.mxu0 0
        %2818 = vmatpush1.bf16.msra.mxu0 %v2800
        %2819 = vmatprep.subr.bf16.mxu0 0
        %2820 = vmatpush1.bf16.msra.mxu0 %v2801
        %2821 = vmatprep.subr.bf16.mxu0 0
        %2822 = vmatpush1.bf16.msra.mxu0 %v2802
        %2823 = vmatprep.subr.bf16.mxu0 0
        %2824 = vmatpush1.bf16.msra.mxu0 %v2803
        %2825 = vmatprep.subr.bf16.mxu0 0
        %2826 = vmatpush1.bf16.msra.mxu0 %v2804
        %2827 = vmatprep.subr.bf16.mxu0 0
        %2828 = vmatpush1.bf16.msra.mxu0 %v2805
        %2829 = vmatprep.subr.bf16.mxu0 0
        %2830 = vmatpush1.bf16.msra.mxu0 %v2806
        %2831 = vmatprep.subr.bf16.mxu0 0
        %2832 = vmatpush1.bf16.msra.mxu0 0
        %2833 = vmatprep.subr.bf16.mxu0 0
        %2834 = vmatpush1.bf16.msra.mxu0 0
        %2835 = vmatprep.subr.bf16.mxu0 0
        %2836 = vmatpush1.bf16.msra.mxu0 0
        %2837 = vmatprep.subr.bf16.mxu0 0
        %2838 = vmatpush1.bf16.msra.mxu0 0
        %2839 = vmatprep.subr.bf16.mxu0 0
        %2840 = vmatpush1.bf16.msra.mxu0 0
        %2841 = vmatprep.subr.bf16.mxu0 0
        %2842 = vmatpush1.bf16.msra.mxu0 0
        %2843 = vmatprep.subr.bf16.mxu0 0
        %2844 = vmatpush1.bf16.msra.mxu0 0
        %2845 = vmatprep.subr.bf16.mxu0 0
        %2846 = vmatpush1.bf16.msra.mxu0 0
        %2847 = vmatprep.mubr.bf16.mxu0 0
        %2848 = vmatmul.mubr.bf16.gmra.mrb[0].mxu0 %v921
        %v2849 = vpop.f32.mrb[0].mxu0
        %v2850 = vadd.f32 0.0, %v2849
        %v2851 = vpop.f32.mrb[0].mxu0
        %v2852 = vpop.f32.mrb[0].mxu0
        %v2853 = vadd.f32 0.0, %v2852
        %v2854 = vpop.f32.mrb[0].mxu0
        %2855 = vmatprep.mubr.bf16.mxu0 0
        %2856 = vmatmul.mubr.bf16.gmra.mrb[0].mxu0 %v922
        %v2857 = vpop.f32.mrb[0].mxu0
        %v2858 = vadd.f32 0.0, %v2857
        %v2859 = vpop.f32.mrb[0].mxu0
        %v2860 = vpop.f32.mrb[0].mxu0
        %v2861 = vadd.f32 0.0, %v2860
        %v2862 = vpop.f32.mrb[0].mxu0
        %2863 = vmatprep.mubr.bf16.mxu0 0
        %2864 = vmatmul.mubr.bf16.gmra.mrb[0].mxu0 %v923
        %v2865 = vpop.f32.mrb[0].mxu0
        %v2866 = vadd.f32 0.0, %v2865
        %v2867 = vpop.f32.mrb[0].mxu0
        %v2868 = vpop.f32.mrb[0].mxu0
        %v2869 = vadd.f32 0.0, %v2868
        %v2870 = vpop.f32.mrb[0].mxu0
        %2871 = vmatprep.mubr.bf16.mxu0 0
        %2872 = vmatmul.mubr.bf16.gmra.mrb[0].mxu0 %v924
        %v2873 = vpop.f32.mrb[0].mxu0
        %v2874 = vadd.f32 0.0, %v2873
        %v2875 = vpop.f32.mrb[0].mxu0
        %v2876 = vpop.f32.mrb[0].mxu0
        %v2877 = vadd.f32 0.0, %v2876
        %v2878 = vpop.f32.mrb[0].mxu0
        %2879 = vmatprep.mubr.bf16.mxu0 0
        %2880 = vmatmul.mubr.bf16.gmra.mrb[0].mxu0 %v925
        %v2881 = vpop.f32.mrb[0].mxu0
        %v2882 = vadd.f32 0.0, %v2881
        %v2883 = vpop.f32.mrb[0].mxu0
        %v2884 = vpop.f32.mrb[0].mxu0
        %v2885 = vadd.f32 0.0, %v2884
        %v2886 = vpop.f32.mrb[0].mxu0
        %2887 = vmatprep.mubr.bf16.mxu0 0
        %2888 = vmatmul.mubr.bf16.gmra.mrb[0].mxu0 %v926
        %v2889 = vpop.f32.mrb[0].mxu0
        %v2890 = vadd.f32 0.0, %v2889
        %v2891 = vpop.f32.mrb[0].mxu0
        %v2892 = vpop.f32.mrb[0].mxu0
        %v2893 = vadd.f32 0.0, %v2892
        %v2894 = vpop.f32.mrb[0].mxu0
        %2895 = vmatprep.mubr.bf16.mxu0 0
        %2896 = vmatmul.mubr.bf16.gmra.mrb[0].mxu0 %v927
        %v2897 = vpop.f32.mrb[0].mxu0
        %v2898 = vadd.f32 0.0, %v2897
        %v2899 = vpop.f32.mrb[0].mxu0
        %v2900 = vpop.f32.mrb[0].mxu0
        %v2901 = vadd.f32 0.0, %v2900
        %v2902 = vpop.f32.mrb[0].mxu0
        %2903 = vmatprep.mubr.bf16.mxu0 0
        %2904 = vmatmul.mubr.bf16.gmra.mrb[0].mxu0 %v928
        %v2905 = vpop.f32.mrb[0].mxu0
        %v2906 = vadd.f32 0.0, %v2905
        %v2907 = vpop.f32.mrb[0].mxu0
        %v2908 = vpop.f32.mrb[0].mxu0
        %v2909 = vadd.f32 0.0, %v2908
        %v2910 = vpop.f32.mrb[0].mxu0
        %2911 = vdwg.mxu0
        %2912 = vset.pattern.permute.xlu0 7
        %2913 = vperm.xlu0 %2912, %v843
        %v2914 = vpop.permute.xlu0 %2913
        %2916 = vset.pattern.permute.xlu0 7
        %2917 = vperm.xlu0 %2916, %v846
        %v2918 = vpop.permute.xlu0 %2917
        %2920 = vset.pattern.permute.xlu0 7
        %2921 = vperm.xlu0 %2920, %v851
        %v2922 = vpop.permute.xlu0 %2921
        %2924 = vset.pattern.permute.xlu0 7
        %2925 = vperm.xlu0 %2924, %v854
        %v2926 = vpop.permute.xlu0 %2925
        %2928 = vset.pattern.permute.xlu0 7
        %2929 = vperm.xlu0 %2928, %v859
        %v2930 = vpop.permute.xlu0 %2929
        %2932 = vset.pattern.permute.xlu0 7
        %2933 = vperm.xlu0 %2932, %v862
        %v2934 = vpop.permute.xlu0 %2933
        %2936 = vset.pattern.permute.xlu0 7
        %2937 = vperm.xlu0 %2936, %v867
        %v2938 = vpop.permute.xlu0 %2937
        %2940 = vset.pattern.permute.xlu0 7
        %2941 = vperm.xlu0 %2940, %v870
        %v2942 = vpop.permute.xlu0 %2941
        %2944 = vset.pattern.permute.xlu0 7
        %2945 = vperm.xlu0 %2944, %v875
        %v2946 = vpop.permute.xlu0 %2945
        %2948 = vset.pattern.permute.xlu0 7
        %2949 = vperm.xlu0 %2948, %v878
        %v2950 = vpop.permute.xlu0 %2949
        %2952 = vset.pattern.permute.xlu0 7
        %2953 = vperm.xlu0 %2952, %v883
        %v2954 = vpop.permute.xlu0 %2953
        %2956 = vset.pattern.permute.xlu0 7
        %2957 = vperm.xlu0 %2956, %v886
        %v2958 = vpop.permute.xlu0 %2957
        %2960 = vset.pattern.permute.xlu0 7
        %2961 = vperm.xlu0 %2960, %v891
        %v2962 = vpop.permute.xlu0 %2961
        %2964 = vset.pattern.permute.xlu0 7
        %2965 = vperm.xlu0 %2964, %v894
        %v2966 = vpop.permute.xlu0 %2965
        %2968 = vset.pattern.permute.xlu0 7
        %2969 = vperm.xlu0 %2968, %v899
        %v2970 = vpop.permute.xlu0 %2969
        %2972 = vset.pattern.permute.xlu0 7
        %2973 = vperm.xlu0 %2972, %v902
        %v2974 = vpop.permute.xlu0 %2973
        %v2976 = vmul.f32 %v2914, %v2850
        %v2977 = vmul.f32 %v2918, %v2853
        %v2978 = vmul.f32 %v2922, %v2858
        %v2979 = vmul.f32 %v2926, %v2861
        %v2980 = vmul.f32 %v2930, %v2866
        %v2981 = vmul.f32 %v2934, %v2869
        %v2982 = vmul.f32 %v2938, %v2874
        %v2983 = vmul.f32 %v2942, %v2877
        %v2984 = vmul.f32 %v2946, %v2882
        %v2985 = vmul.f32 %v2950, %v2885
        %v2986 = vmul.f32 %v2954, %v2890
        %v2987 = vmul.f32 %v2958, %v2893
        %v2988 = vmul.f32 %v2962, %v2898
        %v2989 = vmul.f32 %v2966, %v2901
        %v2990 = vmul.f32 %v2970, %v2906
        %v2991 = vmul.f32 %v2974, %v2909
        %v2992 = vadd.f32 %v2734, %v2976
        %v2993 = vadd.f32 %v2735, %v2977
        %v2994 = vadd.f32 %v2736, %v2978
        %v2995 = vadd.f32 %v2737, %v2979
        %v2996 = vadd.f32 %v2738, %v2980
        %v2997 = vadd.f32 %v2739, %v2981
        %v2998 = vadd.f32 %v2740, %v2982
        %v2999 = vadd.f32 %v2741, %v2983
        %v3000 = vadd.f32 %v2742, %v2984
        %v3001 = vadd.f32 %v2743, %v2985
        %v3002 = vadd.f32 %v2744, %v2986
        %v3003 = vadd.f32 %v2745, %v2987
        %v3004 = vadd.f32 %v2746, %v2988
        %v3005 = vadd.f32 %v2747, %v2989
        %v3006 = vadd.f32 %v2748, %v2990
        %v3007 = vadd.f32 %v2749, %v2991
        %v3008 = vpack.c.bf16 %v2993, %v2992
        %v3009 = vpack.c.bf16 %v2995, %v2994
        %v3010 = vpack.c.bf16 %v2997, %v2996
        %v3011 = vpack.c.bf16 %v2999, %v2998
        %v3012 = vpack.c.bf16 %v3001, %v3000
        %v3013 = vpack.c.bf16 %v3003, %v3002
        %v3014 = vpack.c.bf16 %v3005, %v3004
        %v3015 = vpack.c.bf16 %v3007, %v3006
        %v3024 = vunpack.c.l.b16 %v3008
        %v3025 = vunpack.c.h.b16 %v3008
        %v3026 = vunpack.c.l.b16 %v3009
        %v3027 = vunpack.c.h.b16 %v3009
        %v3028 = vunpack.c.l.b16 %v3010
        %v3029 = vunpack.c.h.b16 %v3010
        %v3030 = vunpack.c.l.b16 %v3011
        %v3031 = vunpack.c.h.b16 %v3011
        %v3032 = vunpack.c.l.b16 %v3012
        %v3033 = vunpack.c.h.b16 %v3012
        %v3034 = vunpack.c.l.b16 %v3013
        %v3035 = vunpack.c.h.b16 %v3013
        %v3036 = vunpack.c.l.b16 %v3014
        %v3037 = vunpack.c.h.b16 %v3014
        %v3038 = vunpack.c.l.b16 %v3015
        %v3039 = vunpack.c.h.b16 %v3015
        %v3040 = vpack.c.b16 %v3024, %v3024
        %v3041 = vpack.c.b16 %v3025, %v3025
        %v3042 = vpack.c.b16 %v3026, %v3026
        %v3043 = vpack.c.b16 %v3027, %v3027
        %v3044 = vpack.c.b16 %v3028, %v3028
        %v3045 = vpack.c.b16 %v3029, %v3029
        %v3046 = vpack.c.b16 %v3030, %v3030
        %v3047 = vpack.c.b16 %v3031, %v3031
        %v3048 = vpack.c.b16 %v3032, %v3032
        %v3049 = vpack.c.b16 %v3033, %v3033
        %v3050 = vpack.c.b16 %v3034, %v3034
        %v3051 = vpack.c.b16 %v3035, %v3035
        %v3052 = vpack.c.b16 %v3036, %v3036
        %v3053 = vpack.c.b16 %v3037, %v3037
        %v3054 = vpack.c.b16 %v3038, %v3038
        %v3055 = vpack.c.b16 %v3039, %v3039
        %3072 = vst [vmem:[%s282] sm:$0xf] %v3040
        %3073 = vst [vmem:[%s282 + $0x4] sm:$0xf] %v3041
        %3074 = vst [vmem:[%s282 + $0x8] sm:$0xf] %v3042
        %3075 = vst [vmem:[%s282 + $0xc] sm:$0xf] %v3043
        %3076 = vst [vmem:[%s282 + $0x10] sm:$0xf] %v3044
        %3077 = vst [vmem:[%s282 + $0x14] sm:$0xf] %v3045
        %3078 = vst [vmem:[%s282 + $0x18] sm:$0xf] %v3046
        %3079 = vst [vmem:[%s282 + $0x1c] sm:$0xf] %v3047
        %3080 = vst [vmem:[%s282 + $0x20] sm:$0xf] %v3048
        %3081 = vst [vmem:[%s282 + $0x24] sm:$0xf] %v3049
        %3082 = vst [vmem:[%s282 + $0x28] sm:$0xf] %v3050
        %3083 = vst [vmem:[%s282 + $0x2c] sm:$0xf] %v3051
        %3084 = vst [vmem:[%s282 + $0x30] sm:$0xf] %v3052
        %3085 = vst [vmem:[%s282 + $0x34] sm:$0xf] %v3053
        %3086 = vst [vmem:[%s282 + $0x38] sm:$0xf] %v3054
        %3087 = vst [vmem:[%s282 + $0x3c] sm:$0xf] %v3055
      $region48: #{interaction_block_pallas.4} parent=39 // pred_fallthru
        _
      %s3088 = smul.u32 16, %s20
      %p3089 = scmp.lt.s32.totalorder %s3088, 63
      %s3090 = scalar_select %p3089, %s3088, 63
      %s3091 = smul.addr %s3090, 4
      %s3092 = scalar_lea.vmem %s5, %s3091
      // Predicated region
      $region49: #{interaction_block_pallas.4} parent=39 // pred_check
        %p3093 = pneg %p166
      $region50: #{interaction_block_pallas.4} parent=39 // pred_check_branch
        %3095 = sbr.rel (%p3093) target = $region52
      $region51: #{interaction_block_pallas.4} parent=39 // pred_region
        %s3096 = smul.u32 16, %s20
      $region52: #{interaction_block_pallas.4} parent=39 // pred_fallthru
        _
    $region40: #{interaction_block_pallas.4} parent=5 // pred_fallthru
      _
    %p3097 = scmp.le.s32.totalorder 2, %s11
    // Predicated region
    $region53: #{interaction_block_pallas.4} parent=5 // pred_check
      %p3098 = pneg %p3097
    $region54: #{interaction_block_pallas.4} parent=5 // pred_check_branch
      %3100 = sbr.rel (%p3098) target = $region56
    $region55: #{interaction_block_pallas.4} parent=5 // pred_region
      %s3101 = ssub.s32 %s11, 2
      // Predicated region
      $region57: #{interaction_block_pallas.4} parent=55 // pred_check
        %p3102 = pneg %p172
      $region58: #{interaction_block_pallas.4} parent=55 // pred_check_branch
        %3104 = sbr.rel (%p3102) target = $region60
      $region59: #{interaction_block_pallas.4} parent=55 // pred_region
        %s3105 = smul.u32 16, %s22
        %p3106 = scmp.lt.s32.totalorder %s3105, 63
        %s3107 = scalar_select %p3106, %s3105, 63
        %s3108 = smul.addr %s3107, 4
        %s3109 = scalar_lea.vmem %s5, %s3108
      $region60: #{interaction_block_pallas.4} parent=55 // pred_fallthru
        _
    $region56: #{interaction_block_pallas.4} parent=5 // pred_fallthru
      _
  $region6: #{interaction_block_pallas.4} parent=0 // loop_footer
    %s15 = sadd.s32 1, %s11
  $region7: #{interaction_block_pallas.4} parent=0 // loop_footer_branch
    %10 = sbr.rel target = $region3
  $region8: #{interaction_block_pallas.4} parent=0 // loop_exit
    _

// kernel: interaction_block_pallas.5
$region0: #{interaction_block_pallas.5}
  #allocation0 [shape = 'u32[]', space=smem, size = 0x4, offset = 0x4, fixed_abs, tag = 'smem constant byte address 0x4 - core index']
  #allocation1 [shape = 'u32[144,128]{1,0:T(1,128)}', space=vmem, size = 0x12000, scoped, tag = 'internal scratch']
  #allocation2 [shape = 'f32[128,128]{1,0:T(8,128)}', space=vmem, size = 0x10000, scoped, tag = 'scratch operand']
  %s0 = inlined_call_operand.vmem [shape: s32[1,512], index: 0, kind: input, shape index: {}]
  %s1 = inlined_call_operand.vmem [shape: bf16[512,128], index: 1, kind: input, shape index: {}]
  %s2 = inlined_call_operand.vmem [shape: f32[256,128], index: 2, kind: input, shape index: {}]
  %s3 = inlined_call_operand.vmem [shape: f32[256,128], index: 3, kind: input, shape index: {}]
  %s4 = inlined_call_operand.vmem [shape: bf16[6,128,128], index: 4, kind: input, shape index: {}]
  %s5 = inlined_call_operand.vmem [shape: f32[6,1,128], index: 5, kind: input, shape index: {}]
  %s6 = inlined_call_operand.vmem [shape: bf16[128,128], index: 6, kind: input, shape index: {}]
  %s7 = inlined_call_operand.vmem [shape: f32[1,128], index: 7, kind: input, shape index: {}]
  %s8 = inlined_call_operand.hbm [shape: f32[256,128], index: 8, kind: output, shape index: {}]
  %s9 = sld [smem:[#allocation0]]
  $region73: #{interaction_block_pallas.5} parent=0
    _
  %s11 = ssub.s32 1, %s9
  %s12 = scalar_select 0, %s11, %s9
  $region1: #{interaction_block_pallas.5} parent=0
    #allocation3 [shape = 'u8[131072]{0}', space=vmem, size = 0x20000, scoped, tag = 'output window, operand 0']
    #allocation4 [shape = 's32[2]{0}', space=sflag, size = 0x8, scoped, tag = 'scoped memory for interaction_block_pallas.5']
    %13 = vsyncpa [#allocation4], 0
    %s14 = scalar_lea.sflag [#allocation4], 1
    %15 = vsyncpa %s14, 0
    loop: start=0, step=1, limit=4
    $region2: #{interaction_block_pallas.5} parent=1 // loop_pre_header
      _
    $region3: #{interaction_block_pallas.5} parent=1 // loop_header
      %s17 = sphi 0, %s21
      %p18 = scmp.ge.s32.totalorder %s17, 4
      %s24 = sphi 0, %s36
      %s25 = sphi 0, %s32
      %s26 = sphi 0, %s24
      %s27 = sphi 0, %s25
      %s28 = sphi 0, %s26
      %s29 = sphi 0, %s27
      %s39 = sphi 0, %s41
      %s42 = sphi 0, %s39
      %s43 = sphi 0, %s42
      %s59 = sphi 0, %s43
      %s65 = sphi 0, %s67
      %s68 = sphi 0, %s65
      %s69 = sphi 0, %s68
      %s85 = sphi 0, %s69
      %s91 = sphi 0, %s93
      %s94 = sphi 0, %s91
      %s95 = sphi 0, %s94
      %s111 = sphi 0, %s95
      %s117 = sphi 0, %s119
      %s120 = sphi 0, %s117
      %s121 = sphi 0, %s120
      %s137 = sphi 0, %s121
      %s141 = sphi 0, %s141
      %s143 = sphi 0, %s141
      %s144 = sphi 0, %s143
      %s158 = sphi 0, %s144
      %s162 = sphi 0, %s162
      %s164 = sphi 0, %s162
      %s165 = sphi 0, %s164
      %s179 = sphi 0, %s165
      %s183 = sphi 0, %s183
      %s185 = sphi 0, %s183
      %s186 = sphi 0, %s185
      %s200 = sphi 0, %s186
      %s204 = sphi 0, %s204
      %s206 = sphi 0, %s204
      %s207 = sphi 0, %s206
      %s221 = sphi 0, %s207
      %s227 = sphi 0, %s229
      %s230 = sphi 0, %s227
      %s231 = sphi 0, %s230
      %s247 = sphi 0, %s231
    $region4: #{interaction_block_pallas.5} parent=1 // loop_header_branch
      %20 = sbr.rel (%p18) target = $region8
    $region5: #{interaction_block_pallas.5} parent=1 // loop_body
      %s22 = ssub.s32 %s17, 1
      %s23 = ssub.s32 %s17, 2
      %s30 = sadd.s32 1, %s25
      %p31 = scmp.ge.s32.totalorder %s30, 1
      %s32 = scalar_select %p31, 0, %s30
      %s33 = sadd.s32 1, %s24
      %s34 = scalar_select %p31, %s33, %s24
      %p35 = scmp.ge.s32.totalorder %s34, 2
      %s36 = scalar_select %p35, 0, %s34
      %s37 = ssub.s32 %s25, %s32
      %p38 = scmp.eq.s32.totalorder %s37, 0
      %s40 = sadd.s32 %s39, 1
      %s41 = scalar_select %p38, %s39, %s40
      %p44 = pneg %p38
      %p45 = scmp.eq.s32.totalorder %s17, 1
      %p46 = por %p44, %p45
      %p47 = scmp.ne.s32.totalorder %s39, %s42
      %p48 = scmp.eq.s32.totalorder %s17, 0
      %p49 = por %p47, %p48
      %p50 = scmp.ne.s32.totalorder %s39, %s42
      %p51 = scmp.eq.s32.totalorder %s22, 1
      %p52 = por %p50, %p51
      %p53 = scmp.ne.s32.totalorder %s42, %s43
      %p54 = scmp.eq.s32.totalorder %s22, 0
      %p55 = por %p53, %p54
      %p56 = scmp.ne.s32.totalorder %s42, %s43
      %p57 = scmp.eq.s32.totalorder %s23, 1
      %p58 = por %p56, %p57
      %p60 = scmp.ne.s32.totalorder %s43, %s59
      %p61 = scmp.eq.s32.totalorder %s23, 0
      %p62 = por %p60, %p61
      %s63 = ssub.s32 %s25, %s32
      %p64 = scmp.eq.s32.totalorder %s63, 0
      %s66 = sadd.s32 %s65, 1
      %s67 = scalar_select %p64, %s65, %s66
      %p70 = pneg %p64
      %p71 = scmp.eq.s32.totalorder %s17, 1
      %p72 = por %p70, %p71
      %p73 = scmp.ne.s32.totalorder %s65, %s68
      %p74 = scmp.eq.s32.totalorder %s17, 0
      %p75 = por %p73, %p74
      %p76 = scmp.ne.s32.totalorder %s65, %s68
      %p77 = scmp.eq.s32.totalorder %s22, 1
      %p78 = por %p76, %p77
      %p79 = scmp.ne.s32.totalorder %s68, %s69
      %p80 = scmp.eq.s32.totalorder %s22, 0
      %p81 = por %p79, %p80
      %p82 = scmp.ne.s32.totalorder %s68, %s69
      %p83 = scmp.eq.s32.totalorder %s23, 1
      %p84 = por %p82, %p83
      %p86 = scmp.ne.s32.totalorder %s69, %s85
      %p87 = scmp.eq.s32.totalorder %s23, 0
      %p88 = por %p86, %p87
      %s89 = ssub.s32 %s24, %s36
      %p90 = scmp.eq.s32.totalorder %s89, 0
      %s92 = sadd.s32 %s91, 1
      %s93 = scalar_select %p90, %s91, %s92
      %p96 = pneg %p90
      %p97 = scmp.eq.s32.totalorder %s17, 1
      %p98 = por %p96, %p97
      %p99 = scmp.ne.s32.totalorder %s91, %s94
      %p100 = scmp.eq.s32.totalorder %s17, 0
      %p101 = por %p99, %p100
      %p102 = scmp.ne.s32.totalorder %s91, %s94
      %p103 = scmp.eq.s32.totalorder %s22, 1
      %p104 = por %p102, %p103
      %p105 = scmp.ne.s32.totalorder %s94, %s95
      %p106 = scmp.eq.s32.totalorder %s22, 0
      %p107 = por %p105, %p106
      %p108 = scmp.ne.s32.totalorder %s94, %s95
      %p109 = scmp.eq.s32.totalorder %s23, 1
      %p110 = por %p108, %p109
      %p112 = scmp.ne.s32.totalorder %s95, %s111
      %p113 = scmp.eq.s32.totalorder %s23, 0
      %p114 = por %p112, %p113
      %s115 = ssub.s32 %s24, %s36
      %p116 = scmp.eq.s32.totalorder %s115, 0
      %s118 = sadd.s32 %s117, 1
      %s119 = scalar_select %p116, %s117, %s118
      %p122 = pneg %p116
      %p123 = scmp.eq.s32.totalorder %s17, 1
      %p124 = por %p122, %p123
      %p125 = scmp.ne.s32.totalorder %s117, %s120
      %p126 = scmp.eq.s32.totalorder %s17, 0
      %p127 = por %p125, %p126
      %p128 = scmp.ne.s32.totalorder %s117, %s120
      %p129 = scmp.eq.s32.totalorder %s22, 1
      %p130 = por %p128, %p129
      %p131 = scmp.ne.s32.totalorder %s120, %s121
      %p132 = scmp.eq.s32.totalorder %s22, 0
      %p133 = por %p131, %p132
      %p134 = scmp.ne.s32.totalorder %s120, %s121
      %p135 = scmp.eq.s32.totalorder %s23, 1
      %p136 = por %p134, %p135
      %p138 = scmp.ne.s32.totalorder %s121, %s137
      %p139 = scmp.eq.s32.totalorder %s23, 0
      %p140 = por %p138, %p139
      %s142 = sadd.s32 %s141, 1
      %p145 = scmp.eq.s32.totalorder %s17, 1
      %p146 = scmp.ne.s32.totalorder %s141, %s143
      %p147 = scmp.eq.s32.totalorder %s17, 0
      %p148 = por %p146, %p147
      %p149 = scmp.ne.s32.totalorder %s141, %s143
      %p150 = scmp.eq.s32.totalorder %s22, 1
      %p151 = por %p149, %p150
      %p152 = scmp.ne.s32.totalorder %s143, %s144
      %p153 = scmp.eq.s32.totalorder %s22, 0
      %p154 = por %p152, %p153
      %p155 = scmp.ne.s32.totalorder %s143, %s144
      %p156 = scmp.eq.s32.totalorder %s23, 1
      %p157 = por %p155, %p156
      %p159 = scmp.ne.s32.totalorder %s144, %s158
      %p160 = scmp.eq.s32.totalorder %s23, 0
      %p161 = por %p159, %p160
      %s163 = sadd.s32 %s162, 1
      %p166 = scmp.eq.s32.totalorder %s17, 1
      %p167 = scmp.ne.s32.totalorder %s162, %s164
      %p168 = scmp.eq.s32.totalorder %s17, 0
      %p169 = por %p167, %p168
      %p170 = scmp.ne.s32.totalorder %s162, %s164
      %p171 = scmp.eq.s32.totalorder %s22, 1
      %p172 = por %p170, %p171
      %p173 = scmp.ne.s32.totalorder %s164, %s165
      %p174 = scmp.eq.s32.totalorder %s22, 0
      %p175 = por %p173, %p174
      %p176 = scmp.ne.s32.totalorder %s164, %s165
      %p177 = scmp.eq.s32.totalorder %s23, 1
      %p178 = por %p176, %p177
      %p180 = scmp.ne.s32.totalorder %s165, %s179
      %p181 = scmp.eq.s32.totalorder %s23, 0
      %p182 = por %p180, %p181
      %s184 = sadd.s32 %s183, 1
      %p187 = scmp.eq.s32.totalorder %s17, 1
      %p188 = scmp.ne.s32.totalorder %s183, %s185
      %p189 = scmp.eq.s32.totalorder %s17, 0
      %p190 = por %p188, %p189
      %p191 = scmp.ne.s32.totalorder %s183, %s185
      %p192 = scmp.eq.s32.totalorder %s22, 1
      %p193 = por %p191, %p192
      %p194 = scmp.ne.s32.totalorder %s185, %s186
      %p195 = scmp.eq.s32.totalorder %s22, 0
      %p196 = por %p194, %p195
      %p197 = scmp.ne.s32.totalorder %s185, %s186
      %p198 = scmp.eq.s32.totalorder %s23, 1
      %p199 = por %p197, %p198
      %p201 = scmp.ne.s32.totalorder %s186, %s200
      %p202 = scmp.eq.s32.totalorder %s23, 0
      %p203 = por %p201, %p202
      %s205 = sadd.s32 %s204, 1
      %p208 = scmp.eq.s32.totalorder %s17, 1
      %p209 = scmp.ne.s32.totalorder %s204, %s206
      %p210 = scmp.eq.s32.totalorder %s17, 0
      %p211 = por %p209, %p210
      %p212 = scmp.ne.s32.totalorder %s204, %s206
      %p213 = scmp.eq.s32.totalorder %s22, 1
      %p214 = por %p212, %p213
      %p215 = scmp.ne.s32.totalorder %s206, %s207
      %p216 = scmp.eq.s32.totalorder %s22, 0
      %p217 = por %p215, %p216
      %p218 = scmp.ne.s32.totalorder %s206, %s207
      %p219 = scmp.eq.s32.totalorder %s23, 1
      %p220 = por %p218, %p219
      %p222 = scmp.ne.s32.totalorder %s207, %s221
      %p223 = scmp.eq.s32.totalorder %s23, 0
      %p224 = por %p222, %p223
      %s225 = ssub.s32 %s24, %s36
      %p226 = scmp.eq.s32.totalorder %s225, 0
      %s228 = sadd.s32 %s227, 1
      %s229 = scalar_select %p226, %s227, %s228
      %p232 = pneg %p226
      %p233 = scmp.eq.s32.totalorder %s17, 1
      %p234 = por %p232, %p233
      %p235 = scmp.ne.s32.totalorder %s227, %s230
      %p236 = scmp.eq.s32.totalorder %s17, 0
      %p237 = por %p235, %p236
      %p238 = scmp.ne.s32.totalorder %s227, %s230
      %p239 = scmp.eq.s32.totalorder %s22, 1
      %p240 = por %p238, %p239
      %p241 = scmp.ne.s32.totalorder %s230, %s231
      %p242 = scmp.eq.s32.totalorder %s22, 0
      %p243 = por %p241, %p242
      %p244 = scmp.ne.s32.totalorder %s230, %s231
      %p245 = scmp.eq.s32.totalorder %s23, 1
      %p246 = por %p244, %p245
      %p248 = scmp.ne.s32.totalorder %s231, %s247
      %p249 = scmp.eq.s32.totalorder %s23, 0
      %p250 = por %p248, %p249
      %p251 = scmp.le.s32.totalorder 1, %s17
      %p252 = scmp.lt.s32.totalorder %s17, 3
      %p253 = pnand %p251, %p252
      %p254 = pneg %p253
      // Predicated region
      $region9: #{interaction_block_pallas.5} parent=5 // pred_check
        _
      $region10: #{interaction_block_pallas.5} parent=5 // pred_check_branch
        %256 = sbr.rel (%p253) target = $region12
      $region11: #{interaction_block_pallas.5} parent=5 // pred_region
        %s257 = ssub.s32 %s17, 1
        // Predicated region
        $region13: #{interaction_block_pallas.5} parent=11 // pred_check
          %p258 = pneg %p55
        $region14: #{interaction_block_pallas.5} parent=11 // pred_check_branch
          %260 = sbr.rel (%p258) target = $region16
        $region15: #{interaction_block_pallas.5} parent=11 // pred_region
          %s261 = smul.u32 4, %s27
          %p262 = scmp.lt.s32.totalorder %s261, 3
          %s263 = scalar_select %p262, %s261, 3
          %s264 = scalar_lea.vmem %s0, %s263
          %s265 = smul.u32 4, %s27
        $region16: #{interaction_block_pallas.5} parent=11 // pred_fallthru
          _
        // Predicated region
        $region17: #{interaction_block_pallas.5} parent=11 // pred_check
          %p266 = pneg %p81
        $region18: #{interaction_block_pallas.5} parent=11 // pred_check_branch
          %268 = sbr.rel (%p266) target = $region20
        $region19: #{interaction_block_pallas.5} parent=11 // pred_region
          %s269 = smul.u32 64, %s27
          %p270 = scmp.lt.s32.totalorder %s269, 63
          %s271 = scalar_select %p270, %s269, 63
          %s272 = smul.addr %s271, 4
          %s273 = scalar_lea.vmem %s1, %s272
          %s274 = smul.u32 64, %s27
        $region20: #{interaction_block_pallas.5} parent=11 // pred_fallthru
          _
        // Predicated region
        $region21: #{interaction_block_pallas.5} parent=11 // pred_check
          %p275 = pneg %p154
        $region22: #{interaction_block_pallas.5} parent=11 // pred_check_branch
          %277 = sbr.rel (%p275) target = $region24
        $region23: #{interaction_block_pallas.5} parent=11 // pred_region
          _
        $region24: #{interaction_block_pallas.5} parent=11 // pred_fallthru
          _
        // Predicated region
        $region25: #{interaction_block_pallas.5} parent=11 // pred_check
          %p278 = pneg %p175
        $region26: #{interaction_block_pallas.5} parent=11 // pred_check_branch
          %280 = sbr.rel (%p278) target = $region28
        $region27: #{interaction_block_pallas.5} parent=11 // pred_region
          _
        $region28: #{interaction_block_pallas.5} parent=11 // pred_fallthru
          _
        // Predicated region
        $region29: #{interaction_block_pallas.5} parent=11 // pred_check
          %p281 = pneg %p196
        $region30: #{interaction_block_pallas.5} parent=11 // pred_check_branch
          %283 = sbr.rel (%p281) target = $region32
        $region31: #{interaction_block_pallas.5} parent=11 // pred_region
          _
        $region32: #{interaction_block_pallas.5} parent=11 // pred_fallthru
          _
        // Predicated region
        $region33: #{interaction_block_pallas.5} parent=11 // pred_check
          %p284 = pneg %p217
        $region34: #{interaction_block_pallas.5} parent=11 // pred_check_branch
          %286 = sbr.rel (%p284) target = $region36
        $region35: #{interaction_block_pallas.5} parent=11 // pred_region
          _
        $region36: #{interaction_block_pallas.5} parent=11 // pred_fallthru
          _
      $region12: #{interaction_block_pallas.5} parent=5 // pred_fallthru
        _
      %p287 = scmp.lt.s32.totalorder %s17, 2
      // Predicated region
      $region37: #{interaction_block_pallas.5} parent=5 // pred_check
        %p288 = pneg %p287
      $region38: #{interaction_block_pallas.5} parent=5 // pred_check_branch
        %290 = sbr.rel (%p288) target = $region40
      $region39: #{interaction_block_pallas.5} parent=5 // pred_region
        // Predicated region
        $region41: #{interaction_block_pallas.5} parent=39 // pred_check
          %p291 = pneg %p101
        $region42: #{interaction_block_pallas.5} parent=39 // pred_check_branch
          %293 = sbr.rel (%p291) target = $region44
        $region43: #{interaction_block_pallas.5} parent=39 // pred_region
          %s294 = smul.u32 16, %s24
          %p295 = scmp.lt.s32.totalorder %s294, 31
          %s296 = scalar_select %p295, %s294, 31
          %s297 = smul.addr %s296, 8
          %s298 = scalar_lea.vmem %s2, %s297
          %s299 = smul.u32 16, %s24
        $region44: #{interaction_block_pallas.5} parent=39 // pred_fallthru
          _
        // Predicated region
        $region45: #{interaction_block_pallas.5} parent=39 // pred_check
          %p300 = pneg %p127
        $region46: #{interaction_block_pallas.5} parent=39 // pred_check_branch
          %302 = sbr.rel (%p300) target = $region48
        $region47: #{interaction_block_pallas.5} parent=39 // pred_region
          %s303 = smul.u32 16, %s24
          %p304 = scmp.lt.s32.totalorder %s303, 31
          %s305 = scalar_select %p304, %s303, 31
          %s306 = smul.addr %s305, 8
          %s307 = scalar_lea.vmem %s3, %s306
          %s308 = smul.u32 16, %s24
        $region48: #{interaction_block_pallas.5} parent=39 // pred_fallthru
          _
      $region40: #{interaction_block_pallas.5} parent=5 // pred_fallthru
        _
      %p309 = scmp.le.s32.totalorder 1, %s17
      %p310 = scmp.lt.s32.totalorder %s17, 3
      %p311 = pnand %p309, %p310
      %p312 = pneg %p311
      // Predicated region
      $region49: #{interaction_block_pallas.5} parent=5 // pred_check
        _
      $region50: #{interaction_block_pallas.5} parent=5 // pred_check_branch
        %314 = sbr.rel (%p311) target = $region52
      $region51: #{interaction_block_pallas.5} parent=5 // pred_region
        %s315 = ssub.s32 %s17, 1
        %s316 = smul.u32 4, %s27
        %p317 = scmp.lt.s32.totalorder %s316, 3
        %s318 = scalar_select %p317, %s316, 3
        %s319 = scalar_lea.vmem %s0, %s318
        %p320 = pneg %p55
        %p321 = pneg %p52
        %s322 = smul.u32 64, %s27
        %p323 = scmp.lt.s32.totalorder %s322, 63
        %s324 = scalar_select %p323, %s322, 63
        %s325 = smul.addr %s324, 4
        %s326 = scalar_lea.vmem %s1, %s325
        %p327 = pneg %p81
        %p328 = pneg %p78
        %s329 = smul.u32 16, %s26
        %p330 = scmp.lt.s32.totalorder %s329, 31
        %s331 = scalar_select %p330, %s329, 31
        %s332 = smul.addr %s331, 8
        %s333 = scalar_lea.vmem %s2, %s332
        %p334 = pneg %p107
        %p335 = pneg %p104
        %s336 = smul.u32 16, %s26
        %p337 = scmp.lt.s32.totalorder %s336, 31
        %s338 = scalar_select %p337, %s336, 31
        %s339 = smul.addr %s338, 8
        %s340 = scalar_lea.vmem %s3, %s339
        %p341 = pneg %p133
        %p342 = pneg %p130
        %p343 = pneg %p154
        %p344 = pneg %p151
        %p345 = pneg %p175
        %p346 = pneg %p172
        %p347 = pneg %p196
        %p348 = pneg %p193
        %p349 = pneg %p217
        %p350 = pneg %p214
        %p351 = pneg %p243
        %p352 = pneg %p240
        %s353 = sand.u32 %s230, 1
        %s354 = scalar_lea.sflag [#allocation4], %s353
        %s355 = sand.u32 %s230, 1
        %s356 = smul.addr %s355, 128
        %s357 = scalar_lea.vmem [#allocation3], %s356
        %s358 = smul.u32 4, %s27
        %p359 = scmp.lt.s32.totalorder %s358, 3
        %s360 = scalar_select %p359, %s358, 3
        %s361 = scalar_lea.vmem %s0, %s360
        %s362 = smul.u32 4, %s27
        %s363 = smul.u32 64, %s27
        %p364 = scmp.lt.s32.totalorder %s363, 63
        %s365 = scalar_select %p364, %s363, 63
        %s366 = smul.addr %s365, 4
        %s367 = scalar_lea.vmem %s1, %s366
        %s368 = smul.u32 64, %s27
        %s369 = smul.u32 16, %s26
        %p370 = scmp.lt.s32.totalorder %s369, 31
        %s371 = scalar_select %p370, %s369, 31
        %s372 = smul.addr %s371, 8
        %s373 = scalar_lea.vmem %s2, %s372
        %s374 = smul.u32 16, %s26
        %s375 = smul.u32 16, %s26
        %p376 = scmp.lt.s32.totalorder %s375, 31
        %s377 = scalar_select %p376, %s375, 31
        %s378 = smul.addr %s377, 8
        %s379 = scalar_lea.vmem %s3, %s378
        %s380 = smul.u32 16, %s26
        %s381 = smul.u32 16, %s26
        %p383 = scmp.eq.s32.totalorder %s27, 0
        // Predicated region
        $region53: #{interaction_block_pallas.5} parent=51 // pred_check
          %p384 = pneg %p383
        $region54: #{interaction_block_pallas.5} parent=51 // pred_check_branch
          %386 = sbr.rel (%p384) target = $region56
        $region55: #{interaction_block_pallas.5} parent=51 // pred_region
          %387 = vst [vmem:[#allocation2] sm:$0xff] 0.0
          %388 = vst [vmem:[#allocation2 + $0x8] sm:$0xff] 0.0
          %389 = vst [vmem:[#allocation2 + $0x10] sm:$0xff] 0.0
          %390 = vst [vmem:[#allocation2 + $0x18] sm:$0xff] 0.0
          %391 = vst [vmem:[#allocation2 + $0x20] sm:$0xff] 0.0
          %392 = vst [vmem:[#allocation2 + $0x28] sm:$0xff] 0.0
          %393 = vst [vmem:[#allocation2 + $0x30] sm:$0xff] 0.0
          %394 = vst [vmem:[#allocation2 + $0x38] sm:$0xff] 0.0
          %395 = vst [vmem:[#allocation2 + $0x40] sm:$0xff] 0.0
          %396 = vst [vmem:[#allocation2 + $0x48] sm:$0xff] 0.0
          %397 = vst [vmem:[#allocation2 + $0x50] sm:$0xff] 0.0
          %398 = vst [vmem:[#allocation2 + $0x58] sm:$0xff] 0.0
          %399 = vst [vmem:[#allocation2 + $0x60] sm:$0xff] 0.0
          %400 = vst [vmem:[#allocation2 + $0x68] sm:$0xff] 0.0
          %401 = vst [vmem:[#allocation2 + $0x70] sm:$0xff] 0.0
          %402 = vst [vmem:[#allocation2 + $0x78] sm:$0xff] 0.0
        $region56: #{interaction_block_pallas.5} parent=51 // pred_fallthru
          _
        %v403 = vld [vmem:[%s367] sm:$0xf]
        %v404 = vld [vmem:[%s367 + $0x4] sm:$0xf]
        %v405 = vld [vmem:[%s367 + $0x8] sm:$0xf]
        %v406 = vld [vmem:[%s367 + $0xc] sm:$0xf]
        %v407 = vld [vmem:[%s367 + $0x10] sm:$0xf]
        %v408 = vld [vmem:[%s367 + $0x14] sm:$0xf]
        %v409 = vld [vmem:[%s367 + $0x18] sm:$0xf]
        %v410 = vld [vmem:[%s367 + $0x1c] sm:$0xf]
        %v411 = vld [vmem:[%s367 + $0x20] sm:$0xf]
        %v412 = vld [vmem:[%s367 + $0x24] sm:$0xf]
        %v413 = vld [vmem:[%s367 + $0x28] sm:$0xf]
        %v414 = vld [vmem:[%s367 + $0x2c] sm:$0xf]
        %v415 = vld [vmem:[%s367 + $0x30] sm:$0xf]
        %v416 = vld [vmem:[%s367 + $0x34] sm:$0xf]
        %v417 = vld [vmem:[%s367 + $0x38] sm:$0xf]
        %v418 = vld [vmem:[%s367 + $0x3c] sm:$0xf]
        %v419 = vld [vmem:[%s367 + $0x40] sm:$0xf]
        %v420 = vld [vmem:[%s367 + $0x44] sm:$0xf]
        %v421 = vld [vmem:[%s367 + $0x48] sm:$0xf]
        %v422 = vld [vmem:[%s367 + $0x4c] sm:$0xf]
        %v423 = vld [vmem:[%s367 + $0x50] sm:$0xf]
        %v424 = vld [vmem:[%s367 + $0x54] sm:$0xf]
        %v425 = vld [vmem:[%s367 + $0x58] sm:$0xf]
        %v426 = vld [vmem:[%s367 + $0x5c] sm:$0xf]
        %v427 = vld [vmem:[%s367 + $0x60] sm:$0xf]
        %v428 = vld [vmem:[%s367 + $0x64] sm:$0xf]
        %v429 = vld [vmem:[%s367 + $0x68] sm:$0xf]
        %v430 = vld [vmem:[%s367 + $0x6c] sm:$0xf]
        %v431 = vld [vmem:[%s367 + $0x70] sm:$0xf]
        %v432 = vld [vmem:[%s367 + $0x74] sm:$0xf]
        %v433 = vld [vmem:[%s367 + $0x78] sm:$0xf]
        %v434 = vld [vmem:[%s367 + $0x7c] sm:$0xf]
        %v435 = vld [vmem:[%s367 + $0x80] sm:$0xf]
        %v436 = vld [vmem:[%s367 + $0x84] sm:$0xf]
        %v437 = vld [vmem:[%s367 + $0x88] sm:$0xf]
        %v438 = vld [vmem:[%s367 + $0x8c] sm:$0xf]
        %v439 = vld [vmem:[%s367 + $0x90] sm:$0xf]
        %v440 = vld [vmem:[%s367 + $0x94] sm:$0xf]
        %v441 = vld [vmem:[%s367 + $0x98] sm:$0xf]
        %v442 = vld [vmem:[%s367 + $0x9c] sm:$0xf]
        %v443 = vld [vmem:[%s367 + $0xa0] sm:$0xf]
        %v444 = vld [vmem:[%s367 + $0xa4] sm:$0xf]
        %v445 = vld [vmem:[%s367 + $0xa8] sm:$0xf]
        %v446 = vld [vmem:[%s367 + $0xac] sm:$0xf]
        %v447 = vld [vmem:[%s367 + $0xb0] sm:$0xf]
        %v448 = vld [vmem:[%s367 + $0xb4] sm:$0xf]
        %v449 = vld [vmem:[%s367 + $0xb8] sm:$0xf]
        %v450 = vld [vmem:[%s367 + $0xbc] sm:$0xf]
        %v451 = vld [vmem:[%s367 + $0xc0] sm:$0xf]
        %v452 = vld [vmem:[%s367 + $0xc4] sm:$0xf]
        %v453 = vld [vmem:[%s367 + $0xc8] sm:$0xf]
        %v454 = vld [vmem:[%s367 + $0xcc] sm:$0xf]
        %v455 = vld [vmem:[%s367 + $0xd0] sm:$0xf]
        %v456 = vld [vmem:[%s367 + $0xd4] sm:$0xf]
        %v457 = vld [vmem:[%s367 + $0xd8] sm:$0xf]
        %v458 = vld [vmem:[%s367 + $0xdc] sm:$0xf]
        %v459 = vld [vmem:[%s367 + $0xe0] sm:$0xf]
        %v460 = vld [vmem:[%s367 + $0xe4] sm:$0xf]
        %v461 = vld [vmem:[%s367 + $0xe8] sm:$0xf]
        %v462 = vld [vmem:[%s367 + $0xec] sm:$0xf]
        %v463 = vld [vmem:[%s367 + $0xf0] sm:$0xf]
        %v464 = vld [vmem:[%s367 + $0xf4] sm:$0xf]
        %v465 = vld [vmem:[%s367 + $0xf8] sm:$0xf]
        %v466 = vld [vmem:[%s367 + $0xfc] sm:$0xf]
        %s467 = smul.u32 %s26, 128
        %v468 = vlaneseq
        %v469 = vshrl.u32 %v468, 7
        %v470 = vadd.s32 %v469, 8
        %v471 = vadd.s32 %v469, 16
        %v472 = vadd.s32 %v469, 24
        %v473 = vadd.s32 %v469, 32
        %v474 = vadd.s32 %v469, 40
        %v475 = vadd.s32 %v469, 48
        %v476 = vadd.s32 %v469, 56
        %v477 = vadd.s32 %v469, 64
        %v478 = vadd.s32 %v469, 72
        %v479 = vadd.s32 %v469, 80
        %v480 = vadd.s32 %v469, 88
        %v481 = vadd.s32 %v469, 96
        %v482 = vadd.s32 %v469, 104
        %v483 = vadd.s32 %v469, 112
        %v484 = vadd.s32 %v469, 120
        %v485 = vstv %s467
        %v486 = vadd.s32 %v485, %v469
        %v487 = vadd.s32 %v485, %v470
        %v488 = vadd.s32 %v485, %v471
        %v489 = vadd.s32 %v485, %v472
        %v490 = vadd.s32 %v485, %v473
        %v491 = vadd.s32 %v485, %v474
        %v492 = vadd.s32 %v485, %v475
        %v493 = vadd.s32 %v485, %v476
        %v494 = vadd.s32 %v485, %v477
        %v495 = vadd.s32 %v485, %v478
        %v496 = vadd.s32 %v485, %v479
        %v497 = vadd.s32 %v485, %v480
        %v498 = vadd.s32 %v485, %v481
        %v499 = vadd.s32 %v485, %v482
        %v500 = vadd.s32 %v485, %v483
        %v501 = vadd.s32 %v485, %v484
        %v502 = vld [vmem:[%s361] sm:$0xf]
        %v503 = vlaneseq
        %v504 = vshrl.u32 %v503, 7
        %v505 = vsub.s32 0, %v504
        %v506 = vrot.slane %v502, %v505
        %v507 = vlaneseq
        %v508 = vshrl.u32 %v507, 7
        %v509 = vsub.s32 1, %v508
        %v510 = vrot.slane %v502, %v509
        %v511 = vlaneseq
        %v512 = vshrl.u32 %v511, 7
        %v513 = vsub.s32 2, %v512
        %v514 = vrot.slane %v502, %v513
        %v515 = vlaneseq
        %v516 = vshrl.u32 %v515, 7
        %v517 = vsub.s32 3, %v516
        %v518 = vrot.slane %v502, %v517
        %vm519 = vcmp.eq.s32.totalorder %v506, %v486
        %vm520 = vcmp.eq.s32.totalorder %v510, %v486
        %vm521 = vcmp.eq.s32.totalorder %v514, %v486
        %vm522 = vcmp.eq.s32.totalorder %v518, %v486
        %vm523 = vcmp.eq.s32.totalorder %v506, %v487
        %vm524 = vcmp.eq.s32.totalorder %v510, %v487
        %vm525 = vcmp.eq.s32.totalorder %v514, %v487
        %vm526 = vcmp.eq.s32.totalorder %v518, %v487
        %vm527 = vcmp.eq.s32.totalorder %v506, %v488
        %vm528 = vcmp.eq.s32.totalorder %v510, %v488
        %vm529 = vcmp.eq.s32.totalorder %v514, %v488
        %vm530 = vcmp.eq.s32.totalorder %v518, %v488
        %vm531 = vcmp.eq.s32.totalorder %v506, %v489
        %vm532 = vcmp.eq.s32.totalorder %v510, %v489
        %vm533 = vcmp.eq.s32.totalorder %v514, %v489
        %vm534 = vcmp.eq.s32.totalorder %v518, %v489
        %vm535 = vcmp.eq.s32.totalorder %v506, %v490
        %vm536 = vcmp.eq.s32.totalorder %v510, %v490
        %vm537 = vcmp.eq.s32.totalorder %v514, %v490
        %vm538 = vcmp.eq.s32.totalorder %v518, %v490
        %vm539 = vcmp.eq.s32.totalorder %v506, %v491
        %vm540 = vcmp.eq.s32.totalorder %v510, %v491
        %vm541 = vcmp.eq.s32.totalorder %v514, %v491
        %vm542 = vcmp.eq.s32.totalorder %v518, %v491
        %vm543 = vcmp.eq.s32.totalorder %v506, %v492
        %vm544 = vcmp.eq.s32.totalorder %v510, %v492
        %vm545 = vcmp.eq.s32.totalorder %v514, %v492
        %vm546 = vcmp.eq.s32.totalorder %v518, %v492
        %vm547 = vcmp.eq.s32.totalorder %v506, %v493
        %vm548 = vcmp.eq.s32.totalorder %v510, %v493
        %vm549 = vcmp.eq.s32.totalorder %v514, %v493
        %vm550 = vcmp.eq.s32.totalorder %v518, %v493
        %vm551 = vcmp.eq.s32.totalorder %v506, %v494
        %vm552 = vcmp.eq.s32.totalorder %v510, %v494
        %vm553 = vcmp.eq.s32.totalorder %v514, %v494
        %vm554 = vcmp.eq.s32.totalorder %v518, %v494
        %vm555 = vcmp.eq.s32.totalorder %v506, %v495
        %vm556 = vcmp.eq.s32.totalorder %v510, %v495
        %vm557 = vcmp.eq.s32.totalorder %v514, %v495
        %vm558 = vcmp.eq.s32.totalorder %v518, %v495
        %vm559 = vcmp.eq.s32.totalorder %v506, %v496
        %vm560 = vcmp.eq.s32.totalorder %v510, %v496
        %vm561 = vcmp.eq.s32.totalorder %v514, %v496
        %vm562 = vcmp.eq.s32.totalorder %v518, %v496
        %vm563 = vcmp.eq.s32.totalorder %v506, %v497
        %vm564 = vcmp.eq.s32.totalorder %v510, %v497
        %vm565 = vcmp.eq.s32.totalorder %v514, %v497
        %vm566 = vcmp.eq.s32.totalorder %v518, %v497
        %vm567 = vcmp.eq.s32.totalorder %v506, %v498
        %vm568 = vcmp.eq.s32.totalorder %v510, %v498
        %vm569 = vcmp.eq.s32.totalorder %v514, %v498
        %vm570 = vcmp.eq.s32.totalorder %v518, %v498
        %vm571 = vcmp.eq.s32.totalorder %v506, %v499
        %vm572 = vcmp.eq.s32.totalorder %v510, %v499
        %vm573 = vcmp.eq.s32.totalorder %v514, %v499
        %vm574 = vcmp.eq.s32.totalorder %v518, %v499
        %vm575 = vcmp.eq.s32.totalorder %v506, %v500
        %vm576 = vcmp.eq.s32.totalorder %v510, %v500
        %vm577 = vcmp.eq.s32.totalorder %v514, %v500
        %vm578 = vcmp.eq.s32.totalorder %v518, %v500
        %vm579 = vcmp.eq.s32.totalorder %v506, %v501
        %vm580 = vcmp.eq.s32.totalorder %v510, %v501
        %vm581 = vcmp.eq.s32.totalorder %v514, %v501
        %vm582 = vcmp.eq.s32.totalorder %v518, %v501
        %v583 = vsel %vm519, 1.0, 0.0
        %v584 = vsel %vm520, 1.0, 0.0
        %v585 = vsel %vm521, 1.0, 0.0
        %v586 = vsel %vm522, 1.0, 0.0
        %v587 = vsel %vm523, 1.0, 0.0
        %v588 = vsel %vm524, 1.0, 0.0
        %v589 = vsel %vm525, 1.0, 0.0
        %v590 = vsel %vm526, 1.0, 0.0
        %v591 = vsel %vm527, 1.0, 0.0
        %v592 = vsel %vm528, 1.0, 0.0
        %v593 = vsel %vm529, 1.0, 0.0
        %v594 = vsel %vm530, 1.0, 0.0
        %v595 = vsel %vm531, 1.0, 0.0
        %v596 = vsel %vm532, 1.0, 0.0
        %v597 = vsel %vm533, 1.0, 0.0
        %v598 = vsel %vm534, 1.0, 0.0
        %v599 = vsel %vm535, 1.0, 0.0
        %v600 = vsel %vm536, 1.0, 0.0
        %v601 = vsel %vm537, 1.0, 0.0
        %v602 = vsel %vm538, 1.0, 0.0
        %v603 = vsel %vm539, 1.0, 0.0
        %v604 = vsel %vm540, 1.0, 0.0
        %v605 = vsel %vm541, 1.0, 0.0
        %v606 = vsel %vm542, 1.0, 0.0
        %v607 = vsel %vm543, 1.0, 0.0
        %v608 = vsel %vm544, 1.0, 0.0
        %v609 = vsel %vm545, 1.0, 0.0
        %v610 = vsel %vm546, 1.0, 0.0
        %v611 = vsel %vm547, 1.0, 0.0
        %v612 = vsel %vm548, 1.0, 0.0
        %v613 = vsel %vm549, 1.0, 0.0
        %v614 = vsel %vm550, 1.0, 0.0
        %v615 = vsel %vm551, 1.0, 0.0
        %v616 = vsel %vm552, 1.0, 0.0
        %v617 = vsel %vm553, 1.0, 0.0
        %v618 = vsel %vm554, 1.0, 0.0
        %v619 = vsel %vm555, 1.0, 0.0
        %v620 = vsel %vm556, 1.0, 0.0
        %v621 = vsel %vm557, 1.0, 0.0
        %v622 = vsel %vm558, 1.0, 0.0
        %v623 = vsel %vm559, 1.0, 0.0
        %v624 = vsel %vm560, 1.0, 0.0
        %v625 = vsel %vm561, 1.0, 0.0
        %v626 = vsel %vm562, 1.0, 0.0
        %v627 = vsel %vm563, 1.0, 0.0
        %v628 = vsel %vm564, 1.0, 0.0
        %v629 = vsel %vm565, 1.0, 0.0
        %v630 = vsel %vm566, 1.0, 0.0
        %v631 = vsel %vm567, 1.0, 0.0
        %v632 = vsel %vm568, 1.0, 0.0
        %v633 = vsel %vm569, 1.0, 0.0
        %v634 = vsel %vm570, 1.0, 0.0
        %v635 = vsel %vm571, 1.0, 0.0
        %v636 = vsel %vm572, 1.0, 0.0
        %v637 = vsel %vm573, 1.0, 0.0
        %v638 = vsel %vm574, 1.0, 0.0
        %v639 = vsel %vm575, 1.0, 0.0
        %v640 = vsel %vm576, 1.0, 0.0
        %v641 = vsel %vm577, 1.0, 0.0
        %v642 = vsel %vm578, 1.0, 0.0
        %v643 = vsel %vm579, 1.0, 0.0
        %v644 = vsel %vm580, 1.0, 0.0
        %v645 = vsel %vm581, 1.0, 0.0
        %v646 = vsel %vm582, 1.0, 0.0
        %v647 = vpack.c.bf16 %v587, %v583
        %v648 = vpack.c.bf16 %v588, %v584
        %v649 = vpack.c.bf16 %v589, %v585
        %v650 = vpack.c.bf16 %v590, %v586
        %v651 = vpack.c.bf16 %v595, %v591
        %v652 = vpack.c.bf16 %v596, %v592
        %v653 = vpack.c.bf16 %v597, %v593
        %v654 = vpack.c.bf16 %v598, %v594
        %v655 = vpack.c.bf16 %v603, %v599
        %v656 = vpack.c.bf16 %v604, %v600
        %v657 = vpack.c.bf16 %v605, %v601
        %v658 = vpack.c.bf16 %v606, %v602
        %v659 = vpack.c.bf16 %v611, %v607
        %v660 = vpack.c.bf16 %v612, %v608
        %v661 = vpack.c.bf16 %v613, %v609
        %v662 = vpack.c.bf16 %v614, %v610
        %v663 = vpack.c.bf16 %v619, %v615
        %v664 = vpack.c.bf16 %v620, %v616
        %v665 = vpack.c.bf16 %v621, %v617
        %v666 = vpack.c.bf16 %v622, %v618
        %v667 = vpack.c.bf16 %v627, %v623
        %v668 = vpack.c.bf16 %v628, %v624
        %v669 = vpack.c.bf16 %v629, %v625
        %v670 = vpack.c.bf16 %v630, %v626
        %v671 = vpack.c.bf16 %v635, %v631
        %v672 = vpack.c.bf16 %v636, %v632
        %v673 = vpack.c.bf16 %v637, %v633
        %v674 = vpack.c.bf16 %v638, %v634
        %v675 = vpack.c.bf16 %v643, %v639
        %v676 = vpack.c.bf16 %v644, %v640
        %v677 = vpack.c.bf16 %v645, %v641
        %v678 = vpack.c.bf16 %v646, %v642
        %v679 = vld [vmem:[#allocation2] sm:$0xff]
        %v680 = vld [vmem:[#allocation2 + $0x8] sm:$0xff]
        %v681 = vld [vmem:[#allocation2 + $0x10] sm:$0xff]
        %v682 = vld [vmem:[#allocation2 + $0x18] sm:$0xff]
        %v683 = vld [vmem:[#allocation2 + $0x20] sm:$0xff]
        %v684 = vld [vmem:[#allocation2 + $0x28] sm:$0xff]
        %v685 = vld [vmem:[#allocation2 + $0x30] sm:$0xff]
        %v686 = vld [vmem:[#allocation2 + $0x38] sm:$0xff]
        %v687 = vld [vmem:[#allocation2 + $0x40] sm:$0xff]
        %v688 = vld [vmem:[#allocation2 + $0x48] sm:$0xff]
        %v689 = vld [vmem:[#allocation2 + $0x50] sm:$0xff]
        %v690 = vld [vmem:[#allocation2 + $0x58] sm:$0xff]
        %v691 = vld [vmem:[#allocation2 + $0x60] sm:$0xff]
        %v692 = vld [vmem:[#allocation2 + $0x68] sm:$0xff]
        %v693 = vld [vmem:[#allocation2 + $0x70] sm:$0xff]
        %v694 = vld [vmem:[#allocation2 + $0x78] sm:$0xff]
        %v759 = vunpack.c.l.b16 %v403
        %v760 = vunpack.c.l.b16 %v404
        %v761 = vunpack.c.l.b16 %v405
        %v762 = vunpack.c.l.b16 %v406
        %v763 = vunpack.c.l.b16 %v407
        %v764 = vunpack.c.l.b16 %v408
        %v765 = vunpack.c.l.b16 %v409
        %v766 = vunpack.c.l.b16 %v410
        %v767 = vunpack.c.l.b16 %v411
        %v768 = vunpack.c.l.b16 %v412
        %v769 = vunpack.c.l.b16 %v413
        %v770 = vunpack.c.l.b16 %v414
        %v771 = vunpack.c.l.b16 %v415
        %v772 = vunpack.c.l.b16 %v416
        %v773 = vunpack.c.l.b16 %v417
        %v774 = vunpack.c.l.b16 %v418
        %v775 = vunpack.c.l.b16 %v419
        %v776 = vunpack.c.l.b16 %v420
        %v777 = vunpack.c.l.b16 %v421
        %v778 = vunpack.c.l.b16 %v422
        %v779 = vunpack.c.l.b16 %v423
        %v780 = vunpack.c.l.b16 %v424
        %v781 = vunpack.c.l.b16 %v425
        %v782 = vunpack.c.l.b16 %v426
        %v783 = vunpack.c.l.b16 %v427
        %v784 = vunpack.c.l.b16 %v428
        %v785 = vunpack.c.l.b16 %v429
        %v786 = vunpack.c.l.b16 %v430
        %v787 = vunpack.c.l.b16 %v431
        %v788 = vunpack.c.l.b16 %v432
        %v789 = vunpack.c.l.b16 %v433
        %v790 = vunpack.c.l.b16 %v434
        %v791 = vunpack.c.l.b16 %v435
        %v792 = vunpack.c.l.b16 %v436
        %v793 = vunpack.c.l.b16 %v437
        %v794 = vunpack.c.l.b16 %v438
        %v795 = vunpack.c.l.b16 %v439
        %v796 = vunpack.c.l.b16 %v440
        %v797 = vunpack.c.l.b16 %v441
        %v798 = vunpack.c.l.b16 %v442
        %v799 = vunpack.c.l.b16 %v443
        %v800 = vunpack.c.l.b16 %v444
        %v801 = vunpack.c.l.b16 %v445
        %v802 = vunpack.c.l.b16 %v446
        %v803 = vunpack.c.l.b16 %v447
        %v804 = vunpack.c.l.b16 %v448
        %v805 = vunpack.c.l.b16 %v449
        %v806 = vunpack.c.l.b16 %v450
        %v807 = vunpack.c.l.b16 %v451
        %v808 = vunpack.c.l.b16 %v452
        %v809 = vunpack.c.l.b16 %v453
        %v810 = vunpack.c.l.b16 %v454
        %v811 = vunpack.c.l.b16 %v455
        %v812 = vunpack.c.l.b16 %v456
        %v813 = vunpack.c.l.b16 %v457
        %v814 = vunpack.c.l.b16 %v458
        %v815 = vunpack.c.l.b16 %v459
        %v816 = vunpack.c.l.b16 %v460
        %v817 = vunpack.c.l.b16 %v461
        %v818 = vunpack.c.l.b16 %v462
        %v819 = vunpack.c.l.b16 %v463
        %v820 = vunpack.c.l.b16 %v464
        %v821 = vunpack.c.l.b16 %v465
        %v822 = vunpack.c.l.b16 %v466
        %v823 = vpack.c.b16 %v760, %v759
        %v824 = vpack.c.b16 %v762, %v761
        %v825 = vpack.c.b16 %v764, %v763
        %v826 = vpack.c.b16 %v766, %v765
        %v827 = vpack.c.b16 %v768, %v767
        %v828 = vpack.c.b16 %v770, %v769
        %v829 = vpack.c.b16 %v772, %v771
        %v830 = vpack.c.b16 %v774, %v773
        %v831 = vpack.c.b16 %v776, %v775
        %v832 = vpack.c.b16 %v778, %v777
        %v833 = vpack.c.b16 %v780, %v779
        %v834 = vpack.c.b16 %v782, %v781
        %v835 = vpack.c.b16 %v784, %v783
        %v836 = vpack.c.b16 %v786, %v785
        %v837 = vpack.c.b16 %v788, %v787
        %v838 = vpack.c.b16 %v790, %v789
        %v839 = vpack.c.b16 %v792, %v791
        %v840 = vpack.c.b16 %v794, %v793
        %v841 = vpack.c.b16 %v796, %v795
        %v842 = vpack.c.b16 %v798, %v797
        %v843 = vpack.c.b16 %v800, %v799
        %v844 = vpack.c.b16 %v802, %v801
        %v845 = vpack.c.b16 %v804, %v803
        %v846 = vpack.c.b16 %v806, %v805
        %v847 = vpack.c.b16 %v808, %v807
        %v848 = vpack.c.b16 %v810, %v809
        %v849 = vpack.c.b16 %v812, %v811
        %v850 = vpack.c.b16 %v814, %v813
        %v851 = vpack.c.b16 %v816, %v815
        %v852 = vpack.c.b16 %v818, %v817
        %v853 = vpack.c.b16 %v820, %v819
        %v854 = vpack.c.b16 %v822, %v821
        %887 = vmatprep.subr.bf16.mxu0 0
        %888 = vmatpush1.bf16.msra.mxu0 %v823
        %889 = vmatprep.subr.bf16.mxu0 0
        %890 = vmatpush1.bf16.msra.mxu0 %v824
        %891 = vmatprep.subr.bf16.mxu0 0
        %892 = vmatpush1.bf16.msra.mxu0 %v825
        %893 = vmatprep.subr.bf16.mxu0 0
        %894 = vmatpush1.bf16.msra.mxu0 %v826
        %895 = vmatprep.subr.bf16.mxu0 0
        %896 = vmatpush1.bf16.msra.mxu0 %v827
        %897 = vmatprep.subr.bf16.mxu0 0
        %898 = vmatpush1.bf16.msra.mxu0 %v828
        %899 = vmatprep.subr.bf16.mxu0 0
        %900 = vmatpush1.bf16.msra.mxu0 %v829
        %901 = vmatprep.subr.bf16.mxu0 0
        %902 = vmatpush1.bf16.msra.mxu0 %v830
        %903 = vmatprep.subr.bf16.mxu0 0
        %904 = vmatpush1.bf16.msra.mxu0 %v831
        %905 = vmatprep.subr.bf16.mxu0 0
        %906 = vmatpush1.bf16.msra.mxu0 %v832
        %907 = vmatprep.subr.bf16.mxu0 0
        %908 = vmatpush1.bf16.msra.mxu0 %v833
        %909 = vmatprep.subr.bf16.mxu0 0
        %910 = vmatpush1.bf16.msra.mxu0 %v834
        %911 = vmatprep.subr.bf16.mxu0 0
        %912 = vmatpush1.bf16.msra.mxu0 %v835
        %913 = vmatprep.subr.bf16.mxu0 0
        %914 = vmatpush1.bf16.msra.mxu0 %v836
        %915 = vmatprep.subr.bf16.mxu0 0
        %916 = vmatpush1.bf16.msra.mxu0 %v837
        %917 = vmatprep.subr.bf16.mxu0 0
        %918 = vmatpush1.bf16.msra.mxu0 %v838
        %919 = vmatprep.mubr.bf16.mxu0 %v648
        %920 = vmatmul.mubr.bf16.gmra.mrb[0].mxu0 %v647
        %v921 = vpop.f32.mrb[0].mxu0
        %v922 = vadd.f32 0.0, %v921
        %v923 = vpop.f32.mrb[0].mxu0
        %v924 = vpop.f32.mrb[0].mxu0
        %v925 = vadd.f32 0.0, %v924
        %v926 = vpop.f32.mrb[0].mxu0
        %927 = vmatprep.mubr.bf16.mxu0 %v652
        %928 = vmatmul.mubr.bf16.gmra.mrb[0].mxu0 %v651
        %v929 = vpop.f32.mrb[0].mxu0
        %v930 = vadd.f32 0.0, %v929
        %v931 = vpop.f32.mrb[0].mxu0
        %v932 = vpop.f32.mrb[0].mxu0
        %v933 = vadd.f32 0.0, %v932
        %v934 = vpop.f32.mrb[0].mxu0
        %935 = vmatprep.mubr.bf16.mxu0 %v656
        %936 = vmatmul.mubr.bf16.gmra.mrb[0].mxu0 %v655
        %v937 = vpop.f32.mrb[0].mxu0
        %v938 = vadd.f32 0.0, %v937
        %v939 = vpop.f32.mrb[0].mxu0
        %v940 = vpop.f32.mrb[0].mxu0
        %v941 = vadd.f32 0.0, %v940
        %v942 = vpop.f32.mrb[0].mxu0
        %943 = vmatprep.mubr.bf16.mxu0 %v660
        %944 = vmatmul.mubr.bf16.gmra.mrb[0].mxu0 %v659
        %v945 = vpop.f32.mrb[0].mxu0
        %v946 = vadd.f32 0.0, %v945
        %v947 = vpop.f32.mrb[0].mxu0
        %v948 = vpop.f32.mrb[0].mxu0
        %v949 = vadd.f32 0.0, %v948
        %v950 = vpop.f32.mrb[0].mxu0
        %951 = vmatprep.mubr.bf16.mxu0 %v664
        %952 = vmatmul.mubr.bf16.gmra.mrb[0].mxu0 %v663
        %v953 = vpop.f32.mrb[0].mxu0
        %v954 = vadd.f32 0.0, %v953
        %v955 = vpop.f32.mrb[0].mxu0
        %v956 = vpop.f32.mrb[0].mxu0
        %v957 = vadd.f32 0.0, %v956
        %v958 = vpop.f32.mrb[0].mxu0
        %959 = vmatprep.mubr.bf16.mxu0 %v668
        %960 = vmatmul.mubr.bf16.gmra.mrb[0].mxu0 %v667
        %v961 = vpop.f32.mrb[0].mxu0
        %v962 = vadd.f32 0.0, %v961
        %v963 = vpop.f32.mrb[0].mxu0
        %v964 = vpop.f32.mrb[0].mxu0
        %v965 = vadd.f32 0.0, %v964
        %v966 = vpop.f32.mrb[0].mxu0
        %967 = vmatprep.mubr.bf16.mxu0 %v672
        %968 = vmatmul.mubr.bf16.gmra.mrb[0].mxu0 %v671
        %v969 = vpop.f32.mrb[0].mxu0
        %v970 = vadd.f32 0.0, %v969
        %v971 = vpop.f32.mrb[0].mxu0
        %v972 = vpop.f32.mrb[0].mxu0
        %v973 = vadd.f32 0.0, %v972
        %v974 = vpop.f32.mrb[0].mxu0
        %975 = vmatprep.mubr.bf16.mxu0 %v676
        %976 = vmatmul.mubr.bf16.gmra.mrb[0].mxu0 %v675
        %v977 = vpop.f32.mrb[0].mxu0
        %v978 = vadd.f32 0.0, %v977
        %v979 = vpop.f32.mrb[0].mxu0
        %v980 = vpop.f32.mrb[0].mxu0
        %v981 = vadd.f32 0.0, %v980
        %v982 = vpop.f32.mrb[0].mxu0
        %983 = vdwg.mxu0
        %984 = vmatprep.subr.bf16.mxu0 0
        %985 = vmatpush1.bf16.msra.mxu0 %v839
        %986 = vmatprep.subr.bf16.mxu0 0
        %987 = vmatpush1.bf16.msra.mxu0 %v840
        %988 = vmatprep.subr.bf16.mxu0 0
        %989 = vmatpush1.bf16.msra.mxu0 %v841
        %990 = vmatprep.subr.bf16.mxu0 0
        %991 = vmatpush1.bf16.msra.mxu0 %v842
        %992 = vmatprep.subr.bf16.mxu0 0
        %993 = vmatpush1.bf16.msra.mxu0 %v843
        %994 = vmatprep.subr.bf16.mxu0 0
        %995 = vmatpush1.bf16.msra.mxu0 %v844
        %996 = vmatprep.subr.bf16.mxu0 0
        %997 = vmatpush1.bf16.msra.mxu0 %v845
        %998 = vmatprep.subr.bf16.mxu0 0
        %999 = vmatpush1.bf16.msra.mxu0 %v846
        %1000 = vmatprep.subr.bf16.mxu0 0
        %1001 = vmatpush1.bf16.msra.mxu0 %v847
        %1002 = vmatprep.subr.bf16.mxu0 0
        %1003 = vmatpush1.bf16.msra.mxu0 %v848
        %1004 = vmatprep.subr.bf16.mxu0 0
        %1005 = vmatpush1.bf16.msra.mxu0 %v849
        %1006 = vmatprep.subr.bf16.mxu0 0
        %1007 = vmatpush1.bf16.msra.mxu0 %v850
        %1008 = vmatprep.subr.bf16.mxu0 0
        %1009 = vmatpush1.bf16.msra.mxu0 %v851
        %1010 = vmatprep.subr.bf16.mxu0 0
        %1011 = vmatpush1.bf16.msra.mxu0 %v852
        %1012 = vmatprep.subr.bf16.mxu0 0
        %1013 = vmatpush1.bf16.msra.mxu0 %v853
        %1014 = vmatprep.subr.bf16.mxu0 0
        %1015 = vmatpush1.bf16.msra.mxu0 %v854
        %1016 = vmatprep.mubr.bf16.mxu0 %v650
        %1017 = vmatmul.mubr.bf16.gmra.mrb[0].mxu0 %v649
        %v1018 = vpop.f32.mrb[0].mxu0
        %v1019 = vadd.f32 %v922, %v1018
        %v1020 = vpop.f32.mrb[0].mxu0
        %v1021 = vpop.f32.mrb[0].mxu0
        %v1022 = vadd.f32 %v925, %v1021
        %v1023 = vpop.f32.mrb[0].mxu0
        %1024 = vmatprep.mubr.bf16.mxu0 %v654
        %1025 = vmatmul.mubr.bf16.gmra.mrb[0].mxu0 %v653
        %v1026 = vpop.f32.mrb[0].mxu0
        %v1027 = vadd.f32 %v930, %v1026
        %v1028 = vpop.f32.mrb[0].mxu0
        %v1029 = vpop.f32.mrb[0].mxu0
        %v1030 = vadd.f32 %v933, %v1029
        %v1031 = vpop.f32.mrb[0].mxu0
        %1032 = vmatprep.mubr.bf16.mxu0 %v658
        %1033 = vmatmul.mubr.bf16.gmra.mrb[0].mxu0 %v657
        %v1034 = vpop.f32.mrb[0].mxu0
        %v1035 = vadd.f32 %v938, %v1034
        %v1036 = vpop.f32.mrb[0].mxu0
        %v1037 = vpop.f32.mrb[0].mxu0
        %v1038 = vadd.f32 %v941, %v1037
        %v1039 = vpop.f32.mrb[0].mxu0
        %1040 = vmatprep.mubr.bf16.mxu0 %v662
        %1041 = vmatmul.mubr.bf16.gmra.mrb[0].mxu0 %v661
        %v1042 = vpop.f32.mrb[0].mxu0
        %v1043 = vadd.f32 %v946, %v1042
        %v1044 = vpop.f32.mrb[0].mxu0
        %v1045 = vpop.f32.mrb[0].mxu0
        %v1046 = vadd.f32 %v949, %v1045
        %v1047 = vpop.f32.mrb[0].mxu0
        %1048 = vmatprep.mubr.bf16.mxu0 %v666
        %1049 = vmatmul.mubr.bf16.gmra.mrb[0].mxu0 %v665
        %v1050 = vpop.f32.mrb[0].mxu0
        %v1051 = vadd.f32 %v954, %v1050
        %v1052 = vpop.f32.mrb[0].mxu0
        %v1053 = vpop.f32.mrb[0].mxu0
        %v1054 = vadd.f32 %v957, %v1053
        %v1055 = vpop.f32.mrb[0].mxu0
        %1056 = vmatprep.mubr.bf16.mxu0 %v670
        %1057 = vmatmul.mubr.bf16.gmra.mrb[0].mxu0 %v669
        %v1058 = vpop.f32.mrb[0].mxu0
        %v1059 = vadd.f32 %v962, %v1058
        %v1060 = vpop.f32.mrb[0].mxu0
        %v1061 = vpop.f32.mrb[0].mxu0
        %v1062 = vadd.f32 %v965, %v1061
        %v1063 = vpop.f32.mrb[0].mxu0
        %1064 = vmatprep.mubr.bf16.mxu0 %v674
        %1065 = vmatmul.mubr.bf16.gmra.mrb[0].mxu0 %v673
        %v1066 = vpop.f32.mrb[0].mxu0
        %v1067 = vadd.f32 %v970, %v1066
        %v1068 = vpop.f32.mrb[0].mxu0
        %v1069 = vpop.f32.mrb[0].mxu0
        %v1070 = vadd.f32 %v973, %v1069
        %v1071 = vpop.f32.mrb[0].mxu0
        %1072 = vmatprep.mubr.bf16.mxu0 %v678
        %1073 = vmatmul.mubr.bf16.gmra.mrb[0].mxu0 %v677
        %v1074 = vpop.f32.mrb[0].mxu0
        %v1075 = vadd.f32 %v978, %v1074
        %v1076 = vpop.f32.mrb[0].mxu0
        %v1077 = vpop.f32.mrb[0].mxu0
        %v1078 = vadd.f32 %v981, %v1077
        %v1079 = vpop.f32.mrb[0].mxu0
        %1080 = vdwg.mxu0
        %v1081 = vadd.f32 %v679, %v1019
        %v1082 = vadd.f32 %v680, %v1022
        %v1083 = vadd.f32 %v681, %v1027
        %v1084 = vadd.f32 %v682, %v1030
        %v1085 = vadd.f32 %v683, %v1035
        %v1086 = vadd.f32 %v684, %v1038
        %v1087 = vadd.f32 %v685, %v1043
        %v1088 = vadd.f32 %v686, %v1046
        %v1089 = vadd.f32 %v687, %v1051
        %v1090 = vadd.f32 %v688, %v1054
        %v1091 = vadd.f32 %v689, %v1059
        %v1092 = vadd.f32 %v690, %v1062
        %v1093 = vadd.f32 %v691, %v1067
        %v1094 = vadd.f32 %v692, %v1070
        %v1095 = vadd.f32 %v693, %v1075
        %v1096 = vadd.f32 %v694, %v1078
        %1097 = vst [vmem:[#allocation2] sm:$0xff] %v1081
        %1098 = vst [vmem:[#allocation2 + $0x8] sm:$0xff] %v1082
        %1099 = vst [vmem:[#allocation2 + $0x10] sm:$0xff] %v1083
        %1100 = vst [vmem:[#allocation2 + $0x18] sm:$0xff] %v1084
        %1101 = vst [vmem:[#allocation2 + $0x20] sm:$0xff] %v1085
        %1102 = vst [vmem:[#allocation2 + $0x28] sm:$0xff] %v1086
        %1103 = vst [vmem:[#allocation2 + $0x30] sm:$0xff] %v1087
        %1104 = vst [vmem:[#allocation2 + $0x38] sm:$0xff] %v1088
        %1105 = vst [vmem:[#allocation2 + $0x40] sm:$0xff] %v1089
        %1106 = vst [vmem:[#allocation2 + $0x48] sm:$0xff] %v1090
        %1107 = vst [vmem:[#allocation2 + $0x50] sm:$0xff] %v1091
        %1108 = vst [vmem:[#allocation2 + $0x58] sm:$0xff] %v1092
        %1109 = vst [vmem:[#allocation2 + $0x60] sm:$0xff] %v1093
        %1110 = vst [vmem:[#allocation2 + $0x68] sm:$0xff] %v1094
        %1111 = vst [vmem:[#allocation2 + $0x70] sm:$0xff] %v1095
        %1112 = vst [vmem:[#allocation2 + $0x78] sm:$0xff] %v1096
        // Predicated region
        $region57: #{interaction_block_pallas.5} parent=51 // pred_check
          %p1113 = pneg %p383
        $region58: #{interaction_block_pallas.5} parent=51 // pred_check_branch
          %1115 = sbr.rel (%p1113) target = $region60
        $region59: #{interaction_block_pallas.5} parent=51 // pred_region
          %v1116 = vld [vmem:[%s373] sm:$0xff]
          %v1117 = vld [vmem:[%s373 + $0x8] sm:$0xff]
          %v1118 = vld [vmem:[%s373 + $0x10] sm:$0xff]
          %v1119 = vld [vmem:[%s373 + $0x18] sm:$0xff]
          %v1120 = vld [vmem:[%s373 + $0x20] sm:$0xff]
          %v1121 = vld [vmem:[%s373 + $0x28] sm:$0xff]
          %v1122 = vld [vmem:[%s373 + $0x30] sm:$0xff]
          %v1123 = vld [vmem:[%s373 + $0x38] sm:$0xff]
          %v1124 = vld [vmem:[%s373 + $0x40] sm:$0xff]
          %v1125 = vld [vmem:[%s373 + $0x48] sm:$0xff]
          %v1126 = vld [vmem:[%s373 + $0x50] sm:$0xff]
          %v1127 = vld [vmem:[%s373 + $0x58] sm:$0xff]
          %v1128 = vld [vmem:[%s373 + $0x60] sm:$0xff]
          %v1129 = vld [vmem:[%s373 + $0x68] sm:$0xff]
          %v1130 = vld [vmem:[%s373 + $0x70] sm:$0xff]
          %v1131 = vld [vmem:[%s373 + $0x78] sm:$0xff]
          %v1132 = vld [vmem:[#allocation2] sm:$0xff]
          %v1133 = vld [vmem:[#allocation2 + $0x8] sm:$0xff]
          %v1134 = vld [vmem:[#allocation2 + $0x10] sm:$0xff]
          %v1135 = vld [vmem:[#allocation2 + $0x18] sm:$0xff]
          %v1136 = vld [vmem:[#allocation2 + $0x20] sm:$0xff]
          %v1137 = vld [vmem:[#allocation2 + $0x28] sm:$0xff]
          %v1138 = vld [vmem:[#allocation2 + $0x30] sm:$0xff]
          %v1139 = vld [vmem:[#allocation2 + $0x38] sm:$0xff]
          %v1140 = vld [vmem:[#allocation2 + $0x40] sm:$0xff]
          %v1141 = vld [vmem:[#allocation2 + $0x48] sm:$0xff]
          %v1142 = vld [vmem:[#allocation2 + $0x50] sm:$0xff]
          %v1143 = vld [vmem:[#allocation2 + $0x58] sm:$0xff]
          %v1144 = vld [vmem:[#allocation2 + $0x60] sm:$0xff]
          %v1145 = vld [vmem:[#allocation2 + $0x68] sm:$0xff]
          %v1146 = vld [vmem:[#allocation2 + $0x70] sm:$0xff]
          %v1147 = vld [vmem:[#allocation2 + $0x78] sm:$0xff]
          %v1148 = vadd.f32 %v1116, %v1132
          %v1149 = vadd.f32 %v1117, %v1133
          %v1150 = vadd.f32 %v1118, %v1134
          %v1151 = vadd.f32 %v1119, %v1135
          %v1152 = vadd.f32 %v1120, %v1136
          %v1153 = vadd.f32 %v1121, %v1137
          %v1154 = vadd.f32 %v1122, %v1138
          %v1155 = vadd.f32 %v1123, %v1139
          %v1156 = vadd.f32 %v1124, %v1140
          %v1157 = vadd.f32 %v1125, %v1141
          %v1158 = vadd.f32 %v1126, %v1142
          %v1159 = vadd.f32 %v1127, %v1143
          %v1160 = vadd.f32 %v1128, %v1144
          %v1161 = vadd.f32 %v1129, %v1145
          %v1162 = vadd.f32 %v1130, %v1146
          %v1163 = vadd.f32 %v1131, %v1147
          %v1164 = vpack.c.bf16 %v1149, %v1148
          %v1165 = vpack.c.bf16 %v1151, %v1150
          %v1166 = vpack.c.bf16 %v1153, %v1152
          %v1167 = vpack.c.bf16 %v1155, %v1154
          %v1168 = vpack.c.bf16 %v1157, %v1156
          %v1169 = vpack.c.bf16 %v1159, %v1158
          %v1170 = vpack.c.bf16 %v1161, %v1160
          %v1171 = vpack.c.bf16 %v1163, %v1162
          %v1172 = vld [vmem:[%s4] sm:$0xf]
          %v1173 = vld [vmem:[%s4 + $0x4] sm:$0xf]
          %v1174 = vld [vmem:[%s4 + $0x8] sm:$0xf]
          %v1175 = vld [vmem:[%s4 + $0xc] sm:$0xf]
          %v1176 = vld [vmem:[%s4 + $0x10] sm:$0xf]
          %v1177 = vld [vmem:[%s4 + $0x14] sm:$0xf]
          %v1178 = vld [vmem:[%s4 + $0x18] sm:$0xf]
          %v1179 = vld [vmem:[%s4 + $0x1c] sm:$0xf]
          %v1180 = vld [vmem:[%s4 + $0x20] sm:$0xf]
          %v1181 = vld [vmem:[%s4 + $0x24] sm:$0xf]
          %v1182 = vld [vmem:[%s4 + $0x28] sm:$0xf]
          %v1183 = vld [vmem:[%s4 + $0x2c] sm:$0xf]
          %v1184 = vld [vmem:[%s4 + $0x30] sm:$0xf]
          %v1185 = vld [vmem:[%s4 + $0x34] sm:$0xf]
          %v1186 = vld [vmem:[%s4 + $0x38] sm:$0xf]
          %v1187 = vld [vmem:[%s4 + $0x3c] sm:$0xf]
          %v1188 = vld [vmem:[%s5] sm:$0x1]
          %v1190 = vlaneseq
          %v1191 = vshrl.u32 %v1190, 7
          %v1192 = vsub.s32 0, %v1191
          %v1193 = vrot.slane %v1188, %v1192
          %v1211 = vunpack.c.l.b16 %v1172
          %v1212 = vunpack.c.l.b16 %v1173
          %v1213 = vunpack.c.l.b16 %v1174
          %v1214 = vunpack.c.l.b16 %v1175
          %v1215 = vunpack.c.l.b16 %v1176
          %v1216 = vunpack.c.l.b16 %v1177
          %v1217 = vunpack.c.l.b16 %v1178
          %v1218 = vunpack.c.l.b16 %v1179
          %v1219 = vunpack.c.l.b16 %v1180
          %v1220 = vunpack.c.l.b16 %v1181
          %v1221 = vunpack.c.l.b16 %v1182
          %v1222 = vunpack.c.l.b16 %v1183
          %v1223 = vunpack.c.l.b16 %v1184
          %v1224 = vunpack.c.l.b16 %v1185
          %v1225 = vunpack.c.l.b16 %v1186
          %v1226 = vunpack.c.l.b16 %v1187
          %v1227 = vpack.c.b16 %v1212, %v1211
          %v1228 = vpack.c.b16 %v1214, %v1213
          %v1229 = vpack.c.b16 %v1216, %v1215
          %v1230 = vpack.c.b16 %v1218, %v1217
          %v1231 = vpack.c.b16 %v1220, %v1219
          %v1232 = vpack.c.b16 %v1222, %v1221
          %v1233 = vpack.c.b16 %v1224, %v1223
          %v1234 = vpack.c.b16 %v1226, %v1225
          %1243 = vmatprep.subr.bf16.mxu0 0
          %1244 = vmatpush1.bf16.msra.mxu0 %v1227
          %1245 = vmatprep.subr.bf16.mxu0 0
          %1246 = vmatpush1.bf16.msra.mxu0 %v1228
          %1247 = vmatprep.subr.bf16.mxu0 0
          %1248 = vmatpush1.bf16.msra.mxu0 %v1229
          %1249 = vmatprep.subr.bf16.mxu0 0
          %1250 = vmatpush1.bf16.msra.mxu0 %v1230
          %1251 = vmatprep.subr.bf16.mxu0 0
          %1252 = vmatpush1.bf16.msra.mxu0 %v1231
          %1253 = vmatprep.subr.bf16.mxu0 0
          %1254 = vmatpush1.bf16.msra.mxu0 %v1232
          %1255 = vmatprep.subr.bf16.mxu0 0
          %1256 = vmatpush1.bf16.msra.mxu0 %v1233
          %1257 = vmatprep.subr.bf16.mxu0 0
          %1258 = vmatpush1.bf16.msra.mxu0 %v1234
          %1259 = vmatprep.subr.bf16.mxu0 0
          %1260 = vmatpush1.bf16.msra.mxu0 0
          %1261 = vmatprep.subr.bf16.mxu0 0
          %1262 = vmatpush1.bf16.msra.mxu0 0
          %1263 = vmatprep.subr.bf16.mxu0 0
          %1264 = vmatpush1.bf16.msra.mxu0 0
          %1265 = vmatprep.subr.bf16.mxu0 0
          %1266 = vmatpush1.bf16.msra.mxu0 0
          %1267 = vmatprep.subr.bf16.mxu0 0
          %1268 = vmatpush1.bf16.msra.mxu0 0
          %1269 = vmatprep.subr.bf16.mxu0 0
          %1270 = vmatpush1.bf16.msra.mxu0 0
          %1271 = vmatprep.subr.bf16.mxu0 0
          %1272 = vmatpush1.bf16.msra.mxu0 0
          %1273 = vmatprep.subr.bf16.mxu0 0
          %1274 = vmatpush1.bf16.msra.mxu0 0
          %1275 = vmatprep.mubr.bf16.mxu0 0
          %1276 = vmatmul.mubr.bf16.gmra.mrb[0].mxu0 %v1164
          %v1277 = vpop.f32.mrb[0].mxu0
          %v1278 = vadd.f32 %v1193, %v1277
          %v1279 = vpop.f32.mrb[0].mxu0
          %v1280 = vpop.f32.mrb[0].mxu0
          %v1281 = vadd.f32 %v1193, %v1280
          %v1282 = vpop.f32.mrb[0].mxu0
          %1283 = vmatprep.mubr.bf16.mxu0 0
          %1284 = vmatmul.mubr.bf16.gmra.mrb[0].mxu0 %v1165
          %v1285 = vpop.f32.mrb[0].mxu0
          %v1286 = vadd.f32 %v1193, %v1285
          %v1287 = vpop.f32.mrb[0].mxu0
          %v1288 = vpop.f32.mrb[0].mxu0
          %v1289 = vadd.f32 %v1193, %v1288
          %v1290 = vpop.f32.mrb[0].mxu0
          %1291 = vmatprep.mubr.bf16.mxu0 0
          %1292 = vmatmul.mubr.bf16.gmra.mrb[0].mxu0 %v1166
          %v1293 = vpop.f32.mrb[0].mxu0
          %v1294 = vadd.f32 %v1193, %v1293
          %v1295 = vpop.f32.mrb[0].mxu0
          %v1296 = vpop.f32.mrb[0].mxu0
          %v1297 = vadd.f32 %v1193, %v1296
          %v1298 = vpop.f32.mrb[0].mxu0
          %1299 = vmatprep.mubr.bf16.mxu0 0
          %1300 = vmatmul.mubr.bf16.gmra.mrb[0].mxu0 %v1167
          %v1301 = vpop.f32.mrb[0].mxu0
          %v1302 = vadd.f32 %v1193, %v1301
          %v1303 = vpop.f32.mrb[0].mxu0
          %v1304 = vpop.f32.mrb[0].mxu0
          %v1305 = vadd.f32 %v1193, %v1304
          %v1306 = vpop.f32.mrb[0].mxu0
          %1307 = vmatprep.mubr.bf16.mxu0 0
          %1308 = vmatmul.mubr.bf16.gmra.mrb[0].mxu0 %v1168
          %v1309 = vpop.f32.mrb[0].mxu0
          %v1310 = vadd.f32 %v1193, %v1309
          %v1311 = vpop.f32.mrb[0].mxu0
          %v1312 = vpop.f32.mrb[0].mxu0
          %v1313 = vadd.f32 %v1193, %v1312
          %v1314 = vpop.f32.mrb[0].mxu0
          %1315 = vmatprep.mubr.bf16.mxu0 0
          %1316 = vmatmul.mubr.bf16.gmra.mrb[0].mxu0 %v1169
          %v1317 = vpop.f32.mrb[0].mxu0
          %v1318 = vadd.f32 %v1193, %v1317
          %v1319 = vpop.f32.mrb[0].mxu0
          %v1320 = vpop.f32.mrb[0].mxu0
          %v1321 = vadd.f32 %v1193, %v1320
          %v1322 = vpop.f32.mrb[0].mxu0
          %1323 = vmatprep.mubr.bf16.mxu0 0
          %1324 = vmatmul.mubr.bf16.gmra.mrb[0].mxu0 %v1170
          %v1325 = vpop.f32.mrb[0].mxu0
          %v1326 = vadd.f32 %v1193, %v1325
          %v1327 = vpop.f32.mrb[0].mxu0
          %v1328 = vpop.f32.mrb[0].mxu0
          %v1329 = vadd.f32 %v1193, %v1328
          %v1330 = vpop.f32.mrb[0].mxu0
          %1331 = vmatprep.mubr.bf16.mxu0 0
          %1332 = vmatmul.mubr.bf16.gmra.mrb[0].mxu0 %v1171
          %v1333 = vpop.f32.mrb[0].mxu0
          %v1334 = vadd.f32 %v1193, %v1333
          %v1335 = vpop.f32.mrb[0].mxu0
          %v1336 = vpop.f32.mrb[0].mxu0
          %v1337 = vadd.f32 %v1193, %v1336
          %v1338 = vpop.f32.mrb[0].mxu0
          %1339 = vdwg.mxu0
          %v1340 = vsub.f32 0.0, %v1278
          %v1341 = vsub.f32 0.0, %v1281
          %v1342 = vsub.f32 0.0, %v1286
          %v1343 = vsub.f32 0.0, %v1289
          %v1344 = vsub.f32 0.0, %v1294
          %v1345 = vsub.f32 0.0, %v1297
          %v1346 = vsub.f32 0.0, %v1302
          %v1347 = vsub.f32 0.0, %v1305
          %v1348 = vsub.f32 0.0, %v1310
          %v1349 = vsub.f32 0.0, %v1313
          %v1350 = vsub.f32 0.0, %v1318
          %v1351 = vsub.f32 0.0, %v1321
          %v1352 = vsub.f32 0.0, %v1326
          %v1353 = vsub.f32 0.0, %v1329
          %v1354 = vsub.f32 0.0, %v1334
          %v1355 = vsub.f32 0.0, %v1337
          %v1356 = vmul.f32 %v1340, 1.442695
          %v1357 = vpow.pop %v1356
          %v1358 = vmul.f32 %v1341, 1.442695
          %v1359 = vpow.pop %v1358
          %v1360 = vmul.f32 %v1342, 1.442695
          %v1361 = vpow.pop %v1360
          %v1362 = vmul.f32 %v1343, 1.442695
          %v1363 = vpow.pop %v1362
          %v1364 = vmul.f32 %v1344, 1.442695
          %v1365 = vpow.pop %v1364
          %v1366 = vmul.f32 %v1345, 1.442695
          %v1367 = vpow.pop %v1366
          %v1368 = vmul.f32 %v1346, 1.442695
          %v1369 = vpow.pop %v1368
          %v1370 = vmul.f32 %v1347, 1.442695
          %v1371 = vpow.pop %v1370
          %v1372 = vmul.f32 %v1348, 1.442695
          %v1373 = vpow.pop %v1372
          %v1374 = vmul.f32 %v1349, 1.442695
          %v1375 = vpow.pop %v1374
          %v1376 = vmul.f32 %v1350, 1.442695
          %v1377 = vpow.pop %v1376
          %v1378 = vmul.f32 %v1351, 1.442695
          %v1379 = vpow.pop %v1378
          %v1380 = vmul.f32 %v1352, 1.442695
          %v1381 = vpow.pop %v1380
          %v1382 = vmul.f32 %v1353, 1.442695
          %v1383 = vpow.pop %v1382
          %v1384 = vmul.f32 %v1354, 1.442695
          %v1385 = vpow.pop %v1384
          %v1386 = vmul.f32 %v1355, 1.442695
          %v1387 = vpow.pop %v1386
          %v1388 = vadd.f32 %v1357, 1.0
          %v1389 = vadd.f32 %v1359, 1.0
          %v1390 = vadd.f32 %v1361, 1.0
          %v1391 = vadd.f32 %v1363, 1.0
          %v1392 = vadd.f32 %v1365, 1.0
          %v1393 = vadd.f32 %v1367, 1.0
          %v1394 = vadd.f32 %v1369, 1.0
          %v1395 = vadd.f32 %v1371, 1.0
          %v1396 = vadd.f32 %v1373, 1.0
          %v1397 = vadd.f32 %v1375, 1.0
          %v1398 = vadd.f32 %v1377, 1.0
          %v1399 = vadd.f32 %v1379, 1.0
          %v1400 = vadd.f32 %v1381, 1.0
          %v1401 = vadd.f32 %v1383, 1.0
          %v1402 = vadd.f32 %v1385, 1.0
          %v1403 = vadd.f32 %v1387, 1.0
          %v1404 = vrcp.pop %v1388
          %v1405 = vrcp.pop %v1389
          %v1406 = vrcp.pop %v1390
          %v1407 = vrcp.pop %v1391
          %v1408 = vrcp.pop %v1392
          %v1409 = vrcp.pop %v1393
          %v1410 = vrcp.pop %v1394
          %v1411 = vrcp.pop %v1395
          %v1412 = vrcp.pop %v1396
          %v1413 = vrcp.pop %v1397
          %v1414 = vrcp.pop %v1398
          %v1415 = vrcp.pop %v1399
          %v1416 = vrcp.pop %v1400
          %v1417 = vrcp.pop %v1401
          %v1418 = vrcp.pop %v1402
          %v1419 = vrcp.pop %v1403
          %v1420 = vmul.f32 %v1278, %v1404
          %v1421 = vmul.f32 %v1281, %v1405
          %v1422 = vmul.f32 %v1286, %v1406
          %v1423 = vmul.f32 %v1289, %v1407
          %v1424 = vmul.f32 %v1294, %v1408
          %v1425 = vmul.f32 %v1297, %v1409
          %v1426 = vmul.f32 %v1302, %v1410
          %v1427 = vmul.f32 %v1305, %v1411
          %v1428 = vmul.f32 %v1310, %v1412
          %v1429 = vmul.f32 %v1313, %v1413
          %v1430 = vmul.f32 %v1318, %v1414
          %v1431 = vmul.f32 %v1321, %v1415
          %v1432 = vmul.f32 %v1326, %v1416
          %v1433 = vmul.f32 %v1329, %v1417
          %v1434 = vmul.f32 %v1334, %v1418
          %v1435 = vmul.f32 %v1337, %v1419
          %v1436 = vpack.c.bf16 %v1421, %v1420
          %v1437 = vpack.c.bf16 %v1423, %v1422
          %v1438 = vpack.c.bf16 %v1425, %v1424
          %v1439 = vpack.c.bf16 %v1427, %v1426
          %v1440 = vpack.c.bf16 %v1429, %v1428
          %v1441 = vpack.c.bf16 %v1431, %v1430
          %v1442 = vpack.c.bf16 %v1433, %v1432
          %v1443 = vpack.c.bf16 %v1435, %v1434
          %s1444 = scalar_lea.vmem %s4, 64
          %v1445 = vld [vmem:[%s1444] sm:$0xf]
          %v1446 = vld [vmem:[%s1444 + $0x4] sm:$0xf]
          %v1447 = vld [vmem:[%s1444 + $0x8] sm:$0xf]
          %v1448 = vld [vmem:[%s1444 + $0xc] sm:$0xf]
          %v1449 = vld [vmem:[%s1444 + $0x10] sm:$0xf]
          %v1450 = vld [vmem:[%s1444 + $0x14] sm:$0xf]
          %v1451 = vld [vmem:[%s1444 + $0x18] sm:$0xf]
          %v1452 = vld [vmem:[%s1444 + $0x1c] sm:$0xf]
          %v1453 = vld [vmem:[%s1444 + $0x20] sm:$0xf]
          %v1454 = vld [vmem:[%s1444 + $0x24] sm:$0xf]
          %v1455 = vld [vmem:[%s1444 + $0x28] sm:$0xf]
          %v1456 = vld [vmem:[%s1444 + $0x2c] sm:$0xf]
          %v1457 = vld [vmem:[%s1444 + $0x30] sm:$0xf]
          %v1458 = vld [vmem:[%s1444 + $0x34] sm:$0xf]
          %v1459 = vld [vmem:[%s1444 + $0x38] sm:$0xf]
          %v1460 = vld [vmem:[%s1444 + $0x3c] sm:$0xf]
          %s1461 = scalar_lea.vmem %s5, 1
          %v1462 = vld [vmem:[%s1461] sm:$0x1]
          %v1464 = vlaneseq
          %v1465 = vshrl.u32 %v1464, 7
          %v1466 = vsub.s32 0, %v1465
          %v1467 = vrot.slane %v1462, %v1466
          %v1485 = vunpack.c.l.b16 %v1445
          %v1486 = vunpack.c.l.b16 %v1446
          %v1487 = vunpack.c.l.b16 %v1447
          %v1488 = vunpack.c.l.b16 %v1448
          %v1489 = vunpack.c.l.b16 %v1449
          %v1490 = vunpack.c.l.b16 %v1450
          %v1491 = vunpack.c.l.b16 %v1451
          %v1492 = vunpack.c.l.b16 %v1452
          %v1493 = vunpack.c.l.b16 %v1453
          %v1494 = vunpack.c.l.b16 %v1454
          %v1495 = vunpack.c.l.b16 %v1455
          %v1496 = vunpack.c.l.b16 %v1456
          %v1497 = vunpack.c.l.b16 %v1457
          %v1498 = vunpack.c.l.b16 %v1458
          %v1499 = vunpack.c.l.b16 %v1459
          %v1500 = vunpack.c.l.b16 %v1460
          %v1501 = vpack.c.b16 %v1486, %v1485
          %v1502 = vpack.c.b16 %v1488, %v1487
          %v1503 = vpack.c.b16 %v1490, %v1489
          %v1504 = vpack.c.b16 %v1492, %v1491
          %v1505 = vpack.c.b16 %v1494, %v1493
          %v1506 = vpack.c.b16 %v1496, %v1495
          %v1507 = vpack.c.b16 %v1498, %v1497
          %v1508 = vpack.c.b16 %v1500, %v1499
          %1517 = vmatprep.subr.bf16.mxu0 0
          %1518 = vmatpush1.bf16.msra.mxu0 %v1501
          %1519 = vmatprep.subr.bf16.mxu0 0
          %1520 = vmatpush1.bf16.msra.mxu0 %v1502
          %1521 = vmatprep.subr.bf16.mxu0 0
          %1522 = vmatpush1.bf16.msra.mxu0 %v1503
          %1523 = vmatprep.subr.bf16.mxu0 0
          %1524 = vmatpush1.bf16.msra.mxu0 %v1504
          %1525 = vmatprep.subr.bf16.mxu0 0
          %1526 = vmatpush1.bf16.msra.mxu0 %v1505
          %1527 = vmatprep.subr.bf16.mxu0 0
          %1528 = vmatpush1.bf16.msra.mxu0 %v1506
          %1529 = vmatprep.subr.bf16.mxu0 0
          %1530 = vmatpush1.bf16.msra.mxu0 %v1507
          %1531 = vmatprep.subr.bf16.mxu0 0
          %1532 = vmatpush1.bf16.msra.mxu0 %v1508
          %1533 = vmatprep.subr.bf16.mxu0 0
          %1534 = vmatpush1.bf16.msra.mxu0 0
          %1535 = vmatprep.subr.bf16.mxu0 0
          %1536 = vmatpush1.bf16.msra.mxu0 0
          %1537 = vmatprep.subr.bf16.mxu0 0
          %1538 = vmatpush1.bf16.msra.mxu0 0
          %1539 = vmatprep.subr.bf16.mxu0 0
          %1540 = vmatpush1.bf16.msra.mxu0 0
          %1541 = vmatprep.subr.bf16.mxu0 0
          %1542 = vmatpush1.bf16.msra.mxu0 0
          %1543 = vmatprep.subr.bf16.mxu0 0
          %1544 = vmatpush1.bf16.msra.mxu0 0
          %1545 = vmatprep.subr.bf16.mxu0 0
          %1546 = vmatpush1.bf16.msra.mxu0 0
          %1547 = vmatprep.subr.bf16.mxu0 0
          %1548 = vmatpush1.bf16.msra.mxu0 0
          %1549 = vmatprep.mubr.bf16.mxu0 0
          %1550 = vmatmul.mubr.bf16.gmra.mrb[0].mxu0 %v1436
          %v1551 = vpop.f32.mrb[0].mxu0
          %v1552 = vadd.f32 %v1467, %v1551
          %v1553 = vpop.f32.mrb[0].mxu0
          %v1554 = vpop.f32.mrb[0].mxu0
          %v1555 = vadd.f32 %v1467, %v1554
          %v1556 = vpop.f32.mrb[0].mxu0
          %1557 = vmatprep.mubr.bf16.mxu0 0
          %1558 = vmatmul.mubr.bf16.gmra.mrb[0].mxu0 %v1437
          %v1559 = vpop.f32.mrb[0].mxu0
          %v1560 = vadd.f32 %v1467, %v1559
          %v1561 = vpop.f32.mrb[0].mxu0
          %v1562 = vpop.f32.mrb[0].mxu0
          %v1563 = vadd.f32 %v1467, %v1562
          %v1564 = vpop.f32.mrb[0].mxu0
          %1565 = vmatprep.mubr.bf16.mxu0 0
          %1566 = vmatmul.mubr.bf16.gmra.mrb[0].mxu0 %v1438
          %v1567 = vpop.f32.mrb[0].mxu0
          %v1568 = vadd.f32 %v1467, %v1567
          %v1569 = vpop.f32.mrb[0].mxu0
          %v1570 = vpop.f32.mrb[0].mxu0
          %v1571 = vadd.f32 %v1467, %v1570
          %v1572 = vpop.f32.mrb[0].mxu0
          %1573 = vmatprep.mubr.bf16.mxu0 0
          %1574 = vmatmul.mubr.bf16.gmra.mrb[0].mxu0 %v1439
          %v1575 = vpop.f32.mrb[0].mxu0
          %v1576 = vadd.f32 %v1467, %v1575
          %v1577 = vpop.f32.mrb[0].mxu0
          %v1578 = vpop.f32.mrb[0].mxu0
          %v1579 = vadd.f32 %v1467, %v1578
          %v1580 = vpop.f32.mrb[0].mxu0
          %1581 = vmatprep.mubr.bf16.mxu0 0
          %1582 = vmatmul.mubr.bf16.gmra.mrb[0].mxu0 %v1440
          %v1583 = vpop.f32.mrb[0].mxu0
          %v1584 = vadd.f32 %v1467, %v1583
          %v1585 = vpop.f32.mrb[0].mxu0
          %v1586 = vpop.f32.mrb[0].mxu0
          %v1587 = vadd.f32 %v1467, %v1586
          %v1588 = vpop.f32.mrb[0].mxu0
          %1589 = vmatprep.mubr.bf16.mxu0 0
          %1590 = vmatmul.mubr.bf16.gmra.mrb[0].mxu0 %v1441
          %v1591 = vpop.f32.mrb[0].mxu0
          %v1592 = vadd.f32 %v1467, %v1591
          %v1593 = vpop.f32.mrb[0].mxu0
          %v1594 = vpop.f32.mrb[0].mxu0
          %v1595 = vadd.f32 %v1467, %v1594
          %v1596 = vpop.f32.mrb[0].mxu0
          %1597 = vmatprep.mubr.bf16.mxu0 0
          %1598 = vmatmul.mubr.bf16.gmra.mrb[0].mxu0 %v1442
          %v1599 = vpop.f32.mrb[0].mxu0
          %v1600 = vadd.f32 %v1467, %v1599
          %v1601 = vpop.f32.mrb[0].mxu0
          %v1602 = vpop.f32.mrb[0].mxu0
          %v1603 = vadd.f32 %v1467, %v1602
          %v1604 = vpop.f32.mrb[0].mxu0
          %1605 = vmatprep.mubr.bf16.mxu0 0
          %1606 = vmatmul.mubr.bf16.gmra.mrb[0].mxu0 %v1443
          %v1607 = vpop.f32.mrb[0].mxu0
          %v1608 = vadd.f32 %v1467, %v1607
          %v1609 = vpop.f32.mrb[0].mxu0
          %v1610 = vpop.f32.mrb[0].mxu0
          %v1611 = vadd.f32 %v1467, %v1610
          %v1612 = vpop.f32.mrb[0].mxu0
          %1613 = vdwg.mxu0
          %v1614 = vsub.f32 0.0, %v1552
          %v1615 = vsub.f32 0.0, %v1555
          %v1616 = vsub.f32 0.0, %v1560
          %v1617 = vsub.f32 0.0, %v1563
          %v1618 = vsub.f32 0.0, %v1568
          %v1619 = vsub.f32 0.0, %v1571
          %v1620 = vsub.f32 0.0, %v1576
          %v1621 = vsub.f32 0.0, %v1579
          %v1622 = vsub.f32 0.0, %v1584
          %v1623 = vsub.f32 0.0, %v1587
          %v1624 = vsub.f32 0.0, %v1592
          %v1625 = vsub.f32 0.0, %v1595
          %v1626 = vsub.f32 0.0, %v1600
          %v1627 = vsub.f32 0.0, %v1603
          %v1628 = vsub.f32 0.0, %v1608
          %v1629 = vsub.f32 0.0, %v1611
          %v1630 = vmul.f32 %v1614, 1.442695
          %v1631 = vpow.pop %v1630
          %v1632 = vmul.f32 %v1615, 1.442695
          %v1633 = vpow.pop %v1632
          %v1634 = vmul.f32 %v1616, 1.442695
          %v1635 = vpow.pop %v1634
          %v1636 = vmul.f32 %v1617, 1.442695
          %v1637 = vpow.pop %v1636
          %v1638 = vmul.f32 %v1618, 1.442695
          %v1639 = vpow.pop %v1638
          %v1640 = vmul.f32 %v1619, 1.442695
          %v1641 = vpow.pop %v1640
          %v1642 = vmul.f32 %v1620, 1.442695
          %v1643 = vpow.pop %v1642
          %v1644 = vmul.f32 %v1621, 1.442695
          %v1645 = vpow.pop %v1644
          %v1646 = vmul.f32 %v1622, 1.442695
          %v1647 = vpow.pop %v1646
          %v1648 = vmul.f32 %v1623, 1.442695
          %v1649 = vpow.pop %v1648
          %v1650 = vmul.f32 %v1624, 1.442695
          %v1651 = vpow.pop %v1650
          %v1652 = vmul.f32 %v1625, 1.442695
          %v1653 = vpow.pop %v1652
          %v1654 = vmul.f32 %v1626, 1.442695
          %v1655 = vpow.pop %v1654
          %v1656 = vmul.f32 %v1627, 1.442695
          %v1657 = vpow.pop %v1656
          %v1658 = vmul.f32 %v1628, 1.442695
          %v1659 = vpow.pop %v1658
          %v1660 = vmul.f32 %v1629, 1.442695
          %v1661 = vpow.pop %v1660
          %v1662 = vadd.f32 %v1631, 1.0
          %v1663 = vadd.f32 %v1633, 1.0
          %v1664 = vadd.f32 %v1635, 1.0
          %v1665 = vadd.f32 %v1637, 1.0
          %v1666 = vadd.f32 %v1639, 1.0
          %v1667 = vadd.f32 %v1641, 1.0
          %v1668 = vadd.f32 %v1643, 1.0
          %v1669 = vadd.f32 %v1645, 1.0
          %v1670 = vadd.f32 %v1647, 1.0
          %v1671 = vadd.f32 %v1649, 1.0
          %v1672 = vadd.f32 %v1651, 1.0
          %v1673 = vadd.f32 %v1653, 1.0
          %v1674 = vadd.f32 %v1655, 1.0
          %v1675 = vadd.f32 %v1657, 1.0
          %v1676 = vadd.f32 %v1659, 1.0
          %v1677 = vadd.f32 %v1661, 1.0
          %v1678 = vrcp.pop %v1662
          %v1679 = vrcp.pop %v1663
          %v1680 = vrcp.pop %v1664
          %v1681 = vrcp.pop %v1665
          %v1682 = vrcp.pop %v1666
          %v1683 = vrcp.pop %v1667
          %v1684 = vrcp.pop %v1668
          %v1685 = vrcp.pop %v1669
          %v1686 = vrcp.pop %v1670
          %v1687 = vrcp.pop %v1671
          %v1688 = vrcp.pop %v1672
          %v1689 = vrcp.pop %v1673
          %v1690 = vrcp.pop %v1674
          %v1691 = vrcp.pop %v1675
          %v1692 = vrcp.pop %v1676
          %v1693 = vrcp.pop %v1677
          %v1694 = vmul.f32 %v1552, %v1678
          %v1695 = vmul.f32 %v1555, %v1679
          %v1696 = vmul.f32 %v1560, %v1680
          %v1697 = vmul.f32 %v1563, %v1681
          %v1698 = vmul.f32 %v1568, %v1682
          %v1699 = vmul.f32 %v1571, %v1683
          %v1700 = vmul.f32 %v1576, %v1684
          %v1701 = vmul.f32 %v1579, %v1685
          %v1702 = vmul.f32 %v1584, %v1686
          %v1703 = vmul.f32 %v1587, %v1687
          %v1704 = vmul.f32 %v1592, %v1688
          %v1705 = vmul.f32 %v1595, %v1689
          %v1706 = vmul.f32 %v1600, %v1690
          %v1707 = vmul.f32 %v1603, %v1691
          %v1708 = vmul.f32 %v1608, %v1692
          %v1709 = vmul.f32 %v1611, %v1693
          %v1710 = vadd.f32 %v1148, %v1694
          %v1711 = vadd.f32 %v1149, %v1695
          %v1712 = vadd.f32 %v1150, %v1696
          %v1713 = vadd.f32 %v1151, %v1697
          %v1714 = vadd.f32 %v1152, %v1698
          %v1715 = vadd.f32 %v1153, %v1699
          %v1716 = vadd.f32 %v1154, %v1700
          %v1717 = vadd.f32 %v1155, %v1701
          %v1718 = vadd.f32 %v1156, %v1702
          %v1719 = vadd.f32 %v1157, %v1703
          %v1720 = vadd.f32 %v1158, %v1704
          %v1721 = vadd.f32 %v1159, %v1705
          %v1722 = vadd.f32 %v1160, %v1706
          %v1723 = vadd.f32 %v1161, %v1707
          %v1724 = vadd.f32 %v1162, %v1708
          %v1725 = vadd.f32 %v1163, %v1709
          %v1726 = vpack.c.bf16 %v1711, %v1710
          %v1727 = vpack.c.bf16 %v1713, %v1712
          %v1728 = vpack.c.bf16 %v1715, %v1714
          %v1729 = vpack.c.bf16 %v1717, %v1716
          %v1730 = vpack.c.bf16 %v1719, %v1718
          %v1731 = vpack.c.bf16 %v1721, %v1720
          %v1732 = vpack.c.bf16 %v1723, %v1722
          %v1733 = vpack.c.bf16 %v1725, %v1724
          %v1734 = vld [vmem:[%s6] sm:$0xf]
          %v1735 = vld [vmem:[%s6 + $0x4] sm:$0xf]
          %v1736 = vld [vmem:[%s6 + $0x8] sm:$0xf]
          %v1737 = vld [vmem:[%s6 + $0xc] sm:$0xf]
          %v1738 = vld [vmem:[%s6 + $0x10] sm:$0xf]
          %v1739 = vld [vmem:[%s6 + $0x14] sm:$0xf]
          %v1740 = vld [vmem:[%s6 + $0x18] sm:$0xf]
          %v1741 = vld [vmem:[%s6 + $0x1c] sm:$0xf]
          %v1742 = vld [vmem:[%s6 + $0x20] sm:$0xf]
          %v1743 = vld [vmem:[%s6 + $0x24] sm:$0xf]
          %v1744 = vld [vmem:[%s6 + $0x28] sm:$0xf]
          %v1745 = vld [vmem:[%s6 + $0x2c] sm:$0xf]
          %v1746 = vld [vmem:[%s6 + $0x30] sm:$0xf]
          %v1747 = vld [vmem:[%s6 + $0x34] sm:$0xf]
          %v1748 = vld [vmem:[%s6 + $0x38] sm:$0xf]
          %v1749 = vld [vmem:[%s6 + $0x3c] sm:$0xf]
          %v1750 = vld [vmem:[%s7] sm:$0x1]
          %v1752 = vlaneseq
          %v1753 = vshrl.u32 %v1752, 7
          %v1754 = vsub.s32 0, %v1753
          %v1755 = vrot.slane %v1750, %v1754
          %v1773 = vunpack.c.l.b16 %v1734
          %v1774 = vunpack.c.l.b16 %v1735
          %v1775 = vunpack.c.l.b16 %v1736
          %v1776 = vunpack.c.l.b16 %v1737
          %v1777 = vunpack.c.l.b16 %v1738
          %v1778 = vunpack.c.l.b16 %v1739
          %v1779 = vunpack.c.l.b16 %v1740
          %v1780 = vunpack.c.l.b16 %v1741
          %v1781 = vunpack.c.l.b16 %v1742
          %v1782 = vunpack.c.l.b16 %v1743
          %v1783 = vunpack.c.l.b16 %v1744
          %v1784 = vunpack.c.l.b16 %v1745
          %v1785 = vunpack.c.l.b16 %v1746
          %v1786 = vunpack.c.l.b16 %v1747
          %v1787 = vunpack.c.l.b16 %v1748
          %v1788 = vunpack.c.l.b16 %v1749
          %v1789 = vpack.c.b16 %v1774, %v1773
          %v1790 = vpack.c.b16 %v1776, %v1775
          %v1791 = vpack.c.b16 %v1778, %v1777
          %v1792 = vpack.c.b16 %v1780, %v1779
          %v1793 = vpack.c.b16 %v1782, %v1781
          %v1794 = vpack.c.b16 %v1784, %v1783
          %v1795 = vpack.c.b16 %v1786, %v1785
          %v1796 = vpack.c.b16 %v1788, %v1787
          %1805 = vmatprep.subr.bf16.mxu0 0
          %1806 = vmatpush1.bf16.msra.mxu0 %v1789
          %1807 = vmatprep.subr.bf16.mxu0 0
          %1808 = vmatpush1.bf16.msra.mxu0 %v1790
          %1809 = vmatprep.subr.bf16.mxu0 0
          %1810 = vmatpush1.bf16.msra.mxu0 %v1791
          %1811 = vmatprep.subr.bf16.mxu0 0
          %1812 = vmatpush1.bf16.msra.mxu0 %v1792
          %1813 = vmatprep.subr.bf16.mxu0 0
          %1814 = vmatpush1.bf16.msra.mxu0 %v1793
          %1815 = vmatprep.subr.bf16.mxu0 0
          %1816 = vmatpush1.bf16.msra.mxu0 %v1794
          %1817 = vmatprep.subr.bf16.mxu0 0
          %1818 = vmatpush1.bf16.msra.mxu0 %v1795
          %1819 = vmatprep.subr.bf16.mxu0 0
          %1820 = vmatpush1.bf16.msra.mxu0 %v1796
          %1821 = vmatprep.subr.bf16.mxu0 0
          %1822 = vmatpush1.bf16.msra.mxu0 0
          %1823 = vmatprep.subr.bf16.mxu0 0
          %1824 = vmatpush1.bf16.msra.mxu0 0
          %1825 = vmatprep.subr.bf16.mxu0 0
          %1826 = vmatpush1.bf16.msra.mxu0 0
          %1827 = vmatprep.subr.bf16.mxu0 0
          %1828 = vmatpush1.bf16.msra.mxu0 0
          %1829 = vmatprep.subr.bf16.mxu0 0
          %1830 = vmatpush1.bf16.msra.mxu0 0
          %1831 = vmatprep.subr.bf16.mxu0 0
          %1832 = vmatpush1.bf16.msra.mxu0 0
          %1833 = vmatprep.subr.bf16.mxu0 0
          %1834 = vmatpush1.bf16.msra.mxu0 0
          %1835 = vmatprep.subr.bf16.mxu0 0
          %1836 = vmatpush1.bf16.msra.mxu0 0
          %1837 = vmatprep.mubr.bf16.mxu0 0
          %1838 = vmatmul.mubr.bf16.gmra.mrb[0].mxu0 %v1726
          %v1839 = vpop.f32.mrb[0].mxu0
          %v1840 = vadd.f32 %v1755, %v1839
          %v1841 = vpop.f32.mrb[0].mxu0
          %v1842 = vpop.f32.mrb[0].mxu0
          %v1843 = vadd.f32 %v1755, %v1842
          %v1844 = vpop.f32.mrb[0].mxu0
          %1845 = vmatprep.mubr.bf16.mxu0 0
          %1846 = vmatmul.mubr.bf16.gmra.mrb[0].mxu0 %v1727
          %v1847 = vpop.f32.mrb[0].mxu0
          %v1848 = vadd.f32 %v1755, %v1847
          %v1849 = vpop.f32.mrb[0].mxu0
          %v1850 = vpop.f32.mrb[0].mxu0
          %v1851 = vadd.f32 %v1755, %v1850
          %v1852 = vpop.f32.mrb[0].mxu0
          %1853 = vmatprep.mubr.bf16.mxu0 0
          %1854 = vmatmul.mubr.bf16.gmra.mrb[0].mxu0 %v1728
          %v1855 = vpop.f32.mrb[0].mxu0
          %v1856 = vadd.f32 %v1755, %v1855
          %v1857 = vpop.f32.mrb[0].mxu0
          %v1858 = vpop.f32.mrb[0].mxu0
          %v1859 = vadd.f32 %v1755, %v1858
          %v1860 = vpop.f32.mrb[0].mxu0
          %1861 = vmatprep.mubr.bf16.mxu0 0
          %1862 = vmatmul.mubr.bf16.gmra.mrb[0].mxu0 %v1729
          %v1863 = vpop.f32.mrb[0].mxu0
          %v1864 = vadd.f32 %v1755, %v1863
          %v1865 = vpop.f32.mrb[0].mxu0
          %v1866 = vpop.f32.mrb[0].mxu0
          %v1867 = vadd.f32 %v1755, %v1866
          %v1868 = vpop.f32.mrb[0].mxu0
          %1869 = vmatprep.mubr.bf16.mxu0 0
          %1870 = vmatmul.mubr.bf16.gmra.mrb[0].mxu0 %v1730
          %v1871 = vpop.f32.mrb[0].mxu0
          %v1872 = vadd.f32 %v1755, %v1871
          %v1873 = vpop.f32.mrb[0].mxu0
          %v1874 = vpop.f32.mrb[0].mxu0
          %v1875 = vadd.f32 %v1755, %v1874
          %v1876 = vpop.f32.mrb[0].mxu0
          %1877 = vmatprep.mubr.bf16.mxu0 0
          %1878 = vmatmul.mubr.bf16.gmra.mrb[0].mxu0 %v1731
          %v1879 = vpop.f32.mrb[0].mxu0
          %v1880 = vadd.f32 %v1755, %v1879
          %v1881 = vpop.f32.mrb[0].mxu0
          %v1882 = vpop.f32.mrb[0].mxu0
          %v1883 = vadd.f32 %v1755, %v1882
          %v1884 = vpop.f32.mrb[0].mxu0
          %1885 = vmatprep.mubr.bf16.mxu0 0
          %1886 = vmatmul.mubr.bf16.gmra.mrb[0].mxu0 %v1732
          %v1887 = vpop.f32.mrb[0].mxu0
          %v1888 = vadd.f32 %v1755, %v1887
          %v1889 = vpop.f32.mrb[0].mxu0
          %v1890 = vpop.f32.mrb[0].mxu0
          %v1891 = vadd.f32 %v1755, %v1890
          %v1892 = vpop.f32.mrb[0].mxu0
          %1893 = vmatprep.mubr.bf16.mxu0 0
          %1894 = vmatmul.mubr.bf16.gmra.mrb[0].mxu0 %v1733
          %v1895 = vpop.f32.mrb[0].mxu0
          %v1896 = vadd.f32 %v1755, %v1895
          %v1897 = vpop.f32.mrb[0].mxu0
          %v1898 = vpop.f32.mrb[0].mxu0
          %v1899 = vadd.f32 %v1755, %v1898
          %v1900 = vpop.f32.mrb[0].mxu0
          %1901 = vdwg.mxu0
          %v1902 = vsub.f32 0.0, %v1840
          %v1903 = vsub.f32 0.0, %v1843
          %v1904 = vsub.f32 0.0, %v1848
          %v1905 = vsub.f32 0.0, %v1851
          %v1906 = vsub.f32 0.0, %v1856
          %v1907 = vsub.f32 0.0, %v1859
          %v1908 = vsub.f32 0.0, %v1864
          %v1909 = vsub.f32 0.0, %v1867
          %v1910 = vsub.f32 0.0, %v1872
          %v1911 = vsub.f32 0.0, %v1875
          %v1912 = vsub.f32 0.0, %v1880
          %v1913 = vsub.f32 0.0, %v1883
          %v1914 = vsub.f32 0.0, %v1888
          %v1915 = vsub.f32 0.0, %v1891
          %v1916 = vsub.f32 0.0, %v1896
          %v1917 = vsub.f32 0.0, %v1899
          %v1918 = vmul.f32 %v1902, 1.442695
          %v1919 = vpow.pop %v1918
          %v1920 = vmul.f32 %v1903, 1.442695
          %v1921 = vpow.pop %v1920
          %v1922 = vmul.f32 %v1904, 1.442695
          %v1923 = vpow.pop %v1922
          %v1924 = vmul.f32 %v1905, 1.442695
          %v1925 = vpow.pop %v1924
          %v1926 = vmul.f32 %v1906, 1.442695
          %v1927 = vpow.pop %v1926
          %v1928 = vmul.f32 %v1907, 1.442695
          %v1929 = vpow.pop %v1928
          %v1930 = vmul.f32 %v1908, 1.442695
          %v1931 = vpow.pop %v1930
          %v1932 = vmul.f32 %v1909, 1.442695
          %v1933 = vpow.pop %v1932
          %v1934 = vmul.f32 %v1910, 1.442695
          %v1935 = vpow.pop %v1934
          %v1936 = vmul.f32 %v1911, 1.442695
          %v1937 = vpow.pop %v1936
          %v1938 = vmul.f32 %v1912, 1.442695
          %v1939 = vpow.pop %v1938
          %v1940 = vmul.f32 %v1913, 1.442695
          %v1941 = vpow.pop %v1940
          %v1942 = vmul.f32 %v1914, 1.442695
          %v1943 = vpow.pop %v1942
          %v1944 = vmul.f32 %v1915, 1.442695
          %v1945 = vpow.pop %v1944
          %v1946 = vmul.f32 %v1916, 1.442695
          %v1947 = vpow.pop %v1946
          %v1948 = vmul.f32 %v1917, 1.442695
          %v1949 = vpow.pop %v1948
          %v1950 = vadd.f32 %v1919, 1.0
          %v1951 = vadd.f32 %v1921, 1.0
          %v1952 = vadd.f32 %v1923, 1.0
          %v1953 = vadd.f32 %v1925, 1.0
          %v1954 = vadd.f32 %v1927, 1.0
          %v1955 = vadd.f32 %v1929, 1.0
          %v1956 = vadd.f32 %v1931, 1.0
          %v1957 = vadd.f32 %v1933, 1.0
          %v1958 = vadd.f32 %v1935, 1.0
          %v1959 = vadd.f32 %v1937, 1.0
          %v1960 = vadd.f32 %v1939, 1.0
          %v1961 = vadd.f32 %v1941, 1.0
          %v1962 = vadd.f32 %v1943, 1.0
          %v1963 = vadd.f32 %v1945, 1.0
          %v1964 = vadd.f32 %v1947, 1.0
          %v1965 = vadd.f32 %v1949, 1.0
          %v1966 = vrcp.pop %v1950
          %v1967 = vrcp.pop %v1951
          %v1968 = vrcp.pop %v1952
          %v1969 = vrcp.pop %v1953
          %v1970 = vrcp.pop %v1954
          %v1971 = vrcp.pop %v1955
          %v1972 = vrcp.pop %v1956
          %v1973 = vrcp.pop %v1957
          %v1974 = vrcp.pop %v1958
          %v1975 = vrcp.pop %v1959
          %v1976 = vrcp.pop %v1960
          %v1977 = vrcp.pop %v1961
          %v1978 = vrcp.pop %v1962
          %v1979 = vrcp.pop %v1963
          %v1980 = vrcp.pop %v1964
          %v1981 = vrcp.pop %v1965
          %v1982 = vmul.f32 %v1840, %v1966
          %v1983 = vmul.f32 %v1843, %v1967
          %v1984 = vmul.f32 %v1848, %v1968
          %v1985 = vmul.f32 %v1851, %v1969
          %v1986 = vmul.f32 %v1856, %v1970
          %v1987 = vmul.f32 %v1859, %v1971
          %v1988 = vmul.f32 %v1864, %v1972
          %v1989 = vmul.f32 %v1867, %v1973
          %v1990 = vmul.f32 %v1872, %v1974
          %v1991 = vmul.f32 %v1875, %v1975
          %v1992 = vmul.f32 %v1880, %v1976
          %v1993 = vmul.f32 %v1883, %v1977
          %v1994 = vmul.f32 %v1888, %v1978
          %v1995 = vmul.f32 %v1891, %v1979
          %v1996 = vmul.f32 %v1896, %v1980
          %v1997 = vmul.f32 %v1899, %v1981
          %v1998 = vld [vmem:[%s379] sm:$0xff]
          %v1999 = vld [vmem:[%s379 + $0x8] sm:$0xff]
          %v2000 = vld [vmem:[%s379 + $0x10] sm:$0xff]
          %v2001 = vld [vmem:[%s379 + $0x18] sm:$0xff]
          %v2002 = vld [vmem:[%s379 + $0x20] sm:$0xff]
          %v2003 = vld [vmem:[%s379 + $0x28] sm:$0xff]
          %v2004 = vld [vmem:[%s379 + $0x30] sm:$0xff]
          %v2005 = vld [vmem:[%s379 + $0x38] sm:$0xff]
          %v2006 = vld [vmem:[%s379 + $0x40] sm:$0xff]
          %v2007 = vld [vmem:[%s379 + $0x48] sm:$0xff]
          %v2008 = vld [vmem:[%s379 + $0x50] sm:$0xff]
          %v2009 = vld [vmem:[%s379 + $0x58] sm:$0xff]
          %v2010 = vld [vmem:[%s379 + $0x60] sm:$0xff]
          %v2011 = vld [vmem:[%s379 + $0x68] sm:$0xff]
          %v2012 = vld [vmem:[%s379 + $0x70] sm:$0xff]
          %v2013 = vld [vmem:[%s379 + $0x78] sm:$0xff]
          %v2014 = vadd.f32 %v1982, %v1998
          %v2015 = vadd.f32 %v1983, %v1999
          %v2016 = vadd.f32 %v1984, %v2000
          %v2017 = vadd.f32 %v1985, %v2001
          %v2018 = vadd.f32 %v1986, %v2002
          %v2019 = vadd.f32 %v1987, %v2003
          %v2020 = vadd.f32 %v1988, %v2004
          %v2021 = vadd.f32 %v1989, %v2005
          %v2022 = vadd.f32 %v1990, %v2006
          %v2023 = vadd.f32 %v1991, %v2007
          %v2024 = vadd.f32 %v1992, %v2008
          %v2025 = vadd.f32 %v1993, %v2009
          %v2026 = vadd.f32 %v1994, %v2010
          %v2027 = vadd.f32 %v1995, %v2011
          %v2028 = vadd.f32 %v1996, %v2012
          %v2029 = vadd.f32 %v1997, %v2013
          %v2030 = vpack.c.bf16 %v2015, %v2014
          %v2031 = vpack.c.bf16 %v2017, %v2016
          %v2032 = vpack.c.bf16 %v2019, %v2018
          %v2033 = vpack.c.bf16 %v2021, %v2020
          %v2034 = vpack.c.bf16 %v2023, %v2022
          %v2035 = vpack.c.bf16 %v2025, %v2024
          %v2036 = vpack.c.bf16 %v2027, %v2026
          %v2037 = vpack.c.bf16 %v2029, %v2028
          %s2038 = scalar_lea.vmem %s4, 128
          %v2039 = vld [vmem:[%s2038] sm:$0xf]
          %v2040 = vld [vmem:[%s2038 + $0x4] sm:$0xf]
          %v2041 = vld [vmem:[%s2038 + $0x8] sm:$0xf]
          %v2042 = vld [vmem:[%s2038 + $0xc] sm:$0xf]
          %v2043 = vld [vmem:[%s2038 + $0x10] sm:$0xf]
          %v2044 = vld [vmem:[%s2038 + $0x14] sm:$0xf]
          %v2045 = vld [vmem:[%s2038 + $0x18] sm:$0xf]
          %v2046 = vld [vmem:[%s2038 + $0x1c] sm:$0xf]
          %v2047 = vld [vmem:[%s2038 + $0x20] sm:$0xf]
          %v2048 = vld [vmem:[%s2038 + $0x24] sm:$0xf]
          %v2049 = vld [vmem:[%s2038 + $0x28] sm:$0xf]
          %v2050 = vld [vmem:[%s2038 + $0x2c] sm:$0xf]
          %v2051 = vld [vmem:[%s2038 + $0x30] sm:$0xf]
          %v2052 = vld [vmem:[%s2038 + $0x34] sm:$0xf]
          %v2053 = vld [vmem:[%s2038 + $0x38] sm:$0xf]
          %v2054 = vld [vmem:[%s2038 + $0x3c] sm:$0xf]
          %s2055 = scalar_lea.vmem %s5, 2
          %v2056 = vld [vmem:[%s2055] sm:$0x1]
          %v2058 = vlaneseq
          %v2059 = vshrl.u32 %v2058, 7
          %v2060 = vsub.s32 0, %v2059
          %v2061 = vrot.slane %v2056, %v2060
          %v2079 = vunpack.c.l.b16 %v2039
          %v2080 = vunpack.c.l.b16 %v2040
          %v2081 = vunpack.c.l.b16 %v2041
          %v2082 = vunpack.c.l.b16 %v2042
          %v2083 = vunpack.c.l.b16 %v2043
          %v2084 = vunpack.c.l.b16 %v2044
          %v2085 = vunpack.c.l.b16 %v2045
          %v2086 = vunpack.c.l.b16 %v2046
          %v2087 = vunpack.c.l.b16 %v2047
          %v2088 = vunpack.c.l.b16 %v2048
          %v2089 = vunpack.c.l.b16 %v2049
          %v2090 = vunpack.c.l.b16 %v2050
          %v2091 = vunpack.c.l.b16 %v2051
          %v2092 = vunpack.c.l.b16 %v2052
          %v2093 = vunpack.c.l.b16 %v2053
          %v2094 = vunpack.c.l.b16 %v2054
          %v2095 = vpack.c.b16 %v2080, %v2079
          %v2096 = vpack.c.b16 %v2082, %v2081
          %v2097 = vpack.c.b16 %v2084, %v2083
          %v2098 = vpack.c.b16 %v2086, %v2085
          %v2099 = vpack.c.b16 %v2088, %v2087
          %v2100 = vpack.c.b16 %v2090, %v2089
          %v2101 = vpack.c.b16 %v2092, %v2091
          %v2102 = vpack.c.b16 %v2094, %v2093
          %2111 = vmatprep.subr.bf16.mxu0 0
          %2112 = vmatpush1.bf16.msra.mxu0 %v2095
          %2113 = vmatprep.subr.bf16.mxu0 0
          %2114 = vmatpush1.bf16.msra.mxu0 %v2096
          %2115 = vmatprep.subr.bf16.mxu0 0
          %2116 = vmatpush1.bf16.msra.mxu0 %v2097
          %2117 = vmatprep.subr.bf16.mxu0 0
          %2118 = vmatpush1.bf16.msra.mxu0 %v2098
          %2119 = vmatprep.subr.bf16.mxu0 0
          %2120 = vmatpush1.bf16.msra.mxu0 %v2099
          %2121 = vmatprep.subr.bf16.mxu0 0
          %2122 = vmatpush1.bf16.msra.mxu0 %v2100
          %2123 = vmatprep.subr.bf16.mxu0 0
          %2124 = vmatpush1.bf16.msra.mxu0 %v2101
          %2125 = vmatprep.subr.bf16.mxu0 0
          %2126 = vmatpush1.bf16.msra.mxu0 %v2102
          %2127 = vmatprep.subr.bf16.mxu0 0
          %2128 = vmatpush1.bf16.msra.mxu0 0
          %2129 = vmatprep.subr.bf16.mxu0 0
          %2130 = vmatpush1.bf16.msra.mxu0 0
          %2131 = vmatprep.subr.bf16.mxu0 0
          %2132 = vmatpush1.bf16.msra.mxu0 0
          %2133 = vmatprep.subr.bf16.mxu0 0
          %2134 = vmatpush1.bf16.msra.mxu0 0
          %2135 = vmatprep.subr.bf16.mxu0 0
          %2136 = vmatpush1.bf16.msra.mxu0 0
          %2137 = vmatprep.subr.bf16.mxu0 0
          %2138 = vmatpush1.bf16.msra.mxu0 0
          %2139 = vmatprep.subr.bf16.mxu0 0
          %2140 = vmatpush1.bf16.msra.mxu0 0
          %2141 = vmatprep.subr.bf16.mxu0 0
          %2142 = vmatpush1.bf16.msra.mxu0 0
          %2143 = vmatprep.mubr.bf16.mxu0 0
          %2144 = vmatmul.mubr.bf16.gmra.mrb[0].mxu0 %v2030
          %v2145 = vpop.f32.mrb[0].mxu0
          %v2146 = vadd.f32 %v2061, %v2145
          %v2147 = vpop.f32.mrb[0].mxu0
          %v2148 = vpop.f32.mrb[0].mxu0
          %v2149 = vadd.f32 %v2061, %v2148
          %v2150 = vpop.f32.mrb[0].mxu0
          %2151 = vmatprep.mubr.bf16.mxu0 0
          %2152 = vmatmul.mubr.bf16.gmra.mrb[0].mxu0 %v2031
          %v2153 = vpop.f32.mrb[0].mxu0
          %v2154 = vadd.f32 %v2061, %v2153
          %v2155 = vpop.f32.mrb[0].mxu0
          %v2156 = vpop.f32.mrb[0].mxu0
          %v2157 = vadd.f32 %v2061, %v2156
          %v2158 = vpop.f32.mrb[0].mxu0
          %2159 = vmatprep.mubr.bf16.mxu0 0
          %2160 = vmatmul.mubr.bf16.gmra.mrb[0].mxu0 %v2032
          %v2161 = vpop.f32.mrb[0].mxu0
          %v2162 = vadd.f32 %v2061, %v2161
          %v2163 = vpop.f32.mrb[0].mxu0
          %v2164 = vpop.f32.mrb[0].mxu0
          %v2165 = vadd.f32 %v2061, %v2164
          %v2166 = vpop.f32.mrb[0].mxu0
          %2167 = vmatprep.mubr.bf16.mxu0 0
          %2168 = vmatmul.mubr.bf16.gmra.mrb[0].mxu0 %v2033
          %v2169 = vpop.f32.mrb[0].mxu0
          %v2170 = vadd.f32 %v2061, %v2169
          %v2171 = vpop.f32.mrb[0].mxu0
          %v2172 = vpop.f32.mrb[0].mxu0
          %v2173 = vadd.f32 %v2061, %v2172
          %v2174 = vpop.f32.mrb[0].mxu0
          %2175 = vmatprep.mubr.bf16.mxu0 0
          %2176 = vmatmul.mubr.bf16.gmra.mrb[0].mxu0 %v2034
          %v2177 = vpop.f32.mrb[0].mxu0
          %v2178 = vadd.f32 %v2061, %v2177
          %v2179 = vpop.f32.mrb[0].mxu0
          %v2180 = vpop.f32.mrb[0].mxu0
          %v2181 = vadd.f32 %v2061, %v2180
          %v2182 = vpop.f32.mrb[0].mxu0
          %2183 = vmatprep.mubr.bf16.mxu0 0
          %2184 = vmatmul.mubr.bf16.gmra.mrb[0].mxu0 %v2035
          %v2185 = vpop.f32.mrb[0].mxu0
          %v2186 = vadd.f32 %v2061, %v2185
          %v2187 = vpop.f32.mrb[0].mxu0
          %v2188 = vpop.f32.mrb[0].mxu0
          %v2189 = vadd.f32 %v2061, %v2188
          %v2190 = vpop.f32.mrb[0].mxu0
          %2191 = vmatprep.mubr.bf16.mxu0 0
          %2192 = vmatmul.mubr.bf16.gmra.mrb[0].mxu0 %v2036
          %v2193 = vpop.f32.mrb[0].mxu0
          %v2194 = vadd.f32 %v2061, %v2193
          %v2195 = vpop.f32.mrb[0].mxu0
          %v2196 = vpop.f32.mrb[0].mxu0
          %v2197 = vadd.f32 %v2061, %v2196
          %v2198 = vpop.f32.mrb[0].mxu0
          %2199 = vmatprep.mubr.bf16.mxu0 0
          %2200 = vmatmul.mubr.bf16.gmra.mrb[0].mxu0 %v2037
          %v2201 = vpop.f32.mrb[0].mxu0
          %v2202 = vadd.f32 %v2061, %v2201
          %v2203 = vpop.f32.mrb[0].mxu0
          %v2204 = vpop.f32.mrb[0].mxu0
          %v2205 = vadd.f32 %v2061, %v2204
          %v2206 = vpop.f32.mrb[0].mxu0
          %2207 = vdwg.mxu0
          %v2208 = vsub.f32 0.0, %v2146
          %v2209 = vsub.f32 0.0, %v2149
          %v2210 = vsub.f32 0.0, %v2154
          %v2211 = vsub.f32 0.0, %v2157
          %v2212 = vsub.f32 0.0, %v2162
          %v2213 = vsub.f32 0.0, %v2165
          %v2214 = vsub.f32 0.0, %v2170
          %v2215 = vsub.f32 0.0, %v2173
          %v2216 = vsub.f32 0.0, %v2178
          %v2217 = vsub.f32 0.0, %v2181
          %v2218 = vsub.f32 0.0, %v2186
          %v2219 = vsub.f32 0.0, %v2189
          %v2220 = vsub.f32 0.0, %v2194
          %v2221 = vsub.f32 0.0, %v2197
          %v2222 = vsub.f32 0.0, %v2202
          %v2223 = vsub.f32 0.0, %v2205
          %v2224 = vmul.f32 %v2208, 1.442695
          %v2225 = vpow.pop %v2224
          %v2226 = vmul.f32 %v2209, 1.442695
          %v2227 = vpow.pop %v2226
          %v2228 = vmul.f32 %v2210, 1.442695
          %v2229 = vpow.pop %v2228
          %v2230 = vmul.f32 %v2211, 1.442695
          %v2231 = vpow.pop %v2230
          %v2232 = vmul.f32 %v2212, 1.442695
          %v2233 = vpow.pop %v2232
          %v2234 = vmul.f32 %v2213, 1.442695
          %v2235 = vpow.pop %v2234
          %v2236 = vmul.f32 %v2214, 1.442695
          %v2237 = vpow.pop %v2236
          %v2238 = vmul.f32 %v2215, 1.442695
          %v2239 = vpow.pop %v2238
          %v2240 = vmul.f32 %v2216, 1.442695
          %v2241 = vpow.pop %v2240
          %v2242 = vmul.f32 %v2217, 1.442695
          %v2243 = vpow.pop %v2242
          %v2244 = vmul.f32 %v2218, 1.442695
          %v2245 = vpow.pop %v2244
          %v2246 = vmul.f32 %v2219, 1.442695
          %v2247 = vpow.pop %v2246
          %v2248 = vmul.f32 %v2220, 1.442695
          %v2249 = vpow.pop %v2248
          %v2250 = vmul.f32 %v2221, 1.442695
          %v2251 = vpow.pop %v2250
          %v2252 = vmul.f32 %v2222, 1.442695
          %v2253 = vpow.pop %v2252
          %v2254 = vmul.f32 %v2223, 1.442695
          %v2255 = vpow.pop %v2254
          %v2256 = vadd.f32 %v2225, 1.0
          %v2257 = vadd.f32 %v2227, 1.0
          %v2258 = vadd.f32 %v2229, 1.0
          %v2259 = vadd.f32 %v2231, 1.0
          %v2260 = vadd.f32 %v2233, 1.0
          %v2261 = vadd.f32 %v2235, 1.0
          %v2262 = vadd.f32 %v2237, 1.0
          %v2263 = vadd.f32 %v2239, 1.0
          %v2264 = vadd.f32 %v2241, 1.0
          %v2265 = vadd.f32 %v2243, 1.0
          %v2266 = vadd.f32 %v2245, 1.0
          %v2267 = vadd.f32 %v2247, 1.0
          %v2268 = vadd.f32 %v2249, 1.0
          %v2269 = vadd.f32 %v2251, 1.0
          %v2270 = vadd.f32 %v2253, 1.0
          %v2271 = vadd.f32 %v2255, 1.0
          %v2272 = vrcp.pop %v2256
          %v2273 = vrcp.pop %v2257
          %v2274 = vrcp.pop %v2258
          %v2275 = vrcp.pop %v2259
          %v2276 = vrcp.pop %v2260
          %v2277 = vrcp.pop %v2261
          %v2278 = vrcp.pop %v2262
          %v2279 = vrcp.pop %v2263
          %v2280 = vrcp.pop %v2264
          %v2281 = vrcp.pop %v2265
          %v2282 = vrcp.pop %v2266
          %v2283 = vrcp.pop %v2267
          %v2284 = vrcp.pop %v2268
          %v2285 = vrcp.pop %v2269
          %v2286 = vrcp.pop %v2270
          %v2287 = vrcp.pop %v2271
          %v2288 = vmul.f32 %v2146, %v2272
          %v2289 = vmul.f32 %v2149, %v2273
          %v2290 = vmul.f32 %v2154, %v2274
          %v2291 = vmul.f32 %v2157, %v2275
          %v2292 = vmul.f32 %v2162, %v2276
          %v2293 = vmul.f32 %v2165, %v2277
          %v2294 = vmul.f32 %v2170, %v2278
          %v2295 = vmul.f32 %v2173, %v2279
          %v2296 = vmul.f32 %v2178, %v2280
          %v2297 = vmul.f32 %v2181, %v2281
          %v2298 = vmul.f32 %v2186, %v2282
          %v2299 = vmul.f32 %v2189, %v2283
          %v2300 = vmul.f32 %v2194, %v2284
          %v2301 = vmul.f32 %v2197, %v2285
          %v2302 = vmul.f32 %v2202, %v2286
          %v2303 = vmul.f32 %v2205, %v2287
          %v2304 = vpack.c.bf16 %v2289, %v2288
          %v2305 = vpack.c.bf16 %v2291, %v2290
          %v2306 = vpack.c.bf16 %v2293, %v2292
          %v2307 = vpack.c.bf16 %v2295, %v2294
          %v2308 = vpack.c.bf16 %v2297, %v2296
          %v2309 = vpack.c.bf16 %v2299, %v2298
          %v2310 = vpack.c.bf16 %v2301, %v2300
          %v2311 = vpack.c.bf16 %v2303, %v2302
          %s2312 = scalar_lea.vmem %s4, 192
          %v2313 = vld [vmem:[%s2312] sm:$0xf]
          %v2314 = vld [vmem:[%s2312 + $0x4] sm:$0xf]
          %v2315 = vld [vmem:[%s2312 + $0x8] sm:$0xf]
          %v2316 = vld [vmem:[%s2312 + $0xc] sm:$0xf]
          %v2317 = vld [vmem:[%s2312 + $0x10] sm:$0xf]
          %v2318 = vld [vmem:[%s2312 + $0x14] sm:$0xf]
          %v2319 = vld [vmem:[%s2312 + $0x18] sm:$0xf]
          %v2320 = vld [vmem:[%s2312 + $0x1c] sm:$0xf]
          %v2321 = vld [vmem:[%s2312 + $0x20] sm:$0xf]
          %v2322 = vld [vmem:[%s2312 + $0x24] sm:$0xf]
          %v2323 = vld [vmem:[%s2312 + $0x28] sm:$0xf]
          %v2324 = vld [vmem:[%s2312 + $0x2c] sm:$0xf]
          %v2325 = vld [vmem:[%s2312 + $0x30] sm:$0xf]
          %v2326 = vld [vmem:[%s2312 + $0x34] sm:$0xf]
          %v2327 = vld [vmem:[%s2312 + $0x38] sm:$0xf]
          %v2328 = vld [vmem:[%s2312 + $0x3c] sm:$0xf]
          %s2329 = scalar_lea.vmem %s5, 3
          %v2330 = vld [vmem:[%s2329] sm:$0x1]
          %v2332 = vlaneseq
          %v2333 = vshrl.u32 %v2332, 7
          %v2334 = vsub.s32 0, %v2333
          %v2335 = vrot.slane %v2330, %v2334
          %v2353 = vunpack.c.l.b16 %v2313
          %v2354 = vunpack.c.l.b16 %v2314
          %v2355 = vunpack.c.l.b16 %v2315
          %v2356 = vunpack.c.l.b16 %v2316
          %v2357 = vunpack.c.l.b16 %v2317
          %v2358 = vunpack.c.l.b16 %v2318
          %v2359 = vunpack.c.l.b16 %v2319
          %v2360 = vunpack.c.l.b16 %v2320
          %v2361 = vunpack.c.l.b16 %v2321
          %v2362 = vunpack.c.l.b16 %v2322
          %v2363 = vunpack.c.l.b16 %v2323
          %v2364 = vunpack.c.l.b16 %v2324
          %v2365 = vunpack.c.l.b16 %v2325
          %v2366 = vunpack.c.l.b16 %v2326
          %v2367 = vunpack.c.l.b16 %v2327
          %v2368 = vunpack.c.l.b16 %v2328
          %v2369 = vpack.c.b16 %v2354, %v2353
          %v2370 = vpack.c.b16 %v2356, %v2355
          %v2371 = vpack.c.b16 %v2358, %v2357
          %v2372 = vpack.c.b16 %v2360, %v2359
          %v2373 = vpack.c.b16 %v2362, %v2361
          %v2374 = vpack.c.b16 %v2364, %v2363
          %v2375 = vpack.c.b16 %v2366, %v2365
          %v2376 = vpack.c.b16 %v2368, %v2367
          %2385 = vmatprep.subr.bf16.mxu0 0
          %2386 = vmatpush1.bf16.msra.mxu0 %v2369
          %2387 = vmatprep.subr.bf16.mxu0 0
          %2388 = vmatpush1.bf16.msra.mxu0 %v2370
          %2389 = vmatprep.subr.bf16.mxu0 0
          %2390 = vmatpush1.bf16.msra.mxu0 %v2371
          %2391 = vmatprep.subr.bf16.mxu0 0
          %2392 = vmatpush1.bf16.msra.mxu0 %v2372
          %2393 = vmatprep.subr.bf16.mxu0 0
          %2394 = vmatpush1.bf16.msra.mxu0 %v2373
          %2395 = vmatprep.subr.bf16.mxu0 0
          %2396 = vmatpush1.bf16.msra.mxu0 %v2374
          %2397 = vmatprep.subr.bf16.mxu0 0
          %2398 = vmatpush1.bf16.msra.mxu0 %v2375
          %2399 = vmatprep.subr.bf16.mxu0 0
          %2400 = vmatpush1.bf16.msra.mxu0 %v2376
          %2401 = vmatprep.subr.bf16.mxu0 0
          %2402 = vmatpush1.bf16.msra.mxu0 0
          %2403 = vmatprep.subr.bf16.mxu0 0
          %2404 = vmatpush1.bf16.msra.mxu0 0
          %2405 = vmatprep.subr.bf16.mxu0 0
          %2406 = vmatpush1.bf16.msra.mxu0 0
          %2407 = vmatprep.subr.bf16.mxu0 0
          %2408 = vmatpush1.bf16.msra.mxu0 0
          %2409 = vmatprep.subr.bf16.mxu0 0
          %2410 = vmatpush1.bf16.msra.mxu0 0
          %2411 = vmatprep.subr.bf16.mxu0 0
          %2412 = vmatpush1.bf16.msra.mxu0 0
          %2413 = vmatprep.subr.bf16.mxu0 0
          %2414 = vmatpush1.bf16.msra.mxu0 0
          %2415 = vmatprep.subr.bf16.mxu0 0
          %2416 = vmatpush1.bf16.msra.mxu0 0
          %2417 = vmatprep.mubr.bf16.mxu0 0
          %2418 = vmatmul.mubr.bf16.gmra.mrb[0].mxu0 %v2304
          %v2419 = vpop.f32.mrb[0].mxu0
          %v2420 = vadd.f32 %v2335, %v2419
          %v2421 = vpop.f32.mrb[0].mxu0
          %v2422 = vpop.f32.mrb[0].mxu0
          %v2423 = vadd.f32 %v2335, %v2422
          %v2424 = vpop.f32.mrb[0].mxu0
          %2425 = vmatprep.mubr.bf16.mxu0 0
          %2426 = vmatmul.mubr.bf16.gmra.mrb[0].mxu0 %v2305
          %v2427 = vpop.f32.mrb[0].mxu0
          %v2428 = vadd.f32 %v2335, %v2427
          %v2429 = vpop.f32.mrb[0].mxu0
          %v2430 = vpop.f32.mrb[0].mxu0
          %v2431 = vadd.f32 %v2335, %v2430
          %v2432 = vpop.f32.mrb[0].mxu0
          %2433 = vmatprep.mubr.bf16.mxu0 0
          %2434 = vmatmul.mubr.bf16.gmra.mrb[0].mxu0 %v2306
          %v2435 = vpop.f32.mrb[0].mxu0
          %v2436 = vadd.f32 %v2335, %v2435
          %v2437 = vpop.f32.mrb[0].mxu0
          %v2438 = vpop.f32.mrb[0].mxu0
          %v2439 = vadd.f32 %v2335, %v2438
          %v2440 = vpop.f32.mrb[0].mxu0
          %2441 = vmatprep.mubr.bf16.mxu0 0
          %2442 = vmatmul.mubr.bf16.gmra.mrb[0].mxu0 %v2307
          %v2443 = vpop.f32.mrb[0].mxu0
          %v2444 = vadd.f32 %v2335, %v2443
          %v2445 = vpop.f32.mrb[0].mxu0
          %v2446 = vpop.f32.mrb[0].mxu0
          %v2447 = vadd.f32 %v2335, %v2446
          %v2448 = vpop.f32.mrb[0].mxu0
          %2449 = vmatprep.mubr.bf16.mxu0 0
          %2450 = vmatmul.mubr.bf16.gmra.mrb[0].mxu0 %v2308
          %v2451 = vpop.f32.mrb[0].mxu0
          %v2452 = vadd.f32 %v2335, %v2451
          %v2453 = vpop.f32.mrb[0].mxu0
          %v2454 = vpop.f32.mrb[0].mxu0
          %v2455 = vadd.f32 %v2335, %v2454
          %v2456 = vpop.f32.mrb[0].mxu0
          %2457 = vmatprep.mubr.bf16.mxu0 0
          %2458 = vmatmul.mubr.bf16.gmra.mrb[0].mxu0 %v2309
          %v2459 = vpop.f32.mrb[0].mxu0
          %v2460 = vadd.f32 %v2335, %v2459
          %v2461 = vpop.f32.mrb[0].mxu0
          %v2462 = vpop.f32.mrb[0].mxu0
          %v2463 = vadd.f32 %v2335, %v2462
          %v2464 = vpop.f32.mrb[0].mxu0
          %2465 = vmatprep.mubr.bf16.mxu0 0
          %2466 = vmatmul.mubr.bf16.gmra.mrb[0].mxu0 %v2310
          %v2467 = vpop.f32.mrb[0].mxu0
          %v2468 = vadd.f32 %v2335, %v2467
          %v2469 = vpop.f32.mrb[0].mxu0
          %v2470 = vpop.f32.mrb[0].mxu0
          %v2471 = vadd.f32 %v2335, %v2470
          %v2472 = vpop.f32.mrb[0].mxu0
          %2473 = vmatprep.mubr.bf16.mxu0 0
          %2474 = vmatmul.mubr.bf16.gmra.mrb[0].mxu0 %v2311
          %v2475 = vpop.f32.mrb[0].mxu0
          %v2476 = vadd.f32 %v2335, %v2475
          %v2477 = vpop.f32.mrb[0].mxu0
          %v2478 = vpop.f32.mrb[0].mxu0
          %v2479 = vadd.f32 %v2335, %v2478
          %v2480 = vpop.f32.mrb[0].mxu0
          %2481 = vdwg.mxu0
          %v2482 = vsub.f32 0.0, %v2420
          %v2483 = vsub.f32 0.0, %v2423
          %v2484 = vsub.f32 0.0, %v2428
          %v2485 = vsub.f32 0.0, %v2431
          %v2486 = vsub.f32 0.0, %v2436
          %v2487 = vsub.f32 0.0, %v2439
          %v2488 = vsub.f32 0.0, %v2444
          %v2489 = vsub.f32 0.0, %v2447
          %v2490 = vsub.f32 0.0, %v2452
          %v2491 = vsub.f32 0.0, %v2455
          %v2492 = vsub.f32 0.0, %v2460
          %v2493 = vsub.f32 0.0, %v2463
          %v2494 = vsub.f32 0.0, %v2468
          %v2495 = vsub.f32 0.0, %v2471
          %v2496 = vsub.f32 0.0, %v2476
          %v2497 = vsub.f32 0.0, %v2479
          %v2498 = vmul.f32 %v2482, 1.442695
          %v2499 = vpow.pop %v2498
          %v2500 = vmul.f32 %v2483, 1.442695
          %v2501 = vpow.pop %v2500
          %v2502 = vmul.f32 %v2484, 1.442695
          %v2503 = vpow.pop %v2502
          %v2504 = vmul.f32 %v2485, 1.442695
          %v2505 = vpow.pop %v2504
          %v2506 = vmul.f32 %v2486, 1.442695
          %v2507 = vpow.pop %v2506
          %v2508 = vmul.f32 %v2487, 1.442695
          %v2509 = vpow.pop %v2508
          %v2510 = vmul.f32 %v2488, 1.442695
          %v2511 = vpow.pop %v2510
          %v2512 = vmul.f32 %v2489, 1.442695
          %v2513 = vpow.pop %v2512
          %v2514 = vmul.f32 %v2490, 1.442695
          %v2515 = vpow.pop %v2514
          %v2516 = vmul.f32 %v2491, 1.442695
          %v2517 = vpow.pop %v2516
          %v2518 = vmul.f32 %v2492, 1.442695
          %v2519 = vpow.pop %v2518
          %v2520 = vmul.f32 %v2493, 1.442695
          %v2521 = vpow.pop %v2520
          %v2522 = vmul.f32 %v2494, 1.442695
          %v2523 = vpow.pop %v2522
          %v2524 = vmul.f32 %v2495, 1.442695
          %v2525 = vpow.pop %v2524
          %v2526 = vmul.f32 %v2496, 1.442695
          %v2527 = vpow.pop %v2526
          %v2528 = vmul.f32 %v2497, 1.442695
          %v2529 = vpow.pop %v2528
          %v2530 = vadd.f32 %v2499, 1.0
          %v2531 = vadd.f32 %v2501, 1.0
          %v2532 = vadd.f32 %v2503, 1.0
          %v2533 = vadd.f32 %v2505, 1.0
          %v2534 = vadd.f32 %v2507, 1.0
          %v2535 = vadd.f32 %v2509, 1.0
          %v2536 = vadd.f32 %v2511, 1.0
          %v2537 = vadd.f32 %v2513, 1.0
          %v2538 = vadd.f32 %v2515, 1.0
          %v2539 = vadd.f32 %v2517, 1.0
          %v2540 = vadd.f32 %v2519, 1.0
          %v2541 = vadd.f32 %v2521, 1.0
          %v2542 = vadd.f32 %v2523, 1.0
          %v2543 = vadd.f32 %v2525, 1.0
          %v2544 = vadd.f32 %v2527, 1.0
          %v2545 = vadd.f32 %v2529, 1.0
          %v2546 = vrcp.pop %v2530
          %v2547 = vrcp.pop %v2531
          %v2548 = vrcp.pop %v2532
          %v2549 = vrcp.pop %v2533
          %v2550 = vrcp.pop %v2534
          %v2551 = vrcp.pop %v2535
          %v2552 = vrcp.pop %v2536
          %v2553 = vrcp.pop %v2537
          %v2554 = vrcp.pop %v2538
          %v2555 = vrcp.pop %v2539
          %v2556 = vrcp.pop %v2540
          %v2557 = vrcp.pop %v2541
          %v2558 = vrcp.pop %v2542
          %v2559 = vrcp.pop %v2543
          %v2560 = vrcp.pop %v2544
          %v2561 = vrcp.pop %v2545
          %v2562 = vmul.f32 %v2420, %v2546
          %v2563 = vmul.f32 %v2423, %v2547
          %v2564 = vmul.f32 %v2428, %v2548
          %v2565 = vmul.f32 %v2431, %v2549
          %v2566 = vmul.f32 %v2436, %v2550
          %v2567 = vmul.f32 %v2439, %v2551
          %v2568 = vmul.f32 %v2444, %v2552
          %v2569 = vmul.f32 %v2447, %v2553
          %v2570 = vmul.f32 %v2452, %v2554
          %v2571 = vmul.f32 %v2455, %v2555
          %v2572 = vmul.f32 %v2460, %v2556
          %v2573 = vmul.f32 %v2463, %v2557
          %v2574 = vmul.f32 %v2468, %v2558
          %v2575 = vmul.f32 %v2471, %v2559
          %v2576 = vmul.f32 %v2476, %v2560
          %v2577 = vmul.f32 %v2479, %v2561
          %v2578 = vadd.f32 %v2014, %v2562
          %v2579 = vadd.f32 %v2015, %v2563
          %v2580 = vadd.f32 %v2016, %v2564
          %v2581 = vadd.f32 %v2017, %v2565
          %v2582 = vadd.f32 %v2018, %v2566
          %v2583 = vadd.f32 %v2019, %v2567
          %v2584 = vadd.f32 %v2020, %v2568
          %v2585 = vadd.f32 %v2021, %v2569
          %v2586 = vadd.f32 %v2022, %v2570
          %v2587 = vadd.f32 %v2023, %v2571
          %v2588 = vadd.f32 %v2024, %v2572
          %v2589 = vadd.f32 %v2025, %v2573
          %v2590 = vadd.f32 %v2026, %v2574
          %v2591 = vadd.f32 %v2027, %v2575
          %v2592 = vadd.f32 %v2028, %v2576
          %v2593 = vadd.f32 %v2029, %v2577
          %v2594 = vpack.c.bf16 %v2579, %v2578
          %v2595 = vpack.c.bf16 %v2581, %v2580
          %v2596 = vpack.c.bf16 %v2583, %v2582
          %v2597 = vpack.c.bf16 %v2585, %v2584
          %v2598 = vpack.c.bf16 %v2587, %v2586
          %v2599 = vpack.c.bf16 %v2589, %v2588
          %v2600 = vpack.c.bf16 %v2591, %v2590
          %v2601 = vpack.c.bf16 %v2593, %v2592
          %s2602 = scalar_lea.vmem %s4, 256
          %v2603 = vld [vmem:[%s2602] sm:$0xf]
          %v2604 = vld [vmem:[%s2602 + $0x4] sm:$0xf]
          %v2605 = vld [vmem:[%s2602 + $0x8] sm:$0xf]
          %v2606 = vld [vmem:[%s2602 + $0xc] sm:$0xf]
          %v2607 = vld [vmem:[%s2602 + $0x10] sm:$0xf]
          %v2608 = vld [vmem:[%s2602 + $0x14] sm:$0xf]
          %v2609 = vld [vmem:[%s2602 + $0x18] sm:$0xf]
          %v2610 = vld [vmem:[%s2602 + $0x1c] sm:$0xf]
          %v2611 = vld [vmem:[%s2602 + $0x20] sm:$0xf]
          %v2612 = vld [vmem:[%s2602 + $0x24] sm:$0xf]
          %v2613 = vld [vmem:[%s2602 + $0x28] sm:$0xf]
          %v2614 = vld [vmem:[%s2602 + $0x2c] sm:$0xf]
          %v2615 = vld [vmem:[%s2602 + $0x30] sm:$0xf]
          %v2616 = vld [vmem:[%s2602 + $0x34] sm:$0xf]
          %v2617 = vld [vmem:[%s2602 + $0x38] sm:$0xf]
          %v2618 = vld [vmem:[%s2602 + $0x3c] sm:$0xf]
          %s2619 = scalar_lea.vmem %s5, 4
          %v2620 = vld [vmem:[%s2619] sm:$0x1]
          %v2622 = vlaneseq
          %v2623 = vshrl.u32 %v2622, 7
          %v2624 = vsub.s32 0, %v2623
          %v2625 = vrot.slane %v2620, %v2624
          %v2643 = vunpack.c.l.b16 %v2603
          %v2644 = vunpack.c.l.b16 %v2604
          %v2645 = vunpack.c.l.b16 %v2605
          %v2646 = vunpack.c.l.b16 %v2606
          %v2647 = vunpack.c.l.b16 %v2607
          %v2648 = vunpack.c.l.b16 %v2608
          %v2649 = vunpack.c.l.b16 %v2609
          %v2650 = vunpack.c.l.b16 %v2610
          %v2651 = vunpack.c.l.b16 %v2611
          %v2652 = vunpack.c.l.b16 %v2612
          %v2653 = vunpack.c.l.b16 %v2613
          %v2654 = vunpack.c.l.b16 %v2614
          %v2655 = vunpack.c.l.b16 %v2615
          %v2656 = vunpack.c.l.b16 %v2616
          %v2657 = vunpack.c.l.b16 %v2617
          %v2658 = vunpack.c.l.b16 %v2618
          %v2659 = vpack.c.b16 %v2644, %v2643
          %v2660 = vpack.c.b16 %v2646, %v2645
          %v2661 = vpack.c.b16 %v2648, %v2647
          %v2662 = vpack.c.b16 %v2650, %v2649
          %v2663 = vpack.c.b16 %v2652, %v2651
          %v2664 = vpack.c.b16 %v2654, %v2653
          %v2665 = vpack.c.b16 %v2656, %v2655
          %v2666 = vpack.c.b16 %v2658, %v2657
          %2675 = vmatprep.subr.bf16.mxu0 0
          %2676 = vmatpush1.bf16.msra.mxu0 %v2659
          %2677 = vmatprep.subr.bf16.mxu0 0
          %2678 = vmatpush1.bf16.msra.mxu0 %v2660
          %2679 = vmatprep.subr.bf16.mxu0 0
          %2680 = vmatpush1.bf16.msra.mxu0 %v2661
          %2681 = vmatprep.subr.bf16.mxu0 0
          %2682 = vmatpush1.bf16.msra.mxu0 %v2662
          %2683 = vmatprep.subr.bf16.mxu0 0
          %2684 = vmatpush1.bf16.msra.mxu0 %v2663
          %2685 = vmatprep.subr.bf16.mxu0 0
          %2686 = vmatpush1.bf16.msra.mxu0 %v2664
          %2687 = vmatprep.subr.bf16.mxu0 0
          %2688 = vmatpush1.bf16.msra.mxu0 %v2665
          %2689 = vmatprep.subr.bf16.mxu0 0
          %2690 = vmatpush1.bf16.msra.mxu0 %v2666
          %2691 = vmatprep.subr.bf16.mxu0 0
          %2692 = vmatpush1.bf16.msra.mxu0 0
          %2693 = vmatprep.subr.bf16.mxu0 0
          %2694 = vmatpush1.bf16.msra.mxu0 0
          %2695 = vmatprep.subr.bf16.mxu0 0
          %2696 = vmatpush1.bf16.msra.mxu0 0
          %2697 = vmatprep.subr.bf16.mxu0 0
          %2698 = vmatpush1.bf16.msra.mxu0 0
          %2699 = vmatprep.subr.bf16.mxu0 0
          %2700 = vmatpush1.bf16.msra.mxu0 0
          %2701 = vmatprep.subr.bf16.mxu0 0
          %2702 = vmatpush1.bf16.msra.mxu0 0
          %2703 = vmatprep.subr.bf16.mxu0 0
          %2704 = vmatpush1.bf16.msra.mxu0 0
          %2705 = vmatprep.subr.bf16.mxu0 0
          %2706 = vmatpush1.bf16.msra.mxu0 0
          %2707 = vmatprep.mubr.bf16.mxu0 0
          %2708 = vmatmul.mubr.bf16.gmra.mrb[0].mxu0 %v2594
          %v2709 = vpop.f32.mrb[0].mxu0
          %v2710 = vadd.f32 %v2625, %v2709
          %v2711 = vpop.f32.mrb[0].mxu0
          %v2712 = vpop.f32.mrb[0].mxu0
          %v2713 = vadd.f32 %v2625, %v2712
          %v2714 = vpop.f32.mrb[0].mxu0
          %2715 = vmatprep.mubr.bf16.mxu0 0
          %2716 = vmatmul.mubr.bf16.gmra.mrb[0].mxu0 %v2595
          %v2717 = vpop.f32.mrb[0].mxu0
          %v2718 = vadd.f32 %v2625, %v2717
          %v2719 = vpop.f32.mrb[0].mxu0
          %v2720 = vpop.f32.mrb[0].mxu0
          %v2721 = vadd.f32 %v2625, %v2720
          %v2722 = vpop.f32.mrb[0].mxu0
          %2723 = vmatprep.mubr.bf16.mxu0 0
          %2724 = vmatmul.mubr.bf16.gmra.mrb[0].mxu0 %v2596
          %v2725 = vpop.f32.mrb[0].mxu0
          %v2726 = vadd.f32 %v2625, %v2725
          %v2727 = vpop.f32.mrb[0].mxu0
          %v2728 = vpop.f32.mrb[0].mxu0
          %v2729 = vadd.f32 %v2625, %v2728
          %v2730 = vpop.f32.mrb[0].mxu0
          %2731 = vmatprep.mubr.bf16.mxu0 0
          %2732 = vmatmul.mubr.bf16.gmra.mrb[0].mxu0 %v2597
          %v2733 = vpop.f32.mrb[0].mxu0
          %v2734 = vadd.f32 %v2625, %v2733
          %v2735 = vpop.f32.mrb[0].mxu0
          %v2736 = vpop.f32.mrb[0].mxu0
          %v2737 = vadd.f32 %v2625, %v2736
          %v2738 = vpop.f32.mrb[0].mxu0
          %2739 = vmatprep.mubr.bf16.mxu0 0
          %2740 = vmatmul.mubr.bf16.gmra.mrb[0].mxu0 %v2598
          %v2741 = vpop.f32.mrb[0].mxu0
          %v2742 = vadd.f32 %v2625, %v2741
          %v2743 = vpop.f32.mrb[0].mxu0
          %v2744 = vpop.f32.mrb[0].mxu0
          %v2745 = vadd.f32 %v2625, %v2744
          %v2746 = vpop.f32.mrb[0].mxu0
          %2747 = vmatprep.mubr.bf16.mxu0 0
          %2748 = vmatmul.mubr.bf16.gmra.mrb[0].mxu0 %v2599
          %v2749 = vpop.f32.mrb[0].mxu0
          %v2750 = vadd.f32 %v2625, %v2749
          %v2751 = vpop.f32.mrb[0].mxu0
          %v2752 = vpop.f32.mrb[0].mxu0
          %v2753 = vadd.f32 %v2625, %v2752
          %v2754 = vpop.f32.mrb[0].mxu0
          %2755 = vmatprep.mubr.bf16.mxu0 0
          %2756 = vmatmul.mubr.bf16.gmra.mrb[0].mxu0 %v2600
          %v2757 = vpop.f32.mrb[0].mxu0
          %v2758 = vadd.f32 %v2625, %v2757
          %v2759 = vpop.f32.mrb[0].mxu0
          %v2760 = vpop.f32.mrb[0].mxu0
          %v2761 = vadd.f32 %v2625, %v2760
          %v2762 = vpop.f32.mrb[0].mxu0
          %2763 = vmatprep.mubr.bf16.mxu0 0
          %2764 = vmatmul.mubr.bf16.gmra.mrb[0].mxu0 %v2601
          %v2765 = vpop.f32.mrb[0].mxu0
          %v2766 = vadd.f32 %v2625, %v2765
          %v2767 = vpop.f32.mrb[0].mxu0
          %v2768 = vpop.f32.mrb[0].mxu0
          %v2769 = vadd.f32 %v2625, %v2768
          %v2770 = vpop.f32.mrb[0].mxu0
          %2771 = vdwg.mxu0
          %v2772 = vsub.f32 0.0, %v2710
          %v2773 = vsub.f32 0.0, %v2713
          %v2774 = vsub.f32 0.0, %v2718
          %v2775 = vsub.f32 0.0, %v2721
          %v2776 = vsub.f32 0.0, %v2726
          %v2777 = vsub.f32 0.0, %v2729
          %v2778 = vsub.f32 0.0, %v2734
          %v2779 = vsub.f32 0.0, %v2737
          %v2780 = vsub.f32 0.0, %v2742
          %v2781 = vsub.f32 0.0, %v2745
          %v2782 = vsub.f32 0.0, %v2750
          %v2783 = vsub.f32 0.0, %v2753
          %v2784 = vsub.f32 0.0, %v2758
          %v2785 = vsub.f32 0.0, %v2761
          %v2786 = vsub.f32 0.0, %v2766
          %v2787 = vsub.f32 0.0, %v2769
          %v2788 = vmul.f32 %v2772, 1.442695
          %v2789 = vpow.pop %v2788
          %v2790 = vmul.f32 %v2773, 1.442695
          %v2791 = vpow.pop %v2790
          %v2792 = vmul.f32 %v2774, 1.442695
          %v2793 = vpow.pop %v2792
          %v2794 = vmul.f32 %v2775, 1.442695
          %v2795 = vpow.pop %v2794
          %v2796 = vmul.f32 %v2776, 1.442695
          %v2797 = vpow.pop %v2796
          %v2798 = vmul.f32 %v2777, 1.442695
          %v2799 = vpow.pop %v2798
          %v2800 = vmul.f32 %v2778, 1.442695
          %v2801 = vpow.pop %v2800
          %v2802 = vmul.f32 %v2779, 1.442695
          %v2803 = vpow.pop %v2802
          %v2804 = vmul.f32 %v2780, 1.442695
          %v2805 = vpow.pop %v2804
          %v2806 = vmul.f32 %v2781, 1.442695
          %v2807 = vpow.pop %v2806
          %v2808 = vmul.f32 %v2782, 1.442695
          %v2809 = vpow.pop %v2808
          %v2810 = vmul.f32 %v2783, 1.442695
          %v2811 = vpow.pop %v2810
          %v2812 = vmul.f32 %v2784, 1.442695
          %v2813 = vpow.pop %v2812
          %v2814 = vmul.f32 %v2785, 1.442695
          %v2815 = vpow.pop %v2814
          %v2816 = vmul.f32 %v2786, 1.442695
          %v2817 = vpow.pop %v2816
          %v2818 = vmul.f32 %v2787, 1.442695
          %v2819 = vpow.pop %v2818
          %v2820 = vadd.f32 %v2789, 1.0
          %v2821 = vadd.f32 %v2791, 1.0
          %v2822 = vadd.f32 %v2793, 1.0
          %v2823 = vadd.f32 %v2795, 1.0
          %v2824 = vadd.f32 %v2797, 1.0
          %v2825 = vadd.f32 %v2799, 1.0
          %v2826 = vadd.f32 %v2801, 1.0
          %v2827 = vadd.f32 %v2803, 1.0
          %v2828 = vadd.f32 %v2805, 1.0
          %v2829 = vadd.f32 %v2807, 1.0
          %v2830 = vadd.f32 %v2809, 1.0
          %v2831 = vadd.f32 %v2811, 1.0
          %v2832 = vadd.f32 %v2813, 1.0
          %v2833 = vadd.f32 %v2815, 1.0
          %v2834 = vadd.f32 %v2817, 1.0
          %v2835 = vadd.f32 %v2819, 1.0
          %v2836 = vrcp.pop %v2820
          %v2837 = vrcp.pop %v2821
          %v2838 = vrcp.pop %v2822
          %v2839 = vrcp.pop %v2823
          %v2840 = vrcp.pop %v2824
          %v2841 = vrcp.pop %v2825
          %v2842 = vrcp.pop %v2826
          %v2843 = vrcp.pop %v2827
          %v2844 = vrcp.pop %v2828
          %v2845 = vrcp.pop %v2829
          %v2846 = vrcp.pop %v2830
          %v2847 = vrcp.pop %v2831
          %v2848 = vrcp.pop %v2832
          %v2849 = vrcp.pop %v2833
          %v2850 = vrcp.pop %v2834
          %v2851 = vrcp.pop %v2835
          %v2852 = vmul.f32 %v2710, %v2836
          %v2853 = vmul.f32 %v2713, %v2837
          %v2854 = vmul.f32 %v2718, %v2838
          %v2855 = vmul.f32 %v2721, %v2839
          %v2856 = vmul.f32 %v2726, %v2840
          %v2857 = vmul.f32 %v2729, %v2841
          %v2858 = vmul.f32 %v2734, %v2842
          %v2859 = vmul.f32 %v2737, %v2843
          %v2860 = vmul.f32 %v2742, %v2844
          %v2861 = vmul.f32 %v2745, %v2845
          %v2862 = vmul.f32 %v2750, %v2846
          %v2863 = vmul.f32 %v2753, %v2847
          %v2864 = vmul.f32 %v2758, %v2848
          %v2865 = vmul.f32 %v2761, %v2849
          %v2866 = vmul.f32 %v2766, %v2850
          %v2867 = vmul.f32 %v2769, %v2851
          %v2868 = vpack.c.bf16 %v2853, %v2852
          %v2869 = vpack.c.bf16 %v2855, %v2854
          %v2870 = vpack.c.bf16 %v2857, %v2856
          %v2871 = vpack.c.bf16 %v2859, %v2858
          %v2872 = vpack.c.bf16 %v2861, %v2860
          %v2873 = vpack.c.bf16 %v2863, %v2862
          %v2874 = vpack.c.bf16 %v2865, %v2864
          %v2875 = vpack.c.bf16 %v2867, %v2866
          %s2876 = scalar_lea.vmem %s4, 320
          %v2877 = vld [vmem:[%s2876] sm:$0xf]
          %v2878 = vld [vmem:[%s2876 + $0x4] sm:$0xf]
          %v2879 = vld [vmem:[%s2876 + $0x8] sm:$0xf]
          %v2880 = vld [vmem:[%s2876 + $0xc] sm:$0xf]
          %v2881 = vld [vmem:[%s2876 + $0x10] sm:$0xf]
          %v2882 = vld [vmem:[%s2876 + $0x14] sm:$0xf]
          %v2883 = vld [vmem:[%s2876 + $0x18] sm:$0xf]
          %v2884 = vld [vmem:[%s2876 + $0x1c] sm:$0xf]
          %v2885 = vld [vmem:[%s2876 + $0x20] sm:$0xf]
          %v2886 = vld [vmem:[%s2876 + $0x24] sm:$0xf]
          %v2887 = vld [vmem:[%s2876 + $0x28] sm:$0xf]
          %v2888 = vld [vmem:[%s2876 + $0x2c] sm:$0xf]
          %v2889 = vld [vmem:[%s2876 + $0x30] sm:$0xf]
          %v2890 = vld [vmem:[%s2876 + $0x34] sm:$0xf]
          %v2891 = vld [vmem:[%s2876 + $0x38] sm:$0xf]
          %v2892 = vld [vmem:[%s2876 + $0x3c] sm:$0xf]
          %s2893 = scalar_lea.vmem %s5, 5
          %v2894 = vld [vmem:[%s2893] sm:$0x1]
          %v2896 = vlaneseq
          %v2897 = vshrl.u32 %v2896, 7
          %v2898 = vsub.s32 0, %v2897
          %v2899 = vrot.slane %v2894, %v2898
          %v2917 = vunpack.c.l.b16 %v2877
          %v2918 = vunpack.c.l.b16 %v2878
          %v2919 = vunpack.c.l.b16 %v2879
          %v2920 = vunpack.c.l.b16 %v2880
          %v2921 = vunpack.c.l.b16 %v2881
          %v2922 = vunpack.c.l.b16 %v2882
          %v2923 = vunpack.c.l.b16 %v2883
          %v2924 = vunpack.c.l.b16 %v2884
          %v2925 = vunpack.c.l.b16 %v2885
          %v2926 = vunpack.c.l.b16 %v2886
          %v2927 = vunpack.c.l.b16 %v2887
          %v2928 = vunpack.c.l.b16 %v2888
          %v2929 = vunpack.c.l.b16 %v2889
          %v2930 = vunpack.c.l.b16 %v2890
          %v2931 = vunpack.c.l.b16 %v2891
          %v2932 = vunpack.c.l.b16 %v2892
          %v2933 = vpack.c.b16 %v2918, %v2917
          %v2934 = vpack.c.b16 %v2920, %v2919
          %v2935 = vpack.c.b16 %v2922, %v2921
          %v2936 = vpack.c.b16 %v2924, %v2923
          %v2937 = vpack.c.b16 %v2926, %v2925
          %v2938 = vpack.c.b16 %v2928, %v2927
          %v2939 = vpack.c.b16 %v2930, %v2929
          %v2940 = vpack.c.b16 %v2932, %v2931
          %2949 = vmatprep.subr.bf16.mxu0 0
          %2950 = vmatpush1.bf16.msra.mxu0 %v2933
          %2951 = vmatprep.subr.bf16.mxu0 0
          %2952 = vmatpush1.bf16.msra.mxu0 %v2934
          %2953 = vmatprep.subr.bf16.mxu0 0
          %2954 = vmatpush1.bf16.msra.mxu0 %v2935
          %2955 = vmatprep.subr.bf16.mxu0 0
          %2956 = vmatpush1.bf16.msra.mxu0 %v2936
          %2957 = vmatprep.subr.bf16.mxu0 0
          %2958 = vmatpush1.bf16.msra.mxu0 %v2937
          %2959 = vmatprep.subr.bf16.mxu0 0
          %2960 = vmatpush1.bf16.msra.mxu0 %v2938
          %2961 = vmatprep.subr.bf16.mxu0 0
          %2962 = vmatpush1.bf16.msra.mxu0 %v2939
          %2963 = vmatprep.subr.bf16.mxu0 0
          %2964 = vmatpush1.bf16.msra.mxu0 %v2940
          %2965 = vmatprep.subr.bf16.mxu0 0
          %2966 = vmatpush1.bf16.msra.mxu0 0
          %2967 = vmatprep.subr.bf16.mxu0 0
          %2968 = vmatpush1.bf16.msra.mxu0 0
          %2969 = vmatprep.subr.bf16.mxu0 0
          %2970 = vmatpush1.bf16.msra.mxu0 0
          %2971 = vmatprep.subr.bf16.mxu0 0
          %2972 = vmatpush1.bf16.msra.mxu0 0
          %2973 = vmatprep.subr.bf16.mxu0 0
          %2974 = vmatpush1.bf16.msra.mxu0 0
          %2975 = vmatprep.subr.bf16.mxu0 0
          %2976 = vmatpush1.bf16.msra.mxu0 0
          %2977 = vmatprep.subr.bf16.mxu0 0
          %2978 = vmatpush1.bf16.msra.mxu0 0
          %2979 = vmatprep.subr.bf16.mxu0 0
          %2980 = vmatpush1.bf16.msra.mxu0 0
          %2981 = vmatprep.mubr.bf16.mxu0 0
          %2982 = vmatmul.mubr.bf16.gmra.mrb[0].mxu0 %v2868
          %v2983 = vpop.f32.mrb[0].mxu0
          %v2984 = vadd.f32 %v2899, %v2983
          %v2985 = vpop.f32.mrb[0].mxu0
          %v2986 = vpop.f32.mrb[0].mxu0
          %v2987 = vadd.f32 %v2899, %v2986
          %v2988 = vpop.f32.mrb[0].mxu0
          %2989 = vmatprep.mubr.bf16.mxu0 0
          %2990 = vmatmul.mubr.bf16.gmra.mrb[0].mxu0 %v2869
          %v2991 = vpop.f32.mrb[0].mxu0
          %v2992 = vadd.f32 %v2899, %v2991
          %v2993 = vpop.f32.mrb[0].mxu0
          %v2994 = vpop.f32.mrb[0].mxu0
          %v2995 = vadd.f32 %v2899, %v2994
          %v2996 = vpop.f32.mrb[0].mxu0
          %2997 = vmatprep.mubr.bf16.mxu0 0
          %2998 = vmatmul.mubr.bf16.gmra.mrb[0].mxu0 %v2870
          %v2999 = vpop.f32.mrb[0].mxu0
          %v3000 = vadd.f32 %v2899, %v2999
          %v3001 = vpop.f32.mrb[0].mxu0
          %v3002 = vpop.f32.mrb[0].mxu0
          %v3003 = vadd.f32 %v2899, %v3002
          %v3004 = vpop.f32.mrb[0].mxu0
          %3005 = vmatprep.mubr.bf16.mxu0 0
          %3006 = vmatmul.mubr.bf16.gmra.mrb[0].mxu0 %v2871
          %v3007 = vpop.f32.mrb[0].mxu0
          %v3008 = vadd.f32 %v2899, %v3007
          %v3009 = vpop.f32.mrb[0].mxu0
          %v3010 = vpop.f32.mrb[0].mxu0
          %v3011 = vadd.f32 %v2899, %v3010
          %v3012 = vpop.f32.mrb[0].mxu0
          %3013 = vmatprep.mubr.bf16.mxu0 0
          %3014 = vmatmul.mubr.bf16.gmra.mrb[0].mxu0 %v2872
          %v3015 = vpop.f32.mrb[0].mxu0
          %v3016 = vadd.f32 %v2899, %v3015
          %v3017 = vpop.f32.mrb[0].mxu0
          %v3018 = vpop.f32.mrb[0].mxu0
          %v3019 = vadd.f32 %v2899, %v3018
          %v3020 = vpop.f32.mrb[0].mxu0
          %3021 = vmatprep.mubr.bf16.mxu0 0
          %3022 = vmatmul.mubr.bf16.gmra.mrb[0].mxu0 %v2873
          %v3023 = vpop.f32.mrb[0].mxu0
          %v3024 = vadd.f32 %v2899, %v3023
          %v3025 = vpop.f32.mrb[0].mxu0
          %v3026 = vpop.f32.mrb[0].mxu0
          %v3027 = vadd.f32 %v2899, %v3026
          %v3028 = vpop.f32.mrb[0].mxu0
          %3029 = vmatprep.mubr.bf16.mxu0 0
          %3030 = vmatmul.mubr.bf16.gmra.mrb[0].mxu0 %v2874
          %v3031 = vpop.f32.mrb[0].mxu0
          %v3032 = vadd.f32 %v2899, %v3031
          %v3033 = vpop.f32.mrb[0].mxu0
          %v3034 = vpop.f32.mrb[0].mxu0
          %v3035 = vadd.f32 %v2899, %v3034
          %v3036 = vpop.f32.mrb[0].mxu0
          %3037 = vmatprep.mubr.bf16.mxu0 0
          %3038 = vmatmul.mubr.bf16.gmra.mrb[0].mxu0 %v2875
          %v3039 = vpop.f32.mrb[0].mxu0
          %v3040 = vadd.f32 %v2899, %v3039
          %v3041 = vpop.f32.mrb[0].mxu0
          %v3042 = vpop.f32.mrb[0].mxu0
          %v3043 = vadd.f32 %v2899, %v3042
          %v3044 = vpop.f32.mrb[0].mxu0
          %3045 = vdwg.mxu0
          %v3046 = vsub.f32 0.0, %v2984
          %v3047 = vsub.f32 0.0, %v2987
          %v3048 = vsub.f32 0.0, %v2992
          %v3049 = vsub.f32 0.0, %v2995
          %v3050 = vsub.f32 0.0, %v3000
          %v3051 = vsub.f32 0.0, %v3003
          %v3052 = vsub.f32 0.0, %v3008
          %v3053 = vsub.f32 0.0, %v3011
          %v3054 = vsub.f32 0.0, %v3016
          %v3055 = vsub.f32 0.0, %v3019
          %v3056 = vsub.f32 0.0, %v3024
          %v3057 = vsub.f32 0.0, %v3027
          %v3058 = vsub.f32 0.0, %v3032
          %v3059 = vsub.f32 0.0, %v3035
          %v3060 = vsub.f32 0.0, %v3040
          %v3061 = vsub.f32 0.0, %v3043
          %v3062 = vmul.f32 %v3046, 1.442695
          %v3063 = vpow.pop %v3062
          %v3064 = vmul.f32 %v3047, 1.442695
          %v3065 = vpow.pop %v3064
          %v3066 = vmul.f32 %v3048, 1.442695
          %v3067 = vpow.pop %v3066
          %v3068 = vmul.f32 %v3049, 1.442695
          %v3069 = vpow.pop %v3068
          %v3070 = vmul.f32 %v3050, 1.442695
          %v3071 = vpow.pop %v3070
          %v3072 = vmul.f32 %v3051, 1.442695
          %v3073 = vpow.pop %v3072
          %v3074 = vmul.f32 %v3052, 1.442695
          %v3075 = vpow.pop %v3074
          %v3076 = vmul.f32 %v3053, 1.442695
          %v3077 = vpow.pop %v3076
          %v3078 = vmul.f32 %v3054, 1.442695
          %v3079 = vpow.pop %v3078
          %v3080 = vmul.f32 %v3055, 1.442695
          %v3081 = vpow.pop %v3080
          %v3082 = vmul.f32 %v3056, 1.442695
          %v3083 = vpow.pop %v3082
          %v3084 = vmul.f32 %v3057, 1.442695
          %v3085 = vpow.pop %v3084
          %v3086 = vmul.f32 %v3058, 1.442695
          %v3087 = vpow.pop %v3086
          %v3088 = vmul.f32 %v3059, 1.442695
          %v3089 = vpow.pop %v3088
          %v3090 = vmul.f32 %v3060, 1.442695
          %v3091 = vpow.pop %v3090
          %v3092 = vmul.f32 %v3061, 1.442695
          %v3093 = vpow.pop %v3092
          %v3094 = vadd.f32 %v3063, 1.0
          %v3095 = vadd.f32 %v3065, 1.0
          %v3096 = vadd.f32 %v3067, 1.0
          %v3097 = vadd.f32 %v3069, 1.0
          %v3098 = vadd.f32 %v3071, 1.0
          %v3099 = vadd.f32 %v3073, 1.0
          %v3100 = vadd.f32 %v3075, 1.0
          %v3101 = vadd.f32 %v3077, 1.0
          %v3102 = vadd.f32 %v3079, 1.0
          %v3103 = vadd.f32 %v3081, 1.0
          %v3104 = vadd.f32 %v3083, 1.0
          %v3105 = vadd.f32 %v3085, 1.0
          %v3106 = vadd.f32 %v3087, 1.0
          %v3107 = vadd.f32 %v3089, 1.0
          %v3108 = vadd.f32 %v3091, 1.0
          %v3109 = vadd.f32 %v3093, 1.0
          %v3110 = vrcp.pop %v3094
          %v3111 = vrcp.pop %v3095
          %v3112 = vrcp.pop %v3096
          %v3113 = vrcp.pop %v3097
          %v3114 = vrcp.pop %v3098
          %v3115 = vrcp.pop %v3099
          %v3116 = vrcp.pop %v3100
          %v3117 = vrcp.pop %v3101
          %v3118 = vrcp.pop %v3102
          %v3119 = vrcp.pop %v3103
          %v3120 = vrcp.pop %v3104
          %v3121 = vrcp.pop %v3105
          %v3122 = vrcp.pop %v3106
          %v3123 = vrcp.pop %v3107
          %v3124 = vrcp.pop %v3108
          %v3125 = vrcp.pop %v3109
          %v3126 = vmul.f32 %v2984, %v3110
          %v3127 = vmul.f32 %v2987, %v3111
          %v3128 = vmul.f32 %v2992, %v3112
          %v3129 = vmul.f32 %v2995, %v3113
          %v3130 = vmul.f32 %v3000, %v3114
          %v3131 = vmul.f32 %v3003, %v3115
          %v3132 = vmul.f32 %v3008, %v3116
          %v3133 = vmul.f32 %v3011, %v3117
          %v3134 = vmul.f32 %v3016, %v3118
          %v3135 = vmul.f32 %v3019, %v3119
          %v3136 = vmul.f32 %v3024, %v3120
          %v3137 = vmul.f32 %v3027, %v3121
          %v3138 = vmul.f32 %v3032, %v3122
          %v3139 = vmul.f32 %v3035, %v3123
          %v3140 = vmul.f32 %v3040, %v3124
          %v3141 = vmul.f32 %v3043, %v3125
          %v3142 = vadd.f32 %v2578, %v3126
          %v3143 = vadd.f32 %v2579, %v3127
          %v3144 = vadd.f32 %v2580, %v3128
          %v3145 = vadd.f32 %v2581, %v3129
          %v3146 = vadd.f32 %v2582, %v3130
          %v3147 = vadd.f32 %v2583, %v3131
          %v3148 = vadd.f32 %v2584, %v3132
          %v3149 = vadd.f32 %v2585, %v3133
          %v3150 = vadd.f32 %v2586, %v3134
          %v3151 = vadd.f32 %v2587, %v3135
          %v3152 = vadd.f32 %v2588, %v3136
          %v3153 = vadd.f32 %v2589, %v3137
          %v3154 = vadd.f32 %v2590, %v3138
          %v3155 = vadd.f32 %v2591, %v3139
          %v3156 = vadd.f32 %v2592, %v3140
          %v3157 = vadd.f32 %v2593, %v3141
          %3158 = vst [vmem:[%s357] sm:$0xff] %v3142
          %3159 = vst [vmem:[%s357 + $0x8] sm:$0xff] %v3143
          %3160 = vst [vmem:[%s357 + $0x10] sm:$0xff] %v3144
          %3161 = vst [vmem:[%s357 + $0x18] sm:$0xff] %v3145
          %3162 = vst [vmem:[%s357 + $0x20] sm:$0xff] %v3146
          %3163 = vst [vmem:[%s357 + $0x28] sm:$0xff] %v3147
          %3164 = vst [vmem:[%s357 + $0x30] sm:$0xff] %v3148
          %3165 = vst [vmem:[%s357 + $0x38] sm:$0xff] %v3149
          %3166 = vst [vmem:[%s357 + $0x40] sm:$0xff] %v3150
          %3167 = vst [vmem:[%s357 + $0x48] sm:$0xff] %v3151
          %3168 = vst [vmem:[%s357 + $0x50] sm:$0xff] %v3152
          %3169 = vst [vmem:[%s357 + $0x58] sm:$0xff] %v3153
          %3170 = vst [vmem:[%s357 + $0x60] sm:$0xff] %v3154
          %3171 = vst [vmem:[%s357 + $0x68] sm:$0xff] %v3155
          %3172 = vst [vmem:[%s357 + $0x70] sm:$0xff] %v3156
          %3173 = vst [vmem:[%s357 + $0x78] sm:$0xff] %v3157
        $region60: #{interaction_block_pallas.5} parent=51 // pred_fallthru
          _
        %s3174 = sand.u32 %s230, 1
        %s3175 = scalar_lea.sflag [#allocation4], %s3174
        %s3176 = sand.u32 %s230, 1
        %s3177 = smul.addr %s3176, 128
        %s3178 = scalar_lea.vmem [#allocation3], %s3177
        // Predicated region
        $region61: #{interaction_block_pallas.5} parent=51 // pred_check
          %p3179 = pneg %p240
        $region62: #{interaction_block_pallas.5} parent=51 // pred_check_branch
          %3181 = sbr.rel (%p3179) target = $region64
        $region63: #{interaction_block_pallas.5} parent=51 // pred_region
          %s3182 = smul.u32 16, %s26
          %s3184 = ssub.s32 2048, 2048
          %3185 = vsyncadd %s3175, %s3184
          %s3186 = smul.addr %s3182, 128
          %s3187 = scalar_lea.hbm %s8, %s3186
          %s3188 = sshll.u32 %s3178, 4
          %s3189 = int_to_ptr.vmem [resolvable:$true] %s3188
          %3194 = dma.vmem_to_hbm [thread:$0]  %s3189, 2048, %s3187, %s3175, 128, 128, 8
        $region64: #{interaction_block_pallas.5} parent=51 // pred_fallthru
          _
      $region52: #{interaction_block_pallas.5} parent=5 // pred_fallthru
        _
      %p3195 = scmp.le.s32.totalorder 2, %s17
      // Predicated region
      $region65: #{interaction_block_pallas.5} parent=5 // pred_check
        %p3196 = pneg %p3195
      $region66: #{interaction_block_pallas.5} parent=5 // pred_check_branch
        %3198 = sbr.rel (%p3196) target = $region68
      $region67: #{interaction_block_pallas.5} parent=5 // pred_region
        %s3199 = ssub.s32 %s17, 2
        // Predicated region
        $region69: #{interaction_block_pallas.5} parent=67 // pred_check
          %p3200 = pneg %p246
        $region70: #{interaction_block_pallas.5} parent=67 // pred_check_branch
          %3202 = sbr.rel (%p3200) target = $region72
        $region71: #{interaction_block_pallas.5} parent=67 // pred_region
          %s3203 = sand.u32 %s231, 1
          %s3204 = scalar_lea.sflag [#allocation4], %s3203
          %s3205 = sand.u32 %s231, 1
          %s3206 = smul.addr %s3205, 128
          %s3207 = scalar_lea.vmem [#allocation3], %s3206
          %3208 = dma.done %s3204, 2048
        $region72: #{interaction_block_pallas.5} parent=67 // pred_fallthru
          _
      $region68: #{interaction_block_pallas.5} parent=5 // pred_fallthru
        _
    $region6: #{interaction_block_pallas.5} parent=1 // loop_footer
      %s21 = sadd.s32 1, %s17
    $region7: #{interaction_block_pallas.5} parent=1 // loop_footer_branch
      %16 = sbr.rel target = $region3
    $region8: #{interaction_block_pallas.5} parent=1 // loop_exit
      _
    %3209 = vsyncpa [#allocation4], 1
    %s3210 = scalar_lea.sflag [#allocation4], 1
    %3211 = vsyncpa %s3210, 1

</llo_original>
